<compile_context>
chip_gen: v7x
topology: tpu7x:2x2x1
jax: 0.10.0
libtpu: 0.0.40
codegen_flags: <defaults>
</compile_context>

<pallas_src>
import math

import jax
import jax.numpy as jnp
from jax.experimental import pallas as pl
from jax.experimental.pallas import tpu as pltpu

n_embed = 384
n_head = 6
head_dim = n_embed // n_head          # 64
_PAIR = 2                             # heads packed per attention grid step
pair_dim = _PAIR * head_dim           # 128  -> lane-dense blocks / stores
n_pairs = n_head // _PAIR             # 3    (= n_embed // pair_dim)
_NEG_INF = -1e30                      # large finite negative (robust vs -inf)


# ---------------------------------------------------------------------------
# Kernel 1: tiled linear  y = x @ w (+ b)     (bf16 in, f32 accumulation)
# ---------------------------------------------------------------------------
def _linear_kernel(x_ref, w_ref, o_ref):
    o_ref[...] = jnp.dot(x_ref[...], w_ref[...],
                         preferred_element_type=jnp.float32).astype(o_ref.dtype)


def _linear_bias_kernel(x_ref, w_ref, b_ref, o_ref):
    acc = jnp.dot(x_ref[...], w_ref[...], preferred_element_type=jnp.float32)
    o_ref[...] = (acc + b_ref[...].astype(jnp.float32)).astype(o_ref.dtype)


def linear(x2d, w, b=None, *, out_dtype, tm=256, tn=384):
    """x2d: (M, K), w: (K, N), b: None or (1, N) -> (M, N).

    K is kept un-tiled (<= 1152 here), so no K reduction axis / accumulator is
    needed; grid is (M tiles, N tiles), both parallel.
    """
    M, K = x2d.shape
    K2, N = w.shape
    assert K == K2
    tm = min(tm, M)
    tn = min(tn, N)
    assert M % tm == 0 and N % tn == 0
    assert (tm % 8 == 0 or tm == M) and tn % 128 == 0
    grid = (M // tm, N // tn)

    in_specs = [
        pl.BlockSpec((tm, K), lambda i, j: (i, 0)),
        pl.BlockSpec((K, tn), lambda i, j: (0, j)),
    ]
    args = (x2d, w)
    kernel = _linear_kernel
    bias_bytes = 0
    if b is not None:
        in_specs.append(pl.BlockSpec((1, tn), lambda i, j: (0, j)))
        args = (x2d, w, b)
        kernel = _linear_bias_kernel
        bias_bytes = b.size * b.dtype.itemsize

    cost = pl.CostEstimate(
        flops=2 * M * K * N,
        transcendentals=0,
        bytes_accessed=(x2d.size * x2d.dtype.itemsize
                        + w.size * w.dtype.itemsize
                        + bias_bytes
                        + M * N * jnp.dtype(out_dtype).itemsize),
    )
    return pl.pallas_call(
        kernel,
        out_shape=jax.ShapeDtypeStruct((M, N), out_dtype),
        grid=grid,
        in_specs=in_specs,
        out_specs=pl.BlockSpec((tm, tn), lambda i, j: (i, j)),
        compiler_params=pltpu.CompilerParams(
            dimension_semantics=("parallel", "parallel"),
            vmem_limit_bytes=32 * 1024 * 1024,
        ),
        cost_estimate=cost,
    )(*args)


# ---------------------------------------------------------------------------
# Kernel 2: flash-style causal attention, 2 heads per grid step (lane-dense)
# ---------------------------------------------------------------------------
def _attn_kernel(q_ref, k_ref, v_ref, o_ref, m_sc, l_sc, acc_sc):
    qi = pl.program_id(2)              # q-tile index
    ki = pl.program_id(3)              # kv-tile index (innermost, "arbitrary")
    nk = pl.num_programs(3)
    blk_q = q_ref.shape[1]
    blk_k = k_ref.shape[1]
    sm_scale = 1.0 / math.sqrt(head_dim)   # = 0.125 exactly

    @pl.when(ki == 0)
    def _init():
        m_sc[...] = jnp.full(m_sc.shape, _NEG_INF, m_sc.dtype)
        l_sc[...] = jnp.zeros(l_sc.shape, l_sc.dtype)
        acc_sc[...] = jnp.zeros(acc_sc.shape, acc_sc.dtype)

    def process(on_diagonal):
        q = q_ref[0]                   # (blk_q, 128): two heads side by side
        k = k_ref[0]                   # (blk_k, 128)
        v = v_ref[0]                   # (blk_k, 128)
        if on_diagonal:
            # Local iotas only (blk_q == blk_k and qi == ki on this path).
            row = jax.lax.broadcasted_iota(jnp.int32, (blk_q, blk_k), 0)
            col = jax.lax.broadcasted_iota(jnp.int32, (blk_q, blk_k), 1)
            mask = col <= row
        for h in range(_PAIR):
            lo, hi = h * head_dim, (h + 1) * head_dim
            qh = q[:, lo:hi] * sm_scale                 # scale folded into q
            kh = k[:, lo:hi]
            vh = v[:, lo:hi]
            s = jnp.dot(qh, kh.T, preferred_element_type=jnp.float32)
            if on_diagonal:
                s = jnp.where(mask, s, _NEG_INF)
            m_prev = m_sc[h]                            # (blk_q, 1) f32
            m_new = jnp.maximum(m_prev, jnp.max(s, axis=-1, keepdims=True))
            alpha = jnp.exp(m_prev - m_new)
            p = jnp.exp(s - m_new)
            l_sc[h] = alpha * l_sc[h] + jnp.sum(p, axis=-1, keepdims=True)
            acc_sc[h] = alpha * acc_sc[h] + jnp.dot(
                p.astype(vh.dtype), vh, preferred_element_type=jnp.float32)
            m_sc[h] = m_new

    @pl.when(ki < qi)                  # fully visible tile: no mask math
    def _full():
        process(on_diagonal=False)

    @pl.when(ki == qi)                 # diagonal tile: apply local causal mask
    def _diag():
        process(on_diagonal=True)

    # ki > qi: fully masked tile -> all compute skipped.

    @pl.when(ki == nk - 1)
    def _finalize():
        outs = [acc_sc[h] * pl.reciprocal(l_sc[h], approx=True)
                for h in range(_PAIR)]
        # Single lane-dense (blk_q, 128) store for the head pair.
        o_ref[0] = jnp.concatenate(outs, axis=-1).astype(o_ref.dtype)


def causal_attention(qkv, B, T):
    """qkv: (B, T, 3C) laid out [q | k | v] with heads contiguous inside each.

    Returns (B, T, C) with per-head outputs already concatenated along channels
    (same layout as out.transpose(1,2).view(B,T,C) in the PyTorch module).
    """
    C = n_embed
    blk = min(128, T)
    assert T % blk == 0 and (blk % 8 == 0 or blk == T)
    nq = T // blk
    grid = (B, n_pairs, nq, nq)

    q_spec = pl.BlockSpec((1, blk, pair_dim), lambda b, p, qi, ki: (b, qi, p))
    k_spec = pl.BlockSpec((1, blk, pair_dim), lambda b, p, qi, ki: (b, ki, p + n_pairs))
    v_spec = pl.BlockSpec((1, blk, pair_dim), lambda b, p, qi, ki: (b, ki, p + 2 * n_pairs))
    o_spec = pl.BlockSpec((1, blk, pair_dim), lambda b, p, qi, ki: (b, qi, p))

    itemsize = qkv.dtype.itemsize
    cost = pl.CostEstimate(
        flops=4 * B * n_head * T * T * head_dim,
        transcendentals=B * n_head * T * T,
        bytes_accessed=qkv.size * itemsize + B * T * C * itemsize,
    )
    return pl.pallas_call(
        _attn_kernel,
        out_shape=jax.ShapeDtypeStruct((B, T, C), qkv.dtype),
        grid=grid,
        in_specs=[q_spec, k_spec, v_spec],
        out_specs=o_spec,
        scratch_shapes=[
            pltpu.VMEM((_PAIR, blk, 1), jnp.float32),         # running max m
            pltpu.VMEM((_PAIR, blk, 1), jnp.float32),         # running sum l
            pltpu.VMEM((_PAIR, blk, head_dim), jnp.float32),  # output accumulator
        ],
        compiler_params=pltpu.CompilerParams(
            dimension_semantics=("parallel", "parallel", "parallel", "arbitrary"),
            vmem_limit_bytes=32 * 1024 * 1024,
        ),
        cost_estimate=cost,
    )(qkv, qkv, qkv)


# ---------------------------------------------------------------------------
# Parameter handling + jitted forward
# ---------------------------------------------------------------------------
def init_params(key, dtype=jnp.float32):
    """Torch-convention params: nn.Linear weight is (out_features, in_features)."""
    k1, k2, k3 = jax.random.split(key, 3)
    w_atten = jax.random.normal(k1, (3 * n_embed, n_embed), dtype) * 0.02
    w_proj = jax.random.normal(k2, (n_embed, n_embed), dtype) * 0.02
    b_proj = jax.random.normal(k3, (n_embed,), dtype) * 0.02
    return {"w_atten": w_atten, "w_proj": w_proj, "b_proj": b_proj}


def prepare_kernel_params(params, compute_dtype=jnp.bfloat16):
    """Pre-transpose and pre-cast the weights ONCE, outside the jitted forward."""
    return {
        "w_atten_t": jnp.asarray(params["w_atten"].T, compute_dtype),  # (C, 3C)
        "w_proj_t": jnp.asarray(params["w_proj"].T, compute_dtype),    # (C, C)
        "b_proj": jnp.asarray(params["b_proj"], jnp.float32).reshape(1, n_embed),
    }


@jax.jit
def multi_head_attention(kparams, x):
    B, T, C = x.shape
    assert C == n_embed
    compute_dtype = kparams["w_atten_t"].dtype
    x2d = x.reshape(B * T, C).astype(compute_dtype)

    # 1) fused QKV projection (bias-free), bf16 output.
    qkv = linear(x2d, kparams["w_atten_t"], out_dtype=compute_dtype)   # (B*T, 3C)
    qkv = qkv.reshape(B, T, 3 * C)                                     # free view

    # 2) flash-style causal attention; head split/merge fused into BlockSpecs.
    attn = causal_attention(qkv, B, T)                                 # (B, T, C)

    # 3) output projection + bias, f32 result.
    y = linear(attn.reshape(B * T, C), kparams["w_proj_t"], kparams["b_proj"],
               out_dtype=jnp.float32)                                  # (B*T, C)
    return y.reshape(B, T, C)


# ---------------------------------------------------------------------------
# Pure-JAX f32 reference (mirrors the PyTorch forward, eval mode)
# ---------------------------------------------------------------------------
def reference(params, x):
    B, T, C = x.shape
    qkv = x @ params["w_atten"].T
    q, k, v = jnp.split(qkv, 3, axis=2)
    q = q.reshape(B, T, n_head, head_dim).transpose(0, 2, 1, 3)
    k = k.reshape(B, T, n_head, head_dim).transpose(0, 2, 1, 3)
    v = v.reshape(B, T, n_head, head_dim).transpose(0, 2, 1, 3)
    wei = (q @ jnp.swapaxes(k, -2, -1)) * (1.0 / math.sqrt(head_dim))
    mask = jnp.tril(jnp.ones((T, T), bool))
    wei = jnp.where(mask[None, None], wei, -jnp.inf)
    wei = jax.nn.softmax(wei, axis=-1)
    out = (wei @ v).transpose(0, 2, 1, 3).reshape(B, T, C)
    return out @ params["w_proj"].T + params["b_proj"]


if __name__ == "__main__":
    key = jax.random.PRNGKey(0)
    kp, kx = jax.random.split(key)
    params = init_params(kp)
    kparams = prepare_kernel_params(params)   # pre-transposed bf16 weights, once

    # T = 256 (= the module's block_size) exercises multiple q/kv tiles, the
    # online-softmax accumulation and the causal tile-skipping path.
    B, T = 2, 256
    x = jax.random.normal(kx, (B, T, n_embed), jnp.float32)

    y = multi_head_attention(kparams, x)
    y = jax.block_until_ready(y)

    y_ref = reference(params, x)
    assert y.shape == y_ref.shape
    # Tolerance covers bf16 matmul inputs (f32 accumulation) + approx reciprocal.
    assert jnp.allclose(y, y_ref, atol=2e-2, rtol=2e-2), "mismatch vs reference"

    print("KERNEL_OK")
</pallas_src>

<mosaic_0001>
module attributes {stable_mosaic.version = 11 : i64} {
  func.func @_linear_kernel(%arg0: i32, %arg1: i32, %arg2: memref<256x384xbf16, #tpu.memory_space<vmem>>, %arg3: memref<384x384xbf16, #tpu.memory_space<vmem>>, %arg4: memref<256x384xbf16, #tpu.memory_space<vmem>>) attributes {dimension_semantics = [#tpu.dimension_semantics<parallel>, #tpu.dimension_semantics<parallel>], iteration_bounds = array<i64: 2, 3>, scalar_prefetch = 0 : i64, scratch_operands = 0 : i64, tpu.core_type = #tpu.core_type<tc>, window_params = [{transform_indices = @transform_0, window_bounds = array<i64: 256, 384>}, {transform_indices = @transform_1, window_bounds = array<i64: 384, 384>}, {transform_indices = @transform_2, window_bounds = array<i64: 256, 384>}]} {
    %c0 = arith.constant 0 : index
    %c0_0 = arith.constant 0 : index
    %0 = vector.load %arg2[%c0, %c0_0] : memref<256x384xbf16, #tpu.memory_space<vmem>>, vector<256x384xbf16>
    %c0_1 = arith.constant 0 : index
    %c0_2 = arith.constant 0 : index
    %1 = vector.load %arg3[%c0_1, %c0_2] : memref<384x384xbf16, #tpu.memory_space<vmem>>, vector<384x384xbf16>
    %cst = arith.constant dense<0.000000e+00> : vector<256x384xf32>
    %2 = tpu.matmul %0, %1, %cst {dimension_numbers = #tpu.dot_dimension_numbers<[1], [0], [0], [1], [0, 0, 1, 1], [], []>} : vector<256x384xbf16>, vector<384x384xbf16>, vector<256x384xf32> -> vector<256x384xf32>
    %3 = arith.truncf %2 : vector<256x384xf32> to vector<256x384xbf16>
    %c0_3 = arith.constant 0 : index
    %c0_4 = arith.constant 0 : index
    %4 = vector.load %arg4[%c0_3, %c0_4] : memref<256x384xbf16, #tpu.memory_space<vmem>>, vector<256x384xbf16>
    tpu.vector_store %arg4[%c0_3, %c0_4], %3 {strides = array<i32>} : memref<256x384xbf16, #tpu.memory_space<vmem>>, vector<256x384xbf16>,
    return
  }
  func.func @transform_0(%arg0: i32, %arg1: i32) -> (i32, i32) {
    %c0_i32 = arith.constant 0 : i32
    %c0_i32_0 = arith.constant 0 : i32
    return %arg0, %c0_i32 : i32, i32
  }
  func.func @transform_1(%arg0: i32, %arg1: i32) -> (i32, i32) {
    %c0_i32 = arith.constant 0 : i32
    %c0_i32_0 = arith.constant 0 : i32
    return %c0_i32, %arg1 : i32, i32
  }
  func.func @transform_2(%arg0: i32, %arg1: i32) -> (i32, i32) {
    %c0_i32 = arith.constant 0 : i32
    return %arg0, %arg1 : i32, i32
  }
}

module attributes {stable_mosaic.version = 11 : i64} {
  func.func @_linear_bias_kernel(%arg0: i32, %arg1: i32, %arg2: memref<256x384xbf16, #tpu.memory_space<vmem>>, %arg3: memref<384x384xbf16, #tpu.memory_space<vmem>>, %arg4: memref<1x384xf32, #tpu.memory_space<vmem>>, %arg5: memref<256x384xf32, #tpu.memory_space<vmem>>) attributes {dimension_semantics = [#tpu.dimension_semantics<parallel>, #tpu.dimension_semantics<parallel>], iteration_bounds = array<i64: 2, 1>, scalar_prefetch = 0 : i64, scratch_operands = 0 : i64, tpu.core_type = #tpu.core_type<tc>, window_params = [{transform_indices = @transform_0, window_bounds = array<i64: 256, 384>}, {transform_indices = @transform_1, window_bounds = array<i64: 384, 384>}, {transform_indices = @transform_2, window_bounds = array<i64: 1, 384>}, {transform_indices = @transform_3, window_bounds = array<i64: 256, 384>}]} {
    %c0 = arith.constant 0 : index
    %c0_0 = arith.constant 0 : index
    %0 = vector.load %arg2[%c0, %c0_0] : memref<256x384xbf16, #tpu.memory_space<vmem>>, vector<256x384xbf16>
    %c0_1 = arith.constant 0 : index
    %c0_2 = arith.constant 0 : index
    %1 = vector.load %arg3[%c0_1, %c0_2] : memref<384x384xbf16, #tpu.memory_space<vmem>>, vector<384x384xbf16>
    %cst = arith.constant dense<0.000000e+00> : vector<256x384xf32>
    %2 = tpu.matmul %0, %1, %cst {dimension_numbers = #tpu.dot_dimension_numbers<[1], [0], [0], [1], [0, 0, 1, 1], [], []>} : vector<256x384xbf16>, vector<384x384xbf16>, vector<256x384xf32> -> vector<256x384xf32>
    %c0_3 = arith.constant 0 : index
    %c0_4 = arith.constant 0 : index
    %3 = vector.load %arg4[%c0_3, %c0_4] : memref<1x384xf32, #tpu.memory_space<vmem>>, vector<1x384xf32>
    %4 = vector.broadcast %3 : vector<1x384xf32> to vector<256x384xf32>
    %5 = arith.addf %2, %4 : vector<256x384xf32>
    %c0_5 = arith.constant 0 : index
    %c0_6 = arith.constant 0 : index
    %6 = vector.load %arg5[%c0_5, %c0_6] : memref<256x384xf32, #tpu.memory_space<vmem>>, vector<256x384xf32>
    tpu.vector_store %arg5[%c0_5, %c0_6], %5 {strides = array<i32>} : memref<256x384xf32, #tpu.memory_space<vmem>>, vector<256x384xf32>,
    return
  }
  func.func @transform_0(%arg0: i32, %arg1: i32) -> (i32, i32) {
    %c0_i32 = arith.constant 0 : i32
    %c0_i32_0 = arith.constant 0 : i32
    return %arg0, %c0_i32 : i32, i32
  }
  func.func @transform_1(%arg0: i32, %arg1: i32) -> (i32, i32) {
    %c0_i32 = arith.constant 0 : i32
    %c0_i32_0 = arith.constant 0 : i32
    return %c0_i32, %arg1 : i32, i32
  }
  func.func @transform_2(%arg0: i32, %arg1: i32) -> (i32, i32) {
    %c0_i32 = arith.constant 0 : i32
    %c0_i32_0 = arith.constant 0 : i32
    return %c0_i32, %arg1 : i32, i32
  }
  func.func @transform_3(%arg0: i32, %arg1: i32) -> (i32, i32) {
    %c0_i32 = arith.constant 0 : i32
    return %arg0, %arg1 : i32, i32
  }
}

module attributes {stable_mosaic.version = 11 : i64} {
  func.func @_attn_kernel(%arg0: i32, %arg1: i32, %arg2: i32, %arg3: i32, %arg4: memref<1x128x128xbf16, #tpu.memory_space<vmem>>, %arg5: memref<1x128x128xbf16, #tpu.memory_space<vmem>>, %arg6: memref<1x128x128xbf16, #tpu.memory_space<vmem>>, %arg7: memref<1x128x128xbf16, #tpu.memory_space<vmem>>, %arg8: memref<2x128x1xf32, #tpu.memory_space<vmem>>, %arg9: memref<2x128x1xf32, #tpu.memory_space<vmem>>, %arg10: memref<2x128x64xf32, #tpu.memory_space<vmem>>) attributes {dimension_semantics = [#tpu.dimension_semantics<parallel>, #tpu.dimension_semantics<parallel>, #tpu.dimension_semantics<parallel>, #tpu.dimension_semantics<arbitrary>], iteration_bounds = array<i64: 2, 3, 2, 2>, scalar_prefetch = 0 : i64, scratch_operands = 3 : i64, tpu.core_type = #tpu.core_type<tc>, window_params = [{transform_indices = @transform_0, window_bounds = array<i64: 1, 128, 128>}, {transform_indices = @transform_1, window_bounds = array<i64: 1, 128, 128>}, {transform_indices = @transform_2, window_bounds = array<i64: 1, 128, 128>}, {transform_indices = @transform_3, window_bounds = array<i64: 1, 128, 128>}]} {
    %c0_i32 = arith.constant 0 : i32
    %0 = arith.cmpi eq, %arg3, %c0_i32 : i32
    %1 = arith.extui %0 : i1 to i32
    %c0_i32_0 = arith.constant 0 : i32
    %2 = arith.cmpi ne, %1, %c0_i32_0 : i32
    scf.if %2 {
      %cst = arith.constant -1.000000e+30 : f32
      %12 = vector.broadcast %cst : f32 to vector<2x128x1xf32>
      %c0 = arith.constant 0 : index
      %c0_4 = arith.constant 0 : index
      %c0_5 = arith.constant 0 : index
      %13 = vector.load %arg8[%c0, %c0_4, %c0_5] : memref<2x128x1xf32, #tpu.memory_space<vmem>>, vector<2x128x1xf32>
      tpu.vector_store %arg8[%c0, %c0_4, %c0_5], %12 {strides = array<i32>} : memref<2x128x1xf32, #tpu.memory_space<vmem>>, vector<2x128x1xf32>,
      %cst_6 = arith.constant 0.000000e+00 : f32
      %14 = vector.broadcast %cst_6 : f32 to vector<2x128x1xf32>
      %c0_7 = arith.constant 0 : index
      %c0_8 = arith.constant 0 : index
      %c0_9 = arith.constant 0 : index
      %15 = vector.load %arg9[%c0_7, %c0_8, %c0_9] : memref<2x128x1xf32, #tpu.memory_space<vmem>>, vector<2x128x1xf32>
      tpu.vector_store %arg9[%c0_7, %c0_8, %c0_9], %14 {strides = array<i32>} : memref<2x128x1xf32, #tpu.memory_space<vmem>>, vector<2x128x1xf32>,
      %cst_10 = arith.constant 0.000000e+00 : f32
      %16 = vector.broadcast %cst_10 : f32 to vector<2x128x64xf32>
      %c0_11 = arith.constant 0 : index
      %c0_12 = arith.constant 0 : index
      %c0_13 = arith.constant 0 : index
      %17 = vector.load %arg10[%c0_11, %c0_12, %c0_13] : memref<2x128x64xf32, #tpu.memory_space<vmem>>, vector<2x128x64xf32>
      tpu.vector_store %arg10[%c0_11, %c0_12, %c0_13], %16 {strides = array<i32>} : memref<2x128x64xf32, #tpu.memory_space<vmem>>, vector<2x128x64xf32>,
    } else {
    }
    %3 = arith.cmpi slt, %arg3, %arg2 : i32
    %4 = arith.extui %3 : i1 to i32
    %c0_i32_1 = arith.constant 0 : i32
    %5 = arith.cmpi ne, %4, %c0_i32_1 : i32
    scf.if %5 {
      %c0 = arith.constant 0 : index
      %c0_4 = arith.constant 0 : index
      %c0_5 = arith.constant 0 : index
      %12 = vector.load %arg4[%c0, %c0_4, %c0_5] : memref<1x128x128xbf16, #tpu.memory_space<vmem>>, vector<1x128x128xbf16>
      %13 = vector.shape_cast %12 : vector<1x128x128xbf16> to vector<128x128xbf16>
      %c0_6 = arith.constant 0 : index
      %c0_7 = arith.constant 0 : index
      %c0_8 = arith.constant 0 : index
      %14 = vector.load %arg5[%c0_6, %c0_7, %c0_8] : memref<1x128x128xbf16, #tpu.memory_space<vmem>>, vector<1x128x128xbf16>
      %15 = vector.shape_cast %14 : vector<1x128x128xbf16> to vector<128x128xbf16>
      %c0_9 = arith.constant 0 : index
      %c0_10 = arith.constant 0 : index
      %c0_11 = arith.constant 0 : index
      %16 = vector.load %arg6[%c0_9, %c0_10, %c0_11] : memref<1x128x128xbf16, #tpu.memory_space<vmem>>, vector<1x128x128xbf16>
      %17 = vector.shape_cast %16 : vector<1x128x128xbf16> to vector<128x128xbf16>
      %18 = vector.extract_strided_slice %13 {offsets = [0, 0], sizes = [128, 64], strides = [1, 1]} : vector<128x128xbf16> to vector<128x64xbf16>
      %cst = arith.constant 1.250000e-01 : bf16
      %19 = vector.broadcast %cst : bf16 to vector<128x64xbf16>
      %20 = arith.mulf %18, %19 : vector<128x64xbf16>
      %21 = vector.extract_strided_slice %15 {offsets = [0, 0], sizes = [128, 64], strides = [1, 1]} : vector<128x128xbf16> to vector<128x64xbf16>
      %22 = vector.extract_strided_slice %17 {offsets = [0, 0], sizes = [128, 64], strides = [1, 1]} : vector<128x128xbf16> to vector<128x64xbf16>
      %23 = tpu.transpose %21, [1, 0] : vector<128x64xbf16> -> vector<64x128xbf16>
      %cst_12 = arith.constant dense<0.000000e+00> : vector<128x128xf32>
      %24 = tpu.matmul %20, %23, %cst_12 {dimension_numbers = #tpu.dot_dimension_numbers<[1], [0], [0], [1], [0, 0, 1, 1], [], []>} : vector<128x64xbf16>, vector<64x128xbf16>, vector<128x128xf32> -> vector<128x128xf32>
      %c0_13 = arith.constant 0 : index
      %c0_14 = arith.constant 0 : index
      %c0_15 = arith.constant 0 : index
      %25 = vector.load %arg8[%c0_13, %c0_14, %c0_15] : memref<2x128x1xf32, #tpu.memory_space<vmem>>, vector<1x128x1xf32>
      %26 = vector.shape_cast %25 : vector<1x128x1xf32> to vector<128x1xf32>
      %cst_16 = arith.constant dense<0xFF800000> : vector<128xf32>
      %27 = vector.multi_reduction <maximumf>, %24, %cst_16 [1] : vector<128x128xf32> to vector<128xf32>
      %28 = vector.shape_cast %27 : vector<128xf32> to vector<128x1xf32>
      %29 = arith.maximumf %26, %28 : vector<128x1xf32>
      %30 = arith.subf %26, %29 : vector<128x1xf32>
      %31 = math.exp %30 : vector<128x1xf32>
      %32 = vector.broadcast %29 : vector<128x1xf32> to vector<128x128xf32>
      %33 = arith.subf %24, %32 : vector<128x128xf32>
      %34 = math.exp %33 : vector<128x128xf32>
      %c0_17 = arith.constant 0 : index
      %c0_18 = arith.constant 0 : index
      %c0_19 = arith.constant 0 : index
      %35 = vector.load %arg9[%c0_17, %c0_18, %c0_19] : memref<2x128x1xf32, #tpu.memory_space<vmem>>, vector<1x128x1xf32>
      %36 = vector.shape_cast %35 : vector<1x128x1xf32> to vector<128x1xf32>
      %37 = arith.mulf %31, %36 : vector<128x1xf32>
      %cst_20 = arith.constant dense<0.000000e+00> : vector<128xf32>
      %38 = vector.multi_reduction <add>, %34, %cst_20 [1] : vector<128x128xf32> to vector<128xf32>
      %39 = vector.shape_cast %38 : vector<128xf32> to vector<128x1xf32>
      %40 = arith.addf %37, %39 : vector<128x1xf32>
      %c0_21 = arith.constant 0 : index
      %c0_22 = arith.constant 0 : index
      %c0_23 = arith.constant 0 : index
      %41 = vector.load %arg9[%c0_21, %c0_22, %c0_23] : memref<2x128x1xf32, #tpu.memory_space<vmem>>, vector<1x128x1xf32>
      %42 = vector.shape_cast %41 : vector<1x128x1xf32> to vector<128x1xf32>
      %43 = vector.shape_cast %40 : vector<128x1xf32> to vector<1x128x1xf32>
      tpu.vector_store %arg9[%c0_21, %c0_22, %c0_23], %43 {strides = array<i32>} : memref<2x128x1xf32, #tpu.memory_space<vmem>>, vector<1x128x1xf32>,
      %c0_24 = arith.constant 0 : index
      %c0_25 = arith.constant 0 : index
      %c0_26 = arith.constant 0 : index
      %44 = vector.load %arg10[%c0_24, %c0_25, %c0_26] : memref<2x128x64xf32, #tpu.memory_space<vmem>>, vector<1x128x64xf32>
      %45 = vector.shape_cast %44 : vector<1x128x64xf32> to vector<128x64xf32>
      %46 = vector.broadcast %31 : vector<128x1xf32> to vector<128x64xf32>
      %47 = arith.mulf %46, %45 : vector<128x64xf32>
      %48 = arith.truncf %34 : vector<128x128xf32> to vector<128x128xbf16>
      %cst_27 = arith.constant dense<0.000000e+00> : vector<128x64xf32>
      %49 = tpu.matmul %48, %22, %cst_27 {dimension_numbers = #tpu.dot_dimension_numbers<[1], [0], [0], [1], [0, 0, 1, 1], [], []>} : vector<128x128xbf16>, vector<128x64xbf16>, vector<128x64xf32> -> vector<128x64xf32>
      %50 = arith.addf %47, %49 : vector<128x64xf32>
      %c0_28 = arith.constant 0 : index
      %c0_29 = arith.constant 0 : index
      %c0_30 = arith.constant 0 : index
      %51 = vector.load %arg10[%c0_28, %c0_29, %c0_30] : memref<2x128x64xf32, #tpu.memory_space<vmem>>, vector<1x128x64xf32>
      %52 = vector.shape_cast %51 : vector<1x128x64xf32> to vector<128x64xf32>
      %53 = vector.shape_cast %50 : vector<128x64xf32> to vector<1x128x64xf32>
      tpu.vector_store %arg10[%c0_28, %c0_29, %c0_30], %53 {strides = array<i32>} : memref<2x128x64xf32, #tpu.memory_space<vmem>>, vector<1x128x64xf32>,
      %c0_31 = arith.constant 0 : index
      %c0_32 = arith.constant 0 : index
      %c0_33 = arith.constant 0 : index
      %54 = vector.load %arg8[%c0_31, %c0_32, %c0_33] : memref<2x128x1xf32, #tpu.memory_space<vmem>>, vector<1x128x1xf32>
      %55 = vector.shape_cast %54 : vector<1x128x1xf32> to vector<128x1xf32>
      %56 = vector.shape_cast %29 : vector<128x1xf32> to vector<1x128x1xf32>
      tpu.vector_store %arg8[%c0_31, %c0_32, %c0_33], %56 {strides = array<i32>} : memref<2x128x1xf32, #tpu.memory_space<vmem>>, vector<1x128x1xf32>,
      %57 = vector.extract_strided_slice %13 {offsets = [0, 64], sizes = [128, 64], strides = [1, 1]} : vector<128x128xbf16> to vector<128x64xbf16>
      %cst_34 = arith.constant 1.250000e-01 : bf16
      %58 = vector.broadcast %cst_34 : bf16 to vector<128x64xbf16>
      %59 = arith.mulf %57, %58 : vector<128x64xbf16>
      %60 = vector.extract_strided_slice %15 {offsets = [0, 64], sizes = [128, 64], strides = [1, 1]} : vector<128x128xbf16> to vector<128x64xbf16>
      %61 = vector.extract_strided_slice %17 {offsets = [0, 64], sizes = [128, 64], strides = [1, 1]} : vector<128x128xbf16> to vector<128x64xbf16>
      %62 = tpu.transpose %60, [1, 0] : vector<128x64xbf16> -> vector<64x128xbf16>
      %cst_35 = arith.constant dense<0.000000e+00> : vector<128x128xf32>
      %63 = tpu.matmul %59, %62, %cst_35 {dimension_numbers = #tpu.dot_dimension_numbers<[1], [0], [0], [1], [0, 0, 1, 1], [], []>} : vector<128x64xbf16>, vector<64x128xbf16>, vector<128x128xf32> -> vector<128x128xf32>
      %c1 = arith.constant 1 : index
      %c0_36 = arith.constant 0 : index
      %c0_37 = arith.constant 0 : index
      %64 = vector.load %arg8[%c1, %c0_36, %c0_37] : memref<2x128x1xf32, #tpu.memory_space<vmem>>, vector<1x128x1xf32>
      %65 = vector.shape_cast %64 : vector<1x128x1xf32> to vector<128x1xf32>
      %cst_38 = arith.constant dense<0xFF800000> : vector<128xf32>
      %66 = vector.multi_reduction <maximumf>, %63, %cst_38 [1] : vector<128x128xf32> to vector<128xf32>
      %67 = vector.shape_cast %66 : vector<128xf32> to vector<128x1xf32>
      %68 = arith.maximumf %65, %67 : vector<128x1xf32>
      %69 = arith.subf %65, %68 : vector<128x1xf32>
      %70 = math.exp %69 : vector<128x1xf32>
      %71 = vector.broadcast %68 : vector<128x1xf32> to vector<128x128xf32>
      %72 = arith.subf %63, %71 : vector<128x128xf32>
      %73 = math.exp %72 : vector<128x128xf32>
      %c1_39 = arith.constant 1 : index
      %c0_40 = arith.constant 0 : index
      %c0_41 = arith.constant 0 : index
      %74 = vector.load %arg9[%c1_39, %c0_40, %c0_41] : memref<2x128x1xf32, #tpu.memory_space<vmem>>, vector<1x128x1xf32>
      %75 = vector.shape_cast %74 : vector<1x128x1xf32> to vector<128x1xf32>
      %76 = arith.mulf %70, %75 : vector<128x1xf32>
      %cst_42 = arith.constant dense<0.000000e+00> : vector<128xf32>
      %77 = vector.multi_reduction <add>, %73, %cst_42 [1] : vector<128x128xf32> to vector<128xf32>
      %78 = vector.shape_cast %77 : vector<128xf32> to vector<128x1xf32>
      %79 = arith.addf %76, %78 : vector<128x1xf32>
      %c1_43 = arith.constant 1 : index
      %c0_44 = arith.constant 0 : index
      %c0_45 = arith.constant 0 : index
      %80 = vector.load %arg9[%c1_43, %c0_44, %c0_45] : memref<2x128x1xf32, #tpu.memory_space<vmem>>, vector<1x128x1xf32>
      %81 = vector.shape_cast %80 : vector<1x128x1xf32> to vector<128x1xf32>
      %82 = vector.shape_cast %79 : vector<128x1xf32> to vector<1x128x1xf32>
      tpu.vector_store %arg9[%c1_43, %c0_44, %c0_45], %82 {strides = array<i32>} : memref<2x128x1xf32, #tpu.memory_space<vmem>>, vector<1x128x1xf32>,
      %c1_46 = arith.constant 1 : index
      %c0_47 = arith.constant 0 : index
      %c0_48 = arith.constant 0 : index
      %83 = vector.load %arg10[%c1_46, %c0_47, %c0_48] : memref<2x128x64xf32, #tpu.memory_space<vmem>>, vector<1x128x64xf32>
      %84 = vector.shape_cast %83 : vector<1x128x64xf32> to vector<128x64xf32>
      %85 = vector.broadcast %70 : vector<128x1xf32> to vector<128x64xf32>
      %86 = arith.mulf %85, %84 : vector<128x64xf32>
      %87 = arith.truncf %73 : vector<128x128xf32> to vector<128x128xbf16>
      %cst_49 = arith.constant dense<0.000000e+00> : vector<128x64xf32>
      %88 = tpu.matmul %87, %61, %cst_49 {dimension_numbers = #tpu.dot_dimension_numbers<[1], [0], [0], [1], [0, 0, 1, 1], [], []>} : vector<128x128xbf16>, vector<128x64xbf16>, vector<128x64xf32> -> vector<128x64xf32>
      %89 = arith.addf %86, %88 : vector<128x64xf32>
      %c1_50 = arith.constant 1 : index
      %c0_51 = arith.constant 0 : index
      %c0_52 = arith.constant 0 : index
      %90 = vector.load %arg10[%c1_50, %c0_51, %c0_52] : memref<2x128x64xf32, #tpu.memory_space<vmem>>, vector<1x128x64xf32>
      %91 = vector.shape_cast %90 : vector<1x128x64xf32> to vector<128x64xf32>
      %92 = vector.shape_cast %89 : vector<128x64xf32> to vector<1x128x64xf32>
      tpu.vector_store %arg10[%c1_50, %c0_51, %c0_52], %92 {strides = array<i32>} : memref<2x128x64xf32, #tpu.memory_space<vmem>>, vector<1x128x64xf32>,
      %c1_53 = arith.constant 1 : index
      %c0_54 = arith.constant 0 : index
      %c0_55 = arith.constant 0 : index
      %93 = vector.load %arg8[%c1_53, %c0_54, %c0_55] : memref<2x128x1xf32, #tpu.memory_space<vmem>>, vector<1x128x1xf32>
      %94 = vector.shape_cast %93 : vector<1x128x1xf32> to vector<128x1xf32>
      %95 = vector.shape_cast %68 : vector<128x1xf32> to vector<1x128x1xf32>
      tpu.vector_store %arg8[%c1_53, %c0_54, %c0_55], %95 {strides = array<i32>} : memref<2x128x1xf32, #tpu.memory_space<vmem>>, vector<1x128x1xf32>,
    } else {
    }
    %6 = arith.cmpi eq, %arg3, %arg2 : i32
    %7 = arith.extui %6 : i1 to i32
    %c0_i32_2 = arith.constant 0 : i32
    %8 = arith.cmpi ne, %7, %c0_i32_2 : i32
    scf.if %8 {
      %c0 = arith.constant 0 : index
      %c0_4 = arith.constant 0 : index
      %c0_5 = arith.constant 0 : index
      %12 = vector.load %arg4[%c0, %c0_4, %c0_5] : memref<1x128x128xbf16, #tpu.memory_space<vmem>>, vector<1x128x128xbf16>
      %13 = vector.shape_cast %12 : vector<1x128x128xbf16> to vector<128x128xbf16>
      %c0_6 = arith.constant 0 : index
      %c0_7 = arith.constant 0 : index
      %c0_8 = arith.constant 0 : index
      %14 = vector.load %arg5[%c0_6, %c0_7, %c0_8] : memref<1x128x128xbf16, #tpu.memory_space<vmem>>, vector<1x128x128xbf16>
      %15 = vector.shape_cast %14 : vector<1x128x128xbf16> to vector<128x128xbf16>
      %c0_9 = arith.constant 0 : index
      %c0_10 = arith.constant 0 : index
      %c0_11 = arith.constant 0 : index
      %16 = vector.load %arg6[%c0_9, %c0_10, %c0_11] : memref<1x128x128xbf16, #tpu.memory_space<vmem>>, vector<1x128x128xbf16>
      %17 = vector.shape_cast %16 : vector<1x128x128xbf16> to vector<128x128xbf16>
      %18 = tpu.iota {dimensions = array<i32: 0>} : vector<128x128xi32>
      %19 = tpu.iota {dimensions = array<i32: 1>} : vector<128x128xi32>
      %20 = arith.cmpi sle, %19, %18 : vector<128x128xi32>
      %21 = vector.extract_strided_slice %13 {offsets = [0, 0], sizes = [128, 64], strides = [1, 1]} : vector<128x128xbf16> to vector<128x64xbf16>
      %cst = arith.constant 1.250000e-01 : bf16
      %22 = vector.broadcast %cst : bf16 to vector<128x64xbf16>
      %23 = arith.mulf %21, %22 : vector<128x64xbf16>
      %24 = vector.extract_strided_slice %15 {offsets = [0, 0], sizes = [128, 64], strides = [1, 1]} : vector<128x128xbf16> to vector<128x64xbf16>
      %25 = vector.extract_strided_slice %17 {offsets = [0, 0], sizes = [128, 64], strides = [1, 1]} : vector<128x128xbf16> to vector<128x64xbf16>
      %26 = tpu.transpose %24, [1, 0] : vector<128x64xbf16> -> vector<64x128xbf16>
      %cst_12 = arith.constant dense<0.000000e+00> : vector<128x128xf32>
      %27 = tpu.matmul %23, %26, %cst_12 {dimension_numbers = #tpu.dot_dimension_numbers<[1], [0], [0], [1], [0, 0, 1, 1], [], []>} : vector<128x64xbf16>, vector<64x128xbf16>, vector<128x128xf32> -> vector<128x128xf32>
      %cst_13 = arith.constant -1.000000e+30 : f32
      %28 = vector.broadcast %cst_13 : f32 to vector<128x128xf32>
      %29 = arith.select %20, %27, %28 : vector<128x128xi1>, vector<128x128xf32>
      %c0_14 = arith.constant 0 : index
      %c0_15 = arith.constant 0 : index
      %c0_16 = arith.constant 0 : index
      %30 = vector.load %arg8[%c0_14, %c0_15, %c0_16] : memref<2x128x1xf32, #tpu.memory_space<vmem>>, vector<1x128x1xf32>
      %31 = vector.shape_cast %30 : vector<1x128x1xf32> to vector<128x1xf32>
      %cst_17 = arith.constant dense<0xFF800000> : vector<128xf32>
      %32 = vector.multi_reduction <maximumf>, %29, %cst_17 [1] : vector<128x128xf32> to vector<128xf32>
      %33 = vector.shape_cast %32 : vector<128xf32> to vector<128x1xf32>
      %34 = arith.maximumf %31, %33 : vector<128x1xf32>
      %35 = arith.subf %31, %34 : vector<128x1xf32>
      %36 = math.exp %35 : vector<128x1xf32>
      %37 = vector.broadcast %34 : vector<128x1xf32> to vector<128x128xf32>
      %38 = arith.subf %29, %37 : vector<128x128xf32>
      %39 = math.exp %38 : vector<128x128xf32>
      %c0_18 = arith.constant 0 : index
      %c0_19 = arith.constant 0 : index
      %c0_20 = arith.constant 0 : index
      %40 = vector.load %arg9[%c0_18, %c0_19, %c0_20] : memref<2x128x1xf32, #tpu.memory_space<vmem>>, vector<1x128x1xf32>
      %41 = vector.shape_cast %40 : vector<1x128x1xf32> to vector<128x1xf32>
      %42 = arith.mulf %36, %41 : vector<128x1xf32>
      %cst_21 = arith.constant dense<0.000000e+00> : vector<128xf32>
      %43 = vector.multi_reduction <add>, %39, %cst_21 [1] : vector<128x128xf32> to vector<128xf32>
      %44 = vector.shape_cast %43 : vector<128xf32> to vector<128x1xf32>
      %45 = arith.addf %42, %44 : vector<128x1xf32>
      %c0_22 = arith.constant 0 : index
      %c0_23 = arith.constant 0 : index
      %c0_24 = arith.constant 0 : index
      %46 = vector.load %arg9[%c0_22, %c0_23, %c0_24] : memref<2x128x1xf32, #tpu.memory_space<vmem>>, vector<1x128x1xf32>
      %47 = vector.shape_cast %46 : vector<1x128x1xf32> to vector<128x1xf32>
      %48 = vector.shape_cast %45 : vector<128x1xf32> to vector<1x128x1xf32>
      tpu.vector_store %arg9[%c0_22, %c0_23, %c0_24], %48 {strides = array<i32>} : memref<2x128x1xf32, #tpu.memory_space<vmem>>, vector<1x128x1xf32>,
      %c0_25 = arith.constant 0 : index
      %c0_26 = arith.constant 0 : index
      %c0_27 = arith.constant 0 : index
      %49 = vector.load %arg10[%c0_25, %c0_26, %c0_27] : memref<2x128x64xf32, #tpu.memory_space<vmem>>, vector<1x128x64xf32>
      %50 = vector.shape_cast %49 : vector<1x128x64xf32> to vector<128x64xf32>
      %51 = vector.broadcast %36 : vector<128x1xf32> to vector<128x64xf32>
      %52 = arith.mulf %51, %50 : vector<128x64xf32>
      %53 = arith.truncf %39 : vector<128x128xf32> to vector<128x128xbf16>
      %cst_28 = arith.constant dense<0.000000e+00> : vector<128x64xf32>
      %54 = tpu.matmul %53, %25, %cst_28 {dimension_numbers = #tpu.dot_dimension_numbers<[1], [0], [0], [1], [0, 0, 1, 1], [], []>} : vector<128x128xbf16>, vector<128x64xbf16>, vector<128x64xf32> -> vector<128x64xf32>
      %55 = arith.addf %52, %54 : vector<128x64xf32>
      %c0_29 = arith.constant 0 : index
      %c0_30 = arith.constant 0 : index
      %c0_31 = arith.constant 0 : index
      %56 = vector.load %arg10[%c0_29, %c0_30, %c0_31] : memref<2x128x64xf32, #tpu.memory_space<vmem>>, vector<1x128x64xf32>
      %57 = vector.shape_cast %56 : vector<1x128x64xf32> to vector<128x64xf32>
      %58 = vector.shape_cast %55 : vector<128x64xf32> to vector<1x128x64xf32>
      tpu.vector_store %arg10[%c0_29, %c0_30, %c0_31], %58 {strides = array<i32>} : memref<2x128x64xf32, #tpu.memory_space<vmem>>, vector<1x128x64xf32>,
      %c0_32 = arith.constant 0 : index
      %c0_33 = arith.constant 0 : index
      %c0_34 = arith.constant 0 : index
      %59 = vector.load %arg8[%c0_32, %c0_33, %c0_34] : memref<2x128x1xf32, #tpu.memory_space<vmem>>, vector<1x128x1xf32>
      %60 = vector.shape_cast %59 : vector<1x128x1xf32> to vector<128x1xf32>
      %61 = vector.shape_cast %34 : vector<128x1xf32> to vector<1x128x1xf32>
      tpu.vector_store %arg8[%c0_32, %c0_33, %c0_34], %61 {strides = array<i32>} : memref<2x128x1xf32, #tpu.memory_space<vmem>>, vector<1x128x1xf32>,
      %62 = vector.extract_strided_slice %13 {offsets = [0, 64], sizes = [128, 64], strides = [1, 1]} : vector<128x128xbf16> to vector<128x64xbf16>
      %cst_35 = arith.constant 1.250000e-01 : bf16
      %63 = vector.broadcast %cst_35 : bf16 to vector<128x64xbf16>
      %64 = arith.mulf %62, %63 : vector<128x64xbf16>
      %65 = vector.extract_strided_slice %15 {offsets = [0, 64], sizes = [128, 64], strides = [1, 1]} : vector<128x128xbf16> to vector<128x64xbf16>
      %66 = vector.extract_strided_slice %17 {offsets = [0, 64], sizes = [128, 64], strides = [1, 1]} : vector<128x128xbf16> to vector<128x64xbf16>
      %67 = tpu.transpose %65, [1, 0] : vector<128x64xbf16> -> vector<64x128xbf16>
      %cst_36 = arith.constant dense<0.000000e+00> : vector<128x128xf32>
      %68 = tpu.matmul %64, %67, %cst_36 {dimension_numbers = #tpu.dot_dimension_numbers<[1], [0], [0], [1], [0, 0, 1, 1], [], []>} : vector<128x64xbf16>, vector<64x128xbf16>, vector<128x128xf32> -> vector<128x128xf32>
      %cst_37 = arith.constant -1.000000e+30 : f32
      %69 = vector.broadcast %cst_37 : f32 to vector<128x128xf32>
      %70 = arith.select %20, %68, %69 : vector<128x128xi1>, vector<128x128xf32>
      %c1 = arith.constant 1 : index
      %c0_38 = arith.constant 0 : index
      %c0_39 = arith.constant 0 : index
      %71 = vector.load %arg8[%c1, %c0_38, %c0_39] : memref<2x128x1xf32, #tpu.memory_space<vmem>>, vector<1x128x1xf32>
      %72 = vector.shape_cast %71 : vector<1x128x1xf32> to vector<128x1xf32>
      %cst_40 = arith.constant dense<0xFF800000> : vector<128xf32>
      %73 = vector.multi_reduction <maximumf>, %70, %cst_40 [1] : vector<128x128xf32> to vector<128xf32>
      %74 = vector.shape_cast %73 : vector<128xf32> to vector<128x1xf32>
      %75 = arith.maximumf %72, %74 : vector<128x1xf32>
      %76 = arith.subf %72, %75 : vector<128x1xf32>
      %77 = math.exp %76 : vector<128x1xf32>
      %78 = vector.broadcast %75 : vector<128x1xf32> to vector<128x128xf32>
      %79 = arith.subf %70, %78 : vector<128x128xf32>
      %80 = math.exp %79 : vector<128x128xf32>
      %c1_41 = arith.constant 1 : index
      %c0_42 = arith.constant 0 : index
      %c0_43 = arith.constant 0 : index
      %81 = vector.load %arg9[%c1_41, %c0_42, %c0_43] : memref<2x128x1xf32, #tpu.memory_space<vmem>>, vector<1x128x1xf32>
      %82 = vector.shape_cast %81 : vector<1x128x1xf32> to vector<128x1xf32>
      %83 = arith.mulf %77, %82 : vector<128x1xf32>
      %cst_44 = arith.constant dense<0.000000e+00> : vector<128xf32>
      %84 = vector.multi_reduction <add>, %80, %cst_44 [1] : vector<128x128xf32> to vector<128xf32>
      %85 = vector.shape_cast %84 : vector<128xf32> to vector<128x1xf32>
      %86 = arith.addf %83, %85 : vector<128x1xf32>
      %c1_45 = arith.constant 1 : index
      %c0_46 = arith.constant 0 : index
      %c0_47 = arith.constant 0 : index
      %87 = vector.load %arg9[%c1_45, %c0_46, %c0_47] : memref<2x128x1xf32, #tpu.memory_space<vmem>>, vector<1x128x1xf32>
      %88 = vector.shape_cast %87 : vector<1x128x1xf32> to vector<128x1xf32>
      %89 = vector.shape_cast %86 : vector<128x1xf32> to vector<1x128x1xf32>
      tpu.vector_store %arg9[%c1_45, %c0_46, %c0_47], %89 {strides = array<i32>} : memref<2x128x1xf32, #tpu.memory_space<vmem>>, vector<1x128x1xf32>,
      %c1_48 = arith.constant 1 : index
      %c0_49 = arith.constant 0 : index
      %c0_50 = arith.constant 0 : index
      %90 = vector.load %arg10[%c1_48, %c0_49, %c0_50] : memref<2x128x64xf32, #tpu.memory_space<vmem>>, vector<1x128x64xf32>
      %91 = vector.shape_cast %90 : vector<1x128x64xf32> to vector<128x64xf32>
      %92 = vector.broadcast %77 : vector<128x1xf32> to vector<128x64xf32>
      %93 = arith.mulf %92, %91 : vector<128x64xf32>
      %94 = arith.truncf %80 : vector<128x128xf32> to vector<128x128xbf16>
      %cst_51 = arith.constant dense<0.000000e+00> : vector<128x64xf32>
      %95 = tpu.matmul %94, %66, %cst_51 {dimension_numbers = #tpu.dot_dimension_numbers<[1], [0], [0], [1], [0, 0, 1, 1], [], []>} : vector<128x128xbf16>, vector<128x64xbf16>, vector<128x64xf32> -> vector<128x64xf32>
      %96 = arith.addf %93, %95 : vector<128x64xf32>
      %c1_52 = arith.constant 1 : index
      %c0_53 = arith.constant 0 : index
      %c0_54 = arith.constant 0 : index
      %97 = vector.load %arg10[%c1_52, %c0_53, %c0_54] : memref<2x128x64xf32, #tpu.memory_space<vmem>>, vector<1x128x64xf32>
      %98 = vector.shape_cast %97 : vector<1x128x64xf32> to vector<128x64xf32>
      %99 = vector.shape_cast %96 : vector<128x64xf32> to vector<1x128x64xf32>
      tpu.vector_store %arg10[%c1_52, %c0_53, %c0_54], %99 {strides = array<i32>} : memref<2x128x64xf32, #tpu.memory_space<vmem>>, vector<1x128x64xf32>,
      %c1_55 = arith.constant 1 : index
      %c0_56 = arith.constant 0 : index
      %c0_57 = arith.constant 0 : index
      %100 = vector.load %arg8[%c1_55, %c0_56, %c0_57] : memref<2x128x1xf32, #tpu.memory_space<vmem>>, vector<1x128x1xf32>
      %101 = vector.shape_cast %100 : vector<1x128x1xf32> to vector<128x1xf32>
      %102 = vector.shape_cast %75 : vector<128x1xf32> to vector<1x128x1xf32>
      tpu.vector_store %arg8[%c1_55, %c0_56, %c0_57], %102 {strides = array<i32>} : memref<2x128x1xf32, #tpu.memory_space<vmem>>, vector<1x128x1xf32>,
    } else {
    }
    %c1_i32 = arith.constant 1 : i32
    %9 = arith.cmpi eq, %arg3, %c1_i32 : i32
    %10 = arith.extui %9 : i1 to i32
    %c0_i32_3 = arith.constant 0 : i32
    %11 = arith.cmpi ne, %10, %c0_i32_3 : i32
    scf.if %11 {
      %c0 = arith.constant 0 : index
      %c0_4 = arith.constant 0 : index
      %c0_5 = arith.constant 0 : index
      %12 = vector.load %arg10[%c0, %c0_4, %c0_5] : memref<2x128x64xf32, #tpu.memory_space<vmem>>, vector<1x128x64xf32>
      %13 = vector.shape_cast %12 : vector<1x128x64xf32> to vector<128x64xf32>
      %c0_6 = arith.constant 0 : index
      %c0_7 = arith.constant 0 : index
      %c0_8 = arith.constant 0 : index
      %14 = vector.load %arg9[%c0_6, %c0_7, %c0_8] : memref<2x128x1xf32, #tpu.memory_space<vmem>>, vector<1x128x1xf32>
      %15 = vector.shape_cast %14 : vector<1x128x1xf32> to vector<128x1xf32>
      %16 = tpu.reciprocal %15 {approx = true} : vector<128x1xf32> -> vector<128x1xf32>
      %17 = vector.broadcast %16 : vector<128x1xf32> to vector<128x64xf32>
      %18 = arith.mulf %13, %17 : vector<128x64xf32>
      %c1 = arith.constant 1 : index
      %c0_9 = arith.constant 0 : index
      %c0_10 = arith.constant 0 : index
      %19 = vector.load %arg10[%c1, %c0_9, %c0_10] : memref<2x128x64xf32, #tpu.memory_space<vmem>>, vector<1x128x64xf32>
      %20 = vector.shape_cast %19 : vector<1x128x64xf32> to vector<128x64xf32>
      %c1_11 = arith.constant 1 : index
      %c0_12 = arith.constant 0 : index
      %c0_13 = arith.constant 0 : index
      %21 = vector.load %arg9[%c1_11, %c0_12, %c0_13] : memref<2x128x1xf32, #tpu.memory_space<vmem>>, vector<1x128x1xf32>
      %22 = vector.shape_cast %21 : vector<1x128x1xf32> to vector<128x1xf32>
      %23 = tpu.reciprocal %22 {approx = true} : vector<128x1xf32> -> vector<128x1xf32>
      %24 = vector.broadcast %23 : vector<128x1xf32> to vector<128x64xf32>
      %25 = arith.mulf %20, %24 : vector<128x64xf32>
      %26 = tpu.concatenate %18, %25 in 1 : vector<128x64xf32>, vector<128x64xf32> -> vector<128x128xf32>
      %27 = arith.truncf %26 : vector<128x128xf32> to vector<128x128xbf16>
      %c0_14 = arith.constant 0 : index
      %c0_15 = arith.constant 0 : index
      %c0_16 = arith.constant 0 : index
      %28 = vector.load %arg7[%c0_14, %c0_15, %c0_16] : memref<1x128x128xbf16, #tpu.memory_space<vmem>>, vector<1x128x128xbf16>
      %29 = vector.shape_cast %28 : vector<1x128x128xbf16> to vector<128x128xbf16>
      %30 = vector.shape_cast %27 : vector<128x128xbf16> to vector<1x128x128xbf16>
      tpu.vector_store %arg7[%c0_14, %c0_15, %c0_16], %30 {strides = array<i32>} : memref<1x128x128xbf16, #tpu.memory_space<vmem>>, vector<1x128x128xbf16>,
    } else {
    }
    return
  }
  func.func @transform_0(%arg0: i32, %arg1: i32, %arg2: i32, %arg3: i32) -> (i32, i32, i32) {
    %c0_i32 = arith.constant 0 : i32
    return %arg0, %arg2, %arg1 : i32, i32, i32
  }
  func.func @transform_1(%arg0: i32, %arg1: i32, %arg2: i32, %arg3: i32) -> (i32, i32, i32) {
    %c3_i32 = arith.constant 3 : i32
    %0 = arith.addi %arg1, %c3_i32 : i32
    %c0_i32 = arith.constant 0 : i32
    return %arg0, %arg3, %0 : i32, i32, i32
  }
  func.func @transform_2(%arg0: i32, %arg1: i32, %arg2: i32, %arg3: i32) -> (i32, i32, i32) {
    %c6_i32 = arith.constant 6 : i32
    %0 = arith.addi %arg1, %c6_i32 : i32
    %c0_i32 = arith.constant 0 : i32
    return %arg0, %arg3, %0 : i32, i32, i32
  }
  func.func @transform_3(%arg0: i32, %arg1: i32, %arg2: i32, %arg3: i32) -> (i32, i32, i32) {
    %c0_i32 = arith.constant 0 : i32
    return %arg0, %arg2, %arg1 : i32, i32, i32
  }
}

</mosaic_0001>

<llo_original>
// kernel: multi_head_attention.3
$region0: #{multi_head_attention.3}
  #allocation0 [shape = 'u32[]', space=smem, size = 0x4, offset = 0x4, fixed_abs, tag = 'smem constant byte address 0x4 - core index']
  #allocation1 [shape = 'u32[144,128]{1,0:T(1,128)}', space=vmem, size = 0x12000, scoped, tag = 'internal scratch']
  %s0 = inlined_call_operand.vmem [shape: bf16[512,384], index: 0, kind: input, shape index: {}]
  %s1 = inlined_call_operand.vmem [shape: bf16[384,1152], index: 1, kind: input, shape index: {}]
  %s2 = inlined_call_operand.vmem [shape: bf16[512,1152], index: 2, kind: output, shape index: {}]
  %s3 = sld [smem:[#allocation0]]
  $region89: #{multi_head_attention.3} parent=0
    _
  %s5 = ssub.s32 1, %s3
  %s6 = scalar_select 0, %s5, %s3
  $region1: #{multi_head_attention.3} parent=0
    #allocation2 [shape = 'u8[589824]{0}', space=vmem, size = 0x90000, scoped, tag = 'input window, operand 1']
    #allocation3 [shape = 'u8[393216]{0}', space=vmem, size = 0x60000, scoped, tag = 'output window, operand 0']
    loop: start=0, step=1, limit=8
    $region2: #{multi_head_attention.3} parent=1 // loop_pre_header
      _
    $region3: #{multi_head_attention.3} parent=1 // loop_header
      %s8 = sphi 0, %s12
      %p9 = scmp.ge.s32.totalorder %s8, 8
      %s15 = sphi 0, %s27
      %s16 = sphi 0, %s23
      %s17 = sphi 0, %s15
      %s18 = sphi 0, %s16
      %s19 = sphi 0, %s17
      %s20 = sphi 0, %s18
      %s30 = sphi 0, %s32
      %s33 = sphi 0, %s30
      %s34 = sphi 0, %s33
      %s50 = sphi 0, %s34
      %s56 = sphi 0, %s58
      %s59 = sphi 0, %s56
      %s60 = sphi 0, %s59
      %s76 = sphi 0, %s60
      %s84 = sphi 0, %s86
      %s87 = sphi 0, %s84
      %s88 = sphi 0, %s87
      %s104 = sphi 0, %s88
    $region4: #{multi_head_attention.3} parent=1 // loop_header_branch
      %11 = sbr.rel (%p9) target = $region8
    $region5: #{multi_head_attention.3} parent=1 // loop_body
      %s13 = ssub.s32 %s8, 1
      %s14 = ssub.s32 %s8, 2
      %s21 = sadd.s32 1, %s16
      %p22 = scmp.ge.s32.totalorder %s21, 3
      %s23 = scalar_select %p22, 0, %s21
      %s24 = sadd.s32 1, %s15
      %s25 = scalar_select %p22, %s24, %s15
      %p26 = scmp.ge.s32.totalorder %s25, 2
      %s27 = scalar_select %p26, 0, %s25
      %s28 = ssub.s32 %s15, %s27
      %p29 = scmp.eq.s32.totalorder %s28, 0
      %s31 = sadd.s32 %s30, 1
      %s32 = scalar_select %p29, %s30, %s31
      %p35 = pneg %p29
      %p36 = scmp.eq.s32.totalorder %s8, 5
      %p37 = por %p35, %p36
      %p38 = scmp.ne.s32.totalorder %s30, %s33
      %p39 = scmp.eq.s32.totalorder %s8, 0
      %p40 = por %p38, %p39
      %p41 = scmp.ne.s32.totalorder %s30, %s33
      %p42 = scmp.eq.s32.totalorder %s13, 5
      %p43 = por %p41, %p42
      %p44 = scmp.ne.s32.totalorder %s33, %s34
      %p45 = scmp.eq.s32.totalorder %s13, 0
      %p46 = por %p44, %p45
      %p47 = scmp.ne.s32.totalorder %s33, %s34
      %p48 = scmp.eq.s32.totalorder %s14, 5
      %p49 = por %p47, %p48
      %p51 = scmp.ne.s32.totalorder %s34, %s50
      %p52 = scmp.eq.s32.totalorder %s14, 0
      %p53 = por %p51, %p52
      %s54 = ssub.s32 %s16, %s23
      %p55 = scmp.eq.s32.totalorder %s54, 0
      %s57 = sadd.s32 %s56, 1
      %s58 = scalar_select %p55, %s56, %s57
      %p61 = pneg %p55
      %p62 = scmp.eq.s32.totalorder %s8, 5
      %p63 = por %p61, %p62
      %p64 = scmp.ne.s32.totalorder %s56, %s59
      %p65 = scmp.eq.s32.totalorder %s8, 0
      %p66 = por %p64, %p65
      %p67 = scmp.ne.s32.totalorder %s56, %s59
      %p68 = scmp.eq.s32.totalorder %s13, 5
      %p69 = por %p67, %p68
      %p70 = scmp.ne.s32.totalorder %s59, %s60
      %p71 = scmp.eq.s32.totalorder %s13, 0
      %p72 = por %p70, %p71
      %p73 = scmp.ne.s32.totalorder %s59, %s60
      %p74 = scmp.eq.s32.totalorder %s14, 5
      %p75 = por %p73, %p74
      %p77 = scmp.ne.s32.totalorder %s60, %s76
      %p78 = scmp.eq.s32.totalorder %s14, 0
      %p79 = por %p77, %p78
      %s80 = ssub.s32 %s15, %s27
      %s81 = ssub.s32 %s16, %s23
      %s82 = sor.u32 %s80, %s81
      %p83 = scmp.eq.s32.totalorder %s82, 0
      %s85 = sadd.s32 %s84, 1
      %s86 = scalar_select %p83, %s84, %s85
      %p89 = pneg %p83
      %p90 = scmp.eq.s32.totalorder %s8, 5
      %p91 = por %p89, %p90
      %p92 = scmp.ne.s32.totalorder %s84, %s87
      %p93 = scmp.eq.s32.totalorder %s8, 0
      %p94 = por %p92, %p93
      %p95 = scmp.ne.s32.totalorder %s84, %s87
      %p96 = scmp.eq.s32.totalorder %s13, 5
      %p97 = por %p95, %p96
      %p98 = scmp.ne.s32.totalorder %s87, %s88
      %p99 = scmp.eq.s32.totalorder %s13, 0
      %p100 = por %p98, %p99
      %p101 = scmp.ne.s32.totalorder %s87, %s88
      %p102 = scmp.eq.s32.totalorder %s14, 5
      %p103 = por %p101, %p102
      %p105 = scmp.ne.s32.totalorder %s88, %s104
      %p106 = scmp.eq.s32.totalorder %s14, 0
      %p107 = por %p105, %p106
      %p108 = scmp.le.s32.totalorder 1, %s8
      %p109 = scmp.lt.s32.totalorder %s8, 7
      %p110 = pnand %p108, %p109
      %p111 = pneg %p110
      // Predicated region
      $region9: #{multi_head_attention.3} parent=5 // pred_check
        _
      $region10: #{multi_head_attention.3} parent=5 // pred_check_branch
        %113 = sbr.rel (%p110) target = $region12
      $region11: #{multi_head_attention.3} parent=5 // pred_region
        %s114 = ssub.s32 %s8, 1
      $region12: #{multi_head_attention.3} parent=5 // pred_fallthru
        _
      %p115 = scmp.lt.s32.totalorder %s8, 6
      // Predicated region
      $region13: #{multi_head_attention.3} parent=5 // pred_check
        %p116 = pneg %p115
      $region14: #{multi_head_attention.3} parent=5 // pred_check_branch
        %118 = sbr.rel (%p116) target = $region16
      $region15: #{multi_head_attention.3} parent=5 // pred_region
        // Predicated region
        $region17: #{multi_head_attention.3} parent=15 // pred_check
          %p119 = pneg %p40
        $region18: #{multi_head_attention.3} parent=15 // pred_check_branch
          %121 = sbr.rel (%p119) target = $region20
        $region19: #{multi_head_attention.3} parent=15 // pred_region
          %s122 = smul.u32 32, %s15
          %p123 = scmp.lt.s32.totalorder %s122, 63
          %s124 = scalar_select %p123, %s122, 63
          %s125 = smul.addr %s124, 3
          %s126 = smul.addr %s125, 4
          %s127 = scalar_lea.vmem %s0, %s126
          %s128 = smul.u32 32, %s15
        $region20: #{multi_head_attention.3} parent=15 // pred_fallthru
          _
        // Predicated region
        $region21: #{multi_head_attention.3} parent=15 // pred_check
          %p129 = pneg %p66
        $region22: #{multi_head_attention.3} parent=15 // pred_check_branch
          %131 = sbr.rel (%p129) target = $region24
        $region23: #{multi_head_attention.3} parent=15 // pred_region
          %s132 = sand.u32 %s56, 1
          %s133 = sand.u32 %s56, 1
          %s134 = smul.addr %s133, 576
          %s135 = scalar_lea.vmem [#allocation2], %s134
          %s136 = smul.u32 3, %s16
          %s137 = smul.addr %s136, 4
          %s138 = scalar_lea.vmem %s1, %s137
          // Predicated region
          $region25: #{multi_head_attention.3} parent=23 // pred_check
            _
          $region26: #{multi_head_attention.3} parent=23 // pred_check_branch
            %140 = sbr.rel (0) target = $region28
          $region27: #{multi_head_attention.3} parent=23 // pred_region
            // Predicated region
            $region29: #{multi_head_attention.3} parent=27 // pred_check
              _
            $region30: #{multi_head_attention.3} parent=27 // pred_check_branch
              %142 = sbr.rel (0) target = $region32
            $region31: #{multi_head_attention.3} parent=27 // pred_region
              %s143 = scalar_lea.vmem %s138, 8
              %s144 = scalar_lea.vmem %s135, 8 [#allocation2]
              loop: start=0, step=1, limit=1
              $region33: #{multi_head_attention.3} parent=31 // loop_pre_header
                _
              $region34: #{multi_head_attention.3} parent=31 // loop_header
                %s146 = sphi 0, %s150
                %p147 = scmp.ge.s32.totalorder %s146, 1
                %s151 = sphi %s138, %s138
                %s152 = sphi %s135, %s135
              $region35: #{multi_head_attention.3} parent=31 // loop_header_branch
                %149 = sbr.rel (%p147) target = $region39
              $region36: #{multi_head_attention.3} parent=31 // loop_body
                %v153 = vld [vmem:[%s151] sm:$0xff]
                %154 = vst [vmem:[%s152] sm:$0xff] %v153
                %v155 = vld [vmem:[%s151 + $0x24] sm:$0xff]
                %156 = vst [vmem:[%s152 + $0xc] sm:$0xff] %v155
                %v157 = vld [vmem:[%s151 + $0x48] sm:$0xff]
                %158 = vst [vmem:[%s152 + $0x18] sm:$0xff] %v157
                %v159 = vld [vmem:[%s151 + $0x6c] sm:$0xff]
                %160 = vst [vmem:[%s152 + $0x24] sm:$0xff] %v159
                %v161 = vld [vmem:[%s151 + $0x90] sm:$0xff]
                %162 = vst [vmem:[%s152 + $0x30] sm:$0xff] %v161
                %v163 = vld [vmem:[%s151 + $0xb4] sm:$0xff]
                %164 = vst [vmem:[%s152 + $0x3c] sm:$0xff] %v163
                %v165 = vld [vmem:[%s151 + $0xd8] sm:$0xff]
                %166 = vst [vmem:[%s152 + $0x48] sm:$0xff] %v165
                %v167 = vld [vmem:[%s151 + $0xfc] sm:$0xff]
                %168 = vst [vmem:[%s152 + $0x54] sm:$0xff] %v167
                %v169 = vld [vmem:[%s151 + $0x120] sm:$0xff]
                %170 = vst [vmem:[%s152 + $0x60] sm:$0xff] %v169
                %v171 = vld [vmem:[%s151 + $0x144] sm:$0xff]
                %172 = vst [vmem:[%s152 + $0x6c] sm:$0xff] %v171
                %v173 = vld [vmem:[%s151 + $0x168] sm:$0xff]
                %174 = vst [vmem:[%s152 + $0x78] sm:$0xff] %v173
                %v175 = vld [vmem:[%s151 + $0x18c] sm:$0xff]
                %176 = vst [vmem:[%s152 + $0x84] sm:$0xff] %v175
                %v177 = vld [vmem:[%s151 + $0x1b0] sm:$0xff]
                %178 = vst [vmem:[%s152 + $0x90] sm:$0xff] %v177
                %v179 = vld [vmem:[%s151 + $0x1d4] sm:$0xff]
                %180 = vst [vmem:[%s152 + $0x9c] sm:$0xff] %v179
                %v181 = vld [vmem:[%s151 + $0x1f8] sm:$0xff]
                %182 = vst [vmem:[%s152 + $0xa8] sm:$0xff] %v181
                %v183 = vld [vmem:[%s151 + $0x21c] sm:$0xff]
                %184 = vst [vmem:[%s152 + $0xb4] sm:$0xff] %v183
                %v185 = vld [vmem:[%s151 + $0x240] sm:$0xff]
                %186 = vst [vmem:[%s152 + $0xc0] sm:$0xff] %v185
                %v187 = vld [vmem:[%s151 + $0x264] sm:$0xff]
                %188 = vst [vmem:[%s152 + $0xcc] sm:$0xff] %v187
                %v189 = vld [vmem:[%s151 + $0x288] sm:$0xff]
                %190 = vst [vmem:[%s152 + $0xd8] sm:$0xff] %v189
                %v191 = vld [vmem:[%s151 + $0x2ac] sm:$0xff]
                %192 = vst [vmem:[%s152 + $0xe4] sm:$0xff] %v191
                %v193 = vld [vmem:[%s151 + $0x2d0] sm:$0xff]
                %194 = vst [vmem:[%s152 + $0xf0] sm:$0xff] %v193
                %v195 = vld [vmem:[%s151 + $0x2f4] sm:$0xff]
                %196 = vst [vmem:[%s152 + $0xfc] sm:$0xff] %v195
                %v197 = vld [vmem:[%s151 + $0x318] sm:$0xff]
                %198 = vst [vmem:[%s152 + $0x108] sm:$0xff] %v197
                %v199 = vld [vmem:[%s151 + $0x33c] sm:$0xff]
                %200 = vst [vmem:[%s152 + $0x114] sm:$0xff] %v199
                %v201 = vld [vmem:[%s151 + $0x360] sm:$0xff]
                %202 = vst [vmem:[%s152 + $0x120] sm:$0xff] %v201
                %v203 = vld [vmem:[%s151 + $0x384] sm:$0xff]
                %204 = vst [vmem:[%s152 + $0x12c] sm:$0xff] %v203
                %v205 = vld [vmem:[%s151 + $0x3a8] sm:$0xff]
                %206 = vst [vmem:[%s152 + $0x138] sm:$0xff] %v205
                %v207 = vld [vmem:[%s151 + $0x3cc] sm:$0xff]
                %208 = vst [vmem:[%s152 + $0x144] sm:$0xff] %v207
                %v209 = vld [vmem:[%s151 + $0x3f0] sm:$0xff]
                %210 = vst [vmem:[%s152 + $0x150] sm:$0xff] %v209
                %v211 = vld [vmem:[%s151 + $0x414] sm:$0xff]
                %212 = vst [vmem:[%s152 + $0x15c] sm:$0xff] %v211
                %v213 = vld [vmem:[%s151 + $0x438] sm:$0xff]
                %214 = vst [vmem:[%s152 + $0x168] sm:$0xff] %v213
                %v215 = vld [vmem:[%s151 + $0x45c] sm:$0xff]
                %216 = vst [vmem:[%s152 + $0x174] sm:$0xff] %v215
                %v217 = vld [vmem:[%s151 + $0x480] sm:$0xff]
                %218 = vst [vmem:[%s152 + $0x180] sm:$0xff] %v217
                %v219 = vld [vmem:[%s151 + $0x4a4] sm:$0xff]
                %220 = vst [vmem:[%s152 + $0x18c] sm:$0xff] %v219
                %v221 = vld [vmem:[%s151 + $0x4c8] sm:$0xff]
                %222 = vst [vmem:[%s152 + $0x198] sm:$0xff] %v221
                %v223 = vld [vmem:[%s151 + $0x4ec] sm:$0xff]
                %224 = vst [vmem:[%s152 + $0x1a4] sm:$0xff] %v223
                %v225 = vld [vmem:[%s151 + $0x510] sm:$0xff]
                %226 = vst [vmem:[%s152 + $0x1b0] sm:$0xff] %v225
                %v227 = vld [vmem:[%s151 + $0x534] sm:$0xff]
                %228 = vst [vmem:[%s152 + $0x1bc] sm:$0xff] %v227
                %v229 = vld [vmem:[%s151 + $0x558] sm:$0xff]
                %230 = vst [vmem:[%s152 + $0x1c8] sm:$0xff] %v229
                %v231 = vld [vmem:[%s151 + $0x57c] sm:$0xff]
                %232 = vst [vmem:[%s152 + $0x1d4] sm:$0xff] %v231
                %v233 = vld [vmem:[%s151 + $0x5a0] sm:$0xff]
                %234 = vst [vmem:[%s152 + $0x1e0] sm:$0xff] %v233
                %v235 = vld [vmem:[%s151 + $0x5c4] sm:$0xff]
                %236 = vst [vmem:[%s152 + $0x1ec] sm:$0xff] %v235
                %v237 = vld [vmem:[%s151 + $0x5e8] sm:$0xff]
                %238 = vst [vmem:[%s152 + $0x1f8] sm:$0xff] %v237
                %v239 = vld [vmem:[%s151 + $0x60c] sm:$0xff]
                %240 = vst [vmem:[%s152 + $0x204] sm:$0xff] %v239
                %v241 = vld [vmem:[%s151 + $0x630] sm:$0xff]
                %242 = vst [vmem:[%s152 + $0x210] sm:$0xff] %v241
                %v243 = vld [vmem:[%s151 + $0x654] sm:$0xff]
                %244 = vst [vmem:[%s152 + $0x21c] sm:$0xff] %v243
                %v245 = vld [vmem:[%s151 + $0x678] sm:$0xff]
                %246 = vst [vmem:[%s152 + $0x228] sm:$0xff] %v245
                %v247 = vld [vmem:[%s151 + $0x69c] sm:$0xff]
                %248 = vst [vmem:[%s152 + $0x234] sm:$0xff] %v247
              $region37: #{multi_head_attention.3} parent=31 // loop_footer
                %s150 = sadd.s32 1, %s146
              $region38: #{multi_head_attention.3} parent=31 // loop_footer_branch
                %145 = sbr.rel target = $region34
              $region39: #{multi_head_attention.3} parent=31 // loop_exit
                _
              loop: start=0, step=1, limit=1
              $region40: #{multi_head_attention.3} parent=31 // loop_pre_header
                _
              $region41: #{multi_head_attention.3} parent=31 // loop_header
                %s251 = sphi 0, %s255
                %p252 = scmp.ge.s32.totalorder %s251, 1
                %s256 = sphi %s143, %s143
                %s257 = sphi %s144, %s144
              $region42: #{multi_head_attention.3} parent=31 // loop_header_branch
                %254 = sbr.rel (%p252) target = $region46
              $region43: #{multi_head_attention.3} parent=31 // loop_body
                %v258 = vld [vmem:[%s256] sm:$0xf]
                %259 = vst [vmem:[%s257] sm:$0xf] %v258
                %v260 = vld [vmem:[%s256 + $0x24] sm:$0xf]
                %261 = vst [vmem:[%s257 + $0xc] sm:$0xf] %v260
                %v262 = vld [vmem:[%s256 + $0x48] sm:$0xf]
                %263 = vst [vmem:[%s257 + $0x18] sm:$0xf] %v262
                %v264 = vld [vmem:[%s256 + $0x6c] sm:$0xf]
                %265 = vst [vmem:[%s257 + $0x24] sm:$0xf] %v264
                %v266 = vld [vmem:[%s256 + $0x90] sm:$0xf]
                %267 = vst [vmem:[%s257 + $0x30] sm:$0xf] %v266
                %v268 = vld [vmem:[%s256 + $0xb4] sm:$0xf]
                %269 = vst [vmem:[%s257 + $0x3c] sm:$0xf] %v268
                %v270 = vld [vmem:[%s256 + $0xd8] sm:$0xf]
                %271 = vst [vmem:[%s257 + $0x48] sm:$0xf] %v270
                %v272 = vld [vmem:[%s256 + $0xfc] sm:$0xf]
                %273 = vst [vmem:[%s257 + $0x54] sm:$0xf] %v272
                %v274 = vld [vmem:[%s256 + $0x120] sm:$0xf]
                %275 = vst [vmem:[%s257 + $0x60] sm:$0xf] %v274
                %v276 = vld [vmem:[%s256 + $0x144] sm:$0xf]
                %277 = vst [vmem:[%s257 + $0x6c] sm:$0xf] %v276
                %v278 = vld [vmem:[%s256 + $0x168] sm:$0xf]
                %279 = vst [vmem:[%s257 + $0x78] sm:$0xf] %v278
                %v280 = vld [vmem:[%s256 + $0x18c] sm:$0xf]
                %281 = vst [vmem:[%s257 + $0x84] sm:$0xf] %v280
                %v282 = vld [vmem:[%s256 + $0x1b0] sm:$0xf]
                %283 = vst [vmem:[%s257 + $0x90] sm:$0xf] %v282
                %v284 = vld [vmem:[%s256 + $0x1d4] sm:$0xf]
                %285 = vst [vmem:[%s257 + $0x9c] sm:$0xf] %v284
                %v286 = vld [vmem:[%s256 + $0x1f8] sm:$0xf]
                %287 = vst [vmem:[%s257 + $0xa8] sm:$0xf] %v286
                %v288 = vld [vmem:[%s256 + $0x21c] sm:$0xf]
                %289 = vst [vmem:[%s257 + $0xb4] sm:$0xf] %v288
                %v290 = vld [vmem:[%s256 + $0x240] sm:$0xf]
                %291 = vst [vmem:[%s257 + $0xc0] sm:$0xf] %v290
                %v292 = vld [vmem:[%s256 + $0x264] sm:$0xf]
                %293 = vst [vmem:[%s257 + $0xcc] sm:$0xf] %v292
                %v294 = vld [vmem:[%s256 + $0x288] sm:$0xf]
                %295 = vst [vmem:[%s257 + $0xd8] sm:$0xf] %v294
                %v296 = vld [vmem:[%s256 + $0x2ac] sm:$0xf]
                %297 = vst [vmem:[%s257 + $0xe4] sm:$0xf] %v296
                %v298 = vld [vmem:[%s256 + $0x2d0] sm:$0xf]
                %299 = vst [vmem:[%s257 + $0xf0] sm:$0xf] %v298
                %v300 = vld [vmem:[%s256 + $0x2f4] sm:$0xf]
                %301 = vst [vmem:[%s257 + $0xfc] sm:$0xf] %v300
                %v302 = vld [vmem:[%s256 + $0x318] sm:$0xf]
                %303 = vst [vmem:[%s257 + $0x108] sm:$0xf] %v302
                %v304 = vld [vmem:[%s256 + $0x33c] sm:$0xf]
                %305 = vst [vmem:[%s257 + $0x114] sm:$0xf] %v304
                %v306 = vld [vmem:[%s256 + $0x360] sm:$0xf]
                %307 = vst [vmem:[%s257 + $0x120] sm:$0xf] %v306
                %v308 = vld [vmem:[%s256 + $0x384] sm:$0xf]
                %309 = vst [vmem:[%s257 + $0x12c] sm:$0xf] %v308
                %v310 = vld [vmem:[%s256 + $0x3a8] sm:$0xf]
                %311 = vst [vmem:[%s257 + $0x138] sm:$0xf] %v310
                %v312 = vld [vmem:[%s256 + $0x3cc] sm:$0xf]
                %313 = vst [vmem:[%s257 + $0x144] sm:$0xf] %v312
                %v314 = vld [vmem:[%s256 + $0x3f0] sm:$0xf]
                %315 = vst [vmem:[%s257 + $0x150] sm:$0xf] %v314
                %v316 = vld [vmem:[%s256 + $0x414] sm:$0xf]
                %317 = vst [vmem:[%s257 + $0x15c] sm:$0xf] %v316
                %v318 = vld [vmem:[%s256 + $0x438] sm:$0xf]
                %319 = vst [vmem:[%s257 + $0x168] sm:$0xf] %v318
                %v320 = vld [vmem:[%s256 + $0x45c] sm:$0xf]
                %321 = vst [vmem:[%s257 + $0x174] sm:$0xf] %v320
                %v322 = vld [vmem:[%s256 + $0x480] sm:$0xf]
                %323 = vst [vmem:[%s257 + $0x180] sm:$0xf] %v322
                %v324 = vld [vmem:[%s256 + $0x4a4] sm:$0xf]
                %325 = vst [vmem:[%s257 + $0x18c] sm:$0xf] %v324
                %v326 = vld [vmem:[%s256 + $0x4c8] sm:$0xf]
                %327 = vst [vmem:[%s257 + $0x198] sm:$0xf] %v326
                %v328 = vld [vmem:[%s256 + $0x4ec] sm:$0xf]
                %329 = vst [vmem:[%s257 + $0x1a4] sm:$0xf] %v328
                %v330 = vld [vmem:[%s256 + $0x510] sm:$0xf]
                %331 = vst [vmem:[%s257 + $0x1b0] sm:$0xf] %v330
                %v332 = vld [vmem:[%s256 + $0x534] sm:$0xf]
                %333 = vst [vmem:[%s257 + $0x1bc] sm:$0xf] %v332
                %v334 = vld [vmem:[%s256 + $0x558] sm:$0xf]
                %335 = vst [vmem:[%s257 + $0x1c8] sm:$0xf] %v334
                %v336 = vld [vmem:[%s256 + $0x57c] sm:$0xf]
                %337 = vst [vmem:[%s257 + $0x1d4] sm:$0xf] %v336
                %v338 = vld [vmem:[%s256 + $0x5a0] sm:$0xf]
                %339 = vst [vmem:[%s257 + $0x1e0] sm:$0xf] %v338
                %v340 = vld [vmem:[%s256 + $0x5c4] sm:$0xf]
                %341 = vst [vmem:[%s257 + $0x1ec] sm:$0xf] %v340
                %v342 = vld [vmem:[%s256 + $0x5e8] sm:$0xf]
                %343 = vst [vmem:[%s257 + $0x1f8] sm:$0xf] %v342
                %v344 = vld [vmem:[%s256 + $0x60c] sm:$0xf]
                %345 = vst [vmem:[%s257 + $0x204] sm:$0xf] %v344
                %v346 = vld [vmem:[%s256 + $0x630] sm:$0xf]
                %347 = vst [vmem:[%s257 + $0x210] sm:$0xf] %v346
                %v348 = vld [vmem:[%s256 + $0x654] sm:$0xf]
                %349 = vst [vmem:[%s257 + $0x21c] sm:$0xf] %v348
                %v350 = vld [vmem:[%s256 + $0x678] sm:$0xf]
                %351 = vst [vmem:[%s257 + $0x228] sm:$0xf] %v350
                %v352 = vld [vmem:[%s256 + $0x69c] sm:$0xf]
                %353 = vst [vmem:[%s257 + $0x234] sm:$0xf] %v352
              $region44: #{multi_head_attention.3} parent=31 // loop_footer
                %s255 = sadd.s32 1, %s251
              $region45: #{multi_head_attention.3} parent=31 // loop_footer_branch
                %250 = sbr.rel target = $region41
              $region46: #{multi_head_attention.3} parent=31 // loop_exit
                _
            $region32: #{multi_head_attention.3} parent=27 // pred_fallthru
              _
          $region28: #{multi_head_attention.3} parent=23 // pred_fallthru
            _
          %354 = vnop
        $region24: #{multi_head_attention.3} parent=15 // pred_fallthru
          _
      $region16: #{multi_head_attention.3} parent=5 // pred_fallthru
        _
      %p355 = scmp.le.s32.totalorder 1, %s8
      %p356 = scmp.lt.s32.totalorder %s8, 7
      %p357 = pnand %p355, %p356
      %p358 = pneg %p357
      // Predicated region
      $region47: #{multi_head_attention.3} parent=5 // pred_check
        _
      $region48: #{multi_head_attention.3} parent=5 // pred_check_branch
        %360 = sbr.rel (%p357) target = $region50
      $region49: #{multi_head_attention.3} parent=5 // pred_region
        %s361 = ssub.s32 %s8, 1
        %s362 = sand.u32 %s59, 1
        %s363 = sand.u32 %s59, 1
        %s364 = smul.addr %s363, 576
        %s365 = scalar_lea.vmem [#allocation2], %s364
        // Predicated region
        $region51: #{multi_head_attention.3} parent=49 // pred_check
          %p366 = pneg %p72
        $region52: #{multi_head_attention.3} parent=49 // pred_check_branch
          %368 = sbr.rel (%p366) target = $region54
        $region53: #{multi_head_attention.3} parent=49 // pred_region
          _
        $region54: #{multi_head_attention.3} parent=49 // pred_fallthru
          _
        %s369 = smul.u32 32, %s17
        %p370 = scmp.lt.s32.totalorder %s369, 63
        %s371 = scalar_select %p370, %s369, 63
        %s372 = smul.addr %s371, 3
        %s373 = smul.addr %s372, 4
        %s374 = scalar_lea.vmem %s0, %s373
        %p375 = pneg %p46
        %p376 = pneg %p43
        %s377 = sand.u32 %s59, 1
        %s378 = sand.u32 %s59, 1
        %s379 = smul.addr %s378, 576
        %s380 = scalar_lea.vmem [#allocation2], %s379
        %p381 = pneg %p72
        %p382 = pneg %p69
        %p383 = pneg %p100
        %p384 = pneg %p97
        %s385 = sand.u32 %s87, 1
        %s386 = sand.u32 %s87, 1
        %s387 = smul.addr %s386, 384
        %s388 = scalar_lea.vmem [#allocation3], %s387
        %s389 = smul.u32 32, %s17
        %p390 = scmp.lt.s32.totalorder %s389, 63
        %s391 = scalar_select %p390, %s389, 63
        %s392 = smul.addr %s391, 3
        %s393 = smul.addr %s392, 4
        %s394 = scalar_lea.vmem %s0, %s393
        %s395 = smul.u32 32, %s17
        %s396 = smul.u32 3, %s18
        %s397 = smul.u32 32, %s17
        %s398 = smul.u32 3, %s18
        %v400 = vld [vmem:[%s394] sm:$0xff]
        %v401 = vld [vmem:[%s394 + $0x8] sm:$0xf]
        %v402 = vld [vmem:[%s394 + $0xc] sm:$0xff]
        %v403 = vld [vmem:[%s394 + $0x14] sm:$0xf]
        %v404 = vld [vmem:[%s394 + $0x18] sm:$0xff]
        %v405 = vld [vmem:[%s394 + $0x20] sm:$0xf]
        %v406 = vld [vmem:[%s394 + $0x24] sm:$0xff]
        %v407 = vld [vmem:[%s394 + $0x2c] sm:$0xf]
        %v408 = vld [vmem:[%s394 + $0x30] sm:$0xff]
        %v409 = vld [vmem:[%s394 + $0x38] sm:$0xf]
        %v410 = vld [vmem:[%s394 + $0x3c] sm:$0xff]
        %v411 = vld [vmem:[%s394 + $0x44] sm:$0xf]
        %v412 = vld [vmem:[%s394 + $0x48] sm:$0xff]
        %v413 = vld [vmem:[%s394 + $0x50] sm:$0xf]
        %v414 = vld [vmem:[%s394 + $0x54] sm:$0xff]
        %v415 = vld [vmem:[%s394 + $0x5c] sm:$0xf]
        %v416 = vld [vmem:[%s394 + $0x60] sm:$0xff]
        %v417 = vld [vmem:[%s394 + $0x68] sm:$0xf]
        %v418 = vld [vmem:[%s394 + $0x6c] sm:$0xff]
        %v419 = vld [vmem:[%s394 + $0x74] sm:$0xf]
        %v420 = vld [vmem:[%s394 + $0x78] sm:$0xff]
        %v421 = vld [vmem:[%s394 + $0x80] sm:$0xf]
        %v422 = vld [vmem:[%s394 + $0x84] sm:$0xff]
        %v423 = vld [vmem:[%s394 + $0x8c] sm:$0xf]
        %v424 = vld [vmem:[%s394 + $0x90] sm:$0xff]
        %v425 = vld [vmem:[%s394 + $0x98] sm:$0xf]
        %v426 = vld [vmem:[%s394 + $0x9c] sm:$0xff]
        %v427 = vld [vmem:[%s394 + $0xa4] sm:$0xf]
        %v428 = vld [vmem:[%s394 + $0xa8] sm:$0xff]
        %v429 = vld [vmem:[%s394 + $0xb0] sm:$0xf]
        %v430 = vld [vmem:[%s394 + $0xb4] sm:$0xff]
        %v431 = vld [vmem:[%s394 + $0xbc] sm:$0xf]
        %v432 = vld [vmem:[%s394 + $0xc0] sm:$0xff]
        %v433 = vld [vmem:[%s394 + $0xc8] sm:$0xf]
        %v434 = vld [vmem:[%s394 + $0xcc] sm:$0xff]
        %v435 = vld [vmem:[%s394 + $0xd4] sm:$0xf]
        %v436 = vld [vmem:[%s394 + $0xd8] sm:$0xff]
        %v437 = vld [vmem:[%s394 + $0xe0] sm:$0xf]
        %v438 = vld [vmem:[%s394 + $0xe4] sm:$0xff]
        %v439 = vld [vmem:[%s394 + $0xec] sm:$0xf]
        %v440 = vld [vmem:[%s394 + $0xf0] sm:$0xff]
        %v441 = vld [vmem:[%s394 + $0xf8] sm:$0xf]
        %v442 = vld [vmem:[%s394 + $0xfc] sm:$0xff]
        %v443 = vld [vmem:[%s394 + $0x104] sm:$0xf]
        %v444 = vld [vmem:[%s394 + $0x108] sm:$0xff]
        %v445 = vld [vmem:[%s394 + $0x110] sm:$0xf]
        %v446 = vld [vmem:[%s394 + $0x114] sm:$0xff]
        %v447 = vld [vmem:[%s394 + $0x11c] sm:$0xf]
        %v448 = vld [vmem:[%s394 + $0x120] sm:$0xff]
        %v449 = vld [vmem:[%s394 + $0x128] sm:$0xf]
        %v450 = vld [vmem:[%s394 + $0x12c] sm:$0xff]
        %v451 = vld [vmem:[%s394 + $0x134] sm:$0xf]
        %v452 = vld [vmem:[%s394 + $0x138] sm:$0xff]
        %v453 = vld [vmem:[%s394 + $0x140] sm:$0xf]
        %v454 = vld [vmem:[%s394 + $0x144] sm:$0xff]
        %v455 = vld [vmem:[%s394 + $0x14c] sm:$0xf]
        %v456 = vld [vmem:[%s394 + $0x150] sm:$0xff]
        %v457 = vld [vmem:[%s394 + $0x158] sm:$0xf]
        %v458 = vld [vmem:[%s394 + $0x15c] sm:$0xff]
        %v459 = vld [vmem:[%s394 + $0x164] sm:$0xf]
        %v460 = vld [vmem:[%s394 + $0x168] sm:$0xff]
        %v461 = vld [vmem:[%s394 + $0x170] sm:$0xf]
        %v462 = vld [vmem:[%s394 + $0x174] sm:$0xff]
        %v463 = vld [vmem:[%s394 + $0x17c] sm:$0xf]
        %v464 = vld [vmem:[%s365] sm:$0xff]
        %v465 = vld [vmem:[%s365 + $0x8] sm:$0xf]
        %v466 = vld [vmem:[%s365 + $0xc] sm:$0xff]
        %v467 = vld [vmem:[%s365 + $0x14] sm:$0xf]
        %v468 = vld [vmem:[%s365 + $0x18] sm:$0xff]
        %v469 = vld [vmem:[%s365 + $0x20] sm:$0xf]
        %v470 = vld [vmem:[%s365 + $0x24] sm:$0xff]
        %v471 = vld [vmem:[%s365 + $0x2c] sm:$0xf]
        %v472 = vld [vmem:[%s365 + $0x30] sm:$0xff]
        %v473 = vld [vmem:[%s365 + $0x38] sm:$0xf]
        %v474 = vld [vmem:[%s365 + $0x3c] sm:$0xff]
        %v475 = vld [vmem:[%s365 + $0x44] sm:$0xf]
        %v476 = vld [vmem:[%s365 + $0x48] sm:$0xff]
        %v477 = vld [vmem:[%s365 + $0x50] sm:$0xf]
        %v478 = vld [vmem:[%s365 + $0x54] sm:$0xff]
        %v479 = vld [vmem:[%s365 + $0x5c] sm:$0xf]
        %v480 = vld [vmem:[%s365 + $0x60] sm:$0xff]
        %v481 = vld [vmem:[%s365 + $0x68] sm:$0xf]
        %v482 = vld [vmem:[%s365 + $0x6c] sm:$0xff]
        %v483 = vld [vmem:[%s365 + $0x74] sm:$0xf]
        %v484 = vld [vmem:[%s365 + $0x78] sm:$0xff]
        %v485 = vld [vmem:[%s365 + $0x80] sm:$0xf]
        %v486 = vld [vmem:[%s365 + $0x84] sm:$0xff]
        %v487 = vld [vmem:[%s365 + $0x8c] sm:$0xf]
        %v488 = vld [vmem:[%s365 + $0x90] sm:$0xff]
        %v489 = vld [vmem:[%s365 + $0x98] sm:$0xf]
        %v490 = vld [vmem:[%s365 + $0x9c] sm:$0xff]
        %v491 = vld [vmem:[%s365 + $0xa4] sm:$0xf]
        %v492 = vld [vmem:[%s365 + $0xa8] sm:$0xff]
        %v493 = vld [vmem:[%s365 + $0xb0] sm:$0xf]
        %v494 = vld [vmem:[%s365 + $0xb4] sm:$0xff]
        %v495 = vld [vmem:[%s365 + $0xbc] sm:$0xf]
        %v496 = vld [vmem:[%s365 + $0xc0] sm:$0xff]
        %v497 = vld [vmem:[%s365 + $0xc8] sm:$0xf]
        %v498 = vld [vmem:[%s365 + $0xcc] sm:$0xff]
        %v499 = vld [vmem:[%s365 + $0xd4] sm:$0xf]
        %v500 = vld [vmem:[%s365 + $0xd8] sm:$0xff]
        %v501 = vld [vmem:[%s365 + $0xe0] sm:$0xf]
        %v502 = vld [vmem:[%s365 + $0xe4] sm:$0xff]
        %v503 = vld [vmem:[%s365 + $0xec] sm:$0xf]
        %v504 = vld [vmem:[%s365 + $0xf0] sm:$0xff]
        %v505 = vld [vmem:[%s365 + $0xf8] sm:$0xf]
        %v506 = vld [vmem:[%s365 + $0xfc] sm:$0xff]
        %v507 = vld [vmem:[%s365 + $0x104] sm:$0xf]
        %v508 = vld [vmem:[%s365 + $0x108] sm:$0xff]
        %v509 = vld [vmem:[%s365 + $0x110] sm:$0xf]
        %v510 = vld [vmem:[%s365 + $0x114] sm:$0xff]
        %v511 = vld [vmem:[%s365 + $0x11c] sm:$0xf]
        %v512 = vld [vmem:[%s365 + $0x120] sm:$0xff]
        %v513 = vld [vmem:[%s365 + $0x128] sm:$0xf]
        %v514 = vld [vmem:[%s365 + $0x12c] sm:$0xff]
        %v515 = vld [vmem:[%s365 + $0x134] sm:$0xf]
        %v516 = vld [vmem:[%s365 + $0x138] sm:$0xff]
        %v517 = vld [vmem:[%s365 + $0x140] sm:$0xf]
        %v518 = vld [vmem:[%s365 + $0x144] sm:$0xff]
        %v519 = vld [vmem:[%s365 + $0x14c] sm:$0xf]
        %v520 = vld [vmem:[%s365 + $0x150] sm:$0xff]
        %v521 = vld [vmem:[%s365 + $0x158] sm:$0xf]
        %v522 = vld [vmem:[%s365 + $0x15c] sm:$0xff]
        %v523 = vld [vmem:[%s365 + $0x164] sm:$0xf]
        %v524 = vld [vmem:[%s365 + $0x168] sm:$0xff]
        %v525 = vld [vmem:[%s365 + $0x170] sm:$0xf]
        %v526 = vld [vmem:[%s365 + $0x174] sm:$0xff]
        %v527 = vld [vmem:[%s365 + $0x17c] sm:$0xf]
        %v528 = vld [vmem:[%s365 + $0x180] sm:$0xff]
        %v529 = vld [vmem:[%s365 + $0x188] sm:$0xf]
        %v530 = vld [vmem:[%s365 + $0x18c] sm:$0xff]
        %v531 = vld [vmem:[%s365 + $0x194] sm:$0xf]
        %v532 = vld [vmem:[%s365 + $0x198] sm:$0xff]
        %v533 = vld [vmem:[%s365 + $0x1a0] sm:$0xf]
        %v534 = vld [vmem:[%s365 + $0x1a4] sm:$0xff]
        %v535 = vld [vmem:[%s365 + $0x1ac] sm:$0xf]
        %v536 = vld [vmem:[%s365 + $0x1b0] sm:$0xff]
        %v537 = vld [vmem:[%s365 + $0x1b8] sm:$0xf]
        %v538 = vld [vmem:[%s365 + $0x1bc] sm:$0xff]
        %v539 = vld [vmem:[%s365 + $0x1c4] sm:$0xf]
        %v540 = vld [vmem:[%s365 + $0x1c8] sm:$0xff]
        %v541 = vld [vmem:[%s365 + $0x1d0] sm:$0xf]
        %v542 = vld [vmem:[%s365 + $0x1d4] sm:$0xff]
        %v543 = vld [vmem:[%s365 + $0x1dc] sm:$0xf]
        %v544 = vld [vmem:[%s365 + $0x1e0] sm:$0xff]
        %v545 = vld [vmem:[%s365 + $0x1e8] sm:$0xf]
        %v546 = vld [vmem:[%s365 + $0x1ec] sm:$0xff]
        %v547 = vld [vmem:[%s365 + $0x1f4] sm:$0xf]
        %v548 = vld [vmem:[%s365 + $0x1f8] sm:$0xff]
        %v549 = vld [vmem:[%s365 + $0x200] sm:$0xf]
        %v550 = vld [vmem:[%s365 + $0x204] sm:$0xff]
        %v551 = vld [vmem:[%s365 + $0x20c] sm:$0xf]
        %v552 = vld [vmem:[%s365 + $0x210] sm:$0xff]
        %v553 = vld [vmem:[%s365 + $0x218] sm:$0xf]
        %v554 = vld [vmem:[%s365 + $0x21c] sm:$0xff]
        %v555 = vld [vmem:[%s365 + $0x224] sm:$0xf]
        %v556 = vld [vmem:[%s365 + $0x228] sm:$0xff]
        %v557 = vld [vmem:[%s365 + $0x230] sm:$0xf]
        %v558 = vld [vmem:[%s365 + $0x234] sm:$0xff]
        %v559 = vld [vmem:[%s365 + $0x23c] sm:$0xf]
        %v624 = vunpack.c.l.b16 %v400
        %v625 = vunpack.c.h.b16 %v400
        %v626 = vunpack.c.l.b16 %v401
        %v627 = vunpack.c.l.b16 %v402
        %v628 = vunpack.c.h.b16 %v402
        %v629 = vunpack.c.l.b16 %v403
        %v630 = vunpack.c.l.b16 %v404
        %v631 = vunpack.c.h.b16 %v404
        %v632 = vunpack.c.l.b16 %v405
        %v633 = vunpack.c.l.b16 %v406
        %v634 = vunpack.c.h.b16 %v406
        %v635 = vunpack.c.l.b16 %v407
        %v636 = vunpack.c.l.b16 %v408
        %v637 = vunpack.c.h.b16 %v408
        %v638 = vunpack.c.l.b16 %v409
        %v639 = vunpack.c.l.b16 %v410
        %v640 = vunpack.c.h.b16 %v410
        %v641 = vunpack.c.l.b16 %v411
        %v642 = vunpack.c.l.b16 %v412
        %v643 = vunpack.c.h.b16 %v412
        %v644 = vunpack.c.l.b16 %v413
        %v645 = vunpack.c.l.b16 %v414
        %v646 = vunpack.c.h.b16 %v414
        %v647 = vunpack.c.l.b16 %v415
        %v648 = vunpack.c.l.b16 %v416
        %v649 = vunpack.c.h.b16 %v416
        %v650 = vunpack.c.l.b16 %v417
        %v651 = vunpack.c.l.b16 %v418
        %v652 = vunpack.c.h.b16 %v418
        %v653 = vunpack.c.l.b16 %v419
        %v654 = vunpack.c.l.b16 %v420
        %v655 = vunpack.c.h.b16 %v420
        %v656 = vunpack.c.l.b16 %v421
        %v657 = vunpack.c.l.b16 %v422
        %v658 = vunpack.c.h.b16 %v422
        %v659 = vunpack.c.l.b16 %v423
        %v660 = vunpack.c.l.b16 %v424
        %v661 = vunpack.c.h.b16 %v424
        %v662 = vunpack.c.l.b16 %v425
        %v663 = vunpack.c.l.b16 %v426
        %v664 = vunpack.c.h.b16 %v426
        %v665 = vunpack.c.l.b16 %v427
        %v666 = vunpack.c.l.b16 %v428
        %v667 = vunpack.c.h.b16 %v428
        %v668 = vunpack.c.l.b16 %v429
        %v669 = vunpack.c.l.b16 %v430
        %v670 = vunpack.c.h.b16 %v430
        %v671 = vunpack.c.l.b16 %v431
        %v672 = vunpack.c.l.b16 %v432
        %v673 = vunpack.c.h.b16 %v432
        %v674 = vunpack.c.l.b16 %v433
        %v675 = vunpack.c.l.b16 %v434
        %v676 = vunpack.c.h.b16 %v434
        %v677 = vunpack.c.l.b16 %v435
        %v678 = vunpack.c.l.b16 %v436
        %v679 = vunpack.c.h.b16 %v436
        %v680 = vunpack.c.l.b16 %v437
        %v681 = vunpack.c.l.b16 %v438
        %v682 = vunpack.c.h.b16 %v438
        %v683 = vunpack.c.l.b16 %v439
        %v684 = vunpack.c.l.b16 %v440
        %v685 = vunpack.c.h.b16 %v440
        %v686 = vunpack.c.l.b16 %v441
        %v687 = vunpack.c.l.b16 %v442
        %v688 = vunpack.c.h.b16 %v442
        %v689 = vunpack.c.l.b16 %v443
        %v690 = vunpack.c.l.b16 %v444
        %v691 = vunpack.c.h.b16 %v444
        %v692 = vunpack.c.l.b16 %v445
        %v693 = vunpack.c.l.b16 %v446
        %v694 = vunpack.c.h.b16 %v446
        %v695 = vunpack.c.l.b16 %v447
        %v696 = vunpack.c.l.b16 %v448
        %v697 = vunpack.c.h.b16 %v448
        %v698 = vunpack.c.l.b16 %v449
        %v699 = vunpack.c.l.b16 %v450
        %v700 = vunpack.c.h.b16 %v450
        %v701 = vunpack.c.l.b16 %v451
        %v702 = vunpack.c.l.b16 %v452
        %v703 = vunpack.c.h.b16 %v452
        %v704 = vunpack.c.l.b16 %v453
        %v705 = vunpack.c.l.b16 %v454
        %v706 = vunpack.c.h.b16 %v454
        %v707 = vunpack.c.l.b16 %v455
        %v708 = vunpack.c.l.b16 %v456
        %v709 = vunpack.c.h.b16 %v456
        %v710 = vunpack.c.l.b16 %v457
        %v711 = vunpack.c.l.b16 %v458
        %v712 = vunpack.c.h.b16 %v458
        %v713 = vunpack.c.l.b16 %v459
        %v714 = vunpack.c.l.b16 %v460
        %v715 = vunpack.c.h.b16 %v460
        %v716 = vunpack.c.l.b16 %v461
        %v717 = vunpack.c.l.b16 %v462
        %v718 = vunpack.c.h.b16 %v462
        %v719 = vunpack.c.l.b16 %v463
        %v720 = vpack.c.b16 %v627, %v624
        %v721 = vpack.c.b16 %v628, %v625
        %v722 = vpack.c.b16 %v629, %v626
        %v723 = vpack.c.b16 %v633, %v630
        %v724 = vpack.c.b16 %v634, %v631
        %v725 = vpack.c.b16 %v635, %v632
        %v726 = vpack.c.b16 %v639, %v636
        %v727 = vpack.c.b16 %v640, %v637
        %v728 = vpack.c.b16 %v641, %v638
        %v729 = vpack.c.b16 %v645, %v642
        %v730 = vpack.c.b16 %v646, %v643
        %v731 = vpack.c.b16 %v647, %v644
        %v732 = vpack.c.b16 %v651, %v648
        %v733 = vpack.c.b16 %v652, %v649
        %v734 = vpack.c.b16 %v653, %v650
        %v735 = vpack.c.b16 %v657, %v654
        %v736 = vpack.c.b16 %v658, %v655
        %v737 = vpack.c.b16 %v659, %v656
        %v738 = vpack.c.b16 %v663, %v660
        %v739 = vpack.c.b16 %v664, %v661
        %v740 = vpack.c.b16 %v665, %v662
        %v741 = vpack.c.b16 %v669, %v666
        %v742 = vpack.c.b16 %v670, %v667
        %v743 = vpack.c.b16 %v671, %v668
        %v744 = vpack.c.b16 %v675, %v672
        %v745 = vpack.c.b16 %v676, %v673
        %v746 = vpack.c.b16 %v677, %v674
        %v747 = vpack.c.b16 %v681, %v678
        %v748 = vpack.c.b16 %v682, %v679
        %v749 = vpack.c.b16 %v683, %v680
        %v750 = vpack.c.b16 %v687, %v684
        %v751 = vpack.c.b16 %v688, %v685
        %v752 = vpack.c.b16 %v689, %v686
        %v753 = vpack.c.b16 %v693, %v690
        %v754 = vpack.c.b16 %v694, %v691
        %v755 = vpack.c.b16 %v695, %v692
        %v756 = vpack.c.b16 %v699, %v696
        %v757 = vpack.c.b16 %v700, %v697
        %v758 = vpack.c.b16 %v701, %v698
        %v759 = vpack.c.b16 %v705, %v702
        %v760 = vpack.c.b16 %v706, %v703
        %v761 = vpack.c.b16 %v707, %v704
        %v762 = vpack.c.b16 %v711, %v708
        %v763 = vpack.c.b16 %v712, %v709
        %v764 = vpack.c.b16 %v713, %v710
        %v765 = vpack.c.b16 %v717, %v714
        %v766 = vpack.c.b16 %v718, %v715
        %v767 = vpack.c.b16 %v719, %v716
        %v912 = vunpack.c.l.b16 %v464
        %v913 = vunpack.c.h.b16 %v464
        %v914 = vunpack.c.l.b16 %v465
        %v915 = vunpack.c.l.b16 %v466
        %v916 = vunpack.c.h.b16 %v466
        %v917 = vunpack.c.l.b16 %v467
        %v918 = vunpack.c.l.b16 %v468
        %v919 = vunpack.c.h.b16 %v468
        %v920 = vunpack.c.l.b16 %v469
        %v921 = vunpack.c.l.b16 %v470
        %v922 = vunpack.c.h.b16 %v470
        %v923 = vunpack.c.l.b16 %v471
        %v924 = vunpack.c.l.b16 %v472
        %v925 = vunpack.c.h.b16 %v472
        %v926 = vunpack.c.l.b16 %v473
        %v927 = vunpack.c.l.b16 %v474
        %v928 = vunpack.c.h.b16 %v474
        %v929 = vunpack.c.l.b16 %v475
        %v930 = vunpack.c.l.b16 %v476
        %v931 = vunpack.c.h.b16 %v476
        %v932 = vunpack.c.l.b16 %v477
        %v933 = vunpack.c.l.b16 %v478
        %v934 = vunpack.c.h.b16 %v478
        %v935 = vunpack.c.l.b16 %v479
        %v936 = vunpack.c.l.b16 %v480
        %v937 = vunpack.c.h.b16 %v480
        %v938 = vunpack.c.l.b16 %v481
        %v939 = vunpack.c.l.b16 %v482
        %v940 = vunpack.c.h.b16 %v482
        %v941 = vunpack.c.l.b16 %v483
        %v942 = vunpack.c.l.b16 %v484
        %v943 = vunpack.c.h.b16 %v484
        %v944 = vunpack.c.l.b16 %v485
        %v945 = vunpack.c.l.b16 %v486
        %v946 = vunpack.c.h.b16 %v486
        %v947 = vunpack.c.l.b16 %v487
        %v948 = vunpack.c.l.b16 %v488
        %v949 = vunpack.c.h.b16 %v488
        %v950 = vunpack.c.l.b16 %v489
        %v951 = vunpack.c.l.b16 %v490
        %v952 = vunpack.c.h.b16 %v490
        %v953 = vunpack.c.l.b16 %v491
        %v954 = vunpack.c.l.b16 %v492
        %v955 = vunpack.c.h.b16 %v492
        %v956 = vunpack.c.l.b16 %v493
        %v957 = vunpack.c.l.b16 %v494
        %v958 = vunpack.c.h.b16 %v494
        %v959 = vunpack.c.l.b16 %v495
        %v960 = vunpack.c.l.b16 %v496
        %v961 = vunpack.c.h.b16 %v496
        %v962 = vunpack.c.l.b16 %v497
        %v963 = vunpack.c.l.b16 %v498
        %v964 = vunpack.c.h.b16 %v498
        %v965 = vunpack.c.l.b16 %v499
        %v966 = vunpack.c.l.b16 %v500
        %v967 = vunpack.c.h.b16 %v500
        %v968 = vunpack.c.l.b16 %v501
        %v969 = vunpack.c.l.b16 %v502
        %v970 = vunpack.c.h.b16 %v502
        %v971 = vunpack.c.l.b16 %v503
        %v972 = vunpack.c.l.b16 %v504
        %v973 = vunpack.c.h.b16 %v504
        %v974 = vunpack.c.l.b16 %v505
        %v975 = vunpack.c.l.b16 %v506
        %v976 = vunpack.c.h.b16 %v506
        %v977 = vunpack.c.l.b16 %v507
        %v978 = vunpack.c.l.b16 %v508
        %v979 = vunpack.c.h.b16 %v508
        %v980 = vunpack.c.l.b16 %v509
        %v981 = vunpack.c.l.b16 %v510
        %v982 = vunpack.c.h.b16 %v510
        %v983 = vunpack.c.l.b16 %v511
        %v984 = vunpack.c.l.b16 %v512
        %v985 = vunpack.c.h.b16 %v512
        %v986 = vunpack.c.l.b16 %v513
        %v987 = vunpack.c.l.b16 %v514
        %v988 = vunpack.c.h.b16 %v514
        %v989 = vunpack.c.l.b16 %v515
        %v990 = vunpack.c.l.b16 %v516
        %v991 = vunpack.c.h.b16 %v516
        %v992 = vunpack.c.l.b16 %v517
        %v993 = vunpack.c.l.b16 %v518
        %v994 = vunpack.c.h.b16 %v518
        %v995 = vunpack.c.l.b16 %v519
        %v996 = vunpack.c.l.b16 %v520
        %v997 = vunpack.c.h.b16 %v520
        %v998 = vunpack.c.l.b16 %v521
        %v999 = vunpack.c.l.b16 %v522
        %v1000 = vunpack.c.h.b16 %v522
        %v1001 = vunpack.c.l.b16 %v523
        %v1002 = vunpack.c.l.b16 %v524
        %v1003 = vunpack.c.h.b16 %v524
        %v1004 = vunpack.c.l.b16 %v525
        %v1005 = vunpack.c.l.b16 %v526
        %v1006 = vunpack.c.h.b16 %v526
        %v1007 = vunpack.c.l.b16 %v527
        %v1008 = vunpack.c.l.b16 %v528
        %v1009 = vunpack.c.h.b16 %v528
        %v1010 = vunpack.c.l.b16 %v529
        %v1011 = vunpack.c.l.b16 %v530
        %v1012 = vunpack.c.h.b16 %v530
        %v1013 = vunpack.c.l.b16 %v531
        %v1014 = vunpack.c.l.b16 %v532
        %v1015 = vunpack.c.h.b16 %v532
        %v1016 = vunpack.c.l.b16 %v533
        %v1017 = vunpack.c.l.b16 %v534
        %v1018 = vunpack.c.h.b16 %v534
        %v1019 = vunpack.c.l.b16 %v535
        %v1020 = vunpack.c.l.b16 %v536
        %v1021 = vunpack.c.h.b16 %v536
        %v1022 = vunpack.c.l.b16 %v537
        %v1023 = vunpack.c.l.b16 %v538
        %v1024 = vunpack.c.h.b16 %v538
        %v1025 = vunpack.c.l.b16 %v539
        %v1026 = vunpack.c.l.b16 %v540
        %v1027 = vunpack.c.h.b16 %v540
        %v1028 = vunpack.c.l.b16 %v541
        %v1029 = vunpack.c.l.b16 %v542
        %v1030 = vunpack.c.h.b16 %v542
        %v1031 = vunpack.c.l.b16 %v543
        %v1032 = vunpack.c.l.b16 %v544
        %v1033 = vunpack.c.h.b16 %v544
        %v1034 = vunpack.c.l.b16 %v545
        %v1035 = vunpack.c.l.b16 %v546
        %v1036 = vunpack.c.h.b16 %v546
        %v1037 = vunpack.c.l.b16 %v547
        %v1038 = vunpack.c.l.b16 %v548
        %v1039 = vunpack.c.h.b16 %v548
        %v1040 = vunpack.c.l.b16 %v549
        %v1041 = vunpack.c.l.b16 %v550
        %v1042 = vunpack.c.h.b16 %v550
        %v1043 = vunpack.c.l.b16 %v551
        %v1044 = vunpack.c.l.b16 %v552
        %v1045 = vunpack.c.h.b16 %v552
        %v1046 = vunpack.c.l.b16 %v553
        %v1047 = vunpack.c.l.b16 %v554
        %v1048 = vunpack.c.h.b16 %v554
        %v1049 = vunpack.c.l.b16 %v555
        %v1050 = vunpack.c.l.b16 %v556
        %v1051 = vunpack.c.h.b16 %v556
        %v1052 = vunpack.c.l.b16 %v557
        %v1053 = vunpack.c.l.b16 %v558
        %v1054 = vunpack.c.h.b16 %v558
        %v1055 = vunpack.c.l.b16 %v559
        %v1056 = vpack.c.b16 %v915, %v912
        %v1057 = vpack.c.b16 %v916, %v913
        %v1058 = vpack.c.b16 %v917, %v914
        %v1059 = vpack.c.b16 %v921, %v918
        %v1060 = vpack.c.b16 %v922, %v919
        %v1061 = vpack.c.b16 %v923, %v920
        %v1062 = vpack.c.b16 %v927, %v924
        %v1063 = vpack.c.b16 %v928, %v925
        %v1064 = vpack.c.b16 %v929, %v926
        %v1065 = vpack.c.b16 %v933, %v930
        %v1066 = vpack.c.b16 %v934, %v931
        %v1067 = vpack.c.b16 %v935, %v932
        %v1068 = vpack.c.b16 %v939, %v936
        %v1069 = vpack.c.b16 %v940, %v937
        %v1070 = vpack.c.b16 %v941, %v938
        %v1071 = vpack.c.b16 %v945, %v942
        %v1072 = vpack.c.b16 %v946, %v943
        %v1073 = vpack.c.b16 %v947, %v944
        %v1074 = vpack.c.b16 %v951, %v948
        %v1075 = vpack.c.b16 %v952, %v949
        %v1076 = vpack.c.b16 %v953, %v950
        %v1077 = vpack.c.b16 %v957, %v954
        %v1078 = vpack.c.b16 %v958, %v955
        %v1079 = vpack.c.b16 %v959, %v956
        %v1080 = vpack.c.b16 %v963, %v960
        %v1081 = vpack.c.b16 %v964, %v961
        %v1082 = vpack.c.b16 %v965, %v962
        %v1083 = vpack.c.b16 %v969, %v966
        %v1084 = vpack.c.b16 %v970, %v967
        %v1085 = vpack.c.b16 %v971, %v968
        %v1086 = vpack.c.b16 %v975, %v972
        %v1087 = vpack.c.b16 %v976, %v973
        %v1088 = vpack.c.b16 %v977, %v974
        %v1089 = vpack.c.b16 %v981, %v978
        %v1090 = vpack.c.b16 %v982, %v979
        %v1091 = vpack.c.b16 %v983, %v980
        %v1092 = vpack.c.b16 %v987, %v984
        %v1093 = vpack.c.b16 %v988, %v985
        %v1094 = vpack.c.b16 %v989, %v986
        %v1095 = vpack.c.b16 %v993, %v990
        %v1096 = vpack.c.b16 %v994, %v991
        %v1097 = vpack.c.b16 %v995, %v992
        %v1098 = vpack.c.b16 %v999, %v996
        %v1099 = vpack.c.b16 %v1000, %v997
        %v1100 = vpack.c.b16 %v1001, %v998
        %v1101 = vpack.c.b16 %v1005, %v1002
        %v1102 = vpack.c.b16 %v1006, %v1003
        %v1103 = vpack.c.b16 %v1007, %v1004
        %v1104 = vpack.c.b16 %v1011, %v1008
        %v1105 = vpack.c.b16 %v1012, %v1009
        %v1106 = vpack.c.b16 %v1013, %v1010
        %v1107 = vpack.c.b16 %v1017, %v1014
        %v1108 = vpack.c.b16 %v1018, %v1015
        %v1109 = vpack.c.b16 %v1019, %v1016
        %v1110 = vpack.c.b16 %v1023, %v1020
        %v1111 = vpack.c.b16 %v1024, %v1021
        %v1112 = vpack.c.b16 %v1025, %v1022
        %v1113 = vpack.c.b16 %v1029, %v1026
        %v1114 = vpack.c.b16 %v1030, %v1027
        %v1115 = vpack.c.b16 %v1031, %v1028
        %v1116 = vpack.c.b16 %v1035, %v1032
        %v1117 = vpack.c.b16 %v1036, %v1033
        %v1118 = vpack.c.b16 %v1037, %v1034
        %v1119 = vpack.c.b16 %v1041, %v1038
        %v1120 = vpack.c.b16 %v1042, %v1039
        %v1121 = vpack.c.b16 %v1043, %v1040
        %v1122 = vpack.c.b16 %v1047, %v1044
        %v1123 = vpack.c.b16 %v1048, %v1045
        %v1124 = vpack.c.b16 %v1049, %v1046
        %v1125 = vpack.c.b16 %v1053, %v1050
        %v1126 = vpack.c.b16 %v1054, %v1051
        %v1127 = vpack.c.b16 %v1055, %v1052
        %1200 = vmatprep.subr.bf16.mxu0 %v1057
        %1201 = vmatpush1.bf16.msra.mxu0 %v1056
        %1202 = vmatprep.subr.bf16.mxu0 %v1060
        %1203 = vmatpush1.bf16.msra.mxu0 %v1059
        %1204 = vmatprep.subr.bf16.mxu0 %v1063
        %1205 = vmatpush1.bf16.msra.mxu0 %v1062
        %1206 = vmatprep.subr.bf16.mxu0 %v1066
        %1207 = vmatpush1.bf16.msra.mxu0 %v1065
        %1208 = vmatprep.subr.bf16.mxu0 %v1069
        %1209 = vmatpush1.bf16.msra.mxu0 %v1068
        %1210 = vmatprep.subr.bf16.mxu0 %v1072
        %1211 = vmatpush1.bf16.msra.mxu0 %v1071
        %1212 = vmatprep.subr.bf16.mxu0 %v1075
        %1213 = vmatpush1.bf16.msra.mxu0 %v1074
        %1214 = vmatprep.subr.bf16.mxu0 %v1078
        %1215 = vmatpush1.bf16.msra.mxu0 %v1077
        %1216 = vmatprep.subr.bf16.mxu0 %v1081
        %1217 = vmatpush1.bf16.msra.mxu0 %v1080
        %1218 = vmatprep.subr.bf16.mxu0 %v1084
        %1219 = vmatpush1.bf16.msra.mxu0 %v1083
        %1220 = vmatprep.subr.bf16.mxu0 %v1087
        %1221 = vmatpush1.bf16.msra.mxu0 %v1086
        %1222 = vmatprep.subr.bf16.mxu0 %v1090
        %1223 = vmatpush1.bf16.msra.mxu0 %v1089
        %1224 = vmatprep.subr.bf16.mxu0 %v1093
        %1225 = vmatpush1.bf16.msra.mxu0 %v1092
        %1226 = vmatprep.subr.bf16.mxu0 %v1096
        %1227 = vmatpush1.bf16.msra.mxu0 %v1095
        %1228 = vmatprep.subr.bf16.mxu0 %v1099
        %1229 = vmatpush1.bf16.msra.mxu0 %v1098
        %1230 = vmatprep.subr.bf16.mxu0 %v1102
        %1231 = vmatpush1.bf16.msra.mxu0 %v1101
        %1232 = vmatprep.mubr.bf16.mxu0 %v721
        %1233 = vmatmul.mubr.bf16.gmra.mrb[0].mxu0 %v720
        %v1234 = vpop.f32.mrb[0].mxu0
        %v1235 = vadd.f32 0.0, %v1234
        %v1236 = vpop.f32.mrb[0].mxu0
        %v1237 = vadd.f32 0.0, %v1236
        %v1238 = vpop.f32.mrb[0].mxu0
        %v1239 = vadd.f32 0.0, %v1238
        %v1240 = vpop.f32.mrb[0].mxu0
        %v1241 = vadd.f32 0.0, %v1240
        %1242 = vmatprep.mubr.bf16.mxu0 %v724
        %1243 = vmatmul.mubr.bf16.gmra.mrb[0].mxu0 %v723
        %v1244 = vpop.f32.mrb[0].mxu0
        %v1245 = vadd.f32 0.0, %v1244
        %v1246 = vpop.f32.mrb[0].mxu0
        %v1247 = vadd.f32 0.0, %v1246
        %v1248 = vpop.f32.mrb[0].mxu0
        %v1249 = vadd.f32 0.0, %v1248
        %v1250 = vpop.f32.mrb[0].mxu0
        %v1251 = vadd.f32 0.0, %v1250
        %1252 = vmatprep.mubr.bf16.mxu0 %v727
        %1253 = vmatmul.mubr.bf16.gmra.mrb[0].mxu0 %v726
        %v1254 = vpop.f32.mrb[0].mxu0
        %v1255 = vadd.f32 0.0, %v1254
        %v1256 = vpop.f32.mrb[0].mxu0
        %v1257 = vadd.f32 0.0, %v1256
        %v1258 = vpop.f32.mrb[0].mxu0
        %v1259 = vadd.f32 0.0, %v1258
        %v1260 = vpop.f32.mrb[0].mxu0
        %v1261 = vadd.f32 0.0, %v1260
        %1262 = vmatprep.mubr.bf16.mxu0 %v730
        %1263 = vmatmul.mubr.bf16.gmra.mrb[0].mxu0 %v729
        %v1264 = vpop.f32.mrb[0].mxu0
        %v1265 = vadd.f32 0.0, %v1264
        %v1266 = vpop.f32.mrb[0].mxu0
        %v1267 = vadd.f32 0.0, %v1266
        %v1268 = vpop.f32.mrb[0].mxu0
        %v1269 = vadd.f32 0.0, %v1268
        %v1270 = vpop.f32.mrb[0].mxu0
        %v1271 = vadd.f32 0.0, %v1270
        %1272 = vmatprep.mubr.bf16.mxu0 %v733
        %1273 = vmatmul.mubr.bf16.gmra.mrb[0].mxu0 %v732
        %v1274 = vpop.f32.mrb[0].mxu0
        %v1275 = vadd.f32 0.0, %v1274
        %v1276 = vpop.f32.mrb[0].mxu0
        %v1277 = vadd.f32 0.0, %v1276
        %v1278 = vpop.f32.mrb[0].mxu0
        %v1279 = vadd.f32 0.0, %v1278
        %v1280 = vpop.f32.mrb[0].mxu0
        %v1281 = vadd.f32 0.0, %v1280
        %1282 = vmatprep.mubr.bf16.mxu0 %v736
        %1283 = vmatmul.mubr.bf16.gmra.mrb[0].mxu0 %v735
        %v1284 = vpop.f32.mrb[0].mxu0
        %v1285 = vadd.f32 0.0, %v1284
        %v1286 = vpop.f32.mrb[0].mxu0
        %v1287 = vadd.f32 0.0, %v1286
        %v1288 = vpop.f32.mrb[0].mxu0
        %v1289 = vadd.f32 0.0, %v1288
        %v1290 = vpop.f32.mrb[0].mxu0
        %v1291 = vadd.f32 0.0, %v1290
        %1292 = vmatprep.mubr.bf16.mxu0 %v739
        %1293 = vmatmul.mubr.bf16.gmra.mrb[0].mxu0 %v738
        %v1294 = vpop.f32.mrb[0].mxu0
        %v1295 = vadd.f32 0.0, %v1294
        %v1296 = vpop.f32.mrb[0].mxu0
        %v1297 = vadd.f32 0.0, %v1296
        %v1298 = vpop.f32.mrb[0].mxu0
        %v1299 = vadd.f32 0.0, %v1298
        %v1300 = vpop.f32.mrb[0].mxu0
        %v1301 = vadd.f32 0.0, %v1300
        %1302 = vmatprep.mubr.bf16.mxu0 %v742
        %1303 = vmatmul.mubr.bf16.gmra.mrb[0].mxu0 %v741
        %v1304 = vpop.f32.mrb[0].mxu0
        %v1305 = vadd.f32 0.0, %v1304
        %v1306 = vpop.f32.mrb[0].mxu0
        %v1307 = vadd.f32 0.0, %v1306
        %v1308 = vpop.f32.mrb[0].mxu0
        %v1309 = vadd.f32 0.0, %v1308
        %v1310 = vpop.f32.mrb[0].mxu0
        %v1311 = vadd.f32 0.0, %v1310
        %1312 = vmatprep.mubr.bf16.mxu0 %v745
        %1313 = vmatmul.mubr.bf16.gmra.mrb[0].mxu0 %v744
        %v1314 = vpop.f32.mrb[0].mxu0
        %v1315 = vadd.f32 0.0, %v1314
        %v1316 = vpop.f32.mrb[0].mxu0
        %v1317 = vadd.f32 0.0, %v1316
        %v1318 = vpop.f32.mrb[0].mxu0
        %v1319 = vadd.f32 0.0, %v1318
        %v1320 = vpop.f32.mrb[0].mxu0
        %v1321 = vadd.f32 0.0, %v1320
        %1322 = vmatprep.mubr.bf16.mxu0 %v748
        %1323 = vmatmul.mubr.bf16.gmra.mrb[0].mxu0 %v747
        %v1324 = vpop.f32.mrb[0].mxu0
        %v1325 = vadd.f32 0.0, %v1324
        %v1326 = vpop.f32.mrb[0].mxu0
        %v1327 = vadd.f32 0.0, %v1326
        %v1328 = vpop.f32.mrb[0].mxu0
        %v1329 = vadd.f32 0.0, %v1328
        %v1330 = vpop.f32.mrb[0].mxu0
        %v1331 = vadd.f32 0.0, %v1330
        %1332 = vmatprep.mubr.bf16.mxu0 %v751
        %1333 = vmatmul.mubr.bf16.gmra.mrb[0].mxu0 %v750
        %v1334 = vpop.f32.mrb[0].mxu0
        %v1335 = vadd.f32 0.0, %v1334
        %v1336 = vpop.f32.mrb[0].mxu0
        %v1337 = vadd.f32 0.0, %v1336
        %v1338 = vpop.f32.mrb[0].mxu0
        %v1339 = vadd.f32 0.0, %v1338
        %v1340 = vpop.f32.mrb[0].mxu0
        %v1341 = vadd.f32 0.0, %v1340
        %1342 = vmatprep.mubr.bf16.mxu0 %v754
        %1343 = vmatmul.mubr.bf16.gmra.mrb[0].mxu0 %v753
        %v1344 = vpop.f32.mrb[0].mxu0
        %v1345 = vadd.f32 0.0, %v1344
        %v1346 = vpop.f32.mrb[0].mxu0
        %v1347 = vadd.f32 0.0, %v1346
        %v1348 = vpop.f32.mrb[0].mxu0
        %v1349 = vadd.f32 0.0, %v1348
        %v1350 = vpop.f32.mrb[0].mxu0
        %v1351 = vadd.f32 0.0, %v1350
        %1352 = vmatprep.mubr.bf16.mxu0 %v757
        %1353 = vmatmul.mubr.bf16.gmra.mrb[0].mxu0 %v756
        %v1354 = vpop.f32.mrb[0].mxu0
        %v1355 = vadd.f32 0.0, %v1354
        %v1356 = vpop.f32.mrb[0].mxu0
        %v1357 = vadd.f32 0.0, %v1356
        %v1358 = vpop.f32.mrb[0].mxu0
        %v1359 = vadd.f32 0.0, %v1358
        %v1360 = vpop.f32.mrb[0].mxu0
        %v1361 = vadd.f32 0.0, %v1360
        %1362 = vmatprep.mubr.bf16.mxu0 %v760
        %1363 = vmatmul.mubr.bf16.gmra.mrb[0].mxu0 %v759
        %v1364 = vpop.f32.mrb[0].mxu0
        %v1365 = vadd.f32 0.0, %v1364
        %v1366 = vpop.f32.mrb[0].mxu0
        %v1367 = vadd.f32 0.0, %v1366
        %v1368 = vpop.f32.mrb[0].mxu0
        %v1369 = vadd.f32 0.0, %v1368
        %v1370 = vpop.f32.mrb[0].mxu0
        %v1371 = vadd.f32 0.0, %v1370
        %1372 = vmatprep.mubr.bf16.mxu0 %v763
        %1373 = vmatmul.mubr.bf16.gmra.mrb[0].mxu0 %v762
        %v1374 = vpop.f32.mrb[0].mxu0
        %v1375 = vadd.f32 0.0, %v1374
        %v1376 = vpop.f32.mrb[0].mxu0
        %v1377 = vadd.f32 0.0, %v1376
        %v1378 = vpop.f32.mrb[0].mxu0
        %v1379 = vadd.f32 0.0, %v1378
        %v1380 = vpop.f32.mrb[0].mxu0
        %v1381 = vadd.f32 0.0, %v1380
        %1382 = vmatprep.mubr.bf16.mxu0 %v766
        %1383 = vmatmul.mubr.bf16.gmra.mrb[0].mxu0 %v765
        %v1384 = vpop.f32.mrb[0].mxu0
        %v1385 = vadd.f32 0.0, %v1384
        %v1386 = vpop.f32.mrb[0].mxu0
        %v1387 = vadd.f32 0.0, %v1386
        %v1388 = vpop.f32.mrb[0].mxu0
        %v1389 = vadd.f32 0.0, %v1388
        %v1390 = vpop.f32.mrb[0].mxu0
        %v1391 = vadd.f32 0.0, %v1390
        %1392 = vdwg.mxu0
        %1393 = vmatprep.subr.bf16.mxu0 %v1105
        %1394 = vmatpush1.bf16.msra.mxu0 %v1104
        %1395 = vmatprep.subr.bf16.mxu0 %v1108
        %1396 = vmatpush1.bf16.msra.mxu0 %v1107
        %1397 = vmatprep.subr.bf16.mxu0 %v1111
        %1398 = vmatpush1.bf16.msra.mxu0 %v1110
        %1399 = vmatprep.subr.bf16.mxu0 %v1114
        %1400 = vmatpush1.bf16.msra.mxu0 %v1113
        %1401 = vmatprep.subr.bf16.mxu0 %v1117
        %1402 = vmatpush1.bf16.msra.mxu0 %v1116
        %1403 = vmatprep.subr.bf16.mxu0 %v1120
        %1404 = vmatpush1.bf16.msra.mxu0 %v1119
        %1405 = vmatprep.subr.bf16.mxu0 %v1123
        %1406 = vmatpush1.bf16.msra.mxu0 %v1122
        %1407 = vmatprep.subr.bf16.mxu0 %v1126
        %1408 = vmatpush1.bf16.msra.mxu0 %v1125
        %1409 = vmatprep.subr.bf16.mxu0 0
        %1410 = vmatpush1.bf16.msra.mxu0 0
        %1411 = vmatprep.subr.bf16.mxu0 0
        %1412 = vmatpush1.bf16.msra.mxu0 0
        %1413 = vmatprep.subr.bf16.mxu0 0
        %1414 = vmatpush1.bf16.msra.mxu0 0
        %1415 = vmatprep.subr.bf16.mxu0 0
        %1416 = vmatpush1.bf16.msra.mxu0 0
        %1417 = vmatprep.subr.bf16.mxu0 0
        %1418 = vmatpush1.bf16.msra.mxu0 0
        %1419 = vmatprep.subr.bf16.mxu0 0
        %1420 = vmatpush1.bf16.msra.mxu0 0
        %1421 = vmatprep.subr.bf16.mxu0 0
        %1422 = vmatpush1.bf16.msra.mxu0 0
        %1423 = vmatprep.subr.bf16.mxu0 0
        %1424 = vmatpush1.bf16.msra.mxu0 0
        %1425 = vmatprep.mubr.bf16.mxu0 0
        %1426 = vmatmul.mubr.bf16.gmra.mrb[0].mxu0 %v722
        %v1427 = vpop.f32.mrb[0].mxu0
        %v1428 = vadd.f32 %v1235, %v1427
        %v1429 = vpop.f32.mrb[0].mxu0
        %v1430 = vadd.f32 %v1237, %v1429
        %v1431 = vpop.f32.mrb[0].mxu0
        %v1432 = vadd.f32 %v1239, %v1431
        %v1433 = vpop.f32.mrb[0].mxu0
        %v1434 = vadd.f32 %v1241, %v1433
        %1435 = vmatprep.mubr.bf16.mxu0 0
        %1436 = vmatmul.mubr.bf16.gmra.mrb[0].mxu0 %v725
        %v1437 = vpop.f32.mrb[0].mxu0
        %v1438 = vadd.f32 %v1245, %v1437
        %v1439 = vpop.f32.mrb[0].mxu0
        %v1440 = vadd.f32 %v1247, %v1439
        %v1441 = vpop.f32.mrb[0].mxu0
        %v1442 = vadd.f32 %v1249, %v1441
        %v1443 = vpop.f32.mrb[0].mxu0
        %v1444 = vadd.f32 %v1251, %v1443
        %1445 = vmatprep.mubr.bf16.mxu0 0
        %1446 = vmatmul.mubr.bf16.gmra.mrb[0].mxu0 %v728
        %v1447 = vpop.f32.mrb[0].mxu0
        %v1448 = vadd.f32 %v1255, %v1447
        %v1449 = vpop.f32.mrb[0].mxu0
        %v1450 = vadd.f32 %v1257, %v1449
        %v1451 = vpop.f32.mrb[0].mxu0
        %v1452 = vadd.f32 %v1259, %v1451
        %v1453 = vpop.f32.mrb[0].mxu0
        %v1454 = vadd.f32 %v1261, %v1453
        %1455 = vmatprep.mubr.bf16.mxu0 0
        %1456 = vmatmul.mubr.bf16.gmra.mrb[0].mxu0 %v731
        %v1457 = vpop.f32.mrb[0].mxu0
        %v1458 = vadd.f32 %v1265, %v1457
        %v1459 = vpop.f32.mrb[0].mxu0
        %v1460 = vadd.f32 %v1267, %v1459
        %v1461 = vpop.f32.mrb[0].mxu0
        %v1462 = vadd.f32 %v1269, %v1461
        %v1463 = vpop.f32.mrb[0].mxu0
        %v1464 = vadd.f32 %v1271, %v1463
        %1465 = vmatprep.mubr.bf16.mxu0 0
        %1466 = vmatmul.mubr.bf16.gmra.mrb[0].mxu0 %v734
        %v1467 = vpop.f32.mrb[0].mxu0
        %v1468 = vadd.f32 %v1275, %v1467
        %v1469 = vpop.f32.mrb[0].mxu0
        %v1470 = vadd.f32 %v1277, %v1469
        %v1471 = vpop.f32.mrb[0].mxu0
        %v1472 = vadd.f32 %v1279, %v1471
        %v1473 = vpop.f32.mrb[0].mxu0
        %v1474 = vadd.f32 %v1281, %v1473
        %1475 = vmatprep.mubr.bf16.mxu0 0
        %1476 = vmatmul.mubr.bf16.gmra.mrb[0].mxu0 %v737
        %v1477 = vpop.f32.mrb[0].mxu0
        %v1478 = vadd.f32 %v1285, %v1477
        %v1479 = vpop.f32.mrb[0].mxu0
        %v1480 = vadd.f32 %v1287, %v1479
        %v1481 = vpop.f32.mrb[0].mxu0
        %v1482 = vadd.f32 %v1289, %v1481
        %v1483 = vpop.f32.mrb[0].mxu0
        %v1484 = vadd.f32 %v1291, %v1483
        %1485 = vmatprep.mubr.bf16.mxu0 0
        %1486 = vmatmul.mubr.bf16.gmra.mrb[0].mxu0 %v740
        %v1487 = vpop.f32.mrb[0].mxu0
        %v1488 = vadd.f32 %v1295, %v1487
        %v1489 = vpop.f32.mrb[0].mxu0
        %v1490 = vadd.f32 %v1297, %v1489
        %v1491 = vpop.f32.mrb[0].mxu0
        %v1492 = vadd.f32 %v1299, %v1491
        %v1493 = vpop.f32.mrb[0].mxu0
        %v1494 = vadd.f32 %v1301, %v1493
        %1495 = vmatprep.mubr.bf16.mxu0 0
        %1496 = vmatmul.mubr.bf16.gmra.mrb[0].mxu0 %v743
        %v1497 = vpop.f32.mrb[0].mxu0
        %v1498 = vadd.f32 %v1305, %v1497
        %v1499 = vpop.f32.mrb[0].mxu0
        %v1500 = vadd.f32 %v1307, %v1499
        %v1501 = vpop.f32.mrb[0].mxu0
        %v1502 = vadd.f32 %v1309, %v1501
        %v1503 = vpop.f32.mrb[0].mxu0
        %v1504 = vadd.f32 %v1311, %v1503
        %1505 = vmatprep.mubr.bf16.mxu0 0
        %1506 = vmatmul.mubr.bf16.gmra.mrb[0].mxu0 %v746
        %v1507 = vpop.f32.mrb[0].mxu0
        %v1508 = vadd.f32 %v1315, %v1507
        %v1509 = vpop.f32.mrb[0].mxu0
        %v1510 = vadd.f32 %v1317, %v1509
        %v1511 = vpop.f32.mrb[0].mxu0
        %v1512 = vadd.f32 %v1319, %v1511
        %v1513 = vpop.f32.mrb[0].mxu0
        %v1514 = vadd.f32 %v1321, %v1513
        %1515 = vmatprep.mubr.bf16.mxu0 0
        %1516 = vmatmul.mubr.bf16.gmra.mrb[0].mxu0 %v749
        %v1517 = vpop.f32.mrb[0].mxu0
        %v1518 = vadd.f32 %v1325, %v1517
        %v1519 = vpop.f32.mrb[0].mxu0
        %v1520 = vadd.f32 %v1327, %v1519
        %v1521 = vpop.f32.mrb[0].mxu0
        %v1522 = vadd.f32 %v1329, %v1521
        %v1523 = vpop.f32.mrb[0].mxu0
        %v1524 = vadd.f32 %v1331, %v1523
        %1525 = vmatprep.mubr.bf16.mxu0 0
        %1526 = vmatmul.mubr.bf16.gmra.mrb[0].mxu0 %v752
        %v1527 = vpop.f32.mrb[0].mxu0
        %v1528 = vadd.f32 %v1335, %v1527
        %v1529 = vpop.f32.mrb[0].mxu0
        %v1530 = vadd.f32 %v1337, %v1529
        %v1531 = vpop.f32.mrb[0].mxu0
        %v1532 = vadd.f32 %v1339, %v1531
        %v1533 = vpop.f32.mrb[0].mxu0
        %v1534 = vadd.f32 %v1341, %v1533
        %1535 = vmatprep.mubr.bf16.mxu0 0
        %1536 = vmatmul.mubr.bf16.gmra.mrb[0].mxu0 %v755
        %v1537 = vpop.f32.mrb[0].mxu0
        %v1538 = vadd.f32 %v1345, %v1537
        %v1539 = vpop.f32.mrb[0].mxu0
        %v1540 = vadd.f32 %v1347, %v1539
        %v1541 = vpop.f32.mrb[0].mxu0
        %v1542 = vadd.f32 %v1349, %v1541
        %v1543 = vpop.f32.mrb[0].mxu0
        %v1544 = vadd.f32 %v1351, %v1543
        %1545 = vmatprep.mubr.bf16.mxu0 0
        %1546 = vmatmul.mubr.bf16.gmra.mrb[0].mxu0 %v758
        %v1547 = vpop.f32.mrb[0].mxu0
        %v1548 = vadd.f32 %v1355, %v1547
        %v1549 = vpop.f32.mrb[0].mxu0
        %v1550 = vadd.f32 %v1357, %v1549
        %v1551 = vpop.f32.mrb[0].mxu0
        %v1552 = vadd.f32 %v1359, %v1551
        %v1553 = vpop.f32.mrb[0].mxu0
        %v1554 = vadd.f32 %v1361, %v1553
        %1555 = vmatprep.mubr.bf16.mxu0 0
        %1556 = vmatmul.mubr.bf16.gmra.mrb[0].mxu0 %v761
        %v1557 = vpop.f32.mrb[0].mxu0
        %v1558 = vadd.f32 %v1365, %v1557
        %v1559 = vpop.f32.mrb[0].mxu0
        %v1560 = vadd.f32 %v1367, %v1559
        %v1561 = vpop.f32.mrb[0].mxu0
        %v1562 = vadd.f32 %v1369, %v1561
        %v1563 = vpop.f32.mrb[0].mxu0
        %v1564 = vadd.f32 %v1371, %v1563
        %1565 = vmatprep.mubr.bf16.mxu0 0
        %1566 = vmatmul.mubr.bf16.gmra.mrb[0].mxu0 %v764
        %v1567 = vpop.f32.mrb[0].mxu0
        %v1568 = vadd.f32 %v1375, %v1567
        %v1569 = vpop.f32.mrb[0].mxu0
        %v1570 = vadd.f32 %v1377, %v1569
        %v1571 = vpop.f32.mrb[0].mxu0
        %v1572 = vadd.f32 %v1379, %v1571
        %v1573 = vpop.f32.mrb[0].mxu0
        %v1574 = vadd.f32 %v1381, %v1573
        %1575 = vmatprep.mubr.bf16.mxu0 0
        %1576 = vmatmul.mubr.bf16.gmra.mrb[0].mxu0 %v767
        %v1577 = vpop.f32.mrb[0].mxu0
        %v1578 = vadd.f32 %v1385, %v1577
        %v1579 = vpop.f32.mrb[0].mxu0
        %v1580 = vadd.f32 %v1387, %v1579
        %v1581 = vpop.f32.mrb[0].mxu0
        %v1582 = vadd.f32 %v1389, %v1581
        %v1583 = vpop.f32.mrb[0].mxu0
        %v1584 = vadd.f32 %v1391, %v1583
        %1585 = vdwg.mxu0
        %1586 = vmatprep.subr.bf16.mxu0 0
        %1587 = vmatpush1.bf16.msra.mxu0 %v1058
        %1588 = vmatprep.subr.bf16.mxu0 0
        %1589 = vmatpush1.bf16.msra.mxu0 %v1061
        %1590 = vmatprep.subr.bf16.mxu0 0
        %1591 = vmatpush1.bf16.msra.mxu0 %v1064
        %1592 = vmatprep.subr.bf16.mxu0 0
        %1593 = vmatpush1.bf16.msra.mxu0 %v1067
        %1594 = vmatprep.subr.bf16.mxu0 0
        %1595 = vmatpush1.bf16.msra.mxu0 %v1070
        %1596 = vmatprep.subr.bf16.mxu0 0
        %1597 = vmatpush1.bf16.msra.mxu0 %v1073
        %1598 = vmatprep.subr.bf16.mxu0 0
        %1599 = vmatpush1.bf16.msra.mxu0 %v1076
        %1600 = vmatprep.subr.bf16.mxu0 0
        %1601 = vmatpush1.bf16.msra.mxu0 %v1079
        %1602 = vmatprep.subr.bf16.mxu0 0
        %1603 = vmatpush1.bf16.msra.mxu0 %v1082
        %1604 = vmatprep.subr.bf16.mxu0 0
        %1605 = vmatpush1.bf16.msra.mxu0 %v1085
        %1606 = vmatprep.subr.bf16.mxu0 0
        %1607 = vmatpush1.bf16.msra.mxu0 %v1088
        %1608 = vmatprep.subr.bf16.mxu0 0
        %1609 = vmatpush1.bf16.msra.mxu0 %v1091
        %1610 = vmatprep.subr.bf16.mxu0 0
        %1611 = vmatpush1.bf16.msra.mxu0 %v1094
        %1612 = vmatprep.subr.bf16.mxu0 0
        %1613 = vmatpush1.bf16.msra.mxu0 %v1097
        %1614 = vmatprep.subr.bf16.mxu0 0
        %1615 = vmatpush1.bf16.msra.mxu0 %v1100
        %1616 = vmatprep.subr.bf16.mxu0 0
        %1617 = vmatpush1.bf16.msra.mxu0 %v1103
        %1618 = vmatprep.mubr.bf16.mxu0 %v721
        %1619 = vmatmul.mubr.bf16.gmra.mrb[0].mxu0 %v720
        %v1620 = vpop.f32.mrb[0].mxu0
        %v1621 = vadd.f32 0.0, %v1620
        %v1622 = vpop.f32.mrb[0].mxu0
        %v1623 = vpop.f32.mrb[0].mxu0
        %v1624 = vadd.f32 0.0, %v1623
        %v1625 = vpop.f32.mrb[0].mxu0
        %1626 = vmatprep.mubr.bf16.mxu0 %v724
        %1627 = vmatmul.mubr.bf16.gmra.mrb[0].mxu0 %v723
        %v1628 = vpop.f32.mrb[0].mxu0
        %v1629 = vadd.f32 0.0, %v1628
        %v1630 = vpop.f32.mrb[0].mxu0
        %v1631 = vpop.f32.mrb[0].mxu0
        %v1632 = vadd.f32 0.0, %v1631
        %v1633 = vpop.f32.mrb[0].mxu0
        %1634 = vmatprep.mubr.bf16.mxu0 %v727
        %1635 = vmatmul.mubr.bf16.gmra.mrb[0].mxu0 %v726
        %v1636 = vpop.f32.mrb[0].mxu0
        %v1637 = vadd.f32 0.0, %v1636
        %v1638 = vpop.f32.mrb[0].mxu0
        %v1639 = vpop.f32.mrb[0].mxu0
        %v1640 = vadd.f32 0.0, %v1639
        %v1641 = vpop.f32.mrb[0].mxu0
        %1642 = vmatprep.mubr.bf16.mxu0 %v730
        %1643 = vmatmul.mubr.bf16.gmra.mrb[0].mxu0 %v729
        %v1644 = vpop.f32.mrb[0].mxu0
        %v1645 = vadd.f32 0.0, %v1644
        %v1646 = vpop.f32.mrb[0].mxu0
        %v1647 = vpop.f32.mrb[0].mxu0
        %v1648 = vadd.f32 0.0, %v1647
        %v1649 = vpop.f32.mrb[0].mxu0
        %1650 = vmatprep.mubr.bf16.mxu0 %v733
        %1651 = vmatmul.mubr.bf16.gmra.mrb[0].mxu0 %v732
        %v1652 = vpop.f32.mrb[0].mxu0
        %v1653 = vadd.f32 0.0, %v1652
        %v1654 = vpop.f32.mrb[0].mxu0
        %v1655 = vpop.f32.mrb[0].mxu0
        %v1656 = vadd.f32 0.0, %v1655
        %v1657 = vpop.f32.mrb[0].mxu0
        %1658 = vmatprep.mubr.bf16.mxu0 %v736
        %1659 = vmatmul.mubr.bf16.gmra.mrb[0].mxu0 %v735
        %v1660 = vpop.f32.mrb[0].mxu0
        %v1661 = vadd.f32 0.0, %v1660
        %v1662 = vpop.f32.mrb[0].mxu0
        %v1663 = vpop.f32.mrb[0].mxu0
        %v1664 = vadd.f32 0.0, %v1663
        %v1665 = vpop.f32.mrb[0].mxu0
        %1666 = vmatprep.mubr.bf16.mxu0 %v739
        %1667 = vmatmul.mubr.bf16.gmra.mrb[0].mxu0 %v738
        %v1668 = vpop.f32.mrb[0].mxu0
        %v1669 = vadd.f32 0.0, %v1668
        %v1670 = vpop.f32.mrb[0].mxu0
        %v1671 = vpop.f32.mrb[0].mxu0
        %v1672 = vadd.f32 0.0, %v1671
        %v1673 = vpop.f32.mrb[0].mxu0
        %1674 = vmatprep.mubr.bf16.mxu0 %v742
        %1675 = vmatmul.mubr.bf16.gmra.mrb[0].mxu0 %v741
        %v1676 = vpop.f32.mrb[0].mxu0
        %v1677 = vadd.f32 0.0, %v1676
        %v1678 = vpop.f32.mrb[0].mxu0
        %v1679 = vpop.f32.mrb[0].mxu0
        %v1680 = vadd.f32 0.0, %v1679
        %v1681 = vpop.f32.mrb[0].mxu0
        %1682 = vmatprep.mubr.bf16.mxu0 %v745
        %1683 = vmatmul.mubr.bf16.gmra.mrb[0].mxu0 %v744
        %v1684 = vpop.f32.mrb[0].mxu0
        %v1685 = vadd.f32 0.0, %v1684
        %v1686 = vpop.f32.mrb[0].mxu0
        %v1687 = vpop.f32.mrb[0].mxu0
        %v1688 = vadd.f32 0.0, %v1687
        %v1689 = vpop.f32.mrb[0].mxu0
        %1690 = vmatprep.mubr.bf16.mxu0 %v748
        %1691 = vmatmul.mubr.bf16.gmra.mrb[0].mxu0 %v747
        %v1692 = vpop.f32.mrb[0].mxu0
        %v1693 = vadd.f32 0.0, %v1692
        %v1694 = vpop.f32.mrb[0].mxu0
        %v1695 = vpop.f32.mrb[0].mxu0
        %v1696 = vadd.f32 0.0, %v1695
        %v1697 = vpop.f32.mrb[0].mxu0
        %1698 = vmatprep.mubr.bf16.mxu0 %v751
        %1699 = vmatmul.mubr.bf16.gmra.mrb[0].mxu0 %v750
        %v1700 = vpop.f32.mrb[0].mxu0
        %v1701 = vadd.f32 0.0, %v1700
        %v1702 = vpop.f32.mrb[0].mxu0
        %v1703 = vpop.f32.mrb[0].mxu0
        %v1704 = vadd.f32 0.0, %v1703
        %v1705 = vpop.f32.mrb[0].mxu0
        %1706 = vmatprep.mubr.bf16.mxu0 %v754
        %1707 = vmatmul.mubr.bf16.gmra.mrb[0].mxu0 %v753
        %v1708 = vpop.f32.mrb[0].mxu0
        %v1709 = vadd.f32 0.0, %v1708
        %v1710 = vpop.f32.mrb[0].mxu0
        %v1711 = vpop.f32.mrb[0].mxu0
        %v1712 = vadd.f32 0.0, %v1711
        %v1713 = vpop.f32.mrb[0].mxu0
        %1714 = vmatprep.mubr.bf16.mxu0 %v757
        %1715 = vmatmul.mubr.bf16.gmra.mrb[0].mxu0 %v756
        %v1716 = vpop.f32.mrb[0].mxu0
        %v1717 = vadd.f32 0.0, %v1716
        %v1718 = vpop.f32.mrb[0].mxu0
        %v1719 = vpop.f32.mrb[0].mxu0
        %v1720 = vadd.f32 0.0, %v1719
        %v1721 = vpop.f32.mrb[0].mxu0
        %1722 = vmatprep.mubr.bf16.mxu0 %v760
        %1723 = vmatmul.mubr.bf16.gmra.mrb[0].mxu0 %v759
        %v1724 = vpop.f32.mrb[0].mxu0
        %v1725 = vadd.f32 0.0, %v1724
        %v1726 = vpop.f32.mrb[0].mxu0
        %v1727 = vpop.f32.mrb[0].mxu0
        %v1728 = vadd.f32 0.0, %v1727
        %v1729 = vpop.f32.mrb[0].mxu0
        %1730 = vmatprep.mubr.bf16.mxu0 %v763
        %1731 = vmatmul.mubr.bf16.gmra.mrb[0].mxu0 %v762
        %v1732 = vpop.f32.mrb[0].mxu0
        %v1733 = vadd.f32 0.0, %v1732
        %v1734 = vpop.f32.mrb[0].mxu0
        %v1735 = vpop.f32.mrb[0].mxu0
        %v1736 = vadd.f32 0.0, %v1735
        %v1737 = vpop.f32.mrb[0].mxu0
        %1738 = vmatprep.mubr.bf16.mxu0 %v766
        %1739 = vmatmul.mubr.bf16.gmra.mrb[0].mxu0 %v765
        %v1740 = vpop.f32.mrb[0].mxu0
        %v1741 = vadd.f32 0.0, %v1740
        %v1742 = vpop.f32.mrb[0].mxu0
        %v1743 = vpop.f32.mrb[0].mxu0
        %v1744 = vadd.f32 0.0, %v1743
        %v1745 = vpop.f32.mrb[0].mxu0
        %1746 = vdwg.mxu0
        %1747 = vmatprep.subr.bf16.mxu0 0
        %1748 = vmatpush1.bf16.msra.mxu0 %v1106
        %1749 = vmatprep.subr.bf16.mxu0 0
        %1750 = vmatpush1.bf16.msra.mxu0 %v1109
        %1751 = vmatprep.subr.bf16.mxu0 0
        %1752 = vmatpush1.bf16.msra.mxu0 %v1112
        %1753 = vmatprep.subr.bf16.mxu0 0
        %1754 = vmatpush1.bf16.msra.mxu0 %v1115
        %1755 = vmatprep.subr.bf16.mxu0 0
        %1756 = vmatpush1.bf16.msra.mxu0 %v1118
        %1757 = vmatprep.subr.bf16.mxu0 0
        %1758 = vmatpush1.bf16.msra.mxu0 %v1121
        %1759 = vmatprep.subr.bf16.mxu0 0
        %1760 = vmatpush1.bf16.msra.mxu0 %v1124
        %1761 = vmatprep.subr.bf16.mxu0 0
        %1762 = vmatpush1.bf16.msra.mxu0 %v1127
        %1763 = vmatprep.subr.bf16.mxu0 0
        %1764 = vmatpush1.bf16.msra.mxu0 0
        %1765 = vmatprep.subr.bf16.mxu0 0
        %1766 = vmatpush1.bf16.msra.mxu0 0
        %1767 = vmatprep.subr.bf16.mxu0 0
        %1768 = vmatpush1.bf16.msra.mxu0 0
        %1769 = vmatprep.subr.bf16.mxu0 0
        %1770 = vmatpush1.bf16.msra.mxu0 0
        %1771 = vmatprep.subr.bf16.mxu0 0
        %1772 = vmatpush1.bf16.msra.mxu0 0
        %1773 = vmatprep.subr.bf16.mxu0 0
        %1774 = vmatpush1.bf16.msra.mxu0 0
        %1775 = vmatprep.subr.bf16.mxu0 0
        %1776 = vmatpush1.bf16.msra.mxu0 0
        %1777 = vmatprep.subr.bf16.mxu0 0
        %1778 = vmatpush1.bf16.msra.mxu0 0
        %1779 = vmatprep.mubr.bf16.mxu0 0
        %1780 = vmatmul.mubr.bf16.gmra.mrb[0].mxu0 %v722
        %v1781 = vpop.f32.mrb[0].mxu0
        %v1782 = vadd.f32 %v1621, %v1781
        %v1783 = vpop.f32.mrb[0].mxu0
        %v1784 = vpop.f32.mrb[0].mxu0
        %v1785 = vadd.f32 %v1624, %v1784
        %v1786 = vpop.f32.mrb[0].mxu0
        %1787 = vmatprep.mubr.bf16.mxu0 0
        %1788 = vmatmul.mubr.bf16.gmra.mrb[0].mxu0 %v725
        %v1789 = vpop.f32.mrb[0].mxu0
        %v1790 = vadd.f32 %v1629, %v1789
        %v1791 = vpop.f32.mrb[0].mxu0
        %v1792 = vpop.f32.mrb[0].mxu0
        %v1793 = vadd.f32 %v1632, %v1792
        %v1794 = vpop.f32.mrb[0].mxu0
        %1795 = vmatprep.mubr.bf16.mxu0 0
        %1796 = vmatmul.mubr.bf16.gmra.mrb[0].mxu0 %v728
        %v1797 = vpop.f32.mrb[0].mxu0
        %v1798 = vadd.f32 %v1637, %v1797
        %v1799 = vpop.f32.mrb[0].mxu0
        %v1800 = vpop.f32.mrb[0].mxu0
        %v1801 = vadd.f32 %v1640, %v1800
        %v1802 = vpop.f32.mrb[0].mxu0
        %1803 = vmatprep.mubr.bf16.mxu0 0
        %1804 = vmatmul.mubr.bf16.gmra.mrb[0].mxu0 %v731
        %v1805 = vpop.f32.mrb[0].mxu0
        %v1806 = vadd.f32 %v1645, %v1805
        %v1807 = vpop.f32.mrb[0].mxu0
        %v1808 = vpop.f32.mrb[0].mxu0
        %v1809 = vadd.f32 %v1648, %v1808
        %v1810 = vpop.f32.mrb[0].mxu0
        %1811 = vmatprep.mubr.bf16.mxu0 0
        %1812 = vmatmul.mubr.bf16.gmra.mrb[0].mxu0 %v734
        %v1813 = vpop.f32.mrb[0].mxu0
        %v1814 = vadd.f32 %v1653, %v1813
        %v1815 = vpop.f32.mrb[0].mxu0
        %v1816 = vpop.f32.mrb[0].mxu0
        %v1817 = vadd.f32 %v1656, %v1816
        %v1818 = vpop.f32.mrb[0].mxu0
        %1819 = vmatprep.mubr.bf16.mxu0 0
        %1820 = vmatmul.mubr.bf16.gmra.mrb[0].mxu0 %v737
        %v1821 = vpop.f32.mrb[0].mxu0
        %v1822 = vadd.f32 %v1661, %v1821
        %v1823 = vpop.f32.mrb[0].mxu0
        %v1824 = vpop.f32.mrb[0].mxu0
        %v1825 = vadd.f32 %v1664, %v1824
        %v1826 = vpop.f32.mrb[0].mxu0
        %1827 = vmatprep.mubr.bf16.mxu0 0
        %1828 = vmatmul.mubr.bf16.gmra.mrb[0].mxu0 %v740
        %v1829 = vpop.f32.mrb[0].mxu0
        %v1830 = vadd.f32 %v1669, %v1829
        %v1831 = vpop.f32.mrb[0].mxu0
        %v1832 = vpop.f32.mrb[0].mxu0
        %v1833 = vadd.f32 %v1672, %v1832
        %v1834 = vpop.f32.mrb[0].mxu0
        %1835 = vmatprep.mubr.bf16.mxu0 0
        %1836 = vmatmul.mubr.bf16.gmra.mrb[0].mxu0 %v743
        %v1837 = vpop.f32.mrb[0].mxu0
        %v1838 = vadd.f32 %v1677, %v1837
        %v1839 = vpop.f32.mrb[0].mxu0
        %v1840 = vpop.f32.mrb[0].mxu0
        %v1841 = vadd.f32 %v1680, %v1840
        %v1842 = vpop.f32.mrb[0].mxu0
        %1843 = vmatprep.mubr.bf16.mxu0 0
        %1844 = vmatmul.mubr.bf16.gmra.mrb[0].mxu0 %v746
        %v1845 = vpop.f32.mrb[0].mxu0
        %v1846 = vadd.f32 %v1685, %v1845
        %v1847 = vpop.f32.mrb[0].mxu0
        %v1848 = vpop.f32.mrb[0].mxu0
        %v1849 = vadd.f32 %v1688, %v1848
        %v1850 = vpop.f32.mrb[0].mxu0
        %1851 = vmatprep.mubr.bf16.mxu0 0
        %1852 = vmatmul.mubr.bf16.gmra.mrb[0].mxu0 %v749
        %v1853 = vpop.f32.mrb[0].mxu0
        %v1854 = vadd.f32 %v1693, %v1853
        %v1855 = vpop.f32.mrb[0].mxu0
        %v1856 = vpop.f32.mrb[0].mxu0
        %v1857 = vadd.f32 %v1696, %v1856
        %v1858 = vpop.f32.mrb[0].mxu0
        %1859 = vmatprep.mubr.bf16.mxu0 0
        %1860 = vmatmul.mubr.bf16.gmra.mrb[0].mxu0 %v752
        %v1861 = vpop.f32.mrb[0].mxu0
        %v1862 = vadd.f32 %v1701, %v1861
        %v1863 = vpop.f32.mrb[0].mxu0
        %v1864 = vpop.f32.mrb[0].mxu0
        %v1865 = vadd.f32 %v1704, %v1864
        %v1866 = vpop.f32.mrb[0].mxu0
        %1867 = vmatprep.mubr.bf16.mxu0 0
        %1868 = vmatmul.mubr.bf16.gmra.mrb[0].mxu0 %v755
        %v1869 = vpop.f32.mrb[0].mxu0
        %v1870 = vadd.f32 %v1709, %v1869
        %v1871 = vpop.f32.mrb[0].mxu0
        %v1872 = vpop.f32.mrb[0].mxu0
        %v1873 = vadd.f32 %v1712, %v1872
        %v1874 = vpop.f32.mrb[0].mxu0
        %1875 = vmatprep.mubr.bf16.mxu0 0
        %1876 = vmatmul.mubr.bf16.gmra.mrb[0].mxu0 %v758
        %v1877 = vpop.f32.mrb[0].mxu0
        %v1878 = vadd.f32 %v1717, %v1877
        %v1879 = vpop.f32.mrb[0].mxu0
        %v1880 = vpop.f32.mrb[0].mxu0
        %v1881 = vadd.f32 %v1720, %v1880
        %v1882 = vpop.f32.mrb[0].mxu0
        %1883 = vmatprep.mubr.bf16.mxu0 0
        %1884 = vmatmul.mubr.bf16.gmra.mrb[0].mxu0 %v761
        %v1885 = vpop.f32.mrb[0].mxu0
        %v1886 = vadd.f32 %v1725, %v1885
        %v1887 = vpop.f32.mrb[0].mxu0
        %v1888 = vpop.f32.mrb[0].mxu0
        %v1889 = vadd.f32 %v1728, %v1888
        %v1890 = vpop.f32.mrb[0].mxu0
        %1891 = vmatprep.mubr.bf16.mxu0 0
        %1892 = vmatmul.mubr.bf16.gmra.mrb[0].mxu0 %v764
        %v1893 = vpop.f32.mrb[0].mxu0
        %v1894 = vadd.f32 %v1733, %v1893
        %v1895 = vpop.f32.mrb[0].mxu0
        %v1896 = vpop.f32.mrb[0].mxu0
        %v1897 = vadd.f32 %v1736, %v1896
        %v1898 = vpop.f32.mrb[0].mxu0
        %1899 = vmatprep.mubr.bf16.mxu0 0
        %1900 = vmatmul.mubr.bf16.gmra.mrb[0].mxu0 %v767
        %v1901 = vpop.f32.mrb[0].mxu0
        %v1902 = vadd.f32 %v1741, %v1901
        %v1903 = vpop.f32.mrb[0].mxu0
        %v1904 = vpop.f32.mrb[0].mxu0
        %v1905 = vadd.f32 %v1744, %v1904
        %v1906 = vpop.f32.mrb[0].mxu0
        %1907 = vdwg.mxu0
        %v1908 = vpack.c.bf16 %v1432, %v1428
        %v1909 = vpack.c.bf16 %v1434, %v1430
        %v1910 = vpack.c.bf16 %v1785, %v1782
        %v1911 = vpack.c.bf16 %v1442, %v1438
        %v1912 = vpack.c.bf16 %v1444, %v1440
        %v1913 = vpack.c.bf16 %v1793, %v1790
        %v1914 = vpack.c.bf16 %v1452, %v1448
        %v1915 = vpack.c.bf16 %v1454, %v1450
        %v1916 = vpack.c.bf16 %v1801, %v1798
        %v1917 = vpack.c.bf16 %v1462, %v1458
        %v1918 = vpack.c.bf16 %v1464, %v1460
        %v1919 = vpack.c.bf16 %v1809, %v1806
        %v1920 = vpack.c.bf16 %v1472, %v1468
        %v1921 = vpack.c.bf16 %v1474, %v1470
        %v1922 = vpack.c.bf16 %v1817, %v1814
        %v1923 = vpack.c.bf16 %v1482, %v1478
        %v1924 = vpack.c.bf16 %v1484, %v1480
        %v1925 = vpack.c.bf16 %v1825, %v1822
        %v1926 = vpack.c.bf16 %v1492, %v1488
        %v1927 = vpack.c.bf16 %v1494, %v1490
        %v1928 = vpack.c.bf16 %v1833, %v1830
        %v1929 = vpack.c.bf16 %v1502, %v1498
        %v1930 = vpack.c.bf16 %v1504, %v1500
        %v1931 = vpack.c.bf16 %v1841, %v1838
        %v1932 = vpack.c.bf16 %v1512, %v1508
        %v1933 = vpack.c.bf16 %v1514, %v1510
        %v1934 = vpack.c.bf16 %v1849, %v1846
        %v1935 = vpack.c.bf16 %v1522, %v1518
        %v1936 = vpack.c.bf16 %v1524, %v1520
        %v1937 = vpack.c.bf16 %v1857, %v1854
        %v1938 = vpack.c.bf16 %v1532, %v1528
        %v1939 = vpack.c.bf16 %v1534, %v1530
        %v1940 = vpack.c.bf16 %v1865, %v1862
        %v1941 = vpack.c.bf16 %v1542, %v1538
        %v1942 = vpack.c.bf16 %v1544, %v1540
        %v1943 = vpack.c.bf16 %v1873, %v1870
        %v1944 = vpack.c.bf16 %v1552, %v1548
        %v1945 = vpack.c.bf16 %v1554, %v1550
        %v1946 = vpack.c.bf16 %v1881, %v1878
        %v1947 = vpack.c.bf16 %v1562, %v1558
        %v1948 = vpack.c.bf16 %v1564, %v1560
        %v1949 = vpack.c.bf16 %v1889, %v1886
        %v1950 = vpack.c.bf16 %v1572, %v1568
        %v1951 = vpack.c.bf16 %v1574, %v1570
        %v1952 = vpack.c.bf16 %v1897, %v1894
        %v1953 = vpack.c.bf16 %v1582, %v1578
        %v1954 = vpack.c.bf16 %v1584, %v1580
        %v1955 = vpack.c.bf16 %v1905, %v1902
        %v2004 = vunpack.c.l.b16 %v1908
        %v2005 = vunpack.c.l.b16 %v1909
        %v2006 = vunpack.c.l.b16 %v1910
        %v2007 = vunpack.c.h.b16 %v1908
        %v2008 = vunpack.c.h.b16 %v1909
        %v2009 = vunpack.c.h.b16 %v1910
        %v2010 = vunpack.c.l.b16 %v1911
        %v2011 = vunpack.c.l.b16 %v1912
        %v2012 = vunpack.c.l.b16 %v1913
        %v2013 = vunpack.c.h.b16 %v1911
        %v2014 = vunpack.c.h.b16 %v1912
        %v2015 = vunpack.c.h.b16 %v1913
        %v2016 = vunpack.c.l.b16 %v1914
        %v2017 = vunpack.c.l.b16 %v1915
        %v2018 = vunpack.c.l.b16 %v1916
        %v2019 = vunpack.c.h.b16 %v1914
        %v2020 = vunpack.c.h.b16 %v1915
        %v2021 = vunpack.c.h.b16 %v1916
        %v2022 = vunpack.c.l.b16 %v1917
        %v2023 = vunpack.c.l.b16 %v1918
        %v2024 = vunpack.c.l.b16 %v1919
        %v2025 = vunpack.c.h.b16 %v1917
        %v2026 = vunpack.c.h.b16 %v1918
        %v2027 = vunpack.c.h.b16 %v1919
        %v2028 = vunpack.c.l.b16 %v1920
        %v2029 = vunpack.c.l.b16 %v1921
        %v2030 = vunpack.c.l.b16 %v1922
        %v2031 = vunpack.c.h.b16 %v1920
        %v2032 = vunpack.c.h.b16 %v1921
        %v2033 = vunpack.c.h.b16 %v1922
        %v2034 = vunpack.c.l.b16 %v1923
        %v2035 = vunpack.c.l.b16 %v1924
        %v2036 = vunpack.c.l.b16 %v1925
        %v2037 = vunpack.c.h.b16 %v1923
        %v2038 = vunpack.c.h.b16 %v1924
        %v2039 = vunpack.c.h.b16 %v1925
        %v2040 = vunpack.c.l.b16 %v1926
        %v2041 = vunpack.c.l.b16 %v1927
        %v2042 = vunpack.c.l.b16 %v1928
        %v2043 = vunpack.c.h.b16 %v1926
        %v2044 = vunpack.c.h.b16 %v1927
        %v2045 = vunpack.c.h.b16 %v1928
        %v2046 = vunpack.c.l.b16 %v1929
        %v2047 = vunpack.c.l.b16 %v1930
        %v2048 = vunpack.c.l.b16 %v1931
        %v2049 = vunpack.c.h.b16 %v1929
        %v2050 = vunpack.c.h.b16 %v1930
        %v2051 = vunpack.c.h.b16 %v1931
        %v2052 = vunpack.c.l.b16 %v1932
        %v2053 = vunpack.c.l.b16 %v1933
        %v2054 = vunpack.c.l.b16 %v1934
        %v2055 = vunpack.c.h.b16 %v1932
        %v2056 = vunpack.c.h.b16 %v1933
        %v2057 = vunpack.c.h.b16 %v1934
        %v2058 = vunpack.c.l.b16 %v1935
        %v2059 = vunpack.c.l.b16 %v1936
        %v2060 = vunpack.c.l.b16 %v1937
        %v2061 = vunpack.c.h.b16 %v1935
        %v2062 = vunpack.c.h.b16 %v1936
        %v2063 = vunpack.c.h.b16 %v1937
        %v2064 = vunpack.c.l.b16 %v1938
        %v2065 = vunpack.c.l.b16 %v1939
        %v2066 = vunpack.c.l.b16 %v1940
        %v2067 = vunpack.c.h.b16 %v1938
        %v2068 = vunpack.c.h.b16 %v1939
        %v2069 = vunpack.c.h.b16 %v1940
        %v2070 = vunpack.c.l.b16 %v1941
        %v2071 = vunpack.c.l.b16 %v1942
        %v2072 = vunpack.c.l.b16 %v1943
        %v2073 = vunpack.c.h.b16 %v1941
        %v2074 = vunpack.c.h.b16 %v1942
        %v2075 = vunpack.c.h.b16 %v1943
        %v2076 = vunpack.c.l.b16 %v1944
        %v2077 = vunpack.c.l.b16 %v1945
        %v2078 = vunpack.c.l.b16 %v1946
        %v2079 = vunpack.c.h.b16 %v1944
        %v2080 = vunpack.c.h.b16 %v1945
        %v2081 = vunpack.c.h.b16 %v1946
        %v2082 = vunpack.c.l.b16 %v1947
        %v2083 = vunpack.c.l.b16 %v1948
        %v2084 = vunpack.c.l.b16 %v1949
        %v2085 = vunpack.c.h.b16 %v1947
        %v2086 = vunpack.c.h.b16 %v1948
        %v2087 = vunpack.c.h.b16 %v1949
        %v2088 = vunpack.c.l.b16 %v1950
        %v2089 = vunpack.c.l.b16 %v1951
        %v2090 = vunpack.c.l.b16 %v1952
        %v2091 = vunpack.c.h.b16 %v1950
        %v2092 = vunpack.c.h.b16 %v1951
        %v2093 = vunpack.c.h.b16 %v1952
        %v2094 = vunpack.c.l.b16 %v1953
        %v2095 = vunpack.c.l.b16 %v1954
        %v2096 = vunpack.c.l.b16 %v1955
        %v2097 = vunpack.c.h.b16 %v1953
        %v2098 = vunpack.c.h.b16 %v1954
        %v2099 = vunpack.c.h.b16 %v1955
        %v2100 = vpack.c.b16 %v2005, %v2004
        %v2101 = vpack.c.b16 %v2006, %v2006
        %v2102 = vpack.c.b16 %v2008, %v2007
        %v2103 = vpack.c.b16 %v2009, %v2009
        %v2104 = vpack.c.b16 %v2011, %v2010
        %v2105 = vpack.c.b16 %v2012, %v2012
        %v2106 = vpack.c.b16 %v2014, %v2013
        %v2107 = vpack.c.b16 %v2015, %v2015
        %v2108 = vpack.c.b16 %v2017, %v2016
        %v2109 = vpack.c.b16 %v2018, %v2018
        %v2110 = vpack.c.b16 %v2020, %v2019
        %v2111 = vpack.c.b16 %v2021, %v2021
        %v2112 = vpack.c.b16 %v2023, %v2022
        %v2113 = vpack.c.b16 %v2024, %v2024
        %v2114 = vpack.c.b16 %v2026, %v2025
        %v2115 = vpack.c.b16 %v2027, %v2027
        %v2116 = vpack.c.b16 %v2029, %v2028
        %v2117 = vpack.c.b16 %v2030, %v2030
        %v2118 = vpack.c.b16 %v2032, %v2031
        %v2119 = vpack.c.b16 %v2033, %v2033
        %v2120 = vpack.c.b16 %v2035, %v2034
        %v2121 = vpack.c.b16 %v2036, %v2036
        %v2122 = vpack.c.b16 %v2038, %v2037
        %v2123 = vpack.c.b16 %v2039, %v2039
        %v2124 = vpack.c.b16 %v2041, %v2040
        %v2125 = vpack.c.b16 %v2042, %v2042
        %v2126 = vpack.c.b16 %v2044, %v2043
        %v2127 = vpack.c.b16 %v2045, %v2045
        %v2128 = vpack.c.b16 %v2047, %v2046
        %v2129 = vpack.c.b16 %v2048, %v2048
        %v2130 = vpack.c.b16 %v2050, %v2049
        %v2131 = vpack.c.b16 %v2051, %v2051
        %v2132 = vpack.c.b16 %v2053, %v2052
        %v2133 = vpack.c.b16 %v2054, %v2054
        %v2134 = vpack.c.b16 %v2056, %v2055
        %v2135 = vpack.c.b16 %v2057, %v2057
        %v2136 = vpack.c.b16 %v2059, %v2058
        %v2137 = vpack.c.b16 %v2060, %v2060
        %v2138 = vpack.c.b16 %v2062, %v2061
        %v2139 = vpack.c.b16 %v2063, %v2063
        %v2140 = vpack.c.b16 %v2065, %v2064
        %v2141 = vpack.c.b16 %v2066, %v2066
        %v2142 = vpack.c.b16 %v2068, %v2067
        %v2143 = vpack.c.b16 %v2069, %v2069
        %v2144 = vpack.c.b16 %v2071, %v2070
        %v2145 = vpack.c.b16 %v2072, %v2072
        %v2146 = vpack.c.b16 %v2074, %v2073
        %v2147 = vpack.c.b16 %v2075, %v2075
        %v2148 = vpack.c.b16 %v2077, %v2076
        %v2149 = vpack.c.b16 %v2078, %v2078
        %v2150 = vpack.c.b16 %v2080, %v2079
        %v2151 = vpack.c.b16 %v2081, %v2081
        %v2152 = vpack.c.b16 %v2083, %v2082
        %v2153 = vpack.c.b16 %v2084, %v2084
        %v2154 = vpack.c.b16 %v2086, %v2085
        %v2155 = vpack.c.b16 %v2087, %v2087
        %v2156 = vpack.c.b16 %v2089, %v2088
        %v2157 = vpack.c.b16 %v2090, %v2090
        %v2158 = vpack.c.b16 %v2092, %v2091
        %v2159 = vpack.c.b16 %v2093, %v2093
        %v2160 = vpack.c.b16 %v2095, %v2094
        %v2161 = vpack.c.b16 %v2096, %v2096
        %v2162 = vpack.c.b16 %v2098, %v2097
        %v2163 = vpack.c.b16 %v2099, %v2099
        %2228 = vst [vmem:[%s388] sm:$0xff] %v2100
        %2229 = vst [vmem:[%s388 + $0x8] sm:$0xf] %v2101
        %2230 = vst [vmem:[%s388 + $0xc] sm:$0xff] %v2102
        %2231 = vst [vmem:[%s388 + $0x14] sm:$0xf] %v2103
        %2232 = vst [vmem:[%s388 + $0x18] sm:$0xff] %v2104
        %2233 = vst [vmem:[%s388 + $0x20] sm:$0xf] %v2105
        %2234 = vst [vmem:[%s388 + $0x24] sm:$0xff] %v2106
        %2235 = vst [vmem:[%s388 + $0x2c] sm:$0xf] %v2107
        %2236 = vst [vmem:[%s388 + $0x30] sm:$0xff] %v2108
        %2237 = vst [vmem:[%s388 + $0x38] sm:$0xf] %v2109
        %2238 = vst [vmem:[%s388 + $0x3c] sm:$0xff] %v2110
        %2239 = vst [vmem:[%s388 + $0x44] sm:$0xf] %v2111
        %2240 = vst [vmem:[%s388 + $0x48] sm:$0xff] %v2112
        %2241 = vst [vmem:[%s388 + $0x50] sm:$0xf] %v2113
        %2242 = vst [vmem:[%s388 + $0x54] sm:$0xff] %v2114
        %2243 = vst [vmem:[%s388 + $0x5c] sm:$0xf] %v2115
        %2244 = vst [vmem:[%s388 + $0x60] sm:$0xff] %v2116
        %2245 = vst [vmem:[%s388 + $0x68] sm:$0xf] %v2117
        %2246 = vst [vmem:[%s388 + $0x6c] sm:$0xff] %v2118
        %2247 = vst [vmem:[%s388 + $0x74] sm:$0xf] %v2119
        %2248 = vst [vmem:[%s388 + $0x78] sm:$0xff] %v2120
        %2249 = vst [vmem:[%s388 + $0x80] sm:$0xf] %v2121
        %2250 = vst [vmem:[%s388 + $0x84] sm:$0xff] %v2122
        %2251 = vst [vmem:[%s388 + $0x8c] sm:$0xf] %v2123
        %2252 = vst [vmem:[%s388 + $0x90] sm:$0xff] %v2124
        %2253 = vst [vmem:[%s388 + $0x98] sm:$0xf] %v2125
        %2254 = vst [vmem:[%s388 + $0x9c] sm:$0xff] %v2126
        %2255 = vst [vmem:[%s388 + $0xa4] sm:$0xf] %v2127
        %2256 = vst [vmem:[%s388 + $0xa8] sm:$0xff] %v2128
        %2257 = vst [vmem:[%s388 + $0xb0] sm:$0xf] %v2129
        %2258 = vst [vmem:[%s388 + $0xb4] sm:$0xff] %v2130
        %2259 = vst [vmem:[%s388 + $0xbc] sm:$0xf] %v2131
        %2260 = vst [vmem:[%s388 + $0xc0] sm:$0xff] %v2132
        %2261 = vst [vmem:[%s388 + $0xc8] sm:$0xf] %v2133
        %2262 = vst [vmem:[%s388 + $0xcc] sm:$0xff] %v2134
        %2263 = vst [vmem:[%s388 + $0xd4] sm:$0xf] %v2135
        %2264 = vst [vmem:[%s388 + $0xd8] sm:$0xff] %v2136
        %2265 = vst [vmem:[%s388 + $0xe0] sm:$0xf] %v2137
        %2266 = vst [vmem:[%s388 + $0xe4] sm:$0xff] %v2138
        %2267 = vst [vmem:[%s388 + $0xec] sm:$0xf] %v2139
        %2268 = vst [vmem:[%s388 + $0xf0] sm:$0xff] %v2140
        %2269 = vst [vmem:[%s388 + $0xf8] sm:$0xf] %v2141
        %2270 = vst [vmem:[%s388 + $0xfc] sm:$0xff] %v2142
        %2271 = vst [vmem:[%s388 + $0x104] sm:$0xf] %v2143
        %2272 = vst [vmem:[%s388 + $0x108] sm:$0xff] %v2144
        %2273 = vst [vmem:[%s388 + $0x110] sm:$0xf] %v2145
        %2274 = vst [vmem:[%s388 + $0x114] sm:$0xff] %v2146
        %2275 = vst [vmem:[%s388 + $0x11c] sm:$0xf] %v2147
        %2276 = vst [vmem:[%s388 + $0x120] sm:$0xff] %v2148
        %2277 = vst [vmem:[%s388 + $0x128] sm:$0xf] %v2149
        %2278 = vst [vmem:[%s388 + $0x12c] sm:$0xff] %v2150
        %2279 = vst [vmem:[%s388 + $0x134] sm:$0xf] %v2151
        %2280 = vst [vmem:[%s388 + $0x138] sm:$0xff] %v2152
        %2281 = vst [vmem:[%s388 + $0x140] sm:$0xf] %v2153
        %2282 = vst [vmem:[%s388 + $0x144] sm:$0xff] %v2154
        %2283 = vst [vmem:[%s388 + $0x14c] sm:$0xf] %v2155
        %2284 = vst [vmem:[%s388 + $0x150] sm:$0xff] %v2156
        %2285 = vst [vmem:[%s388 + $0x158] sm:$0xf] %v2157
        %2286 = vst [vmem:[%s388 + $0x15c] sm:$0xff] %v2158
        %2287 = vst [vmem:[%s388 + $0x164] sm:$0xf] %v2159
        %2288 = vst [vmem:[%s388 + $0x168] sm:$0xff] %v2160
        %2289 = vst [vmem:[%s388 + $0x170] sm:$0xf] %v2161
        %2290 = vst [vmem:[%s388 + $0x174] sm:$0xff] %v2162
        %2291 = vst [vmem:[%s388 + $0x17c] sm:$0xf] %v2163
        %s2292 = sand.u32 %s87, 1
        %s2293 = sand.u32 %s87, 1
        %s2294 = smul.addr %s2293, 384
        %s2295 = scalar_lea.vmem [#allocation3], %s2294
        // Predicated region
        $region55: #{multi_head_attention.3} parent=49 // pred_check
          %p2296 = pneg %p97
        $region56: #{multi_head_attention.3} parent=49 // pred_check_branch
          %2298 = sbr.rel (%p2296) target = $region58
        $region57: #{multi_head_attention.3} parent=49 // pred_region
          %s2299 = smul.u32 32, %s17
          %s2300 = smul.u32 3, %s18
          %s2301 = smul.addr %s2299, 9
          %s2302 = sadd.s32 %s2300, %s2301
          %s2303 = smul.addr %s2302, 4
          %s2304 = scalar_lea.vmem %s2, %s2303
          // Predicated region
          $region59: #{multi_head_attention.3} parent=57 // pred_check
            _
          $region60: #{multi_head_attention.3} parent=57 // pred_check_branch
            %2306 = sbr.rel (0) target = $region62
          $region61: #{multi_head_attention.3} parent=57 // pred_region
            // Predicated region
            $region63: #{multi_head_attention.3} parent=61 // pred_check
              _
            $region64: #{multi_head_attention.3} parent=61 // pred_check_branch
              %2308 = sbr.rel (0) target = $region66
            $region65: #{multi_head_attention.3} parent=61 // pred_region
              %s2309 = scalar_lea.vmem %s2295, 8 [#allocation3]
              %s2310 = scalar_lea.vmem %s2304, 8
              loop: start=0, step=1, limit=1
              $region67: #{multi_head_attention.3} parent=65 // loop_pre_header
                _
              $region68: #{multi_head_attention.3} parent=65 // loop_header
                %s2312 = sphi 0, %s2316
                %p2313 = scmp.ge.s32.totalorder %s2312, 1
                %s2317 = sphi %s2295, %s2295
                %s2318 = sphi %s2304, %s2304
              $region69: #{multi_head_attention.3} parent=65 // loop_header_branch
                %2315 = sbr.rel (%p2313) target = $region73
              $region70: #{multi_head_attention.3} parent=65 // loop_body
                %v2319 = vld [vmem:[%s2317] sm:$0xff]
                %2320 = vst [vmem:[%s2318] sm:$0xff] %v2319
                %v2321 = vld [vmem:[%s2317 + $0xc] sm:$0xff]
                %2322 = vst [vmem:[%s2318 + $0x24] sm:$0xff] %v2321
                %v2323 = vld [vmem:[%s2317 + $0x18] sm:$0xff]
                %2324 = vst [vmem:[%s2318 + $0x48] sm:$0xff] %v2323
                %v2325 = vld [vmem:[%s2317 + $0x24] sm:$0xff]
                %2326 = vst [vmem:[%s2318 + $0x6c] sm:$0xff] %v2325
                %v2327 = vld [vmem:[%s2317 + $0x30] sm:$0xff]
                %2328 = vst [vmem:[%s2318 + $0x90] sm:$0xff] %v2327
                %v2329 = vld [vmem:[%s2317 + $0x3c] sm:$0xff]
                %2330 = vst [vmem:[%s2318 + $0xb4] sm:$0xff] %v2329
                %v2331 = vld [vmem:[%s2317 + $0x48] sm:$0xff]
                %2332 = vst [vmem:[%s2318 + $0xd8] sm:$0xff] %v2331
                %v2333 = vld [vmem:[%s2317 + $0x54] sm:$0xff]
                %2334 = vst [vmem:[%s2318 + $0xfc] sm:$0xff] %v2333
                %v2335 = vld [vmem:[%s2317 + $0x60] sm:$0xff]
                %2336 = vst [vmem:[%s2318 + $0x120] sm:$0xff] %v2335
                %v2337 = vld [vmem:[%s2317 + $0x6c] sm:$0xff]
                %2338 = vst [vmem:[%s2318 + $0x144] sm:$0xff] %v2337
                %v2339 = vld [vmem:[%s2317 + $0x78] sm:$0xff]
                %2340 = vst [vmem:[%s2318 + $0x168] sm:$0xff] %v2339
                %v2341 = vld [vmem:[%s2317 + $0x84] sm:$0xff]
                %2342 = vst [vmem:[%s2318 + $0x18c] sm:$0xff] %v2341
                %v2343 = vld [vmem:[%s2317 + $0x90] sm:$0xff]
                %2344 = vst [vmem:[%s2318 + $0x1b0] sm:$0xff] %v2343
                %v2345 = vld [vmem:[%s2317 + $0x9c] sm:$0xff]
                %2346 = vst [vmem:[%s2318 + $0x1d4] sm:$0xff] %v2345
                %v2347 = vld [vmem:[%s2317 + $0xa8] sm:$0xff]
                %2348 = vst [vmem:[%s2318 + $0x1f8] sm:$0xff] %v2347
                %v2349 = vld [vmem:[%s2317 + $0xb4] sm:$0xff]
                %2350 = vst [vmem:[%s2318 + $0x21c] sm:$0xff] %v2349
                %v2351 = vld [vmem:[%s2317 + $0xc0] sm:$0xff]
                %2352 = vst [vmem:[%s2318 + $0x240] sm:$0xff] %v2351
                %v2353 = vld [vmem:[%s2317 + $0xcc] sm:$0xff]
                %2354 = vst [vmem:[%s2318 + $0x264] sm:$0xff] %v2353
                %v2355 = vld [vmem:[%s2317 + $0xd8] sm:$0xff]
                %2356 = vst [vmem:[%s2318 + $0x288] sm:$0xff] %v2355
                %v2357 = vld [vmem:[%s2317 + $0xe4] sm:$0xff]
                %2358 = vst [vmem:[%s2318 + $0x2ac] sm:$0xff] %v2357
                %v2359 = vld [vmem:[%s2317 + $0xf0] sm:$0xff]
                %2360 = vst [vmem:[%s2318 + $0x2d0] sm:$0xff] %v2359
                %v2361 = vld [vmem:[%s2317 + $0xfc] sm:$0xff]
                %2362 = vst [vmem:[%s2318 + $0x2f4] sm:$0xff] %v2361
                %v2363 = vld [vmem:[%s2317 + $0x108] sm:$0xff]
                %2364 = vst [vmem:[%s2318 + $0x318] sm:$0xff] %v2363
                %v2365 = vld [vmem:[%s2317 + $0x114] sm:$0xff]
                %2366 = vst [vmem:[%s2318 + $0x33c] sm:$0xff] %v2365
                %v2367 = vld [vmem:[%s2317 + $0x120] sm:$0xff]
                %2368 = vst [vmem:[%s2318 + $0x360] sm:$0xff] %v2367
                %v2369 = vld [vmem:[%s2317 + $0x12c] sm:$0xff]
                %2370 = vst [vmem:[%s2318 + $0x384] sm:$0xff] %v2369
                %v2371 = vld [vmem:[%s2317 + $0x138] sm:$0xff]
                %2372 = vst [vmem:[%s2318 + $0x3a8] sm:$0xff] %v2371
                %v2373 = vld [vmem:[%s2317 + $0x144] sm:$0xff]
                %2374 = vst [vmem:[%s2318 + $0x3cc] sm:$0xff] %v2373
                %v2375 = vld [vmem:[%s2317 + $0x150] sm:$0xff]
                %2376 = vst [vmem:[%s2318 + $0x3f0] sm:$0xff] %v2375
                %v2377 = vld [vmem:[%s2317 + $0x15c] sm:$0xff]
                %2378 = vst [vmem:[%s2318 + $0x414] sm:$0xff] %v2377
                %v2379 = vld [vmem:[%s2317 + $0x168] sm:$0xff]
                %2380 = vst [vmem:[%s2318 + $0x438] sm:$0xff] %v2379
                %v2381 = vld [vmem:[%s2317 + $0x174] sm:$0xff]
                %2382 = vst [vmem:[%s2318 + $0x45c] sm:$0xff] %v2381
              $region71: #{multi_head_attention.3} parent=65 // loop_footer
                %s2316 = sadd.s32 1, %s2312
              $region72: #{multi_head_attention.3} parent=65 // loop_footer_branch
                %2311 = sbr.rel target = $region68
              $region73: #{multi_head_attention.3} parent=65 // loop_exit
                _
              loop: start=0, step=1, limit=1
              $region74: #{multi_head_attention.3} parent=65 // loop_pre_header
                _
              $region75: #{multi_head_attention.3} parent=65 // loop_header
                %s2385 = sphi 0, %s2389
                %p2386 = scmp.ge.s32.totalorder %s2385, 1
                %s2390 = sphi %s2309, %s2309
                %s2391 = sphi %s2310, %s2310
              $region76: #{multi_head_attention.3} parent=65 // loop_header_branch
                %2388 = sbr.rel (%p2386) target = $region80
              $region77: #{multi_head_attention.3} parent=65 // loop_body
                %v2392 = vld [vmem:[%s2390] sm:$0xf]
                %2393 = vst [vmem:[%s2391] sm:$0xf] %v2392
                %v2394 = vld [vmem:[%s2390 + $0xc] sm:$0xf]
                %2395 = vst [vmem:[%s2391 + $0x24] sm:$0xf] %v2394
                %v2396 = vld [vmem:[%s2390 + $0x18] sm:$0xf]
                %2397 = vst [vmem:[%s2391 + $0x48] sm:$0xf] %v2396
                %v2398 = vld [vmem:[%s2390 + $0x24] sm:$0xf]
                %2399 = vst [vmem:[%s2391 + $0x6c] sm:$0xf] %v2398
                %v2400 = vld [vmem:[%s2390 + $0x30] sm:$0xf]
                %2401 = vst [vmem:[%s2391 + $0x90] sm:$0xf] %v2400
                %v2402 = vld [vmem:[%s2390 + $0x3c] sm:$0xf]
                %2403 = vst [vmem:[%s2391 + $0xb4] sm:$0xf] %v2402
                %v2404 = vld [vmem:[%s2390 + $0x48] sm:$0xf]
                %2405 = vst [vmem:[%s2391 + $0xd8] sm:$0xf] %v2404
                %v2406 = vld [vmem:[%s2390 + $0x54] sm:$0xf]
                %2407 = vst [vmem:[%s2391 + $0xfc] sm:$0xf] %v2406
                %v2408 = vld [vmem:[%s2390 + $0x60] sm:$0xf]
                %2409 = vst [vmem:[%s2391 + $0x120] sm:$0xf] %v2408
                %v2410 = vld [vmem:[%s2390 + $0x6c] sm:$0xf]
                %2411 = vst [vmem:[%s2391 + $0x144] sm:$0xf] %v2410
                %v2412 = vld [vmem:[%s2390 + $0x78] sm:$0xf]
                %2413 = vst [vmem:[%s2391 + $0x168] sm:$0xf] %v2412
                %v2414 = vld [vmem:[%s2390 + $0x84] sm:$0xf]
                %2415 = vst [vmem:[%s2391 + $0x18c] sm:$0xf] %v2414
                %v2416 = vld [vmem:[%s2390 + $0x90] sm:$0xf]
                %2417 = vst [vmem:[%s2391 + $0x1b0] sm:$0xf] %v2416
                %v2418 = vld [vmem:[%s2390 + $0x9c] sm:$0xf]
                %2419 = vst [vmem:[%s2391 + $0x1d4] sm:$0xf] %v2418
                %v2420 = vld [vmem:[%s2390 + $0xa8] sm:$0xf]
                %2421 = vst [vmem:[%s2391 + $0x1f8] sm:$0xf] %v2420
                %v2422 = vld [vmem:[%s2390 + $0xb4] sm:$0xf]
                %2423 = vst [vmem:[%s2391 + $0x21c] sm:$0xf] %v2422
                %v2424 = vld [vmem:[%s2390 + $0xc0] sm:$0xf]
                %2425 = vst [vmem:[%s2391 + $0x240] sm:$0xf] %v2424
                %v2426 = vld [vmem:[%s2390 + $0xcc] sm:$0xf]
                %2427 = vst [vmem:[%s2391 + $0x264] sm:$0xf] %v2426
                %v2428 = vld [vmem:[%s2390 + $0xd8] sm:$0xf]
                %2429 = vst [vmem:[%s2391 + $0x288] sm:$0xf] %v2428
                %v2430 = vld [vmem:[%s2390 + $0xe4] sm:$0xf]
                %2431 = vst [vmem:[%s2391 + $0x2ac] sm:$0xf] %v2430
                %v2432 = vld [vmem:[%s2390 + $0xf0] sm:$0xf]
                %2433 = vst [vmem:[%s2391 + $0x2d0] sm:$0xf] %v2432
                %v2434 = vld [vmem:[%s2390 + $0xfc] sm:$0xf]
                %2435 = vst [vmem:[%s2391 + $0x2f4] sm:$0xf] %v2434
                %v2436 = vld [vmem:[%s2390 + $0x108] sm:$0xf]
                %2437 = vst [vmem:[%s2391 + $0x318] sm:$0xf] %v2436
                %v2438 = vld [vmem:[%s2390 + $0x114] sm:$0xf]
                %2439 = vst [vmem:[%s2391 + $0x33c] sm:$0xf] %v2438
                %v2440 = vld [vmem:[%s2390 + $0x120] sm:$0xf]
                %2441 = vst [vmem:[%s2391 + $0x360] sm:$0xf] %v2440
                %v2442 = vld [vmem:[%s2390 + $0x12c] sm:$0xf]
                %2443 = vst [vmem:[%s2391 + $0x384] sm:$0xf] %v2442
                %v2444 = vld [vmem:[%s2390 + $0x138] sm:$0xf]
                %2445 = vst [vmem:[%s2391 + $0x3a8] sm:$0xf] %v2444
                %v2446 = vld [vmem:[%s2390 + $0x144] sm:$0xf]
                %2447 = vst [vmem:[%s2391 + $0x3cc] sm:$0xf] %v2446
                %v2448 = vld [vmem:[%s2390 + $0x150] sm:$0xf]
                %2449 = vst [vmem:[%s2391 + $0x3f0] sm:$0xf] %v2448
                %v2450 = vld [vmem:[%s2390 + $0x15c] sm:$0xf]
                %2451 = vst [vmem:[%s2391 + $0x414] sm:$0xf] %v2450
                %v2452 = vld [vmem:[%s2390 + $0x168] sm:$0xf]
                %2453 = vst [vmem:[%s2391 + $0x438] sm:$0xf] %v2452
                %v2454 = vld [vmem:[%s2390 + $0x174] sm:$0xf]
                %2455 = vst [vmem:[%s2391 + $0x45c] sm:$0xf] %v2454
              $region78: #{multi_head_attention.3} parent=65 // loop_footer
                %s2389 = sadd.s32 1, %s2385
              $region79: #{multi_head_attention.3} parent=65 // loop_footer_branch
                %2384 = sbr.rel target = $region75
              $region80: #{multi_head_attention.3} parent=65 // loop_exit
                _
            $region66: #{multi_head_attention.3} parent=61 // pred_fallthru
              _
          $region62: #{multi_head_attention.3} parent=57 // pred_fallthru
            _
          %2456 = vnop
        $region58: #{multi_head_attention.3} parent=49 // pred_fallthru
          _
      $region50: #{multi_head_attention.3} parent=5 // pred_fallthru
        _
      %p2457 = scmp.le.s32.totalorder 2, %s8
      // Predicated region
      $region81: #{multi_head_attention.3} parent=5 // pred_check
        %p2458 = pneg %p2457
      $region82: #{multi_head_attention.3} parent=5 // pred_check_branch
        %2460 = sbr.rel (%p2458) target = $region84
      $region83: #{multi_head_attention.3} parent=5 // pred_region
        %s2461 = ssub.s32 %s8, 2
        // Predicated region
        $region85: #{multi_head_attention.3} parent=83 // pred_check
          %p2462 = pneg %p103
        $region86: #{multi_head_attention.3} parent=83 // pred_check_branch
          %2464 = sbr.rel (%p2462) target = $region88
        $region87: #{multi_head_attention.3} parent=83 // pred_region
          %s2465 = sand.u32 %s88, 1
          %s2466 = sand.u32 %s88, 1
          %s2467 = smul.addr %s2466, 384
          %s2468 = scalar_lea.vmem [#allocation3], %s2467
        $region88: #{multi_head_attention.3} parent=83 // pred_fallthru
          _
      $region84: #{multi_head_attention.3} parent=5 // pred_fallthru
        _
    $region6: #{multi_head_attention.3} parent=1 // loop_footer
      %s12 = sadd.s32 1, %s8
    $region7: #{multi_head_attention.3} parent=1 // loop_footer_branch
      %7 = sbr.rel target = $region3
    $region8: #{multi_head_attention.3} parent=1 // loop_exit
      _

// kernel: multi_head_attention.5
$region0: #{multi_head_attention.5}
  #allocation0 [shape = 'u32[]', space=smem, size = 0x4, offset = 0x4, fixed_abs, tag = 'smem constant byte address 0x4 - core index']
  #allocation1 [shape = 'u32[144,128]{1,0:T(1,128)}', space=vmem, size = 0x12000, scoped, tag = 'internal scratch']
  %s0 = inlined_call_operand.vmem [shape: bf16[512,384], index: 0, kind: input, shape index: {}]
  %s1 = inlined_call_operand.vmem [shape: bf16[384,384], index: 1, kind: input, shape index: {}]
  %s2 = inlined_call_operand.vmem [shape: f32[1,384], index: 2, kind: input, shape index: {}]
  %s3 = inlined_call_operand.hbm [shape: f32[512,384], index: 3, kind: output, shape index: {}]
  %s4 = sld [smem:[#allocation0]]
  $region45: #{multi_head_attention.5} parent=0
    _
  %s6 = ssub.s32 1, %s4
  %s7 = scalar_select 0, %s6, %s4
  $region1: #{multi_head_attention.5} parent=0
    #allocation2 [shape = 'u8[786432]{0}', space=vmem, size = 0xc0000, scoped, tag = 'output window, operand 0']
    #allocation3 [shape = 's32[2]{0}', space=sflag, size = 0x8, scoped, tag = 'scoped memory for multi_head_attention.5']
    %8 = vsyncpa [#allocation3], 0
    %s9 = scalar_lea.sflag [#allocation3], 1
    %10 = vsyncpa %s9, 0
    loop: start=0, step=1, limit=4
    $region2: #{multi_head_attention.5} parent=1 // loop_pre_header
      _
    $region3: #{multi_head_attention.5} parent=1 // loop_header
      %s12 = sphi 0, %s16
      %p13 = scmp.ge.s32.totalorder %s12, 4
      %s19 = sphi 0, %s31
      %s20 = sphi 0, %s27
      %s21 = sphi 0, %s19
      %s22 = sphi 0, %s20
      %s23 = sphi 0, %s21
      %s24 = sphi 0, %s22
      %s34 = sphi 0, %s36
      %s37 = sphi 0, %s34
      %s38 = sphi 0, %s37
      %s54 = sphi 0, %s38
      %s60 = sphi 0, %s62
      %s63 = sphi 0, %s60
      %s64 = sphi 0, %s63
      %s80 = sphi 0, %s64
      %s86 = sphi 0, %s88
      %s89 = sphi 0, %s86
      %s90 = sphi 0, %s89
      %s106 = sphi 0, %s90
      %s114 = sphi 0, %s116
      %s117 = sphi 0, %s114
      %s118 = sphi 0, %s117
      %s134 = sphi 0, %s118
    $region4: #{multi_head_attention.5} parent=1 // loop_header_branch
      %15 = sbr.rel (%p13) target = $region8
    $region5: #{multi_head_attention.5} parent=1 // loop_body
      %s17 = ssub.s32 %s12, 1
      %s18 = ssub.s32 %s12, 2
      %s25 = sadd.s32 1, %s20
      %p26 = scmp.ge.s32.totalorder %s25, 1
      %s27 = scalar_select %p26, 0, %s25
      %s28 = sadd.s32 1, %s19
      %s29 = scalar_select %p26, %s28, %s19
      %p30 = scmp.ge.s32.totalorder %s29, 2
      %s31 = scalar_select %p30, 0, %s29
      %s32 = ssub.s32 %s19, %s31
      %p33 = scmp.eq.s32.totalorder %s32, 0
      %s35 = sadd.s32 %s34, 1
      %s36 = scalar_select %p33, %s34, %s35
      %p39 = pneg %p33
      %p40 = scmp.eq.s32.totalorder %s12, 1
      %p41 = por %p39, %p40
      %p42 = scmp.ne.s32.totalorder %s34, %s37
      %p43 = scmp.eq.s32.totalorder %s12, 0
      %p44 = por %p42, %p43
      %p45 = scmp.ne.s32.totalorder %s34, %s37
      %p46 = scmp.eq.s32.totalorder %s17, 1
      %p47 = por %p45, %p46
      %p48 = scmp.ne.s32.totalorder %s37, %s38
      %p49 = scmp.eq.s32.totalorder %s17, 0
      %p50 = por %p48, %p49
      %p51 = scmp.ne.s32.totalorder %s37, %s38
      %p52 = scmp.eq.s32.totalorder %s18, 1
      %p53 = por %p51, %p52
      %p55 = scmp.ne.s32.totalorder %s38, %s54
      %p56 = scmp.eq.s32.totalorder %s18, 0
      %p57 = por %p55, %p56
      %s58 = ssub.s32 %s20, %s27
      %p59 = scmp.eq.s32.totalorder %s58, 0
      %s61 = sadd.s32 %s60, 1
      %s62 = scalar_select %p59, %s60, %s61
      %p65 = pneg %p59
      %p66 = scmp.eq.s32.totalorder %s12, 1
      %p67 = por %p65, %p66
      %p68 = scmp.ne.s32.totalorder %s60, %s63
      %p69 = scmp.eq.s32.totalorder %s12, 0
      %p70 = por %p68, %p69
      %p71 = scmp.ne.s32.totalorder %s60, %s63
      %p72 = scmp.eq.s32.totalorder %s17, 1
      %p73 = por %p71, %p72
      %p74 = scmp.ne.s32.totalorder %s63, %s64
      %p75 = scmp.eq.s32.totalorder %s17, 0
      %p76 = por %p74, %p75
      %p77 = scmp.ne.s32.totalorder %s63, %s64
      %p78 = scmp.eq.s32.totalorder %s18, 1
      %p79 = por %p77, %p78
      %p81 = scmp.ne.s32.totalorder %s64, %s80
      %p82 = scmp.eq.s32.totalorder %s18, 0
      %p83 = por %p81, %p82
      %s84 = ssub.s32 %s20, %s27
      %p85 = scmp.eq.s32.totalorder %s84, 0
      %s87 = sadd.s32 %s86, 1
      %s88 = scalar_select %p85, %s86, %s87
      %p91 = pneg %p85
      %p92 = scmp.eq.s32.totalorder %s12, 1
      %p93 = por %p91, %p92
      %p94 = scmp.ne.s32.totalorder %s86, %s89
      %p95 = scmp.eq.s32.totalorder %s12, 0
      %p96 = por %p94, %p95
      %p97 = scmp.ne.s32.totalorder %s86, %s89
      %p98 = scmp.eq.s32.totalorder %s17, 1
      %p99 = por %p97, %p98
      %p100 = scmp.ne.s32.totalorder %s89, %s90
      %p101 = scmp.eq.s32.totalorder %s17, 0
      %p102 = por %p100, %p101
      %p103 = scmp.ne.s32.totalorder %s89, %s90
      %p104 = scmp.eq.s32.totalorder %s18, 1
      %p105 = por %p103, %p104
      %p107 = scmp.ne.s32.totalorder %s90, %s106
      %p108 = scmp.eq.s32.totalorder %s18, 0
      %p109 = por %p107, %p108
      %s110 = ssub.s32 %s19, %s31
      %s111 = ssub.s32 %s20, %s27
      %s112 = sor.u32 %s110, %s111
      %p113 = scmp.eq.s32.totalorder %s112, 0
      %s115 = sadd.s32 %s114, 1
      %s116 = scalar_select %p113, %s114, %s115
      %p119 = pneg %p113
      %p120 = scmp.eq.s32.totalorder %s12, 1
      %p121 = por %p119, %p120
      %p122 = scmp.ne.s32.totalorder %s114, %s117
      %p123 = scmp.eq.s32.totalorder %s12, 0
      %p124 = por %p122, %p123
      %p125 = scmp.ne.s32.totalorder %s114, %s117
      %p126 = scmp.eq.s32.totalorder %s17, 1
      %p127 = por %p125, %p126
      %p128 = scmp.ne.s32.totalorder %s117, %s118
      %p129 = scmp.eq.s32.totalorder %s17, 0
      %p130 = por %p128, %p129
      %p131 = scmp.ne.s32.totalorder %s117, %s118
      %p132 = scmp.eq.s32.totalorder %s18, 1
      %p133 = por %p131, %p132
      %p135 = scmp.ne.s32.totalorder %s118, %s134
      %p136 = scmp.eq.s32.totalorder %s18, 0
      %p137 = por %p135, %p136
      %p138 = scmp.le.s32.totalorder 1, %s12
      %p139 = scmp.lt.s32.totalorder %s12, 3
      %p140 = pnand %p138, %p139
      %p141 = pneg %p140
      // Predicated region
      $region9: #{multi_head_attention.5} parent=5 // pred_check
        _
      $region10: #{multi_head_attention.5} parent=5 // pred_check_branch
        %143 = sbr.rel (%p140) target = $region12
      $region11: #{multi_head_attention.5} parent=5 // pred_region
        %s144 = ssub.s32 %s12, 1
        // Predicated region
        $region13: #{multi_head_attention.5} parent=11 // pred_check
          %p145 = pneg %p76
        $region14: #{multi_head_attention.5} parent=11 // pred_check_branch
          %147 = sbr.rel (%p145) target = $region16
        $region15: #{multi_head_attention.5} parent=11 // pred_region
          %s148 = smul.u32 3, %s22
          %p149 = scmp.lt.s32.totalorder %s148, 2
          %s150 = scalar_select %p149, %s148, 2
          %s151 = smul.addr %s150, 4
          %s152 = scalar_lea.vmem %s1, %s151
          %s153 = smul.u32 3, %s22
        $region16: #{multi_head_attention.5} parent=11 // pred_fallthru
          _
        // Predicated region
        $region17: #{multi_head_attention.5} parent=11 // pred_check
          %p154 = pneg %p102
        $region18: #{multi_head_attention.5} parent=11 // pred_check_branch
          %156 = sbr.rel (%p154) target = $region20
        $region19: #{multi_head_attention.5} parent=11 // pred_region
          %s157 = smul.u32 3, %s22
          %p158 = scmp.lt.s32.totalorder %s157, 2
          %s159 = scalar_select %p158, %s157, 2
          %s160 = scalar_lea.vmem %s2, %s159
          %s161 = smul.u32 3, %s22
        $region20: #{multi_head_attention.5} parent=11 // pred_fallthru
          _
      $region12: #{multi_head_attention.5} parent=5 // pred_fallthru
        _
      %p162 = scmp.lt.s32.totalorder %s12, 2
      // Predicated region
      $region21: #{multi_head_attention.5} parent=5 // pred_check
        %p163 = pneg %p162
      $region22: #{multi_head_attention.5} parent=5 // pred_check_branch
        %165 = sbr.rel (%p163) target = $region24
      $region23: #{multi_head_attention.5} parent=5 // pred_region
        // Predicated region
        $region25: #{multi_head_attention.5} parent=23 // pred_check
          %p166 = pneg %p44
        $region26: #{multi_head_attention.5} parent=23 // pred_check_branch
          %168 = sbr.rel (%p166) target = $region28
        $region27: #{multi_head_attention.5} parent=23 // pred_region
          %s169 = smul.u32 32, %s19
          %p170 = scmp.lt.s32.totalorder %s169, 63
          %s171 = scalar_select %p170, %s169, 63
          %s172 = smul.addr %s171, 3
          %s173 = smul.addr %s172, 4
          %s174 = scalar_lea.vmem %s0, %s173
          %s175 = smul.u32 32, %s19
        $region28: #{multi_head_attention.5} parent=23 // pred_fallthru
          _
      $region24: #{multi_head_attention.5} parent=5 // pred_fallthru
        _
      %p176 = scmp.le.s32.totalorder 1, %s12
      %p177 = scmp.lt.s32.totalorder %s12, 3
      %p178 = pnand %p176, %p177
      %p179 = pneg %p178
      // Predicated region
      $region29: #{multi_head_attention.5} parent=5 // pred_check
        _
      $region30: #{multi_head_attention.5} parent=5 // pred_check_branch
        %181 = sbr.rel (%p178) target = $region32
      $region31: #{multi_head_attention.5} parent=5 // pred_region
        %s182 = ssub.s32 %s12, 1
        %s183 = smul.u32 32, %s21
        %p184 = scmp.lt.s32.totalorder %s183, 63
        %s185 = scalar_select %p184, %s183, 63
        %s186 = smul.addr %s185, 3
        %s187 = smul.addr %s186, 4
        %s188 = scalar_lea.vmem %s0, %s187
        %p189 = pneg %p50
        %p190 = pneg %p47
        %s191 = smul.u32 3, %s22
        %p192 = scmp.lt.s32.totalorder %s191, 2
        %s193 = scalar_select %p192, %s191, 2
        %s194 = smul.addr %s193, 4
        %s195 = scalar_lea.vmem %s1, %s194
        %p196 = pneg %p76
        %p197 = pneg %p73
        %s198 = smul.u32 3, %s22
        %p199 = scmp.lt.s32.totalorder %s198, 2
        %s200 = scalar_select %p199, %s198, 2
        %s201 = scalar_lea.vmem %s2, %s200
        %p202 = pneg %p102
        %p203 = pneg %p99
        %p204 = pneg %p130
        %p205 = pneg %p127
        %s206 = sand.u32 %s117, 1
        %s207 = scalar_lea.sflag [#allocation3], %s206
        %s208 = sand.u32 %s117, 1
        %s209 = smul.addr %s208, 768
        %s210 = scalar_lea.vmem [#allocation2], %s209
        %s211 = smul.u32 32, %s21
        %p212 = scmp.lt.s32.totalorder %s211, 63
        %s213 = scalar_select %p212, %s211, 63
        %s214 = smul.addr %s213, 3
        %s215 = smul.addr %s214, 4
        %s216 = scalar_lea.vmem %s0, %s215
        %s217 = smul.u32 32, %s21
        %s218 = smul.u32 3, %s22
        %p219 = scmp.lt.s32.totalorder %s218, 2
        %s220 = scalar_select %p219, %s218, 2
        %s221 = smul.addr %s220, 4
        %s222 = scalar_lea.vmem %s1, %s221
        %s223 = smul.u32 3, %s22
        %s224 = smul.u32 3, %s22
        %p225 = scmp.lt.s32.totalorder %s224, 2
        %s226 = scalar_select %p225, %s224, 2
        %s227 = scalar_lea.vmem %s2, %s226
        %s228 = smul.u32 3, %s22
        %s229 = smul.u32 32, %s21
        %s230 = smul.u32 3, %s22
        %v232 = vld [vmem:[%s216] sm:$0xff]
        %v233 = vld [vmem:[%s216 + $0x8] sm:$0xf]
        %v234 = vld [vmem:[%s216 + $0xc] sm:$0xff]
        %v235 = vld [vmem:[%s216 + $0x14] sm:$0xf]
        %v236 = vld [vmem:[%s216 + $0x18] sm:$0xff]
        %v237 = vld [vmem:[%s216 + $0x20] sm:$0xf]
        %v238 = vld [vmem:[%s216 + $0x24] sm:$0xff]
        %v239 = vld [vmem:[%s216 + $0x2c] sm:$0xf]
        %v240 = vld [vmem:[%s216 + $0x30] sm:$0xff]
        %v241 = vld [vmem:[%s216 + $0x38] sm:$0xf]
        %v242 = vld [vmem:[%s216 + $0x3c] sm:$0xff]
        %v243 = vld [vmem:[%s216 + $0x44] sm:$0xf]
        %v244 = vld [vmem:[%s216 + $0x48] sm:$0xff]
        %v245 = vld [vmem:[%s216 + $0x50] sm:$0xf]
        %v246 = vld [vmem:[%s216 + $0x54] sm:$0xff]
        %v247 = vld [vmem:[%s216 + $0x5c] sm:$0xf]
        %v248 = vld [vmem:[%s216 + $0x60] sm:$0xff]
        %v249 = vld [vmem:[%s216 + $0x68] sm:$0xf]
        %v250 = vld [vmem:[%s216 + $0x6c] sm:$0xff]
        %v251 = vld [vmem:[%s216 + $0x74] sm:$0xf]
        %v252 = vld [vmem:[%s216 + $0x78] sm:$0xff]
        %v253 = vld [vmem:[%s216 + $0x80] sm:$0xf]
        %v254 = vld [vmem:[%s216 + $0x84] sm:$0xff]
        %v255 = vld [vmem:[%s216 + $0x8c] sm:$0xf]
        %v256 = vld [vmem:[%s216 + $0x90] sm:$0xff]
        %v257 = vld [vmem:[%s216 + $0x98] sm:$0xf]
        %v258 = vld [vmem:[%s216 + $0x9c] sm:$0xff]
        %v259 = vld [vmem:[%s216 + $0xa4] sm:$0xf]
        %v260 = vld [vmem:[%s216 + $0xa8] sm:$0xff]
        %v261 = vld [vmem:[%s216 + $0xb0] sm:$0xf]
        %v262 = vld [vmem:[%s216 + $0xb4] sm:$0xff]
        %v263 = vld [vmem:[%s216 + $0xbc] sm:$0xf]
        %v264 = vld [vmem:[%s216 + $0xc0] sm:$0xff]
        %v265 = vld [vmem:[%s216 + $0xc8] sm:$0xf]
        %v266 = vld [vmem:[%s216 + $0xcc] sm:$0xff]
        %v267 = vld [vmem:[%s216 + $0xd4] sm:$0xf]
        %v268 = vld [vmem:[%s216 + $0xd8] sm:$0xff]
        %v269 = vld [vmem:[%s216 + $0xe0] sm:$0xf]
        %v270 = vld [vmem:[%s216 + $0xe4] sm:$0xff]
        %v271 = vld [vmem:[%s216 + $0xec] sm:$0xf]
        %v272 = vld [vmem:[%s216 + $0xf0] sm:$0xff]
        %v273 = vld [vmem:[%s216 + $0xf8] sm:$0xf]
        %v274 = vld [vmem:[%s216 + $0xfc] sm:$0xff]
        %v275 = vld [vmem:[%s216 + $0x104] sm:$0xf]
        %v276 = vld [vmem:[%s216 + $0x108] sm:$0xff]
        %v277 = vld [vmem:[%s216 + $0x110] sm:$0xf]
        %v278 = vld [vmem:[%s216 + $0x114] sm:$0xff]
        %v279 = vld [vmem:[%s216 + $0x11c] sm:$0xf]
        %v280 = vld [vmem:[%s216 + $0x120] sm:$0xff]
        %v281 = vld [vmem:[%s216 + $0x128] sm:$0xf]
        %v282 = vld [vmem:[%s216 + $0x12c] sm:$0xff]
        %v283 = vld [vmem:[%s216 + $0x134] sm:$0xf]
        %v284 = vld [vmem:[%s216 + $0x138] sm:$0xff]
        %v285 = vld [vmem:[%s216 + $0x140] sm:$0xf]
        %v286 = vld [vmem:[%s216 + $0x144] sm:$0xff]
        %v287 = vld [vmem:[%s216 + $0x14c] sm:$0xf]
        %v288 = vld [vmem:[%s216 + $0x150] sm:$0xff]
        %v289 = vld [vmem:[%s216 + $0x158] sm:$0xf]
        %v290 = vld [vmem:[%s216 + $0x15c] sm:$0xff]
        %v291 = vld [vmem:[%s216 + $0x164] sm:$0xf]
        %v292 = vld [vmem:[%s216 + $0x168] sm:$0xff]
        %v293 = vld [vmem:[%s216 + $0x170] sm:$0xf]
        %v294 = vld [vmem:[%s216 + $0x174] sm:$0xff]
        %v295 = vld [vmem:[%s216 + $0x17c] sm:$0xf]
        %v296 = vld [vmem:[%s222] sm:$0xff]
        %v297 = vld [vmem:[%s222 + $0x8] sm:$0xf]
        %v298 = vld [vmem:[%s222 + $0xc] sm:$0xff]
        %v299 = vld [vmem:[%s222 + $0x14] sm:$0xf]
        %v300 = vld [vmem:[%s222 + $0x18] sm:$0xff]
        %v301 = vld [vmem:[%s222 + $0x20] sm:$0xf]
        %v302 = vld [vmem:[%s222 + $0x24] sm:$0xff]
        %v303 = vld [vmem:[%s222 + $0x2c] sm:$0xf]
        %v304 = vld [vmem:[%s222 + $0x30] sm:$0xff]
        %v305 = vld [vmem:[%s222 + $0x38] sm:$0xf]
        %v306 = vld [vmem:[%s222 + $0x3c] sm:$0xff]
        %v307 = vld [vmem:[%s222 + $0x44] sm:$0xf]
        %v308 = vld [vmem:[%s222 + $0x48] sm:$0xff]
        %v309 = vld [vmem:[%s222 + $0x50] sm:$0xf]
        %v310 = vld [vmem:[%s222 + $0x54] sm:$0xff]
        %v311 = vld [vmem:[%s222 + $0x5c] sm:$0xf]
        %v312 = vld [vmem:[%s222 + $0x60] sm:$0xff]
        %v313 = vld [vmem:[%s222 + $0x68] sm:$0xf]
        %v314 = vld [vmem:[%s222 + $0x6c] sm:$0xff]
        %v315 = vld [vmem:[%s222 + $0x74] sm:$0xf]
        %v316 = vld [vmem:[%s222 + $0x78] sm:$0xff]
        %v317 = vld [vmem:[%s222 + $0x80] sm:$0xf]
        %v318 = vld [vmem:[%s222 + $0x84] sm:$0xff]
        %v319 = vld [vmem:[%s222 + $0x8c] sm:$0xf]
        %v320 = vld [vmem:[%s222 + $0x90] sm:$0xff]
        %v321 = vld [vmem:[%s222 + $0x98] sm:$0xf]
        %v322 = vld [vmem:[%s222 + $0x9c] sm:$0xff]
        %v323 = vld [vmem:[%s222 + $0xa4] sm:$0xf]
        %v324 = vld [vmem:[%s222 + $0xa8] sm:$0xff]
        %v325 = vld [vmem:[%s222 + $0xb0] sm:$0xf]
        %v326 = vld [vmem:[%s222 + $0xb4] sm:$0xff]
        %v327 = vld [vmem:[%s222 + $0xbc] sm:$0xf]
        %v328 = vld [vmem:[%s222 + $0xc0] sm:$0xff]
        %v329 = vld [vmem:[%s222 + $0xc8] sm:$0xf]
        %v330 = vld [vmem:[%s222 + $0xcc] sm:$0xff]
        %v331 = vld [vmem:[%s222 + $0xd4] sm:$0xf]
        %v332 = vld [vmem:[%s222 + $0xd8] sm:$0xff]
        %v333 = vld [vmem:[%s222 + $0xe0] sm:$0xf]
        %v334 = vld [vmem:[%s222 + $0xe4] sm:$0xff]
        %v335 = vld [vmem:[%s222 + $0xec] sm:$0xf]
        %v336 = vld [vmem:[%s222 + $0xf0] sm:$0xff]
        %v337 = vld [vmem:[%s222 + $0xf8] sm:$0xf]
        %v338 = vld [vmem:[%s222 + $0xfc] sm:$0xff]
        %v339 = vld [vmem:[%s222 + $0x104] sm:$0xf]
        %v340 = vld [vmem:[%s222 + $0x108] sm:$0xff]
        %v341 = vld [vmem:[%s222 + $0x110] sm:$0xf]
        %v342 = vld [vmem:[%s222 + $0x114] sm:$0xff]
        %v343 = vld [vmem:[%s222 + $0x11c] sm:$0xf]
        %v344 = vld [vmem:[%s222 + $0x120] sm:$0xff]
        %v345 = vld [vmem:[%s222 + $0x128] sm:$0xf]
        %v346 = vld [vmem:[%s222 + $0x12c] sm:$0xff]
        %v347 = vld [vmem:[%s222 + $0x134] sm:$0xf]
        %v348 = vld [vmem:[%s222 + $0x138] sm:$0xff]
        %v349 = vld [vmem:[%s222 + $0x140] sm:$0xf]
        %v350 = vld [vmem:[%s222 + $0x144] sm:$0xff]
        %v351 = vld [vmem:[%s222 + $0x14c] sm:$0xf]
        %v352 = vld [vmem:[%s222 + $0x150] sm:$0xff]
        %v353 = vld [vmem:[%s222 + $0x158] sm:$0xf]
        %v354 = vld [vmem:[%s222 + $0x15c] sm:$0xff]
        %v355 = vld [vmem:[%s222 + $0x164] sm:$0xf]
        %v356 = vld [vmem:[%s222 + $0x168] sm:$0xff]
        %v357 = vld [vmem:[%s222 + $0x170] sm:$0xf]
        %v358 = vld [vmem:[%s222 + $0x174] sm:$0xff]
        %v359 = vld [vmem:[%s222 + $0x17c] sm:$0xf]
        %v360 = vld [vmem:[%s222 + $0x180] sm:$0xff]
        %v361 = vld [vmem:[%s222 + $0x188] sm:$0xf]
        %v362 = vld [vmem:[%s222 + $0x18c] sm:$0xff]
        %v363 = vld [vmem:[%s222 + $0x194] sm:$0xf]
        %v364 = vld [vmem:[%s222 + $0x198] sm:$0xff]
        %v365 = vld [vmem:[%s222 + $0x1a0] sm:$0xf]
        %v366 = vld [vmem:[%s222 + $0x1a4] sm:$0xff]
        %v367 = vld [vmem:[%s222 + $0x1ac] sm:$0xf]
        %v368 = vld [vmem:[%s222 + $0x1b0] sm:$0xff]
        %v369 = vld [vmem:[%s222 + $0x1b8] sm:$0xf]
        %v370 = vld [vmem:[%s222 + $0x1bc] sm:$0xff]
        %v371 = vld [vmem:[%s222 + $0x1c4] sm:$0xf]
        %v372 = vld [vmem:[%s222 + $0x1c8] sm:$0xff]
        %v373 = vld [vmem:[%s222 + $0x1d0] sm:$0xf]
        %v374 = vld [vmem:[%s222 + $0x1d4] sm:$0xff]
        %v375 = vld [vmem:[%s222 + $0x1dc] sm:$0xf]
        %v376 = vld [vmem:[%s222 + $0x1e0] sm:$0xff]
        %v377 = vld [vmem:[%s222 + $0x1e8] sm:$0xf]
        %v378 = vld [vmem:[%s222 + $0x1ec] sm:$0xff]
        %v379 = vld [vmem:[%s222 + $0x1f4] sm:$0xf]
        %v380 = vld [vmem:[%s222 + $0x1f8] sm:$0xff]
        %v381 = vld [vmem:[%s222 + $0x200] sm:$0xf]
        %v382 = vld [vmem:[%s222 + $0x204] sm:$0xff]
        %v383 = vld [vmem:[%s222 + $0x20c] sm:$0xf]
        %v384 = vld [vmem:[%s222 + $0x210] sm:$0xff]
        %v385 = vld [vmem:[%s222 + $0x218] sm:$0xf]
        %v386 = vld [vmem:[%s222 + $0x21c] sm:$0xff]
        %v387 = vld [vmem:[%s222 + $0x224] sm:$0xf]
        %v388 = vld [vmem:[%s222 + $0x228] sm:$0xff]
        %v389 = vld [vmem:[%s222 + $0x230] sm:$0xf]
        %v390 = vld [vmem:[%s222 + $0x234] sm:$0xff]
        %v391 = vld [vmem:[%s222 + $0x23c] sm:$0xf]
        %v392 = vld [vmem:[%s227] sm:$0x7]
        %v394 = vlaneseq
        %v395 = vshrl.u32 %v394, 7
        %v396 = vsub.s32 0, %v395
        %v397 = vrot.slane %v392, %v396
        %v398 = vlaneseq
        %v399 = vshrl.u32 %v398, 7
        %v400 = vsub.s32 1, %v399
        %v401 = vrot.slane %v392, %v400
        %v402 = vlaneseq
        %v403 = vshrl.u32 %v402, 7
        %v404 = vsub.s32 2, %v403
        %v405 = vrot.slane %v392, %v404
        %v473 = vunpack.c.l.b16 %v232
        %v474 = vunpack.c.h.b16 %v232
        %v475 = vunpack.c.l.b16 %v233
        %v476 = vunpack.c.l.b16 %v234
        %v477 = vunpack.c.h.b16 %v234
        %v478 = vunpack.c.l.b16 %v235
        %v479 = vunpack.c.l.b16 %v236
        %v480 = vunpack.c.h.b16 %v236
        %v481 = vunpack.c.l.b16 %v237
        %v482 = vunpack.c.l.b16 %v238
        %v483 = vunpack.c.h.b16 %v238
        %v484 = vunpack.c.l.b16 %v239
        %v485 = vunpack.c.l.b16 %v240
        %v486 = vunpack.c.h.b16 %v240
        %v487 = vunpack.c.l.b16 %v241
        %v488 = vunpack.c.l.b16 %v242
        %v489 = vunpack.c.h.b16 %v242
        %v490 = vunpack.c.l.b16 %v243
        %v491 = vunpack.c.l.b16 %v244
        %v492 = vunpack.c.h.b16 %v244
        %v493 = vunpack.c.l.b16 %v245
        %v494 = vunpack.c.l.b16 %v246
        %v495 = vunpack.c.h.b16 %v246
        %v496 = vunpack.c.l.b16 %v247
        %v497 = vunpack.c.l.b16 %v248
        %v498 = vunpack.c.h.b16 %v248
        %v499 = vunpack.c.l.b16 %v249
        %v500 = vunpack.c.l.b16 %v250
        %v501 = vunpack.c.h.b16 %v250
        %v502 = vunpack.c.l.b16 %v251
        %v503 = vunpack.c.l.b16 %v252
        %v504 = vunpack.c.h.b16 %v252
        %v505 = vunpack.c.l.b16 %v253
        %v506 = vunpack.c.l.b16 %v254
        %v507 = vunpack.c.h.b16 %v254
        %v508 = vunpack.c.l.b16 %v255
        %v509 = vunpack.c.l.b16 %v256
        %v510 = vunpack.c.h.b16 %v256
        %v511 = vunpack.c.l.b16 %v257
        %v512 = vunpack.c.l.b16 %v258
        %v513 = vunpack.c.h.b16 %v258
        %v514 = vunpack.c.l.b16 %v259
        %v515 = vunpack.c.l.b16 %v260
        %v516 = vunpack.c.h.b16 %v260
        %v517 = vunpack.c.l.b16 %v261
        %v518 = vunpack.c.l.b16 %v262
        %v519 = vunpack.c.h.b16 %v262
        %v520 = vunpack.c.l.b16 %v263
        %v521 = vunpack.c.l.b16 %v264
        %v522 = vunpack.c.h.b16 %v264
        %v523 = vunpack.c.l.b16 %v265
        %v524 = vunpack.c.l.b16 %v266
        %v525 = vunpack.c.h.b16 %v266
        %v526 = vunpack.c.l.b16 %v267
        %v527 = vunpack.c.l.b16 %v268
        %v528 = vunpack.c.h.b16 %v268
        %v529 = vunpack.c.l.b16 %v269
        %v530 = vunpack.c.l.b16 %v270
        %v531 = vunpack.c.h.b16 %v270
        %v532 = vunpack.c.l.b16 %v271
        %v533 = vunpack.c.l.b16 %v272
        %v534 = vunpack.c.h.b16 %v272
        %v535 = vunpack.c.l.b16 %v273
        %v536 = vunpack.c.l.b16 %v274
        %v537 = vunpack.c.h.b16 %v274
        %v538 = vunpack.c.l.b16 %v275
        %v539 = vunpack.c.l.b16 %v276
        %v540 = vunpack.c.h.b16 %v276
        %v541 = vunpack.c.l.b16 %v277
        %v542 = vunpack.c.l.b16 %v278
        %v543 = vunpack.c.h.b16 %v278
        %v544 = vunpack.c.l.b16 %v279
        %v545 = vunpack.c.l.b16 %v280
        %v546 = vunpack.c.h.b16 %v280
        %v547 = vunpack.c.l.b16 %v281
        %v548 = vunpack.c.l.b16 %v282
        %v549 = vunpack.c.h.b16 %v282
        %v550 = vunpack.c.l.b16 %v283
        %v551 = vunpack.c.l.b16 %v284
        %v552 = vunpack.c.h.b16 %v284
        %v553 = vunpack.c.l.b16 %v285
        %v554 = vunpack.c.l.b16 %v286
        %v555 = vunpack.c.h.b16 %v286
        %v556 = vunpack.c.l.b16 %v287
        %v557 = vunpack.c.l.b16 %v288
        %v558 = vunpack.c.h.b16 %v288
        %v559 = vunpack.c.l.b16 %v289
        %v560 = vunpack.c.l.b16 %v290
        %v561 = vunpack.c.h.b16 %v290
        %v562 = vunpack.c.l.b16 %v291
        %v563 = vunpack.c.l.b16 %v292
        %v564 = vunpack.c.h.b16 %v292
        %v565 = vunpack.c.l.b16 %v293
        %v566 = vunpack.c.l.b16 %v294
        %v567 = vunpack.c.h.b16 %v294
        %v568 = vunpack.c.l.b16 %v295
        %v569 = vpack.c.b16 %v476, %v473
        %v570 = vpack.c.b16 %v477, %v474
        %v571 = vpack.c.b16 %v478, %v475
        %v572 = vpack.c.b16 %v482, %v479
        %v573 = vpack.c.b16 %v483, %v480
        %v574 = vpack.c.b16 %v484, %v481
        %v575 = vpack.c.b16 %v488, %v485
        %v576 = vpack.c.b16 %v489, %v486
        %v577 = vpack.c.b16 %v490, %v487
        %v578 = vpack.c.b16 %v494, %v491
        %v579 = vpack.c.b16 %v495, %v492
        %v580 = vpack.c.b16 %v496, %v493
        %v581 = vpack.c.b16 %v500, %v497
        %v582 = vpack.c.b16 %v501, %v498
        %v583 = vpack.c.b16 %v502, %v499
        %v584 = vpack.c.b16 %v506, %v503
        %v585 = vpack.c.b16 %v507, %v504
        %v586 = vpack.c.b16 %v508, %v505
        %v587 = vpack.c.b16 %v512, %v509
        %v588 = vpack.c.b16 %v513, %v510
        %v589 = vpack.c.b16 %v514, %v511
        %v590 = vpack.c.b16 %v518, %v515
        %v591 = vpack.c.b16 %v519, %v516
        %v592 = vpack.c.b16 %v520, %v517
        %v593 = vpack.c.b16 %v524, %v521
        %v594 = vpack.c.b16 %v525, %v522
        %v595 = vpack.c.b16 %v526, %v523
        %v596 = vpack.c.b16 %v530, %v527
        %v597 = vpack.c.b16 %v531, %v528
        %v598 = vpack.c.b16 %v532, %v529
        %v599 = vpack.c.b16 %v536, %v533
        %v600 = vpack.c.b16 %v537, %v534
        %v601 = vpack.c.b16 %v538, %v535
        %v602 = vpack.c.b16 %v542, %v539
        %v603 = vpack.c.b16 %v543, %v540
        %v604 = vpack.c.b16 %v544, %v541
        %v605 = vpack.c.b16 %v548, %v545
        %v606 = vpack.c.b16 %v549, %v546
        %v607 = vpack.c.b16 %v550, %v547
        %v608 = vpack.c.b16 %v554, %v551
        %v609 = vpack.c.b16 %v555, %v552
        %v610 = vpack.c.b16 %v556, %v553
        %v611 = vpack.c.b16 %v560, %v557
        %v612 = vpack.c.b16 %v561, %v558
        %v613 = vpack.c.b16 %v562, %v559
        %v614 = vpack.c.b16 %v566, %v563
        %v615 = vpack.c.b16 %v567, %v564
        %v616 = vpack.c.b16 %v568, %v565
        %v761 = vunpack.c.l.b16 %v296
        %v762 = vunpack.c.h.b16 %v296
        %v763 = vunpack.c.l.b16 %v297
        %v764 = vunpack.c.l.b16 %v298
        %v765 = vunpack.c.h.b16 %v298
        %v766 = vunpack.c.l.b16 %v299
        %v767 = vunpack.c.l.b16 %v300
        %v768 = vunpack.c.h.b16 %v300
        %v769 = vunpack.c.l.b16 %v301
        %v770 = vunpack.c.l.b16 %v302
        %v771 = vunpack.c.h.b16 %v302
        %v772 = vunpack.c.l.b16 %v303
        %v773 = vunpack.c.l.b16 %v304
        %v774 = vunpack.c.h.b16 %v304
        %v775 = vunpack.c.l.b16 %v305
        %v776 = vunpack.c.l.b16 %v306
        %v777 = vunpack.c.h.b16 %v306
        %v778 = vunpack.c.l.b16 %v307
        %v779 = vunpack.c.l.b16 %v308
        %v780 = vunpack.c.h.b16 %v308
        %v781 = vunpack.c.l.b16 %v309
        %v782 = vunpack.c.l.b16 %v310
        %v783 = vunpack.c.h.b16 %v310
        %v784 = vunpack.c.l.b16 %v311
        %v785 = vunpack.c.l.b16 %v312
        %v786 = vunpack.c.h.b16 %v312
        %v787 = vunpack.c.l.b16 %v313
        %v788 = vunpack.c.l.b16 %v314
        %v789 = vunpack.c.h.b16 %v314
        %v790 = vunpack.c.l.b16 %v315
        %v791 = vunpack.c.l.b16 %v316
        %v792 = vunpack.c.h.b16 %v316
        %v793 = vunpack.c.l.b16 %v317
        %v794 = vunpack.c.l.b16 %v318
        %v795 = vunpack.c.h.b16 %v318
        %v796 = vunpack.c.l.b16 %v319
        %v797 = vunpack.c.l.b16 %v320
        %v798 = vunpack.c.h.b16 %v320
        %v799 = vunpack.c.l.b16 %v321
        %v800 = vunpack.c.l.b16 %v322
        %v801 = vunpack.c.h.b16 %v322
        %v802 = vunpack.c.l.b16 %v323
        %v803 = vunpack.c.l.b16 %v324
        %v804 = vunpack.c.h.b16 %v324
        %v805 = vunpack.c.l.b16 %v325
        %v806 = vunpack.c.l.b16 %v326
        %v807 = vunpack.c.h.b16 %v326
        %v808 = vunpack.c.l.b16 %v327
        %v809 = vunpack.c.l.b16 %v328
        %v810 = vunpack.c.h.b16 %v328
        %v811 = vunpack.c.l.b16 %v329
        %v812 = vunpack.c.l.b16 %v330
        %v813 = vunpack.c.h.b16 %v330
        %v814 = vunpack.c.l.b16 %v331
        %v815 = vunpack.c.l.b16 %v332
        %v816 = vunpack.c.h.b16 %v332
        %v817 = vunpack.c.l.b16 %v333
        %v818 = vunpack.c.l.b16 %v334
        %v819 = vunpack.c.h.b16 %v334
        %v820 = vunpack.c.l.b16 %v335
        %v821 = vunpack.c.l.b16 %v336
        %v822 = vunpack.c.h.b16 %v336
        %v823 = vunpack.c.l.b16 %v337
        %v824 = vunpack.c.l.b16 %v338
        %v825 = vunpack.c.h.b16 %v338
        %v826 = vunpack.c.l.b16 %v339
        %v827 = vunpack.c.l.b16 %v340
        %v828 = vunpack.c.h.b16 %v340
        %v829 = vunpack.c.l.b16 %v341
        %v830 = vunpack.c.l.b16 %v342
        %v831 = vunpack.c.h.b16 %v342
        %v832 = vunpack.c.l.b16 %v343
        %v833 = vunpack.c.l.b16 %v344
        %v834 = vunpack.c.h.b16 %v344
        %v835 = vunpack.c.l.b16 %v345
        %v836 = vunpack.c.l.b16 %v346
        %v837 = vunpack.c.h.b16 %v346
        %v838 = vunpack.c.l.b16 %v347
        %v839 = vunpack.c.l.b16 %v348
        %v840 = vunpack.c.h.b16 %v348
        %v841 = vunpack.c.l.b16 %v349
        %v842 = vunpack.c.l.b16 %v350
        %v843 = vunpack.c.h.b16 %v350
        %v844 = vunpack.c.l.b16 %v351
        %v845 = vunpack.c.l.b16 %v352
        %v846 = vunpack.c.h.b16 %v352
        %v847 = vunpack.c.l.b16 %v353
        %v848 = vunpack.c.l.b16 %v354
        %v849 = vunpack.c.h.b16 %v354
        %v850 = vunpack.c.l.b16 %v355
        %v851 = vunpack.c.l.b16 %v356
        %v852 = vunpack.c.h.b16 %v356
        %v853 = vunpack.c.l.b16 %v357
        %v854 = vunpack.c.l.b16 %v358
        %v855 = vunpack.c.h.b16 %v358
        %v856 = vunpack.c.l.b16 %v359
        %v857 = vunpack.c.l.b16 %v360
        %v858 = vunpack.c.h.b16 %v360
        %v859 = vunpack.c.l.b16 %v361
        %v860 = vunpack.c.l.b16 %v362
        %v861 = vunpack.c.h.b16 %v362
        %v862 = vunpack.c.l.b16 %v363
        %v863 = vunpack.c.l.b16 %v364
        %v864 = vunpack.c.h.b16 %v364
        %v865 = vunpack.c.l.b16 %v365
        %v866 = vunpack.c.l.b16 %v366
        %v867 = vunpack.c.h.b16 %v366
        %v868 = vunpack.c.l.b16 %v367
        %v869 = vunpack.c.l.b16 %v368
        %v870 = vunpack.c.h.b16 %v368
        %v871 = vunpack.c.l.b16 %v369
        %v872 = vunpack.c.l.b16 %v370
        %v873 = vunpack.c.h.b16 %v370
        %v874 = vunpack.c.l.b16 %v371
        %v875 = vunpack.c.l.b16 %v372
        %v876 = vunpack.c.h.b16 %v372
        %v877 = vunpack.c.l.b16 %v373
        %v878 = vunpack.c.l.b16 %v374
        %v879 = vunpack.c.h.b16 %v374
        %v880 = vunpack.c.l.b16 %v375
        %v881 = vunpack.c.l.b16 %v376
        %v882 = vunpack.c.h.b16 %v376
        %v883 = vunpack.c.l.b16 %v377
        %v884 = vunpack.c.l.b16 %v378
        %v885 = vunpack.c.h.b16 %v378
        %v886 = vunpack.c.l.b16 %v379
        %v887 = vunpack.c.l.b16 %v380
        %v888 = vunpack.c.h.b16 %v380
        %v889 = vunpack.c.l.b16 %v381
        %v890 = vunpack.c.l.b16 %v382
        %v891 = vunpack.c.h.b16 %v382
        %v892 = vunpack.c.l.b16 %v383
        %v893 = vunpack.c.l.b16 %v384
        %v894 = vunpack.c.h.b16 %v384
        %v895 = vunpack.c.l.b16 %v385
        %v896 = vunpack.c.l.b16 %v386
        %v897 = vunpack.c.h.b16 %v386
        %v898 = vunpack.c.l.b16 %v387
        %v899 = vunpack.c.l.b16 %v388
        %v900 = vunpack.c.h.b16 %v388
        %v901 = vunpack.c.l.b16 %v389
        %v902 = vunpack.c.l.b16 %v390
        %v903 = vunpack.c.h.b16 %v390
        %v904 = vunpack.c.l.b16 %v391
        %v905 = vpack.c.b16 %v764, %v761
        %v906 = vpack.c.b16 %v765, %v762
        %v907 = vpack.c.b16 %v766, %v763
        %v908 = vpack.c.b16 %v770, %v767
        %v909 = vpack.c.b16 %v771, %v768
        %v910 = vpack.c.b16 %v772, %v769
        %v911 = vpack.c.b16 %v776, %v773
        %v912 = vpack.c.b16 %v777, %v774
        %v913 = vpack.c.b16 %v778, %v775
        %v914 = vpack.c.b16 %v782, %v779
        %v915 = vpack.c.b16 %v783, %v780
        %v916 = vpack.c.b16 %v784, %v781
        %v917 = vpack.c.b16 %v788, %v785
        %v918 = vpack.c.b16 %v789, %v786
        %v919 = vpack.c.b16 %v790, %v787
        %v920 = vpack.c.b16 %v794, %v791
        %v921 = vpack.c.b16 %v795, %v792
        %v922 = vpack.c.b16 %v796, %v793
        %v923 = vpack.c.b16 %v800, %v797
        %v924 = vpack.c.b16 %v801, %v798
        %v925 = vpack.c.b16 %v802, %v799
        %v926 = vpack.c.b16 %v806, %v803
        %v927 = vpack.c.b16 %v807, %v804
        %v928 = vpack.c.b16 %v808, %v805
        %v929 = vpack.c.b16 %v812, %v809
        %v930 = vpack.c.b16 %v813, %v810
        %v931 = vpack.c.b16 %v814, %v811
        %v932 = vpack.c.b16 %v818, %v815
        %v933 = vpack.c.b16 %v819, %v816
        %v934 = vpack.c.b16 %v820, %v817
        %v935 = vpack.c.b16 %v824, %v821
        %v936 = vpack.c.b16 %v825, %v822
        %v937 = vpack.c.b16 %v826, %v823
        %v938 = vpack.c.b16 %v830, %v827
        %v939 = vpack.c.b16 %v831, %v828
        %v940 = vpack.c.b16 %v832, %v829
        %v941 = vpack.c.b16 %v836, %v833
        %v942 = vpack.c.b16 %v837, %v834
        %v943 = vpack.c.b16 %v838, %v835
        %v944 = vpack.c.b16 %v842, %v839
        %v945 = vpack.c.b16 %v843, %v840
        %v946 = vpack.c.b16 %v844, %v841
        %v947 = vpack.c.b16 %v848, %v845
        %v948 = vpack.c.b16 %v849, %v846
        %v949 = vpack.c.b16 %v850, %v847
        %v950 = vpack.c.b16 %v854, %v851
        %v951 = vpack.c.b16 %v855, %v852
        %v952 = vpack.c.b16 %v856, %v853
        %v953 = vpack.c.b16 %v860, %v857
        %v954 = vpack.c.b16 %v861, %v858
        %v955 = vpack.c.b16 %v862, %v859
        %v956 = vpack.c.b16 %v866, %v863
        %v957 = vpack.c.b16 %v867, %v864
        %v958 = vpack.c.b16 %v868, %v865
        %v959 = vpack.c.b16 %v872, %v869
        %v960 = vpack.c.b16 %v873, %v870
        %v961 = vpack.c.b16 %v874, %v871
        %v962 = vpack.c.b16 %v878, %v875
        %v963 = vpack.c.b16 %v879, %v876
        %v964 = vpack.c.b16 %v880, %v877
        %v965 = vpack.c.b16 %v884, %v881
        %v966 = vpack.c.b16 %v885, %v882
        %v967 = vpack.c.b16 %v886, %v883
        %v968 = vpack.c.b16 %v890, %v887
        %v969 = vpack.c.b16 %v891, %v888
        %v970 = vpack.c.b16 %v892, %v889
        %v971 = vpack.c.b16 %v896, %v893
        %v972 = vpack.c.b16 %v897, %v894
        %v973 = vpack.c.b16 %v898, %v895
        %v974 = vpack.c.b16 %v902, %v899
        %v975 = vpack.c.b16 %v903, %v900
        %v976 = vpack.c.b16 %v904, %v901
        %1049 = vmatprep.subr.bf16.mxu0 %v906
        %1050 = vmatpush1.bf16.msra.mxu0 %v905
        %1051 = vmatprep.subr.bf16.mxu0 %v909
        %1052 = vmatpush1.bf16.msra.mxu0 %v908
        %1053 = vmatprep.subr.bf16.mxu0 %v912
        %1054 = vmatpush1.bf16.msra.mxu0 %v911
        %1055 = vmatprep.subr.bf16.mxu0 %v915
        %1056 = vmatpush1.bf16.msra.mxu0 %v914
        %1057 = vmatprep.subr.bf16.mxu0 %v918
        %1058 = vmatpush1.bf16.msra.mxu0 %v917
        %1059 = vmatprep.subr.bf16.mxu0 %v921
        %1060 = vmatpush1.bf16.msra.mxu0 %v920
        %1061 = vmatprep.subr.bf16.mxu0 %v924
        %1062 = vmatpush1.bf16.msra.mxu0 %v923
        %1063 = vmatprep.subr.bf16.mxu0 %v927
        %1064 = vmatpush1.bf16.msra.mxu0 %v926
        %1065 = vmatprep.subr.bf16.mxu0 %v930
        %1066 = vmatpush1.bf16.msra.mxu0 %v929
        %1067 = vmatprep.subr.bf16.mxu0 %v933
        %1068 = vmatpush1.bf16.msra.mxu0 %v932
        %1069 = vmatprep.subr.bf16.mxu0 %v936
        %1070 = vmatpush1.bf16.msra.mxu0 %v935
        %1071 = vmatprep.subr.bf16.mxu0 %v939
        %1072 = vmatpush1.bf16.msra.mxu0 %v938
        %1073 = vmatprep.subr.bf16.mxu0 %v942
        %1074 = vmatpush1.bf16.msra.mxu0 %v941
        %1075 = vmatprep.subr.bf16.mxu0 %v945
        %1076 = vmatpush1.bf16.msra.mxu0 %v944
        %1077 = vmatprep.subr.bf16.mxu0 %v948
        %1078 = vmatpush1.bf16.msra.mxu0 %v947
        %1079 = vmatprep.subr.bf16.mxu0 %v951
        %1080 = vmatpush1.bf16.msra.mxu0 %v950
        %1081 = vmatprep.mubr.bf16.mxu0 %v570
        %1082 = vmatmul.mubr.bf16.gmra.mrb[0].mxu0 %v569
        %v1083 = vpop.f32.mrb[0].mxu0
        %v1084 = vadd.f32 %v397, %v1083
        %v1085 = vpop.f32.mrb[0].mxu0
        %v1086 = vadd.f32 %v401, %v1085
        %v1087 = vpop.f32.mrb[0].mxu0
        %v1088 = vadd.f32 %v397, %v1087
        %v1089 = vpop.f32.mrb[0].mxu0
        %v1090 = vadd.f32 %v401, %v1089
        %1091 = vmatprep.mubr.bf16.mxu0 %v573
        %1092 = vmatmul.mubr.bf16.gmra.mrb[0].mxu0 %v572
        %v1093 = vpop.f32.mrb[0].mxu0
        %v1094 = vadd.f32 %v397, %v1093
        %v1095 = vpop.f32.mrb[0].mxu0
        %v1096 = vadd.f32 %v401, %v1095
        %v1097 = vpop.f32.mrb[0].mxu0
        %v1098 = vadd.f32 %v397, %v1097
        %v1099 = vpop.f32.mrb[0].mxu0
        %v1100 = vadd.f32 %v401, %v1099
        %1101 = vmatprep.mubr.bf16.mxu0 %v576
        %1102 = vmatmul.mubr.bf16.gmra.mrb[0].mxu0 %v575
        %v1103 = vpop.f32.mrb[0].mxu0
        %v1104 = vadd.f32 %v397, %v1103
        %v1105 = vpop.f32.mrb[0].mxu0
        %v1106 = vadd.f32 %v401, %v1105
        %v1107 = vpop.f32.mrb[0].mxu0
        %v1108 = vadd.f32 %v397, %v1107
        %v1109 = vpop.f32.mrb[0].mxu0
        %v1110 = vadd.f32 %v401, %v1109
        %1111 = vmatprep.mubr.bf16.mxu0 %v579
        %1112 = vmatmul.mubr.bf16.gmra.mrb[0].mxu0 %v578
        %v1113 = vpop.f32.mrb[0].mxu0
        %v1114 = vadd.f32 %v397, %v1113
        %v1115 = vpop.f32.mrb[0].mxu0
        %v1116 = vadd.f32 %v401, %v1115
        %v1117 = vpop.f32.mrb[0].mxu0
        %v1118 = vadd.f32 %v397, %v1117
        %v1119 = vpop.f32.mrb[0].mxu0
        %v1120 = vadd.f32 %v401, %v1119
        %1121 = vmatprep.mubr.bf16.mxu0 %v582
        %1122 = vmatmul.mubr.bf16.gmra.mrb[0].mxu0 %v581
        %v1123 = vpop.f32.mrb[0].mxu0
        %v1124 = vadd.f32 %v397, %v1123
        %v1125 = vpop.f32.mrb[0].mxu0
        %v1126 = vadd.f32 %v401, %v1125
        %v1127 = vpop.f32.mrb[0].mxu0
        %v1128 = vadd.f32 %v397, %v1127
        %v1129 = vpop.f32.mrb[0].mxu0
        %v1130 = vadd.f32 %v401, %v1129
        %1131 = vmatprep.mubr.bf16.mxu0 %v585
        %1132 = vmatmul.mubr.bf16.gmra.mrb[0].mxu0 %v584
        %v1133 = vpop.f32.mrb[0].mxu0
        %v1134 = vadd.f32 %v397, %v1133
        %v1135 = vpop.f32.mrb[0].mxu0
        %v1136 = vadd.f32 %v401, %v1135
        %v1137 = vpop.f32.mrb[0].mxu0
        %v1138 = vadd.f32 %v397, %v1137
        %v1139 = vpop.f32.mrb[0].mxu0
        %v1140 = vadd.f32 %v401, %v1139
        %1141 = vmatprep.mubr.bf16.mxu0 %v588
        %1142 = vmatmul.mubr.bf16.gmra.mrb[0].mxu0 %v587
        %v1143 = vpop.f32.mrb[0].mxu0
        %v1144 = vadd.f32 %v397, %v1143
        %v1145 = vpop.f32.mrb[0].mxu0
        %v1146 = vadd.f32 %v401, %v1145
        %v1147 = vpop.f32.mrb[0].mxu0
        %v1148 = vadd.f32 %v397, %v1147
        %v1149 = vpop.f32.mrb[0].mxu0
        %v1150 = vadd.f32 %v401, %v1149
        %1151 = vmatprep.mubr.bf16.mxu0 %v591
        %1152 = vmatmul.mubr.bf16.gmra.mrb[0].mxu0 %v590
        %v1153 = vpop.f32.mrb[0].mxu0
        %v1154 = vadd.f32 %v397, %v1153
        %v1155 = vpop.f32.mrb[0].mxu0
        %v1156 = vadd.f32 %v401, %v1155
        %v1157 = vpop.f32.mrb[0].mxu0
        %v1158 = vadd.f32 %v397, %v1157
        %v1159 = vpop.f32.mrb[0].mxu0
        %v1160 = vadd.f32 %v401, %v1159
        %1161 = vmatprep.mubr.bf16.mxu0 %v594
        %1162 = vmatmul.mubr.bf16.gmra.mrb[0].mxu0 %v593
        %v1163 = vpop.f32.mrb[0].mxu0
        %v1164 = vadd.f32 %v397, %v1163
        %v1165 = vpop.f32.mrb[0].mxu0
        %v1166 = vadd.f32 %v401, %v1165
        %v1167 = vpop.f32.mrb[0].mxu0
        %v1168 = vadd.f32 %v397, %v1167
        %v1169 = vpop.f32.mrb[0].mxu0
        %v1170 = vadd.f32 %v401, %v1169
        %1171 = vmatprep.mubr.bf16.mxu0 %v597
        %1172 = vmatmul.mubr.bf16.gmra.mrb[0].mxu0 %v596
        %v1173 = vpop.f32.mrb[0].mxu0
        %v1174 = vadd.f32 %v397, %v1173
        %v1175 = vpop.f32.mrb[0].mxu0
        %v1176 = vadd.f32 %v401, %v1175
        %v1177 = vpop.f32.mrb[0].mxu0
        %v1178 = vadd.f32 %v397, %v1177
        %v1179 = vpop.f32.mrb[0].mxu0
        %v1180 = vadd.f32 %v401, %v1179
        %1181 = vmatprep.mubr.bf16.mxu0 %v600
        %1182 = vmatmul.mubr.bf16.gmra.mrb[0].mxu0 %v599
        %v1183 = vpop.f32.mrb[0].mxu0
        %v1184 = vadd.f32 %v397, %v1183
        %v1185 = vpop.f32.mrb[0].mxu0
        %v1186 = vadd.f32 %v401, %v1185
        %v1187 = vpop.f32.mrb[0].mxu0
        %v1188 = vadd.f32 %v397, %v1187
        %v1189 = vpop.f32.mrb[0].mxu0
        %v1190 = vadd.f32 %v401, %v1189
        %1191 = vmatprep.mubr.bf16.mxu0 %v603
        %1192 = vmatmul.mubr.bf16.gmra.mrb[0].mxu0 %v602
        %v1193 = vpop.f32.mrb[0].mxu0
        %v1194 = vadd.f32 %v397, %v1193
        %v1195 = vpop.f32.mrb[0].mxu0
        %v1196 = vadd.f32 %v401, %v1195
        %v1197 = vpop.f32.mrb[0].mxu0
        %v1198 = vadd.f32 %v397, %v1197
        %v1199 = vpop.f32.mrb[0].mxu0
        %v1200 = vadd.f32 %v401, %v1199
        %1201 = vmatprep.mubr.bf16.mxu0 %v606
        %1202 = vmatmul.mubr.bf16.gmra.mrb[0].mxu0 %v605
        %v1203 = vpop.f32.mrb[0].mxu0
        %v1204 = vadd.f32 %v397, %v1203
        %v1205 = vpop.f32.mrb[0].mxu0
        %v1206 = vadd.f32 %v401, %v1205
        %v1207 = vpop.f32.mrb[0].mxu0
        %v1208 = vadd.f32 %v397, %v1207
        %v1209 = vpop.f32.mrb[0].mxu0
        %v1210 = vadd.f32 %v401, %v1209
        %1211 = vmatprep.mubr.bf16.mxu0 %v609
        %1212 = vmatmul.mubr.bf16.gmra.mrb[0].mxu0 %v608
        %v1213 = vpop.f32.mrb[0].mxu0
        %v1214 = vadd.f32 %v397, %v1213
        %v1215 = vpop.f32.mrb[0].mxu0
        %v1216 = vadd.f32 %v401, %v1215
        %v1217 = vpop.f32.mrb[0].mxu0
        %v1218 = vadd.f32 %v397, %v1217
        %v1219 = vpop.f32.mrb[0].mxu0
        %v1220 = vadd.f32 %v401, %v1219
        %1221 = vmatprep.mubr.bf16.mxu0 %v612
        %1222 = vmatmul.mubr.bf16.gmra.mrb[0].mxu0 %v611
        %v1223 = vpop.f32.mrb[0].mxu0
        %v1224 = vadd.f32 %v397, %v1223
        %v1225 = vpop.f32.mrb[0].mxu0
        %v1226 = vadd.f32 %v401, %v1225
        %v1227 = vpop.f32.mrb[0].mxu0
        %v1228 = vadd.f32 %v397, %v1227
        %v1229 = vpop.f32.mrb[0].mxu0
        %v1230 = vadd.f32 %v401, %v1229
        %1231 = vmatprep.mubr.bf16.mxu0 %v615
        %1232 = vmatmul.mubr.bf16.gmra.mrb[0].mxu0 %v614
        %v1233 = vpop.f32.mrb[0].mxu0
        %v1234 = vadd.f32 %v397, %v1233
        %v1235 = vpop.f32.mrb[0].mxu0
        %v1236 = vadd.f32 %v401, %v1235
        %v1237 = vpop.f32.mrb[0].mxu0
        %v1238 = vadd.f32 %v397, %v1237
        %v1239 = vpop.f32.mrb[0].mxu0
        %v1240 = vadd.f32 %v401, %v1239
        %1241 = vdwg.mxu0
        %1242 = vmatprep.subr.bf16.mxu0 %v954
        %1243 = vmatpush1.bf16.msra.mxu0 %v953
        %1244 = vmatprep.subr.bf16.mxu0 %v957
        %1245 = vmatpush1.bf16.msra.mxu0 %v956
        %1246 = vmatprep.subr.bf16.mxu0 %v960
        %1247 = vmatpush1.bf16.msra.mxu0 %v959
        %1248 = vmatprep.subr.bf16.mxu0 %v963
        %1249 = vmatpush1.bf16.msra.mxu0 %v962
        %1250 = vmatprep.subr.bf16.mxu0 %v966
        %1251 = vmatpush1.bf16.msra.mxu0 %v965
        %1252 = vmatprep.subr.bf16.mxu0 %v969
        %1253 = vmatpush1.bf16.msra.mxu0 %v968
        %1254 = vmatprep.subr.bf16.mxu0 %v972
        %1255 = vmatpush1.bf16.msra.mxu0 %v971
        %1256 = vmatprep.subr.bf16.mxu0 %v975
        %1257 = vmatpush1.bf16.msra.mxu0 %v974
        %1258 = vmatprep.subr.bf16.mxu0 0
        %1259 = vmatpush1.bf16.msra.mxu0 0
        %1260 = vmatprep.subr.bf16.mxu0 0
        %1261 = vmatpush1.bf16.msra.mxu0 0
        %1262 = vmatprep.subr.bf16.mxu0 0
        %1263 = vmatpush1.bf16.msra.mxu0 0
        %1264 = vmatprep.subr.bf16.mxu0 0
        %1265 = vmatpush1.bf16.msra.mxu0 0
        %1266 = vmatprep.subr.bf16.mxu0 0
        %1267 = vmatpush1.bf16.msra.mxu0 0
        %1268 = vmatprep.subr.bf16.mxu0 0
        %1269 = vmatpush1.bf16.msra.mxu0 0
        %1270 = vmatprep.subr.bf16.mxu0 0
        %1271 = vmatpush1.bf16.msra.mxu0 0
        %1272 = vmatprep.subr.bf16.mxu0 0
        %1273 = vmatpush1.bf16.msra.mxu0 0
        %1274 = vmatprep.mubr.bf16.mxu0 0
        %1275 = vmatmul.mubr.bf16.gmra.mrb[0].mxu0 %v571
        %v1276 = vpop.f32.mrb[0].mxu0
        %v1277 = vadd.f32 %v1084, %v1276
        %v1278 = vpop.f32.mrb[0].mxu0
        %v1279 = vadd.f32 %v1086, %v1278
        %v1280 = vpop.f32.mrb[0].mxu0
        %v1281 = vadd.f32 %v1088, %v1280
        %v1282 = vpop.f32.mrb[0].mxu0
        %v1283 = vadd.f32 %v1090, %v1282
        %1284 = vmatprep.mubr.bf16.mxu0 0
        %1285 = vmatmul.mubr.bf16.gmra.mrb[0].mxu0 %v574
        %v1286 = vpop.f32.mrb[0].mxu0
        %v1287 = vadd.f32 %v1094, %v1286
        %v1288 = vpop.f32.mrb[0].mxu0
        %v1289 = vadd.f32 %v1096, %v1288
        %v1290 = vpop.f32.mrb[0].mxu0
        %v1291 = vadd.f32 %v1098, %v1290
        %v1292 = vpop.f32.mrb[0].mxu0
        %v1293 = vadd.f32 %v1100, %v1292
        %1294 = vmatprep.mubr.bf16.mxu0 0
        %1295 = vmatmul.mubr.bf16.gmra.mrb[0].mxu0 %v577
        %v1296 = vpop.f32.mrb[0].mxu0
        %v1297 = vadd.f32 %v1104, %v1296
        %v1298 = vpop.f32.mrb[0].mxu0
        %v1299 = vadd.f32 %v1106, %v1298
        %v1300 = vpop.f32.mrb[0].mxu0
        %v1301 = vadd.f32 %v1108, %v1300
        %v1302 = vpop.f32.mrb[0].mxu0
        %v1303 = vadd.f32 %v1110, %v1302
        %1304 = vmatprep.mubr.bf16.mxu0 0
        %1305 = vmatmul.mubr.bf16.gmra.mrb[0].mxu0 %v580
        %v1306 = vpop.f32.mrb[0].mxu0
        %v1307 = vadd.f32 %v1114, %v1306
        %v1308 = vpop.f32.mrb[0].mxu0
        %v1309 = vadd.f32 %v1116, %v1308
        %v1310 = vpop.f32.mrb[0].mxu0
        %v1311 = vadd.f32 %v1118, %v1310
        %v1312 = vpop.f32.mrb[0].mxu0
        %v1313 = vadd.f32 %v1120, %v1312
        %1314 = vmatprep.mubr.bf16.mxu0 0
        %1315 = vmatmul.mubr.bf16.gmra.mrb[0].mxu0 %v583
        %v1316 = vpop.f32.mrb[0].mxu0
        %v1317 = vadd.f32 %v1124, %v1316
        %v1318 = vpop.f32.mrb[0].mxu0
        %v1319 = vadd.f32 %v1126, %v1318
        %v1320 = vpop.f32.mrb[0].mxu0
        %v1321 = vadd.f32 %v1128, %v1320
        %v1322 = vpop.f32.mrb[0].mxu0
        %v1323 = vadd.f32 %v1130, %v1322
        %1324 = vmatprep.mubr.bf16.mxu0 0
        %1325 = vmatmul.mubr.bf16.gmra.mrb[0].mxu0 %v586
        %v1326 = vpop.f32.mrb[0].mxu0
        %v1327 = vadd.f32 %v1134, %v1326
        %v1328 = vpop.f32.mrb[0].mxu0
        %v1329 = vadd.f32 %v1136, %v1328
        %v1330 = vpop.f32.mrb[0].mxu0
        %v1331 = vadd.f32 %v1138, %v1330
        %v1332 = vpop.f32.mrb[0].mxu0
        %v1333 = vadd.f32 %v1140, %v1332
        %1334 = vmatprep.mubr.bf16.mxu0 0
        %1335 = vmatmul.mubr.bf16.gmra.mrb[0].mxu0 %v589
        %v1336 = vpop.f32.mrb[0].mxu0
        %v1337 = vadd.f32 %v1144, %v1336
        %v1338 = vpop.f32.mrb[0].mxu0
        %v1339 = vadd.f32 %v1146, %v1338
        %v1340 = vpop.f32.mrb[0].mxu0
        %v1341 = vadd.f32 %v1148, %v1340
        %v1342 = vpop.f32.mrb[0].mxu0
        %v1343 = vadd.f32 %v1150, %v1342
        %1344 = vmatprep.mubr.bf16.mxu0 0
        %1345 = vmatmul.mubr.bf16.gmra.mrb[0].mxu0 %v592
        %v1346 = vpop.f32.mrb[0].mxu0
        %v1347 = vadd.f32 %v1154, %v1346
        %v1348 = vpop.f32.mrb[0].mxu0
        %v1349 = vadd.f32 %v1156, %v1348
        %v1350 = vpop.f32.mrb[0].mxu0
        %v1351 = vadd.f32 %v1158, %v1350
        %v1352 = vpop.f32.mrb[0].mxu0
        %v1353 = vadd.f32 %v1160, %v1352
        %1354 = vmatprep.mubr.bf16.mxu0 0
        %1355 = vmatmul.mubr.bf16.gmra.mrb[0].mxu0 %v595
        %v1356 = vpop.f32.mrb[0].mxu0
        %v1357 = vadd.f32 %v1164, %v1356
        %v1358 = vpop.f32.mrb[0].mxu0
        %v1359 = vadd.f32 %v1166, %v1358
        %v1360 = vpop.f32.mrb[0].mxu0
        %v1361 = vadd.f32 %v1168, %v1360
        %v1362 = vpop.f32.mrb[0].mxu0
        %v1363 = vadd.f32 %v1170, %v1362
        %1364 = vmatprep.mubr.bf16.mxu0 0
        %1365 = vmatmul.mubr.bf16.gmra.mrb[0].mxu0 %v598
        %v1366 = vpop.f32.mrb[0].mxu0
        %v1367 = vadd.f32 %v1174, %v1366
        %v1368 = vpop.f32.mrb[0].mxu0
        %v1369 = vadd.f32 %v1176, %v1368
        %v1370 = vpop.f32.mrb[0].mxu0
        %v1371 = vadd.f32 %v1178, %v1370
        %v1372 = vpop.f32.mrb[0].mxu0
        %v1373 = vadd.f32 %v1180, %v1372
        %1374 = vmatprep.mubr.bf16.mxu0 0
        %1375 = vmatmul.mubr.bf16.gmra.mrb[0].mxu0 %v601
        %v1376 = vpop.f32.mrb[0].mxu0
        %v1377 = vadd.f32 %v1184, %v1376
        %v1378 = vpop.f32.mrb[0].mxu0
        %v1379 = vadd.f32 %v1186, %v1378
        %v1380 = vpop.f32.mrb[0].mxu0
        %v1381 = vadd.f32 %v1188, %v1380
        %v1382 = vpop.f32.mrb[0].mxu0
        %v1383 = vadd.f32 %v1190, %v1382
        %1384 = vmatprep.mubr.bf16.mxu0 0
        %1385 = vmatmul.mubr.bf16.gmra.mrb[0].mxu0 %v604
        %v1386 = vpop.f32.mrb[0].mxu0
        %v1387 = vadd.f32 %v1194, %v1386
        %v1388 = vpop.f32.mrb[0].mxu0
        %v1389 = vadd.f32 %v1196, %v1388
        %v1390 = vpop.f32.mrb[0].mxu0
        %v1391 = vadd.f32 %v1198, %v1390
        %v1392 = vpop.f32.mrb[0].mxu0
        %v1393 = vadd.f32 %v1200, %v1392
        %1394 = vmatprep.mubr.bf16.mxu0 0
        %1395 = vmatmul.mubr.bf16.gmra.mrb[0].mxu0 %v607
        %v1396 = vpop.f32.mrb[0].mxu0
        %v1397 = vadd.f32 %v1204, %v1396
        %v1398 = vpop.f32.mrb[0].mxu0
        %v1399 = vadd.f32 %v1206, %v1398
        %v1400 = vpop.f32.mrb[0].mxu0
        %v1401 = vadd.f32 %v1208, %v1400
        %v1402 = vpop.f32.mrb[0].mxu0
        %v1403 = vadd.f32 %v1210, %v1402
        %1404 = vmatprep.mubr.bf16.mxu0 0
        %1405 = vmatmul.mubr.bf16.gmra.mrb[0].mxu0 %v610
        %v1406 = vpop.f32.mrb[0].mxu0
        %v1407 = vadd.f32 %v1214, %v1406
        %v1408 = vpop.f32.mrb[0].mxu0
        %v1409 = vadd.f32 %v1216, %v1408
        %v1410 = vpop.f32.mrb[0].mxu0
        %v1411 = vadd.f32 %v1218, %v1410
        %v1412 = vpop.f32.mrb[0].mxu0
        %v1413 = vadd.f32 %v1220, %v1412
        %1414 = vmatprep.mubr.bf16.mxu0 0
        %1415 = vmatmul.mubr.bf16.gmra.mrb[0].mxu0 %v613
        %v1416 = vpop.f32.mrb[0].mxu0
        %v1417 = vadd.f32 %v1224, %v1416
        %v1418 = vpop.f32.mrb[0].mxu0
        %v1419 = vadd.f32 %v1226, %v1418
        %v1420 = vpop.f32.mrb[0].mxu0
        %v1421 = vadd.f32 %v1228, %v1420
        %v1422 = vpop.f32.mrb[0].mxu0
        %v1423 = vadd.f32 %v1230, %v1422
        %1424 = vmatprep.mubr.bf16.mxu0 0
        %1425 = vmatmul.mubr.bf16.gmra.mrb[0].mxu0 %v616
        %v1426 = vpop.f32.mrb[0].mxu0
        %v1427 = vadd.f32 %v1234, %v1426
        %v1428 = vpop.f32.mrb[0].mxu0
        %v1429 = vadd.f32 %v1236, %v1428
        %v1430 = vpop.f32.mrb[0].mxu0
        %v1431 = vadd.f32 %v1238, %v1430
        %v1432 = vpop.f32.mrb[0].mxu0
        %v1433 = vadd.f32 %v1240, %v1432
        %1434 = vdwg.mxu0
        %1435 = vmatprep.subr.bf16.mxu0 0
        %1436 = vmatpush1.bf16.msra.mxu0 %v907
        %1437 = vmatprep.subr.bf16.mxu0 0
        %1438 = vmatpush1.bf16.msra.mxu0 %v910
        %1439 = vmatprep.subr.bf16.mxu0 0
        %1440 = vmatpush1.bf16.msra.mxu0 %v913
        %1441 = vmatprep.subr.bf16.mxu0 0
        %1442 = vmatpush1.bf16.msra.mxu0 %v916
        %1443 = vmatprep.subr.bf16.mxu0 0
        %1444 = vmatpush1.bf16.msra.mxu0 %v919
        %1445 = vmatprep.subr.bf16.mxu0 0
        %1446 = vmatpush1.bf16.msra.mxu0 %v922
        %1447 = vmatprep.subr.bf16.mxu0 0
        %1448 = vmatpush1.bf16.msra.mxu0 %v925
        %1449 = vmatprep.subr.bf16.mxu0 0
        %1450 = vmatpush1.bf16.msra.mxu0 %v928
        %1451 = vmatprep.subr.bf16.mxu0 0
        %1452 = vmatpush1.bf16.msra.mxu0 %v931
        %1453 = vmatprep.subr.bf16.mxu0 0
        %1454 = vmatpush1.bf16.msra.mxu0 %v934
        %1455 = vmatprep.subr.bf16.mxu0 0
        %1456 = vmatpush1.bf16.msra.mxu0 %v937
        %1457 = vmatprep.subr.bf16.mxu0 0
        %1458 = vmatpush1.bf16.msra.mxu0 %v940
        %1459 = vmatprep.subr.bf16.mxu0 0
        %1460 = vmatpush1.bf16.msra.mxu0 %v943
        %1461 = vmatprep.subr.bf16.mxu0 0
        %1462 = vmatpush1.bf16.msra.mxu0 %v946
        %1463 = vmatprep.subr.bf16.mxu0 0
        %1464 = vmatpush1.bf16.msra.mxu0 %v949
        %1465 = vmatprep.subr.bf16.mxu0 0
        %1466 = vmatpush1.bf16.msra.mxu0 %v952
        %1467 = vmatprep.mubr.bf16.mxu0 %v570
        %1468 = vmatmul.mubr.bf16.gmra.mrb[0].mxu0 %v569
        %v1469 = vpop.f32.mrb[0].mxu0
        %v1470 = vadd.f32 %v405, %v1469
        %v1471 = vpop.f32.mrb[0].mxu0
        %v1472 = vpop.f32.mrb[0].mxu0
        %v1473 = vadd.f32 %v405, %v1472
        %v1474 = vpop.f32.mrb[0].mxu0
        %1475 = vmatprep.mubr.bf16.mxu0 %v573
        %1476 = vmatmul.mubr.bf16.gmra.mrb[0].mxu0 %v572
        %v1477 = vpop.f32.mrb[0].mxu0
        %v1478 = vadd.f32 %v405, %v1477
        %v1479 = vpop.f32.mrb[0].mxu0
        %v1480 = vpop.f32.mrb[0].mxu0
        %v1481 = vadd.f32 %v405, %v1480
        %v1482 = vpop.f32.mrb[0].mxu0
        %1483 = vmatprep.mubr.bf16.mxu0 %v576
        %1484 = vmatmul.mubr.bf16.gmra.mrb[0].mxu0 %v575
        %v1485 = vpop.f32.mrb[0].mxu0
        %v1486 = vadd.f32 %v405, %v1485
        %v1487 = vpop.f32.mrb[0].mxu0
        %v1488 = vpop.f32.mrb[0].mxu0
        %v1489 = vadd.f32 %v405, %v1488
        %v1490 = vpop.f32.mrb[0].mxu0
        %1491 = vmatprep.mubr.bf16.mxu0 %v579
        %1492 = vmatmul.mubr.bf16.gmra.mrb[0].mxu0 %v578
        %v1493 = vpop.f32.mrb[0].mxu0
        %v1494 = vadd.f32 %v405, %v1493
        %v1495 = vpop.f32.mrb[0].mxu0
        %v1496 = vpop.f32.mrb[0].mxu0
        %v1497 = vadd.f32 %v405, %v1496
        %v1498 = vpop.f32.mrb[0].mxu0
        %1499 = vmatprep.mubr.bf16.mxu0 %v582
        %1500 = vmatmul.mubr.bf16.gmra.mrb[0].mxu0 %v581
        %v1501 = vpop.f32.mrb[0].mxu0
        %v1502 = vadd.f32 %v405, %v1501
        %v1503 = vpop.f32.mrb[0].mxu0
        %v1504 = vpop.f32.mrb[0].mxu0
        %v1505 = vadd.f32 %v405, %v1504
        %v1506 = vpop.f32.mrb[0].mxu0
        %1507 = vmatprep.mubr.bf16.mxu0 %v585
        %1508 = vmatmul.mubr.bf16.gmra.mrb[0].mxu0 %v584
        %v1509 = vpop.f32.mrb[0].mxu0
        %v1510 = vadd.f32 %v405, %v1509
        %v1511 = vpop.f32.mrb[0].mxu0
        %v1512 = vpop.f32.mrb[0].mxu0
        %v1513 = vadd.f32 %v405, %v1512
        %v1514 = vpop.f32.mrb[0].mxu0
        %1515 = vmatprep.mubr.bf16.mxu0 %v588
        %1516 = vmatmul.mubr.bf16.gmra.mrb[0].mxu0 %v587
        %v1517 = vpop.f32.mrb[0].mxu0
        %v1518 = vadd.f32 %v405, %v1517
        %v1519 = vpop.f32.mrb[0].mxu0
        %v1520 = vpop.f32.mrb[0].mxu0
        %v1521 = vadd.f32 %v405, %v1520
        %v1522 = vpop.f32.mrb[0].mxu0
        %1523 = vmatprep.mubr.bf16.mxu0 %v591
        %1524 = vmatmul.mubr.bf16.gmra.mrb[0].mxu0 %v590
        %v1525 = vpop.f32.mrb[0].mxu0
        %v1526 = vadd.f32 %v405, %v1525
        %v1527 = vpop.f32.mrb[0].mxu0
        %v1528 = vpop.f32.mrb[0].mxu0
        %v1529 = vadd.f32 %v405, %v1528
        %v1530 = vpop.f32.mrb[0].mxu0
        %1531 = vmatprep.mubr.bf16.mxu0 %v594
        %1532 = vmatmul.mubr.bf16.gmra.mrb[0].mxu0 %v593
        %v1533 = vpop.f32.mrb[0].mxu0
        %v1534 = vadd.f32 %v405, %v1533
        %v1535 = vpop.f32.mrb[0].mxu0
        %v1536 = vpop.f32.mrb[0].mxu0
        %v1537 = vadd.f32 %v405, %v1536
        %v1538 = vpop.f32.mrb[0].mxu0
        %1539 = vmatprep.mubr.bf16.mxu0 %v597
        %1540 = vmatmul.mubr.bf16.gmra.mrb[0].mxu0 %v596
        %v1541 = vpop.f32.mrb[0].mxu0
        %v1542 = vadd.f32 %v405, %v1541
        %v1543 = vpop.f32.mrb[0].mxu0
        %v1544 = vpop.f32.mrb[0].mxu0
        %v1545 = vadd.f32 %v405, %v1544
        %v1546 = vpop.f32.mrb[0].mxu0
        %1547 = vmatprep.mubr.bf16.mxu0 %v600
        %1548 = vmatmul.mubr.bf16.gmra.mrb[0].mxu0 %v599
        %v1549 = vpop.f32.mrb[0].mxu0
        %v1550 = vadd.f32 %v405, %v1549
        %v1551 = vpop.f32.mrb[0].mxu0
        %v1552 = vpop.f32.mrb[0].mxu0
        %v1553 = vadd.f32 %v405, %v1552
        %v1554 = vpop.f32.mrb[0].mxu0
        %1555 = vmatprep.mubr.bf16.mxu0 %v603
        %1556 = vmatmul.mubr.bf16.gmra.mrb[0].mxu0 %v602
        %v1557 = vpop.f32.mrb[0].mxu0
        %v1558 = vadd.f32 %v405, %v1557
        %v1559 = vpop.f32.mrb[0].mxu0
        %v1560 = vpop.f32.mrb[0].mxu0
        %v1561 = vadd.f32 %v405, %v1560
        %v1562 = vpop.f32.mrb[0].mxu0
        %1563 = vmatprep.mubr.bf16.mxu0 %v606
        %1564 = vmatmul.mubr.bf16.gmra.mrb[0].mxu0 %v605
        %v1565 = vpop.f32.mrb[0].mxu0
        %v1566 = vadd.f32 %v405, %v1565
        %v1567 = vpop.f32.mrb[0].mxu0
        %v1568 = vpop.f32.mrb[0].mxu0
        %v1569 = vadd.f32 %v405, %v1568
        %v1570 = vpop.f32.mrb[0].mxu0
        %1571 = vmatprep.mubr.bf16.mxu0 %v609
        %1572 = vmatmul.mubr.bf16.gmra.mrb[0].mxu0 %v608
        %v1573 = vpop.f32.mrb[0].mxu0
        %v1574 = vadd.f32 %v405, %v1573
        %v1575 = vpop.f32.mrb[0].mxu0
        %v1576 = vpop.f32.mrb[0].mxu0
        %v1577 = vadd.f32 %v405, %v1576
        %v1578 = vpop.f32.mrb[0].mxu0
        %1579 = vmatprep.mubr.bf16.mxu0 %v612
        %1580 = vmatmul.mubr.bf16.gmra.mrb[0].mxu0 %v611
        %v1581 = vpop.f32.mrb[0].mxu0
        %v1582 = vadd.f32 %v405, %v1581
        %v1583 = vpop.f32.mrb[0].mxu0
        %v1584 = vpop.f32.mrb[0].mxu0
        %v1585 = vadd.f32 %v405, %v1584
        %v1586 = vpop.f32.mrb[0].mxu0
        %1587 = vmatprep.mubr.bf16.mxu0 %v615
        %1588 = vmatmul.mubr.bf16.gmra.mrb[0].mxu0 %v614
        %v1589 = vpop.f32.mrb[0].mxu0
        %v1590 = vadd.f32 %v405, %v1589
        %v1591 = vpop.f32.mrb[0].mxu0
        %v1592 = vpop.f32.mrb[0].mxu0
        %v1593 = vadd.f32 %v405, %v1592
        %v1594 = vpop.f32.mrb[0].mxu0
        %1595 = vdwg.mxu0
        %1596 = vmatprep.subr.bf16.mxu0 0
        %1597 = vmatpush1.bf16.msra.mxu0 %v955
        %1598 = vmatprep.subr.bf16.mxu0 0
        %1599 = vmatpush1.bf16.msra.mxu0 %v958
        %1600 = vmatprep.subr.bf16.mxu0 0
        %1601 = vmatpush1.bf16.msra.mxu0 %v961
        %1602 = vmatprep.subr.bf16.mxu0 0
        %1603 = vmatpush1.bf16.msra.mxu0 %v964
        %1604 = vmatprep.subr.bf16.mxu0 0
        %1605 = vmatpush1.bf16.msra.mxu0 %v967
        %1606 = vmatprep.subr.bf16.mxu0 0
        %1607 = vmatpush1.bf16.msra.mxu0 %v970
        %1608 = vmatprep.subr.bf16.mxu0 0
        %1609 = vmatpush1.bf16.msra.mxu0 %v973
        %1610 = vmatprep.subr.bf16.mxu0 0
        %1611 = vmatpush1.bf16.msra.mxu0 %v976
        %1612 = vmatprep.subr.bf16.mxu0 0
        %1613 = vmatpush1.bf16.msra.mxu0 0
        %1614 = vmatprep.subr.bf16.mxu0 0
        %1615 = vmatpush1.bf16.msra.mxu0 0
        %1616 = vmatprep.subr.bf16.mxu0 0
        %1617 = vmatpush1.bf16.msra.mxu0 0
        %1618 = vmatprep.subr.bf16.mxu0 0
        %1619 = vmatpush1.bf16.msra.mxu0 0
        %1620 = vmatprep.subr.bf16.mxu0 0
        %1621 = vmatpush1.bf16.msra.mxu0 0
        %1622 = vmatprep.subr.bf16.mxu0 0
        %1623 = vmatpush1.bf16.msra.mxu0 0
        %1624 = vmatprep.subr.bf16.mxu0 0
        %1625 = vmatpush1.bf16.msra.mxu0 0
        %1626 = vmatprep.subr.bf16.mxu0 0
        %1627 = vmatpush1.bf16.msra.mxu0 0
        %1628 = vmatprep.mubr.bf16.mxu0 0
        %1629 = vmatmul.mubr.bf16.gmra.mrb[0].mxu0 %v571
        %v1630 = vpop.f32.mrb[0].mxu0
        %v1631 = vadd.f32 %v1470, %v1630
        %v1632 = vpop.f32.mrb[0].mxu0
        %v1633 = vpop.f32.mrb[0].mxu0
        %v1634 = vadd.f32 %v1473, %v1633
        %v1635 = vpop.f32.mrb[0].mxu0
        %1636 = vmatprep.mubr.bf16.mxu0 0
        %1637 = vmatmul.mubr.bf16.gmra.mrb[0].mxu0 %v574
        %v1638 = vpop.f32.mrb[0].mxu0
        %v1639 = vadd.f32 %v1478, %v1638
        %v1640 = vpop.f32.mrb[0].mxu0
        %v1641 = vpop.f32.mrb[0].mxu0
        %v1642 = vadd.f32 %v1481, %v1641
        %v1643 = vpop.f32.mrb[0].mxu0
        %1644 = vmatprep.mubr.bf16.mxu0 0
        %1645 = vmatmul.mubr.bf16.gmra.mrb[0].mxu0 %v577
        %v1646 = vpop.f32.mrb[0].mxu0
        %v1647 = vadd.f32 %v1486, %v1646
        %v1648 = vpop.f32.mrb[0].mxu0
        %v1649 = vpop.f32.mrb[0].mxu0
        %v1650 = vadd.f32 %v1489, %v1649
        %v1651 = vpop.f32.mrb[0].mxu0
        %1652 = vmatprep.mubr.bf16.mxu0 0
        %1653 = vmatmul.mubr.bf16.gmra.mrb[0].mxu0 %v580
        %v1654 = vpop.f32.mrb[0].mxu0
        %v1655 = vadd.f32 %v1494, %v1654
        %v1656 = vpop.f32.mrb[0].mxu0
        %v1657 = vpop.f32.mrb[0].mxu0
        %v1658 = vadd.f32 %v1497, %v1657
        %v1659 = vpop.f32.mrb[0].mxu0
        %1660 = vmatprep.mubr.bf16.mxu0 0
        %1661 = vmatmul.mubr.bf16.gmra.mrb[0].mxu0 %v583
        %v1662 = vpop.f32.mrb[0].mxu0
        %v1663 = vadd.f32 %v1502, %v1662
        %v1664 = vpop.f32.mrb[0].mxu0
        %v1665 = vpop.f32.mrb[0].mxu0
        %v1666 = vadd.f32 %v1505, %v1665
        %v1667 = vpop.f32.mrb[0].mxu0
        %1668 = vmatprep.mubr.bf16.mxu0 0
        %1669 = vmatmul.mubr.bf16.gmra.mrb[0].mxu0 %v586
        %v1670 = vpop.f32.mrb[0].mxu0
        %v1671 = vadd.f32 %v1510, %v1670
        %v1672 = vpop.f32.mrb[0].mxu0
        %v1673 = vpop.f32.mrb[0].mxu0
        %v1674 = vadd.f32 %v1513, %v1673
        %v1675 = vpop.f32.mrb[0].mxu0
        %1676 = vmatprep.mubr.bf16.mxu0 0
        %1677 = vmatmul.mubr.bf16.gmra.mrb[0].mxu0 %v589
        %v1678 = vpop.f32.mrb[0].mxu0
        %v1679 = vadd.f32 %v1518, %v1678
        %v1680 = vpop.f32.mrb[0].mxu0
        %v1681 = vpop.f32.mrb[0].mxu0
        %v1682 = vadd.f32 %v1521, %v1681
        %v1683 = vpop.f32.mrb[0].mxu0
        %1684 = vmatprep.mubr.bf16.mxu0 0
        %1685 = vmatmul.mubr.bf16.gmra.mrb[0].mxu0 %v592
        %v1686 = vpop.f32.mrb[0].mxu0
        %v1687 = vadd.f32 %v1526, %v1686
        %v1688 = vpop.f32.mrb[0].mxu0
        %v1689 = vpop.f32.mrb[0].mxu0
        %v1690 = vadd.f32 %v1529, %v1689
        %v1691 = vpop.f32.mrb[0].mxu0
        %1692 = vmatprep.mubr.bf16.mxu0 0
        %1693 = vmatmul.mubr.bf16.gmra.mrb[0].mxu0 %v595
        %v1694 = vpop.f32.mrb[0].mxu0
        %v1695 = vadd.f32 %v1534, %v1694
        %v1696 = vpop.f32.mrb[0].mxu0
        %v1697 = vpop.f32.mrb[0].mxu0
        %v1698 = vadd.f32 %v1537, %v1697
        %v1699 = vpop.f32.mrb[0].mxu0
        %1700 = vmatprep.mubr.bf16.mxu0 0
        %1701 = vmatmul.mubr.bf16.gmra.mrb[0].mxu0 %v598
        %v1702 = vpop.f32.mrb[0].mxu0
        %v1703 = vadd.f32 %v1542, %v1702
        %v1704 = vpop.f32.mrb[0].mxu0
        %v1705 = vpop.f32.mrb[0].mxu0
        %v1706 = vadd.f32 %v1545, %v1705
        %v1707 = vpop.f32.mrb[0].mxu0
        %1708 = vmatprep.mubr.bf16.mxu0 0
        %1709 = vmatmul.mubr.bf16.gmra.mrb[0].mxu0 %v601
        %v1710 = vpop.f32.mrb[0].mxu0
        %v1711 = vadd.f32 %v1550, %v1710
        %v1712 = vpop.f32.mrb[0].mxu0
        %v1713 = vpop.f32.mrb[0].mxu0
        %v1714 = vadd.f32 %v1553, %v1713
        %v1715 = vpop.f32.mrb[0].mxu0
        %1716 = vmatprep.mubr.bf16.mxu0 0
        %1717 = vmatmul.mubr.bf16.gmra.mrb[0].mxu0 %v604
        %v1718 = vpop.f32.mrb[0].mxu0
        %v1719 = vadd.f32 %v1558, %v1718
        %v1720 = vpop.f32.mrb[0].mxu0
        %v1721 = vpop.f32.mrb[0].mxu0
        %v1722 = vadd.f32 %v1561, %v1721
        %v1723 = vpop.f32.mrb[0].mxu0
        %1724 = vmatprep.mubr.bf16.mxu0 0
        %1725 = vmatmul.mubr.bf16.gmra.mrb[0].mxu0 %v607
        %v1726 = vpop.f32.mrb[0].mxu0
        %v1727 = vadd.f32 %v1566, %v1726
        %v1728 = vpop.f32.mrb[0].mxu0
        %v1729 = vpop.f32.mrb[0].mxu0
        %v1730 = vadd.f32 %v1569, %v1729
        %v1731 = vpop.f32.mrb[0].mxu0
        %1732 = vmatprep.mubr.bf16.mxu0 0
        %1733 = vmatmul.mubr.bf16.gmra.mrb[0].mxu0 %v610
        %v1734 = vpop.f32.mrb[0].mxu0
        %v1735 = vadd.f32 %v1574, %v1734
        %v1736 = vpop.f32.mrb[0].mxu0
        %v1737 = vpop.f32.mrb[0].mxu0
        %v1738 = vadd.f32 %v1577, %v1737
        %v1739 = vpop.f32.mrb[0].mxu0
        %1740 = vmatprep.mubr.bf16.mxu0 0
        %1741 = vmatmul.mubr.bf16.gmra.mrb[0].mxu0 %v613
        %v1742 = vpop.f32.mrb[0].mxu0
        %v1743 = vadd.f32 %v1582, %v1742
        %v1744 = vpop.f32.mrb[0].mxu0
        %v1745 = vpop.f32.mrb[0].mxu0
        %v1746 = vadd.f32 %v1585, %v1745
        %v1747 = vpop.f32.mrb[0].mxu0
        %1748 = vmatprep.mubr.bf16.mxu0 0
        %1749 = vmatmul.mubr.bf16.gmra.mrb[0].mxu0 %v616
        %v1750 = vpop.f32.mrb[0].mxu0
        %v1751 = vadd.f32 %v1590, %v1750
        %v1752 = vpop.f32.mrb[0].mxu0
        %v1753 = vpop.f32.mrb[0].mxu0
        %v1754 = vadd.f32 %v1593, %v1753
        %v1755 = vpop.f32.mrb[0].mxu0
        %1756 = vdwg.mxu0
        %1757 = vst [vmem:[%s210] sm:$0xff] %v1277
        %1758 = vst [vmem:[%s210 + $0x8] sm:$0xff] %v1279
        %1759 = vst [vmem:[%s210 + $0x10] sm:$0xff] %v1631
        %1760 = vst [vmem:[%s210 + $0x18] sm:$0xff] %v1281
        %1761 = vst [vmem:[%s210 + $0x20] sm:$0xff] %v1283
        %1762 = vst [vmem:[%s210 + $0x28] sm:$0xff] %v1634
        %1763 = vst [vmem:[%s210 + $0x30] sm:$0xff] %v1287
        %1764 = vst [vmem:[%s210 + $0x38] sm:$0xff] %v1289
        %1765 = vst [vmem:[%s210 + $0x40] sm:$0xff] %v1639
        %1766 = vst [vmem:[%s210 + $0x48] sm:$0xff] %v1291
        %1767 = vst [vmem:[%s210 + $0x50] sm:$0xff] %v1293
        %1768 = vst [vmem:[%s210 + $0x58] sm:$0xff] %v1642
        %1769 = vst [vmem:[%s210 + $0x60] sm:$0xff] %v1297
        %1770 = vst [vmem:[%s210 + $0x68] sm:$0xff] %v1299
        %1771 = vst [vmem:[%s210 + $0x70] sm:$0xff] %v1647
        %1772 = vst [vmem:[%s210 + $0x78] sm:$0xff] %v1301
        %1773 = vst [vmem:[%s210 + $0x80] sm:$0xff] %v1303
        %1774 = vst [vmem:[%s210 + $0x88] sm:$0xff] %v1650
        %1775 = vst [vmem:[%s210 + $0x90] sm:$0xff] %v1307
        %1776 = vst [vmem:[%s210 + $0x98] sm:$0xff] %v1309
        %1777 = vst [vmem:[%s210 + $0xa0] sm:$0xff] %v1655
        %1778 = vst [vmem:[%s210 + $0xa8] sm:$0xff] %v1311
        %1779 = vst [vmem:[%s210 + $0xb0] sm:$0xff] %v1313
        %1780 = vst [vmem:[%s210 + $0xb8] sm:$0xff] %v1658
        %1781 = vst [vmem:[%s210 + $0xc0] sm:$0xff] %v1317
        %1782 = vst [vmem:[%s210 + $0xc8] sm:$0xff] %v1319
        %1783 = vst [vmem:[%s210 + $0xd0] sm:$0xff] %v1663
        %1784 = vst [vmem:[%s210 + $0xd8] sm:$0xff] %v1321
        %1785 = vst [vmem:[%s210 + $0xe0] sm:$0xff] %v1323
        %1786 = vst [vmem:[%s210 + $0xe8] sm:$0xff] %v1666
        %1787 = vst [vmem:[%s210 + $0xf0] sm:$0xff] %v1327
        %1788 = vst [vmem:[%s210 + $0xf8] sm:$0xff] %v1329
        %1789 = vst [vmem:[%s210 + $0x100] sm:$0xff] %v1671
        %1790 = vst [vmem:[%s210 + $0x108] sm:$0xff] %v1331
        %1791 = vst [vmem:[%s210 + $0x110] sm:$0xff] %v1333
        %1792 = vst [vmem:[%s210 + $0x118] sm:$0xff] %v1674
        %1793 = vst [vmem:[%s210 + $0x120] sm:$0xff] %v1337
        %1794 = vst [vmem:[%s210 + $0x128] sm:$0xff] %v1339
        %1795 = vst [vmem:[%s210 + $0x130] sm:$0xff] %v1679
        %1796 = vst [vmem:[%s210 + $0x138] sm:$0xff] %v1341
        %1797 = vst [vmem:[%s210 + $0x140] sm:$0xff] %v1343
        %1798 = vst [vmem:[%s210 + $0x148] sm:$0xff] %v1682
        %1799 = vst [vmem:[%s210 + $0x150] sm:$0xff] %v1347
        %1800 = vst [vmem:[%s210 + $0x158] sm:$0xff] %v1349
        %1801 = vst [vmem:[%s210 + $0x160] sm:$0xff] %v1687
        %1802 = vst [vmem:[%s210 + $0x168] sm:$0xff] %v1351
        %1803 = vst [vmem:[%s210 + $0x170] sm:$0xff] %v1353
        %1804 = vst [vmem:[%s210 + $0x178] sm:$0xff] %v1690
        %1805 = vst [vmem:[%s210 + $0x180] sm:$0xff] %v1357
        %1806 = vst [vmem:[%s210 + $0x188] sm:$0xff] %v1359
        %1807 = vst [vmem:[%s210 + $0x190] sm:$0xff] %v1695
        %1808 = vst [vmem:[%s210 + $0x198] sm:$0xff] %v1361
        %1809 = vst [vmem:[%s210 + $0x1a0] sm:$0xff] %v1363
        %1810 = vst [vmem:[%s210 + $0x1a8] sm:$0xff] %v1698
        %1811 = vst [vmem:[%s210 + $0x1b0] sm:$0xff] %v1367
        %1812 = vst [vmem:[%s210 + $0x1b8] sm:$0xff] %v1369
        %1813 = vst [vmem:[%s210 + $0x1c0] sm:$0xff] %v1703
        %1814 = vst [vmem:[%s210 + $0x1c8] sm:$0xff] %v1371
        %1815 = vst [vmem:[%s210 + $0x1d0] sm:$0xff] %v1373
        %1816 = vst [vmem:[%s210 + $0x1d8] sm:$0xff] %v1706
        %1817 = vst [vmem:[%s210 + $0x1e0] sm:$0xff] %v1377
        %1818 = vst [vmem:[%s210 + $0x1e8] sm:$0xff] %v1379
        %1819 = vst [vmem:[%s210 + $0x1f0] sm:$0xff] %v1711
        %1820 = vst [vmem:[%s210 + $0x1f8] sm:$0xff] %v1381
        %1821 = vst [vmem:[%s210 + $0x200] sm:$0xff] %v1383
        %1822 = vst [vmem:[%s210 + $0x208] sm:$0xff] %v1714
        %1823 = vst [vmem:[%s210 + $0x210] sm:$0xff] %v1387
        %1824 = vst [vmem:[%s210 + $0x218] sm:$0xff] %v1389
        %1825 = vst [vmem:[%s210 + $0x220] sm:$0xff] %v1719
        %1826 = vst [vmem:[%s210 + $0x228] sm:$0xff] %v1391
        %1827 = vst [vmem:[%s210 + $0x230] sm:$0xff] %v1393
        %1828 = vst [vmem:[%s210 + $0x238] sm:$0xff] %v1722
        %1829 = vst [vmem:[%s210 + $0x240] sm:$0xff] %v1397
        %1830 = vst [vmem:[%s210 + $0x248] sm:$0xff] %v1399
        %1831 = vst [vmem:[%s210 + $0x250] sm:$0xff] %v1727
        %1832 = vst [vmem:[%s210 + $0x258] sm:$0xff] %v1401
        %1833 = vst [vmem:[%s210 + $0x260] sm:$0xff] %v1403
        %1834 = vst [vmem:[%s210 + $0x268] sm:$0xff] %v1730
        %1835 = vst [vmem:[%s210 + $0x270] sm:$0xff] %v1407
        %1836 = vst [vmem:[%s210 + $0x278] sm:$0xff] %v1409
        %1837 = vst [vmem:[%s210 + $0x280] sm:$0xff] %v1735
        %1838 = vst [vmem:[%s210 + $0x288] sm:$0xff] %v1411
        %1839 = vst [vmem:[%s210 + $0x290] sm:$0xff] %v1413
        %1840 = vst [vmem:[%s210 + $0x298] sm:$0xff] %v1738
        %1841 = vst [vmem:[%s210 + $0x2a0] sm:$0xff] %v1417
        %1842 = vst [vmem:[%s210 + $0x2a8] sm:$0xff] %v1419
        %1843 = vst [vmem:[%s210 + $0x2b0] sm:$0xff] %v1743
        %1844 = vst [vmem:[%s210 + $0x2b8] sm:$0xff] %v1421
        %1845 = vst [vmem:[%s210 + $0x2c0] sm:$0xff] %v1423
        %1846 = vst [vmem:[%s210 + $0x2c8] sm:$0xff] %v1746
        %1847 = vst [vmem:[%s210 + $0x2d0] sm:$0xff] %v1427
        %1848 = vst [vmem:[%s210 + $0x2d8] sm:$0xff] %v1429
        %1849 = vst [vmem:[%s210 + $0x2e0] sm:$0xff] %v1751
        %1850 = vst [vmem:[%s210 + $0x2e8] sm:$0xff] %v1431
        %1851 = vst [vmem:[%s210 + $0x2f0] sm:$0xff] %v1433
        %1852 = vst [vmem:[%s210 + $0x2f8] sm:$0xff] %v1754
        %s1853 = sand.u32 %s117, 1
        %s1854 = scalar_lea.sflag [#allocation3], %s1853
        %s1855 = sand.u32 %s117, 1
        %s1856 = smul.addr %s1855, 768
        %s1857 = scalar_lea.vmem [#allocation2], %s1856
        // Predicated region
        $region33: #{multi_head_attention.5} parent=31 // pred_check
          %p1858 = pneg %p127
        $region34: #{multi_head_attention.5} parent=31 // pred_check_branch
          %1860 = sbr.rel (%p1858) target = $region36
        $region35: #{multi_head_attention.5} parent=31 // pred_region
          %s1861 = smul.u32 32, %s21
          %s1862 = smul.u32 3, %s22
          %s1864 = ssub.s32 12288, 12288
          %1865 = vsyncadd %s1854, %s1864
          %s1866 = smul.addr %s1861, 3
          %s1867 = sadd.s32 %s1862, %s1866
          %s1868 = smul.addr %s1867, 128
          %s1869 = scalar_lea.hbm %s3, %s1868
          %s1870 = sshll.u32 %s1857, 4
          %s1871 = int_to_ptr.vmem [resolvable:$true] %s1870
          %1876 = dma.vmem_to_hbm [thread:$0]  %s1871, 12288, %s1869, %s1854, 384, 384, 24
        $region36: #{multi_head_attention.5} parent=31 // pred_fallthru
          _
      $region32: #{multi_head_attention.5} parent=5 // pred_fallthru
        _
      %p1877 = scmp.le.s32.totalorder 2, %s12
      // Predicated region
      $region37: #{multi_head_attention.5} parent=5 // pred_check
        %p1878 = pneg %p1877
      $region38: #{multi_head_attention.5} parent=5 // pred_check_branch
        %1880 = sbr.rel (%p1878) target = $region40
      $region39: #{multi_head_attention.5} parent=5 // pred_region
        %s1881 = ssub.s32 %s12, 2
        // Predicated region
        $region41: #{multi_head_attention.5} parent=39 // pred_check
          %p1882 = pneg %p133
        $region42: #{multi_head_attention.5} parent=39 // pred_check_branch
          %1884 = sbr.rel (%p1882) target = $region44
        $region43: #{multi_head_attention.5} parent=39 // pred_region
          %s1885 = sand.u32 %s118, 1
          %s1886 = scalar_lea.sflag [#allocation3], %s1885
          %s1887 = sand.u32 %s118, 1
          %s1888 = smul.addr %s1887, 768
          %s1889 = scalar_lea.vmem [#allocation2], %s1888
          %1890 = dma.done %s1886, 12288
        $region44: #{multi_head_attention.5} parent=39 // pred_fallthru
          _
      $region40: #{multi_head_attention.5} parent=5 // pred_fallthru
        _
    $region6: #{multi_head_attention.5} parent=1 // loop_footer
      %s16 = sadd.s32 1, %s12
    $region7: #{multi_head_attention.5} parent=1 // loop_footer_branch
      %11 = sbr.rel target = $region3
    $region8: #{multi_head_attention.5} parent=1 // loop_exit
      _
    %1891 = vsyncpa [#allocation3], 1
    %s1892 = scalar_lea.sflag [#allocation3], 1
    %1893 = vsyncpa %s1892, 1

// kernel: multi_head_attention.4
$region0: #{multi_head_attention.4}
  #allocation0 [shape = 'u32[]', space=smem, size = 0x4, offset = 0x4, fixed_abs, tag = 'smem constant byte address 0x4 - core index']
  #allocation1 [shape = 'u32[144,128]{1,0:T(1,128)}', space=vmem, size = 0x12000, scoped, tag = 'internal scratch']
  #allocation2 [shape = 'f32[2,128,1]{2,1,0:T(8,128)}', space=vmem, size = 0x20000, scoped, tag = 'scratch operand']
  #allocation3 [shape = 'f32[2,128,1]{2,1,0:T(8,128)}', space=vmem, size = 0x20000, scoped, tag = 'scratch operand']
  #allocation4 [shape = 'f32[2,128,64]{2,1,0:T(8,128)}', space=vmem, size = 0x20000, scoped, tag = 'scratch operand']
  %s0 = inlined_call_operand.vmem [shape: bf16[2,256,1152], index: 0, kind: input, shape index: {}, may-alias: {0,1,2}]
  %s1 = inlined_call_operand.vmem [shape: bf16[2,256,1152], index: 1, kind: input, shape index: {}, may-alias: {0,1,2}]
  %s2 = inlined_call_operand.vmem [shape: bf16[2,256,1152], index: 2, kind: input, shape index: {}, may-alias: {0,1,2}]
  %s3 = inlined_call_operand.vmem [shape: bf16[2,256,384], index: 3, kind: output, shape index: {}]
  %s4 = sld [smem:[#allocation0]]
  $region221: #{multi_head_attention.4} parent=0
    _
  %s6 = ssub.s32 1, %s4
  %s7 = scalar_select 0, %s6, %s4
  $region1: #{multi_head_attention.4} parent=0
    #allocation5 [shape = 'u8[65536]{0}', space=vmem, size = 0x10000, scoped, tag = 'input window, operand 0']
    #allocation6 [shape = 'u8[65536]{0}', space=vmem, size = 0x10000, scoped, tag = 'input window, operand 1']
    #allocation7 [shape = 'u8[65536]{0}', space=vmem, size = 0x10000, scoped, tag = 'input window, operand 2']
    #allocation8 [shape = 'u8[65536]{0}', space=vmem, size = 0x10000, scoped, tag = 'output window, operand 0']
    loop: start=0, step=1, limit=26
    $region2: #{multi_head_attention.4} parent=1 // loop_pre_header
      _
    $region3: #{multi_head_attention.4} parent=1 // loop_header
      %s9 = sphi 0, %s13
      %p10 = scmp.ge.s32.totalorder %s9, 26
      %s16 = sphi 0, %s42
      %s17 = sphi 0, %s38
      %s18 = sphi 0, %s34
      %s19 = sphi 0, %s30
      %s20 = sphi 0, %s16
      %s21 = sphi 0, %s17
      %s22 = sphi 0, %s18
      %s23 = sphi 0, %s19
      %s24 = sphi 0, %s20
      %s25 = sphi 0, %s21
      %s26 = sphi 0, %s22
      %s27 = sphi 0, %s23
      %s49 = sphi 0, %s51
      %s52 = sphi 0, %s49
      %s53 = sphi 0, %s52
      %s69 = sphi 0, %s53
      %s81 = sphi 0, %s83
      %s84 = sphi 0, %s81
      %s85 = sphi 0, %s84
      %s101 = sphi 0, %s85
      %s113 = sphi 0, %s115
      %s116 = sphi 0, %s113
      %s117 = sphi 0, %s116
      %s133 = sphi 0, %s117
      %s143 = sphi 0, %s145
      %s146 = sphi 0, %s143
      %s147 = sphi 0, %s146
      %s163 = sphi 0, %s147
    $region4: #{multi_head_attention.4} parent=1 // loop_header_branch
      %12 = sbr.rel (%p10) target = $region8
    $region5: #{multi_head_attention.4} parent=1 // loop_body
      %s14 = ssub.s32 %s9, 1
      %s15 = ssub.s32 %s9, 2
      %s28 = sadd.s32 1, %s19
      %p29 = scmp.ge.s32.totalorder %s28, 2
      %s30 = scalar_select %p29, 0, %s28
      %s31 = sadd.s32 1, %s18
      %s32 = scalar_select %p29, %s31, %s18
      %p33 = scmp.ge.s32.totalorder %s32, 2
      %s34 = scalar_select %p33, 0, %s32
      %s35 = sadd.s32 1, %s17
      %s36 = scalar_select %p33, %s35, %s17
      %p37 = scmp.ge.s32.totalorder %s36, 3
      %s38 = scalar_select %p37, 0, %s36
      %s39 = sadd.s32 1, %s16
      %s40 = scalar_select %p37, %s39, %s16
      %p41 = scmp.ge.s32.totalorder %s40, 2
      %s42 = scalar_select %p41, 0, %s40
      %s43 = ssub.s32 %s16, %s42
      %s44 = ssub.s32 %s18, %s34
      %s45 = sor.u32 %s43, %s44
      %s46 = ssub.s32 %s17, %s38
      %s47 = sor.u32 %s45, %s46
      %p48 = scmp.eq.s32.totalorder %s47, 0
      %s50 = sadd.s32 %s49, 1
      %s51 = scalar_select %p48, %s49, %s50
      %p54 = pneg %p48
      %p55 = scmp.eq.s32.totalorder %s9, 23
      %p56 = por %p54, %p55
      %p57 = scmp.ne.s32.totalorder %s49, %s52
      %p58 = scmp.eq.s32.totalorder %s9, 0
      %p59 = por %p57, %p58
      %p60 = scmp.ne.s32.totalorder %s49, %s52
      %p61 = scmp.eq.s32.totalorder %s14, 23
      %p62 = por %p60, %p61
      %p63 = scmp.ne.s32.totalorder %s52, %s53
      %p64 = scmp.eq.s32.totalorder %s14, 0
      %p65 = por %p63, %p64
      %p66 = scmp.ne.s32.totalorder %s52, %s53
      %p67 = scmp.eq.s32.totalorder %s15, 23
      %p68 = por %p66, %p67
      %p70 = scmp.ne.s32.totalorder %s53, %s69
      %p71 = scmp.eq.s32.totalorder %s15, 0
      %p72 = por %p70, %p71
      %s73 = sadd.s32 %s17, 3
      %s74 = sadd.s32 %s38, 3
      %s75 = ssub.s32 %s16, %s42
      %s76 = ssub.s32 %s19, %s30
      %s77 = sor.u32 %s75, %s76
      %s78 = ssub.s32 %s73, %s74
      %s79 = sor.u32 %s77, %s78
      %p80 = scmp.eq.s32.totalorder %s79, 0
      %s82 = sadd.s32 %s81, 1
      %s83 = scalar_select %p80, %s81, %s82
      %p86 = pneg %p80
      %p87 = scmp.eq.s32.totalorder %s9, 23
      %p88 = por %p86, %p87
      %p89 = scmp.ne.s32.totalorder %s81, %s84
      %p90 = scmp.eq.s32.totalorder %s9, 0
      %p91 = por %p89, %p90
      %p92 = scmp.ne.s32.totalorder %s81, %s84
      %p93 = scmp.eq.s32.totalorder %s14, 23
      %p94 = por %p92, %p93
      %p95 = scmp.ne.s32.totalorder %s84, %s85
      %p96 = scmp.eq.s32.totalorder %s14, 0
      %p97 = por %p95, %p96
      %p98 = scmp.ne.s32.totalorder %s84, %s85
      %p99 = scmp.eq.s32.totalorder %s15, 23
      %p100 = por %p98, %p99
      %p102 = scmp.ne.s32.totalorder %s85, %s101
      %p103 = scmp.eq.s32.totalorder %s15, 0
      %p104 = por %p102, %p103
      %s105 = sadd.s32 %s17, 6
      %s106 = sadd.s32 %s38, 6
      %s107 = ssub.s32 %s16, %s42
      %s108 = ssub.s32 %s19, %s30
      %s109 = sor.u32 %s107, %s108
      %s110 = ssub.s32 %s105, %s106
      %s111 = sor.u32 %s109, %s110
      %p112 = scmp.eq.s32.totalorder %s111, 0
      %s114 = sadd.s32 %s113, 1
      %s115 = scalar_select %p112, %s113, %s114
      %p118 = pneg %p112
      %p119 = scmp.eq.s32.totalorder %s9, 23
      %p120 = por %p118, %p119
      %p121 = scmp.ne.s32.totalorder %s113, %s116
      %p122 = scmp.eq.s32.totalorder %s9, 0
      %p123 = por %p121, %p122
      %p124 = scmp.ne.s32.totalorder %s113, %s116
      %p125 = scmp.eq.s32.totalorder %s14, 23
      %p126 = por %p124, %p125
      %p127 = scmp.ne.s32.totalorder %s116, %s117
      %p128 = scmp.eq.s32.totalorder %s14, 0
      %p129 = por %p127, %p128
      %p130 = scmp.ne.s32.totalorder %s116, %s117
      %p131 = scmp.eq.s32.totalorder %s15, 23
      %p132 = por %p130, %p131
      %p134 = scmp.ne.s32.totalorder %s117, %s133
      %p135 = scmp.eq.s32.totalorder %s15, 0
      %p136 = por %p134, %p135
      %s137 = ssub.s32 %s16, %s42
      %s138 = ssub.s32 %s18, %s34
      %s139 = sor.u32 %s137, %s138
      %s140 = ssub.s32 %s17, %s38
      %s141 = sor.u32 %s139, %s140
      %p142 = scmp.eq.s32.totalorder %s141, 0
      %s144 = sadd.s32 %s143, 1
      %s145 = scalar_select %p142, %s143, %s144
      %p148 = pneg %p142
      %p149 = scmp.eq.s32.totalorder %s9, 23
      %p150 = por %p148, %p149
      %p151 = scmp.ne.s32.totalorder %s143, %s146
      %p152 = scmp.eq.s32.totalorder %s9, 0
      %p153 = por %p151, %p152
      %p154 = scmp.ne.s32.totalorder %s143, %s146
      %p155 = scmp.eq.s32.totalorder %s14, 23
      %p156 = por %p154, %p155
      %p157 = scmp.ne.s32.totalorder %s146, %s147
      %p158 = scmp.eq.s32.totalorder %s14, 0
      %p159 = por %p157, %p158
      %p160 = scmp.ne.s32.totalorder %s146, %s147
      %p161 = scmp.eq.s32.totalorder %s15, 23
      %p162 = por %p160, %p161
      %p164 = scmp.ne.s32.totalorder %s147, %s163
      %p165 = scmp.eq.s32.totalorder %s15, 0
      %p166 = por %p164, %p165
      %p167 = scmp.le.s32.totalorder 1, %s9
      %p168 = scmp.lt.s32.totalorder %s9, 25
      %p169 = pnand %p167, %p168
      %p170 = pneg %p169
      // Predicated region
      $region9: #{multi_head_attention.4} parent=5 // pred_check
        _
      $region10: #{multi_head_attention.4} parent=5 // pred_check_branch
        %172 = sbr.rel (%p169) target = $region12
      $region11: #{multi_head_attention.4} parent=5 // pred_region
        %s173 = ssub.s32 %s9, 1
      $region12: #{multi_head_attention.4} parent=5 // pred_fallthru
        _
      %p174 = scmp.lt.s32.totalorder %s9, 24
      // Predicated region
      $region13: #{multi_head_attention.4} parent=5 // pred_check
        %p175 = pneg %p174
      $region14: #{multi_head_attention.4} parent=5 // pred_check_branch
        %177 = sbr.rel (%p175) target = $region16
      $region15: #{multi_head_attention.4} parent=5 // pred_region
        // Predicated region
        $region17: #{multi_head_attention.4} parent=15 // pred_check
          %p178 = pneg %p59
        $region18: #{multi_head_attention.4} parent=15 // pred_check_branch
          %180 = sbr.rel (%p178) target = $region20
        $region19: #{multi_head_attention.4} parent=15 // pred_region
          %s181 = sand.u32 %s49, 1
          %s182 = sand.u32 %s49, 1
          %s183 = smul.addr %s182, 64
          %s184 = scalar_lea.vmem [#allocation5], %s183
          %s185 = smul.u32 16, %s18
          %s186 = smul.addr %s185, 9
          %s187 = sadd.s32 %s17, %s186
          %s188 = smul.addr %s16, 288
          %s189 = sadd.s32 %s187, %s188
          %s190 = smul.addr %s189, 4
          %s191 = scalar_lea.vmem %s0, %s190
          // Predicated region
          $region21: #{multi_head_attention.4} parent=19 // pred_check
            _
          $region22: #{multi_head_attention.4} parent=19 // pred_check_branch
            %193 = sbr.rel (0) target = $region24
          $region23: #{multi_head_attention.4} parent=19 // pred_region
            // Predicated region
            $region25: #{multi_head_attention.4} parent=23 // pred_check
              _
            $region26: #{multi_head_attention.4} parent=23 // pred_check_branch
              %195 = sbr.rel target = $region28
            $region27: #{multi_head_attention.4} parent=23 // pred_region
              // Predicated region
              $region40: #{multi_head_attention.4} parent=27 // pred_check
                _
              $region41: #{multi_head_attention.4} parent=27 // pred_check_branch
                %240 = sbr.rel (0) target = $region43
              $region42: #{multi_head_attention.4} parent=27 // pred_region
                loop: start=0, step=1, limit=1
                $region44: #{multi_head_attention.4} parent=42 // loop_pre_header
                  _
                $region45: #{multi_head_attention.4} parent=42 // loop_header
                  %s242 = sphi 0, %s246
                  %p243 = scmp.ge.s32.totalorder %s242, 1
                  %s247 = sphi %s191, %s191
                  %s248 = sphi %s184, %s184
                $region46: #{multi_head_attention.4} parent=42 // loop_header_branch
                  %245 = sbr.rel (%p243) target = $region50
                $region47: #{multi_head_attention.4} parent=42 // loop_body
                  _
                $region48: #{multi_head_attention.4} parent=42 // loop_footer
                  %s246 = sadd.s32 1, %s242
                $region49: #{multi_head_attention.4} parent=42 // loop_footer_branch
                  %241 = sbr.rel target = $region45
                $region50: #{multi_head_attention.4} parent=42 // loop_exit
                  _
                loop: start=0, step=1, limit=1
                $region51: #{multi_head_attention.4} parent=42 // loop_pre_header
                  _
                $region52: #{multi_head_attention.4} parent=42 // loop_header
                  %s251 = sphi 0, %s255
                  %p252 = scmp.ge.s32.totalorder %s251, 1
                  %s256 = sphi %s191, %s191
                  %s257 = sphi %s184, %s184
                $region53: #{multi_head_attention.4} parent=42 // loop_header_branch
                  %254 = sbr.rel (%p252) target = $region57
                $region54: #{multi_head_attention.4} parent=42 // loop_body
                  %v258 = vld [vmem:[%s256] sm:$0xf]
                  %259 = vst [vmem:[%s257] sm:$0xf] %v258
                  %v260 = vld [vmem:[%s256 + $0x24] sm:$0xf]
                  %261 = vst [vmem:[%s257 + $0x4] sm:$0xf] %v260
                  %v262 = vld [vmem:[%s256 + $0x48] sm:$0xf]
                  %263 = vst [vmem:[%s257 + $0x8] sm:$0xf] %v262
                  %v264 = vld [vmem:[%s256 + $0x6c] sm:$0xf]
                  %265 = vst [vmem:[%s257 + $0xc] sm:$0xf] %v264
                  %v266 = vld [vmem:[%s256 + $0x90] sm:$0xf]
                  %267 = vst [vmem:[%s257 + $0x10] sm:$0xf] %v266
                  %v268 = vld [vmem:[%s256 + $0xb4] sm:$0xf]
                  %269 = vst [vmem:[%s257 + $0x14] sm:$0xf] %v268
                  %v270 = vld [vmem:[%s256 + $0xd8] sm:$0xf]
                  %271 = vst [vmem:[%s257 + $0x18] sm:$0xf] %v270
                  %v272 = vld [vmem:[%s256 + $0xfc] sm:$0xf]
                  %273 = vst [vmem:[%s257 + $0x1c] sm:$0xf] %v272
                  %v274 = vld [vmem:[%s256 + $0x120] sm:$0xf]
                  %275 = vst [vmem:[%s257 + $0x20] sm:$0xf] %v274
                  %v276 = vld [vmem:[%s256 + $0x144] sm:$0xf]
                  %277 = vst [vmem:[%s257 + $0x24] sm:$0xf] %v276
                  %v278 = vld [vmem:[%s256 + $0x168] sm:$0xf]
                  %279 = vst [vmem:[%s257 + $0x28] sm:$0xf] %v278
                  %v280 = vld [vmem:[%s256 + $0x18c] sm:$0xf]
                  %281 = vst [vmem:[%s257 + $0x2c] sm:$0xf] %v280
                  %v282 = vld [vmem:[%s256 + $0x1b0] sm:$0xf]
                  %283 = vst [vmem:[%s257 + $0x30] sm:$0xf] %v282
                  %v284 = vld [vmem:[%s256 + $0x1d4] sm:$0xf]
                  %285 = vst [vmem:[%s257 + $0x34] sm:$0xf] %v284
                  %v286 = vld [vmem:[%s256 + $0x1f8] sm:$0xf]
                  %287 = vst [vmem:[%s257 + $0x38] sm:$0xf] %v286
                  %v288 = vld [vmem:[%s256 + $0x21c] sm:$0xf]
                  %289 = vst [vmem:[%s257 + $0x3c] sm:$0xf] %v288
                $region55: #{multi_head_attention.4} parent=42 // loop_footer
                  %s255 = sadd.s32 1, %s251
                $region56: #{multi_head_attention.4} parent=42 // loop_footer_branch
                  %250 = sbr.rel target = $region52
                $region57: #{multi_head_attention.4} parent=42 // loop_exit
                  _
              $region43: #{multi_head_attention.4} parent=27 // pred_fallthru
                _
            $region28: #{multi_head_attention.4} parent=23 // pred_fallthru
              _
            // Predicated region
            $region29: #{multi_head_attention.4} parent=23 // pred_check
              _
            $region30: #{multi_head_attention.4} parent=23 // pred_check_branch
              %197 = sbr.rel (0) target = $region32
            $region31: #{multi_head_attention.4} parent=23 // pred_region
              loop: start=0, step=1, limit=1
              $region33: #{multi_head_attention.4} parent=31 // loop_pre_header
                _
              $region34: #{multi_head_attention.4} parent=31 // loop_header
                %s200 = sphi 0, %s204
                %p201 = scmp.ge.s32.totalorder %s200, 1
                %s205 = sphi %s191, %s191
                %s206 = sphi %s184, %s184
              $region35: #{multi_head_attention.4} parent=31 // loop_header_branch
                %203 = sbr.rel (%p201) target = $region39
              $region36: #{multi_head_attention.4} parent=31 // loop_body
                %v207 = vld [vmem:[%s205] sm:$0xf]
                %208 = vst [vmem:[%s206] sm:$0xf] %v207
                %v209 = vld [vmem:[%s205 + $0x24] sm:$0xf]
                %210 = vst [vmem:[%s206 + $0x4] sm:$0xf] %v209
                %v211 = vld [vmem:[%s205 + $0x48] sm:$0xf]
                %212 = vst [vmem:[%s206 + $0x8] sm:$0xf] %v211
                %v213 = vld [vmem:[%s205 + $0x6c] sm:$0xf]
                %214 = vst [vmem:[%s206 + $0xc] sm:$0xf] %v213
                %v215 = vld [vmem:[%s205 + $0x90] sm:$0xf]
                %216 = vst [vmem:[%s206 + $0x10] sm:$0xf] %v215
                %v217 = vld [vmem:[%s205 + $0xb4] sm:$0xf]
                %218 = vst [vmem:[%s206 + $0x14] sm:$0xf] %v217
                %v219 = vld [vmem:[%s205 + $0xd8] sm:$0xf]
                %220 = vst [vmem:[%s206 + $0x18] sm:$0xf] %v219
                %v221 = vld [vmem:[%s205 + $0xfc] sm:$0xf]
                %222 = vst [vmem:[%s206 + $0x1c] sm:$0xf] %v221
                %v223 = vld [vmem:[%s205 + $0x120] sm:$0xf]
                %224 = vst [vmem:[%s206 + $0x20] sm:$0xf] %v223
                %v225 = vld [vmem:[%s205 + $0x144] sm:$0xf]
                %226 = vst [vmem:[%s206 + $0x24] sm:$0xf] %v225
                %v227 = vld [vmem:[%s205 + $0x168] sm:$0xf]
                %228 = vst [vmem:[%s206 + $0x28] sm:$0xf] %v227
                %v229 = vld [vmem:[%s205 + $0x18c] sm:$0xf]
                %230 = vst [vmem:[%s206 + $0x2c] sm:$0xf] %v229
                %v231 = vld [vmem:[%s205 + $0x1b0] sm:$0xf]
                %232 = vst [vmem:[%s206 + $0x30] sm:$0xf] %v231
                %v233 = vld [vmem:[%s205 + $0x1d4] sm:$0xf]
                %234 = vst [vmem:[%s206 + $0x34] sm:$0xf] %v233
                %v235 = vld [vmem:[%s205 + $0x1f8] sm:$0xf]
                %236 = vst [vmem:[%s206 + $0x38] sm:$0xf] %v235
                %v237 = vld [vmem:[%s205 + $0x21c] sm:$0xf]
                %238 = vst [vmem:[%s206 + $0x3c] sm:$0xf] %v237
              $region37: #{multi_head_attention.4} parent=31 // loop_footer
                %s204 = sadd.s32 1, %s200
              $region38: #{multi_head_attention.4} parent=31 // loop_footer_branch
                %199 = sbr.rel target = $region34
              $region39: #{multi_head_attention.4} parent=31 // loop_exit
                _
            $region32: #{multi_head_attention.4} parent=23 // pred_fallthru
              _
          $region24: #{multi_head_attention.4} parent=19 // pred_fallthru
            _
          %290 = vnop
        $region20: #{multi_head_attention.4} parent=15 // pred_fallthru
          _
        // Predicated region
        $region58: #{multi_head_attention.4} parent=15 // pred_check
          %p291 = pneg %p91
        $region59: #{multi_head_attention.4} parent=15 // pred_check_branch
          %293 = sbr.rel (%p291) target = $region61
        $region60: #{multi_head_attention.4} parent=15 // pred_region
          %s294 = sand.u32 %s81, 1
          %s295 = sand.u32 %s81, 1
          %s296 = smul.addr %s295, 64
          %s297 = scalar_lea.vmem [#allocation6], %s296
          %s298 = sadd.s32 %s17, 3
          %s299 = smul.u32 16, %s19
          %s300 = smul.addr %s299, 9
          %s301 = sadd.s32 %s298, %s300
          %s302 = smul.addr %s16, 288
          %s303 = sadd.s32 %s301, %s302
          %s304 = smul.addr %s303, 4
          %s305 = scalar_lea.vmem %s1, %s304
          // Predicated region
          $region62: #{multi_head_attention.4} parent=60 // pred_check
            _
          $region63: #{multi_head_attention.4} parent=60 // pred_check_branch
            %307 = sbr.rel (0) target = $region65
          $region64: #{multi_head_attention.4} parent=60 // pred_region
            // Predicated region
            $region66: #{multi_head_attention.4} parent=64 // pred_check
              _
            $region67: #{multi_head_attention.4} parent=64 // pred_check_branch
              %309 = sbr.rel target = $region69
            $region68: #{multi_head_attention.4} parent=64 // pred_region
              // Predicated region
              $region81: #{multi_head_attention.4} parent=68 // pred_check
                _
              $region82: #{multi_head_attention.4} parent=68 // pred_check_branch
                %354 = sbr.rel (0) target = $region84
              $region83: #{multi_head_attention.4} parent=68 // pred_region
                loop: start=0, step=1, limit=1
                $region85: #{multi_head_attention.4} parent=83 // loop_pre_header
                  _
                $region86: #{multi_head_attention.4} parent=83 // loop_header
                  %s356 = sphi 0, %s360
                  %p357 = scmp.ge.s32.totalorder %s356, 1
                  %s361 = sphi %s305, %s305
                  %s362 = sphi %s297, %s297
                $region87: #{multi_head_attention.4} parent=83 // loop_header_branch
                  %359 = sbr.rel (%p357) target = $region91
                $region88: #{multi_head_attention.4} parent=83 // loop_body
                  _
                $region89: #{multi_head_attention.4} parent=83 // loop_footer
                  %s360 = sadd.s32 1, %s356
                $region90: #{multi_head_attention.4} parent=83 // loop_footer_branch
                  %355 = sbr.rel target = $region86
                $region91: #{multi_head_attention.4} parent=83 // loop_exit
                  _
                loop: start=0, step=1, limit=1
                $region92: #{multi_head_attention.4} parent=83 // loop_pre_header
                  _
                $region93: #{multi_head_attention.4} parent=83 // loop_header
                  %s365 = sphi 0, %s369
                  %p366 = scmp.ge.s32.totalorder %s365, 1
                  %s370 = sphi %s305, %s305
                  %s371 = sphi %s297, %s297
                $region94: #{multi_head_attention.4} parent=83 // loop_header_branch
                  %368 = sbr.rel (%p366) target = $region98
                $region95: #{multi_head_attention.4} parent=83 // loop_body
                  %v372 = vld [vmem:[%s370] sm:$0xf]
                  %373 = vst [vmem:[%s371] sm:$0xf] %v372
                  %v374 = vld [vmem:[%s370 + $0x24] sm:$0xf]
                  %375 = vst [vmem:[%s371 + $0x4] sm:$0xf] %v374
                  %v376 = vld [vmem:[%s370 + $0x48] sm:$0xf]
                  %377 = vst [vmem:[%s371 + $0x8] sm:$0xf] %v376
                  %v378 = vld [vmem:[%s370 + $0x6c] sm:$0xf]
                  %379 = vst [vmem:[%s371 + $0xc] sm:$0xf] %v378
                  %v380 = vld [vmem:[%s370 + $0x90] sm:$0xf]
                  %381 = vst [vmem:[%s371 + $0x10] sm:$0xf] %v380
                  %v382 = vld [vmem:[%s370 + $0xb4] sm:$0xf]
                  %383 = vst [vmem:[%s371 + $0x14] sm:$0xf] %v382
                  %v384 = vld [vmem:[%s370 + $0xd8] sm:$0xf]
                  %385 = vst [vmem:[%s371 + $0x18] sm:$0xf] %v384
                  %v386 = vld [vmem:[%s370 + $0xfc] sm:$0xf]
                  %387 = vst [vmem:[%s371 + $0x1c] sm:$0xf] %v386
                  %v388 = vld [vmem:[%s370 + $0x120] sm:$0xf]
                  %389 = vst [vmem:[%s371 + $0x20] sm:$0xf] %v388
                  %v390 = vld [vmem:[%s370 + $0x144] sm:$0xf]
                  %391 = vst [vmem:[%s371 + $0x24] sm:$0xf] %v390
                  %v392 = vld [vmem:[%s370 + $0x168] sm:$0xf]
                  %393 = vst [vmem:[%s371 + $0x28] sm:$0xf] %v392
                  %v394 = vld [vmem:[%s370 + $0x18c] sm:$0xf]
                  %395 = vst [vmem:[%s371 + $0x2c] sm:$0xf] %v394
                  %v396 = vld [vmem:[%s370 + $0x1b0] sm:$0xf]
                  %397 = vst [vmem:[%s371 + $0x30] sm:$0xf] %v396
                  %v398 = vld [vmem:[%s370 + $0x1d4] sm:$0xf]
                  %399 = vst [vmem:[%s371 + $0x34] sm:$0xf] %v398
                  %v400 = vld [vmem:[%s370 + $0x1f8] sm:$0xf]
                  %401 = vst [vmem:[%s371 + $0x38] sm:$0xf] %v400
                  %v402 = vld [vmem:[%s370 + $0x21c] sm:$0xf]
                  %403 = vst [vmem:[%s371 + $0x3c] sm:$0xf] %v402
                $region96: #{multi_head_attention.4} parent=83 // loop_footer
                  %s369 = sadd.s32 1, %s365
                $region97: #{multi_head_attention.4} parent=83 // loop_footer_branch
                  %364 = sbr.rel target = $region93
                $region98: #{multi_head_attention.4} parent=83 // loop_exit
                  _
              $region84: #{multi_head_attention.4} parent=68 // pred_fallthru
                _
            $region69: #{multi_head_attention.4} parent=64 // pred_fallthru
              _
            // Predicated region
            $region70: #{multi_head_attention.4} parent=64 // pred_check
              _
            $region71: #{multi_head_attention.4} parent=64 // pred_check_branch
              %311 = sbr.rel (0) target = $region73
            $region72: #{multi_head_attention.4} parent=64 // pred_region
              loop: start=0, step=1, limit=1
              $region74: #{multi_head_attention.4} parent=72 // loop_pre_header
                _
              $region75: #{multi_head_attention.4} parent=72 // loop_header
                %s314 = sphi 0, %s318
                %p315 = scmp.ge.s32.totalorder %s314, 1
                %s319 = sphi %s305, %s305
                %s320 = sphi %s297, %s297
              $region76: #{multi_head_attention.4} parent=72 // loop_header_branch
                %317 = sbr.rel (%p315) target = $region80
              $region77: #{multi_head_attention.4} parent=72 // loop_body
                %v321 = vld [vmem:[%s319] sm:$0xf]
                %322 = vst [vmem:[%s320] sm:$0xf] %v321
                %v323 = vld [vmem:[%s319 + $0x24] sm:$0xf]
                %324 = vst [vmem:[%s320 + $0x4] sm:$0xf] %v323
                %v325 = vld [vmem:[%s319 + $0x48] sm:$0xf]
                %326 = vst [vmem:[%s320 + $0x8] sm:$0xf] %v325
                %v327 = vld [vmem:[%s319 + $0x6c] sm:$0xf]
                %328 = vst [vmem:[%s320 + $0xc] sm:$0xf] %v327
                %v329 = vld [vmem:[%s319 + $0x90] sm:$0xf]
                %330 = vst [vmem:[%s320 + $0x10] sm:$0xf] %v329
                %v331 = vld [vmem:[%s319 + $0xb4] sm:$0xf]
                %332 = vst [vmem:[%s320 + $0x14] sm:$0xf] %v331
                %v333 = vld [vmem:[%s319 + $0xd8] sm:$0xf]
                %334 = vst [vmem:[%s320 + $0x18] sm:$0xf] %v333
                %v335 = vld [vmem:[%s319 + $0xfc] sm:$0xf]
                %336 = vst [vmem:[%s320 + $0x1c] sm:$0xf] %v335
                %v337 = vld [vmem:[%s319 + $0x120] sm:$0xf]
                %338 = vst [vmem:[%s320 + $0x20] sm:$0xf] %v337
                %v339 = vld [vmem:[%s319 + $0x144] sm:$0xf]
                %340 = vst [vmem:[%s320 + $0x24] sm:$0xf] %v339
                %v341 = vld [vmem:[%s319 + $0x168] sm:$0xf]
                %342 = vst [vmem:[%s320 + $0x28] sm:$0xf] %v341
                %v343 = vld [vmem:[%s319 + $0x18c] sm:$0xf]
                %344 = vst [vmem:[%s320 + $0x2c] sm:$0xf] %v343
                %v345 = vld [vmem:[%s319 + $0x1b0] sm:$0xf]
                %346 = vst [vmem:[%s320 + $0x30] sm:$0xf] %v345
                %v347 = vld [vmem:[%s319 + $0x1d4] sm:$0xf]
                %348 = vst [vmem:[%s320 + $0x34] sm:$0xf] %v347
                %v349 = vld [vmem:[%s319 + $0x1f8] sm:$0xf]
                %350 = vst [vmem:[%s320 + $0x38] sm:$0xf] %v349
                %v351 = vld [vmem:[%s319 + $0x21c] sm:$0xf]
                %352 = vst [vmem:[%s320 + $0x3c] sm:$0xf] %v351
              $region78: #{multi_head_attention.4} parent=72 // loop_footer
                %s318 = sadd.s32 1, %s314
              $region79: #{multi_head_attention.4} parent=72 // loop_footer_branch
                %313 = sbr.rel target = $region75
              $region80: #{multi_head_attention.4} parent=72 // loop_exit
                _
            $region73: #{multi_head_attention.4} parent=64 // pred_fallthru
              _
          $region65: #{multi_head_attention.4} parent=60 // pred_fallthru
            _
          %404 = vnop
        $region61: #{multi_head_attention.4} parent=15 // pred_fallthru
          _
        // Predicated region
        $region99: #{multi_head_attention.4} parent=15 // pred_check
          %p405 = pneg %p123
        $region100: #{multi_head_attention.4} parent=15 // pred_check_branch
          %407 = sbr.rel (%p405) target = $region102
        $region101: #{multi_head_attention.4} parent=15 // pred_region
          %s408 = sand.u32 %s113, 1
          %s409 = sand.u32 %s113, 1
          %s410 = smul.addr %s409, 64
          %s411 = scalar_lea.vmem [#allocation7], %s410
          %s412 = sadd.s32 %s17, 6
          %s413 = smul.u32 16, %s19
          %s414 = smul.addr %s413, 9
          %s415 = sadd.s32 %s412, %s414
          %s416 = smul.addr %s16, 288
          %s417 = sadd.s32 %s415, %s416
          %s418 = smul.addr %s417, 4
          %s419 = scalar_lea.vmem %s2, %s418
          // Predicated region
          $region103: #{multi_head_attention.4} parent=101 // pred_check
            _
          $region104: #{multi_head_attention.4} parent=101 // pred_check_branch
            %421 = sbr.rel (0) target = $region106
          $region105: #{multi_head_attention.4} parent=101 // pred_region
            // Predicated region
            $region107: #{multi_head_attention.4} parent=105 // pred_check
              _
            $region108: #{multi_head_attention.4} parent=105 // pred_check_branch
              %423 = sbr.rel target = $region110
            $region109: #{multi_head_attention.4} parent=105 // pred_region
              // Predicated region
              $region122: #{multi_head_attention.4} parent=109 // pred_check
                _
              $region123: #{multi_head_attention.4} parent=109 // pred_check_branch
                %468 = sbr.rel (0) target = $region125
              $region124: #{multi_head_attention.4} parent=109 // pred_region
                loop: start=0, step=1, limit=1
                $region126: #{multi_head_attention.4} parent=124 // loop_pre_header
                  _
                $region127: #{multi_head_attention.4} parent=124 // loop_header
                  %s470 = sphi 0, %s474
                  %p471 = scmp.ge.s32.totalorder %s470, 1
                  %s475 = sphi %s419, %s419
                  %s476 = sphi %s411, %s411
                $region128: #{multi_head_attention.4} parent=124 // loop_header_branch
                  %473 = sbr.rel (%p471) target = $region132
                $region129: #{multi_head_attention.4} parent=124 // loop_body
                  _
                $region130: #{multi_head_attention.4} parent=124 // loop_footer
                  %s474 = sadd.s32 1, %s470
                $region131: #{multi_head_attention.4} parent=124 // loop_footer_branch
                  %469 = sbr.rel target = $region127
                $region132: #{multi_head_attention.4} parent=124 // loop_exit
                  _
                loop: start=0, step=1, limit=1
                $region133: #{multi_head_attention.4} parent=124 // loop_pre_header
                  _
                $region134: #{multi_head_attention.4} parent=124 // loop_header
                  %s479 = sphi 0, %s483
                  %p480 = scmp.ge.s32.totalorder %s479, 1
                  %s484 = sphi %s419, %s419
                  %s485 = sphi %s411, %s411
                $region135: #{multi_head_attention.4} parent=124 // loop_header_branch
                  %482 = sbr.rel (%p480) target = $region139
                $region136: #{multi_head_attention.4} parent=124 // loop_body
                  %v486 = vld [vmem:[%s484] sm:$0xf]
                  %487 = vst [vmem:[%s485] sm:$0xf] %v486
                  %v488 = vld [vmem:[%s484 + $0x24] sm:$0xf]
                  %489 = vst [vmem:[%s485 + $0x4] sm:$0xf] %v488
                  %v490 = vld [vmem:[%s484 + $0x48] sm:$0xf]
                  %491 = vst [vmem:[%s485 + $0x8] sm:$0xf] %v490
                  %v492 = vld [vmem:[%s484 + $0x6c] sm:$0xf]
                  %493 = vst [vmem:[%s485 + $0xc] sm:$0xf] %v492
                  %v494 = vld [vmem:[%s484 + $0x90] sm:$0xf]
                  %495 = vst [vmem:[%s485 + $0x10] sm:$0xf] %v494
                  %v496 = vld [vmem:[%s484 + $0xb4] sm:$0xf]
                  %497 = vst [vmem:[%s485 + $0x14] sm:$0xf] %v496
                  %v498 = vld [vmem:[%s484 + $0xd8] sm:$0xf]
                  %499 = vst [vmem:[%s485 + $0x18] sm:$0xf] %v498
                  %v500 = vld [vmem:[%s484 + $0xfc] sm:$0xf]
                  %501 = vst [vmem:[%s485 + $0x1c] sm:$0xf] %v500
                  %v502 = vld [vmem:[%s484 + $0x120] sm:$0xf]
                  %503 = vst [vmem:[%s485 + $0x20] sm:$0xf] %v502
                  %v504 = vld [vmem:[%s484 + $0x144] sm:$0xf]
                  %505 = vst [vmem:[%s485 + $0x24] sm:$0xf] %v504
                  %v506 = vld [vmem:[%s484 + $0x168] sm:$0xf]
                  %507 = vst [vmem:[%s485 + $0x28] sm:$0xf] %v506
                  %v508 = vld [vmem:[%s484 + $0x18c] sm:$0xf]
                  %509 = vst [vmem:[%s485 + $0x2c] sm:$0xf] %v508
                  %v510 = vld [vmem:[%s484 + $0x1b0] sm:$0xf]
                  %511 = vst [vmem:[%s485 + $0x30] sm:$0xf] %v510
                  %v512 = vld [vmem:[%s484 + $0x1d4] sm:$0xf]
                  %513 = vst [vmem:[%s485 + $0x34] sm:$0xf] %v512
                  %v514 = vld [vmem:[%s484 + $0x1f8] sm:$0xf]
                  %515 = vst [vmem:[%s485 + $0x38] sm:$0xf] %v514
                  %v516 = vld [vmem:[%s484 + $0x21c] sm:$0xf]
                  %517 = vst [vmem:[%s485 + $0x3c] sm:$0xf] %v516
                $region137: #{multi_head_attention.4} parent=124 // loop_footer
                  %s483 = sadd.s32 1, %s479
                $region138: #{multi_head_attention.4} parent=124 // loop_footer_branch
                  %478 = sbr.rel target = $region134
                $region139: #{multi_head_attention.4} parent=124 // loop_exit
                  _
              $region125: #{multi_head_attention.4} parent=109 // pred_fallthru
                _
            $region110: #{multi_head_attention.4} parent=105 // pred_fallthru
              _
            // Predicated region
            $region111: #{multi_head_attention.4} parent=105 // pred_check
              _
            $region112: #{multi_head_attention.4} parent=105 // pred_check_branch
              %425 = sbr.rel (0) target = $region114
            $region113: #{multi_head_attention.4} parent=105 // pred_region
              loop: start=0, step=1, limit=1
              $region115: #{multi_head_attention.4} parent=113 // loop_pre_header
                _
              $region116: #{multi_head_attention.4} parent=113 // loop_header
                %s428 = sphi 0, %s432
                %p429 = scmp.ge.s32.totalorder %s428, 1
                %s433 = sphi %s419, %s419
                %s434 = sphi %s411, %s411
              $region117: #{multi_head_attention.4} parent=113 // loop_header_branch
                %431 = sbr.rel (%p429) target = $region121
              $region118: #{multi_head_attention.4} parent=113 // loop_body
                %v435 = vld [vmem:[%s433] sm:$0xf]
                %436 = vst [vmem:[%s434] sm:$0xf] %v435
                %v437 = vld [vmem:[%s433 + $0x24] sm:$0xf]
                %438 = vst [vmem:[%s434 + $0x4] sm:$0xf] %v437
                %v439 = vld [vmem:[%s433 + $0x48] sm:$0xf]
                %440 = vst [vmem:[%s434 + $0x8] sm:$0xf] %v439
                %v441 = vld [vmem:[%s433 + $0x6c] sm:$0xf]
                %442 = vst [vmem:[%s434 + $0xc] sm:$0xf] %v441
                %v443 = vld [vmem:[%s433 + $0x90] sm:$0xf]
                %444 = vst [vmem:[%s434 + $0x10] sm:$0xf] %v443
                %v445 = vld [vmem:[%s433 + $0xb4] sm:$0xf]
                %446 = vst [vmem:[%s434 + $0x14] sm:$0xf] %v445
                %v447 = vld [vmem:[%s433 + $0xd8] sm:$0xf]
                %448 = vst [vmem:[%s434 + $0x18] sm:$0xf] %v447
                %v449 = vld [vmem:[%s433 + $0xfc] sm:$0xf]
                %450 = vst [vmem:[%s434 + $0x1c] sm:$0xf] %v449
                %v451 = vld [vmem:[%s433 + $0x120] sm:$0xf]
                %452 = vst [vmem:[%s434 + $0x20] sm:$0xf] %v451
                %v453 = vld [vmem:[%s433 + $0x144] sm:$0xf]
                %454 = vst [vmem:[%s434 + $0x24] sm:$0xf] %v453
                %v455 = vld [vmem:[%s433 + $0x168] sm:$0xf]
                %456 = vst [vmem:[%s434 + $0x28] sm:$0xf] %v455
                %v457 = vld [vmem:[%s433 + $0x18c] sm:$0xf]
                %458 = vst [vmem:[%s434 + $0x2c] sm:$0xf] %v457
                %v459 = vld [vmem:[%s433 + $0x1b0] sm:$0xf]
                %460 = vst [vmem:[%s434 + $0x30] sm:$0xf] %v459
                %v461 = vld [vmem:[%s433 + $0x1d4] sm:$0xf]
                %462 = vst [vmem:[%s434 + $0x34] sm:$0xf] %v461
                %v463 = vld [vmem:[%s433 + $0x1f8] sm:$0xf]
                %464 = vst [vmem:[%s434 + $0x38] sm:$0xf] %v463
                %v465 = vld [vmem:[%s433 + $0x21c] sm:$0xf]
                %466 = vst [vmem:[%s434 + $0x3c] sm:$0xf] %v465
              $region119: #{multi_head_attention.4} parent=113 // loop_footer
                %s432 = sadd.s32 1, %s428
              $region120: #{multi_head_attention.4} parent=113 // loop_footer_branch
                %427 = sbr.rel target = $region116
              $region121: #{multi_head_attention.4} parent=113 // loop_exit
                _
            $region114: #{multi_head_attention.4} parent=105 // pred_fallthru
              _
          $region106: #{multi_head_attention.4} parent=101 // pred_fallthru
            _
          %518 = vnop
        $region102: #{multi_head_attention.4} parent=15 // pred_fallthru
          _
      $region16: #{multi_head_attention.4} parent=5 // pred_fallthru
        _
      %p519 = scmp.le.s32.totalorder 1, %s9
      %p520 = scmp.lt.s32.totalorder %s9, 25
      %p521 = pnand %p519, %p520
      %p522 = pneg %p521
      // Predicated region
      $region140: #{multi_head_attention.4} parent=5 // pred_check
        _
      $region141: #{multi_head_attention.4} parent=5 // pred_check_branch
        %524 = sbr.rel (%p521) target = $region143
      $region142: #{multi_head_attention.4} parent=5 // pred_region
        %s525 = ssub.s32 %s9, 1
        %s526 = sand.u32 %s52, 1
        %s527 = sand.u32 %s52, 1
        %s528 = smul.addr %s527, 64
        %s529 = scalar_lea.vmem [#allocation5], %s528
        // Predicated region
        $region144: #{multi_head_attention.4} parent=142 // pred_check
          %p530 = pneg %p65
        $region145: #{multi_head_attention.4} parent=142 // pred_check_branch
          %532 = sbr.rel (%p530) target = $region147
        $region146: #{multi_head_attention.4} parent=142 // pred_region
          _
        $region147: #{multi_head_attention.4} parent=142 // pred_fallthru
          _
        %s533 = sand.u32 %s84, 1
        %s534 = sand.u32 %s84, 1
        %s535 = smul.addr %s534, 64
        %s536 = scalar_lea.vmem [#allocation6], %s535
        // Predicated region
        $region148: #{multi_head_attention.4} parent=142 // pred_check
          %p537 = pneg %p97
        $region149: #{multi_head_attention.4} parent=142 // pred_check_branch
          %539 = sbr.rel (%p537) target = $region151
        $region150: #{multi_head_attention.4} parent=142 // pred_region
          _
        $region151: #{multi_head_attention.4} parent=142 // pred_fallthru
          _
        %s540 = sand.u32 %s116, 1
        %s541 = sand.u32 %s116, 1
        %s542 = smul.addr %s541, 64
        %s543 = scalar_lea.vmem [#allocation7], %s542
        // Predicated region
        $region152: #{multi_head_attention.4} parent=142 // pred_check
          %p544 = pneg %p129
        $region153: #{multi_head_attention.4} parent=142 // pred_check_branch
          %546 = sbr.rel (%p544) target = $region155
        $region154: #{multi_head_attention.4} parent=142 // pred_region
          _
        $region155: #{multi_head_attention.4} parent=142 // pred_fallthru
          _
        %s547 = sand.u32 %s52, 1
        %s548 = sand.u32 %s52, 1
        %s549 = smul.addr %s548, 64
        %s550 = scalar_lea.vmem [#allocation5], %s549
        %p551 = pneg %p65
        %p552 = pneg %p62
        %s553 = sand.u32 %s84, 1
        %s554 = sand.u32 %s84, 1
        %s555 = smul.addr %s554, 64
        %s556 = scalar_lea.vmem [#allocation6], %s555
        %p557 = pneg %p97
        %p558 = pneg %p94
        %s559 = sand.u32 %s116, 1
        %s560 = sand.u32 %s116, 1
        %s561 = smul.addr %s560, 64
        %s562 = scalar_lea.vmem [#allocation7], %s561
        %p563 = pneg %p129
        %p564 = pneg %p126
        %p565 = pneg %p159
        %p566 = pneg %p156
        %s567 = sand.u32 %s146, 1
        %s568 = sand.u32 %s146, 1
        %s569 = smul.addr %s568, 64
        %s570 = scalar_lea.vmem [#allocation8], %s569
        %s571 = smul.u32 16, %s22
        %s572 = sadd.s32 %s21, 3
        %s573 = smul.u32 16, %s23
        %s574 = sadd.s32 %s21, 6
        %s575 = smul.u32 16, %s23
        %s576 = smul.u32 16, %s22
        %p579 = scmp.eq.s32.totalorder %s23, 0
        // Predicated region
        $region156: #{multi_head_attention.4} parent=142 // pred_check
          %p580 = pneg %p579
        $region157: #{multi_head_attention.4} parent=142 // pred_check_branch
          %582 = sbr.rel (%p580) target = $region159
        $region158: #{multi_head_attention.4} parent=142 // pred_region
          %vm583 = vcmask 7168
          %584 = vst.msk [vmem:[#allocation2] sm:$0xff] %vm583, -1e+30
          %585 = vst.msk [vmem:[#allocation2 + $0x8] sm:$0xff] %vm583, -1e+30
          %586 = vst.msk [vmem:[#allocation2 + $0x10] sm:$0xff] %vm583, -1e+30
          %587 = vst.msk [vmem:[#allocation2 + $0x18] sm:$0xff] %vm583, -1e+30
          %588 = vst.msk [vmem:[#allocation2 + $0x20] sm:$0xff] %vm583, -1e+30
          %589 = vst.msk [vmem:[#allocation2 + $0x28] sm:$0xff] %vm583, -1e+30
          %590 = vst.msk [vmem:[#allocation2 + $0x30] sm:$0xff] %vm583, -1e+30
          %591 = vst.msk [vmem:[#allocation2 + $0x38] sm:$0xff] %vm583, -1e+30
          %592 = vst.msk [vmem:[#allocation2 + $0x40] sm:$0xff] %vm583, -1e+30
          %593 = vst.msk [vmem:[#allocation2 + $0x48] sm:$0xff] %vm583, -1e+30
          %594 = vst.msk [vmem:[#allocation2 + $0x50] sm:$0xff] %vm583, -1e+30
          %595 = vst.msk [vmem:[#allocation2 + $0x58] sm:$0xff] %vm583, -1e+30
          %596 = vst.msk [vmem:[#allocation2 + $0x60] sm:$0xff] %vm583, -1e+30
          %597 = vst.msk [vmem:[#allocation2 + $0x68] sm:$0xff] %vm583, -1e+30
          %598 = vst.msk [vmem:[#allocation2 + $0x70] sm:$0xff] %vm583, -1e+30
          %599 = vst.msk [vmem:[#allocation2 + $0x78] sm:$0xff] %vm583, -1e+30
          %600 = vst.msk [vmem:[#allocation2 + $0x80] sm:$0xff] %vm583, -1e+30
          %601 = vst.msk [vmem:[#allocation2 + $0x88] sm:$0xff] %vm583, -1e+30
          %602 = vst.msk [vmem:[#allocation2 + $0x90] sm:$0xff] %vm583, -1e+30
          %603 = vst.msk [vmem:[#allocation2 + $0x98] sm:$0xff] %vm583, -1e+30
          %604 = vst.msk [vmem:[#allocation2 + $0xa0] sm:$0xff] %vm583, -1e+30
          %605 = vst.msk [vmem:[#allocation2 + $0xa8] sm:$0xff] %vm583, -1e+30
          %606 = vst.msk [vmem:[#allocation2 + $0xb0] sm:$0xff] %vm583, -1e+30
          %607 = vst.msk [vmem:[#allocation2 + $0xb8] sm:$0xff] %vm583, -1e+30
          %608 = vst.msk [vmem:[#allocation2 + $0xc0] sm:$0xff] %vm583, -1e+30
          %609 = vst.msk [vmem:[#allocation2 + $0xc8] sm:$0xff] %vm583, -1e+30
          %610 = vst.msk [vmem:[#allocation2 + $0xd0] sm:$0xff] %vm583, -1e+30
          %611 = vst.msk [vmem:[#allocation2 + $0xd8] sm:$0xff] %vm583, -1e+30
          %612 = vst.msk [vmem:[#allocation2 + $0xe0] sm:$0xff] %vm583, -1e+30
          %613 = vst.msk [vmem:[#allocation2 + $0xe8] sm:$0xff] %vm583, -1e+30
          %614 = vst.msk [vmem:[#allocation2 + $0xf0] sm:$0xff] %vm583, -1e+30
          %615 = vst.msk [vmem:[#allocation2 + $0xf8] sm:$0xff] %vm583, -1e+30
          %616 = vst.msk [vmem:[#allocation3] sm:$0xff] %vm583, 0.0
          %617 = vst.msk [vmem:[#allocation3 + $0x8] sm:$0xff] %vm583, 0.0
          %618 = vst.msk [vmem:[#allocation3 + $0x10] sm:$0xff] %vm583, 0.0
          %619 = vst.msk [vmem:[#allocation3 + $0x18] sm:$0xff] %vm583, 0.0
          %620 = vst.msk [vmem:[#allocation3 + $0x20] sm:$0xff] %vm583, 0.0
          %621 = vst.msk [vmem:[#allocation3 + $0x28] sm:$0xff] %vm583, 0.0
          %622 = vst.msk [vmem:[#allocation3 + $0x30] sm:$0xff] %vm583, 0.0
          %623 = vst.msk [vmem:[#allocation3 + $0x38] sm:$0xff] %vm583, 0.0
          %624 = vst.msk [vmem:[#allocation3 + $0x40] sm:$0xff] %vm583, 0.0
          %625 = vst.msk [vmem:[#allocation3 + $0x48] sm:$0xff] %vm583, 0.0
          %626 = vst.msk [vmem:[#allocation3 + $0x50] sm:$0xff] %vm583, 0.0
          %627 = vst.msk [vmem:[#allocation3 + $0x58] sm:$0xff] %vm583, 0.0
          %628 = vst.msk [vmem:[#allocation3 + $0x60] sm:$0xff] %vm583, 0.0
          %629 = vst.msk [vmem:[#allocation3 + $0x68] sm:$0xff] %vm583, 0.0
          %630 = vst.msk [vmem:[#allocation3 + $0x70] sm:$0xff] %vm583, 0.0
          %631 = vst.msk [vmem:[#allocation3 + $0x78] sm:$0xff] %vm583, 0.0
          %632 = vst.msk [vmem:[#allocation3 + $0x80] sm:$0xff] %vm583, 0.0
          %633 = vst.msk [vmem:[#allocation3 + $0x88] sm:$0xff] %vm583, 0.0
          %634 = vst.msk [vmem:[#allocation3 + $0x90] sm:$0xff] %vm583, 0.0
          %635 = vst.msk [vmem:[#allocation3 + $0x98] sm:$0xff] %vm583, 0.0
          %636 = vst.msk [vmem:[#allocation3 + $0xa0] sm:$0xff] %vm583, 0.0
          %637 = vst.msk [vmem:[#allocation3 + $0xa8] sm:$0xff] %vm583, 0.0
          %638 = vst.msk [vmem:[#allocation3 + $0xb0] sm:$0xff] %vm583, 0.0
          %639 = vst.msk [vmem:[#allocation3 + $0xb8] sm:$0xff] %vm583, 0.0
          %640 = vst.msk [vmem:[#allocation3 + $0xc0] sm:$0xff] %vm583, 0.0
          %641 = vst.msk [vmem:[#allocation3 + $0xc8] sm:$0xff] %vm583, 0.0
          %642 = vst.msk [vmem:[#allocation3 + $0xd0] sm:$0xff] %vm583, 0.0
          %643 = vst.msk [vmem:[#allocation3 + $0xd8] sm:$0xff] %vm583, 0.0
          %644 = vst.msk [vmem:[#allocation3 + $0xe0] sm:$0xff] %vm583, 0.0
          %645 = vst.msk [vmem:[#allocation3 + $0xe8] sm:$0xff] %vm583, 0.0
          %646 = vst.msk [vmem:[#allocation3 + $0xf0] sm:$0xff] %vm583, 0.0
          %647 = vst.msk [vmem:[#allocation3 + $0xf8] sm:$0xff] %vm583, 0.0
          %vm648 = vcmask 523264
          %649 = vst.msk [vmem:[#allocation4] sm:$0xff] %vm648, 0.0
          %650 = vst.msk [vmem:[#allocation4 + $0x8] sm:$0xff] %vm648, 0.0
          %651 = vst.msk [vmem:[#allocation4 + $0x10] sm:$0xff] %vm648, 0.0
          %652 = vst.msk [vmem:[#allocation4 + $0x18] sm:$0xff] %vm648, 0.0
          %653 = vst.msk [vmem:[#allocation4 + $0x20] sm:$0xff] %vm648, 0.0
          %654 = vst.msk [vmem:[#allocation4 + $0x28] sm:$0xff] %vm648, 0.0
          %655 = vst.msk [vmem:[#allocation4 + $0x30] sm:$0xff] %vm648, 0.0
          %656 = vst.msk [vmem:[#allocation4 + $0x38] sm:$0xff] %vm648, 0.0
          %657 = vst.msk [vmem:[#allocation4 + $0x40] sm:$0xff] %vm648, 0.0
          %658 = vst.msk [vmem:[#allocation4 + $0x48] sm:$0xff] %vm648, 0.0
          %659 = vst.msk [vmem:[#allocation4 + $0x50] sm:$0xff] %vm648, 0.0
          %660 = vst.msk [vmem:[#allocation4 + $0x58] sm:$0xff] %vm648, 0.0
          %661 = vst.msk [vmem:[#allocation4 + $0x60] sm:$0xff] %vm648, 0.0
          %662 = vst.msk [vmem:[#allocation4 + $0x68] sm:$0xff] %vm648, 0.0
          %663 = vst.msk [vmem:[#allocation4 + $0x70] sm:$0xff] %vm648, 0.0
          %664 = vst.msk [vmem:[#allocation4 + $0x78] sm:$0xff] %vm648, 0.0
          %665 = vst.msk [vmem:[#allocation4 + $0x80] sm:$0xff] %vm648, 0.0
          %666 = vst.msk [vmem:[#allocation4 + $0x88] sm:$0xff] %vm648, 0.0
          %667 = vst.msk [vmem:[#allocation4 + $0x90] sm:$0xff] %vm648, 0.0
          %668 = vst.msk [vmem:[#allocation4 + $0x98] sm:$0xff] %vm648, 0.0
          %669 = vst.msk [vmem:[#allocation4 + $0xa0] sm:$0xff] %vm648, 0.0
          %670 = vst.msk [vmem:[#allocation4 + $0xa8] sm:$0xff] %vm648, 0.0
          %671 = vst.msk [vmem:[#allocation4 + $0xb0] sm:$0xff] %vm648, 0.0
          %672 = vst.msk [vmem:[#allocation4 + $0xb8] sm:$0xff] %vm648, 0.0
          %673 = vst.msk [vmem:[#allocation4 + $0xc0] sm:$0xff] %vm648, 0.0
          %674 = vst.msk [vmem:[#allocation4 + $0xc8] sm:$0xff] %vm648, 0.0
          %675 = vst.msk [vmem:[#allocation4 + $0xd0] sm:$0xff] %vm648, 0.0
          %676 = vst.msk [vmem:[#allocation4 + $0xd8] sm:$0xff] %vm648, 0.0
          %677 = vst.msk [vmem:[#allocation4 + $0xe0] sm:$0xff] %vm648, 0.0
          %678 = vst.msk [vmem:[#allocation4 + $0xe8] sm:$0xff] %vm648, 0.0
          %679 = vst.msk [vmem:[#allocation4 + $0xf0] sm:$0xff] %vm648, 0.0
          %680 = vst.msk [vmem:[#allocation4 + $0xf8] sm:$0xff] %vm648, 0.0
        $region159: #{multi_head_attention.4} parent=142 // pred_fallthru
          _
        %p681 = scmp.lt.s32.totalorder %s23, %s22
        // Predicated region
        $region160: #{multi_head_attention.4} parent=142 // pred_check
          %p682 = pneg %p681
        $region161: #{multi_head_attention.4} parent=142 // pred_check_branch
          %684 = sbr.rel (%p682) target = $region163
        $region162: #{multi_head_attention.4} parent=142 // pred_region
          %v685 = vld [vmem:[%s529] sm:$0xf]
          %v686 = vld [vmem:[%s529 + $0x4] sm:$0xf]
          %v687 = vld [vmem:[%s529 + $0x8] sm:$0xf]
          %v688 = vld [vmem:[%s529 + $0xc] sm:$0xf]
          %v689 = vld [vmem:[%s529 + $0x10] sm:$0xf]
          %v690 = vld [vmem:[%s529 + $0x14] sm:$0xf]
          %v691 = vld [vmem:[%s529 + $0x18] sm:$0xf]
          %v692 = vld [vmem:[%s529 + $0x1c] sm:$0xf]
          %v693 = vld [vmem:[%s529 + $0x20] sm:$0xf]
          %v694 = vld [vmem:[%s529 + $0x24] sm:$0xf]
          %v695 = vld [vmem:[%s529 + $0x28] sm:$0xf]
          %v696 = vld [vmem:[%s529 + $0x2c] sm:$0xf]
          %v697 = vld [vmem:[%s529 + $0x30] sm:$0xf]
          %v698 = vld [vmem:[%s529 + $0x34] sm:$0xf]
          %v699 = vld [vmem:[%s529 + $0x38] sm:$0xf]
          %v700 = vld [vmem:[%s529 + $0x3c] sm:$0xf]
          %v701 = vld [vmem:[%s536] sm:$0xf]
          %v702 = vld [vmem:[%s536 + $0x4] sm:$0xf]
          %v703 = vld [vmem:[%s536 + $0x8] sm:$0xf]
          %v704 = vld [vmem:[%s536 + $0xc] sm:$0xf]
          %v705 = vld [vmem:[%s536 + $0x10] sm:$0xf]
          %v706 = vld [vmem:[%s536 + $0x14] sm:$0xf]
          %v707 = vld [vmem:[%s536 + $0x18] sm:$0xf]
          %v708 = vld [vmem:[%s536 + $0x1c] sm:$0xf]
          %v709 = vld [vmem:[%s536 + $0x20] sm:$0xf]
          %v710 = vld [vmem:[%s536 + $0x24] sm:$0xf]
          %v711 = vld [vmem:[%s536 + $0x28] sm:$0xf]
          %v712 = vld [vmem:[%s536 + $0x2c] sm:$0xf]
          %v713 = vld [vmem:[%s536 + $0x30] sm:$0xf]
          %v714 = vld [vmem:[%s536 + $0x34] sm:$0xf]
          %v715 = vld [vmem:[%s536 + $0x38] sm:$0xf]
          %v716 = vld [vmem:[%s536 + $0x3c] sm:$0xf]
          %v717 = vld [vmem:[%s543] sm:$0xf]
          %v718 = vld [vmem:[%s543 + $0x4] sm:$0xf]
          %v719 = vld [vmem:[%s543 + $0x8] sm:$0xf]
          %v720 = vld [vmem:[%s543 + $0xc] sm:$0xf]
          %v721 = vld [vmem:[%s543 + $0x10] sm:$0xf]
          %v722 = vld [vmem:[%s543 + $0x14] sm:$0xf]
          %v723 = vld [vmem:[%s543 + $0x18] sm:$0xf]
          %v724 = vld [vmem:[%s543 + $0x1c] sm:$0xf]
          %v725 = vld [vmem:[%s543 + $0x20] sm:$0xf]
          %v726 = vld [vmem:[%s543 + $0x24] sm:$0xf]
          %v727 = vld [vmem:[%s543 + $0x28] sm:$0xf]
          %v728 = vld [vmem:[%s543 + $0x2c] sm:$0xf]
          %v729 = vld [vmem:[%s543 + $0x30] sm:$0xf]
          %v730 = vld [vmem:[%s543 + $0x34] sm:$0xf]
          %v731 = vld [vmem:[%s543 + $0x38] sm:$0xf]
          %v732 = vld [vmem:[%s543 + $0x3c] sm:$0xf]
          %v733 = vmul.bf16 %v685, 1040203264
          %v734 = vmul.bf16 %v686, 1040203264
          %v735 = vmul.bf16 %v687, 1040203264
          %v736 = vmul.bf16 %v688, 1040203264
          %v737 = vmul.bf16 %v689, 1040203264
          %v738 = vmul.bf16 %v690, 1040203264
          %v739 = vmul.bf16 %v691, 1040203264
          %v740 = vmul.bf16 %v692, 1040203264
          %v741 = vmul.bf16 %v693, 1040203264
          %v742 = vmul.bf16 %v694, 1040203264
          %v743 = vmul.bf16 %v695, 1040203264
          %v744 = vmul.bf16 %v696, 1040203264
          %v745 = vmul.bf16 %v697, 1040203264
          %v746 = vmul.bf16 %v698, 1040203264
          %v747 = vmul.bf16 %v699, 1040203264
          %v748 = vmul.bf16 %v700, 1040203264
          %v765 = vunpack.c.l.b16 %v733
          %v766 = vunpack.c.l.b16 %v734
          %v767 = vunpack.c.l.b16 %v735
          %v768 = vunpack.c.l.b16 %v736
          %v769 = vunpack.c.l.b16 %v737
          %v770 = vunpack.c.l.b16 %v738
          %v771 = vunpack.c.l.b16 %v739
          %v772 = vunpack.c.l.b16 %v740
          %v773 = vunpack.c.l.b16 %v741
          %v774 = vunpack.c.l.b16 %v742
          %v775 = vunpack.c.l.b16 %v743
          %v776 = vunpack.c.l.b16 %v744
          %v777 = vunpack.c.l.b16 %v745
          %v778 = vunpack.c.l.b16 %v746
          %v779 = vunpack.c.l.b16 %v747
          %v780 = vunpack.c.l.b16 %v748
          %v781 = vpack.c.b16 %v766, %v765
          %v782 = vpack.c.b16 %v768, %v767
          %v783 = vpack.c.b16 %v770, %v769
          %v784 = vpack.c.b16 %v772, %v771
          %v785 = vpack.c.b16 %v774, %v773
          %v786 = vpack.c.b16 %v776, %v775
          %v787 = vpack.c.b16 %v778, %v777
          %v788 = vpack.c.b16 %v780, %v779
          %v805 = vunpack.c.l.b16 %v701
          %v806 = vunpack.c.l.b16 %v702
          %v807 = vunpack.c.l.b16 %v703
          %v808 = vunpack.c.l.b16 %v704
          %v809 = vunpack.c.l.b16 %v705
          %v810 = vunpack.c.l.b16 %v706
          %v811 = vunpack.c.l.b16 %v707
          %v812 = vunpack.c.l.b16 %v708
          %v813 = vunpack.c.l.b16 %v709
          %v814 = vunpack.c.l.b16 %v710
          %v815 = vunpack.c.l.b16 %v711
          %v816 = vunpack.c.l.b16 %v712
          %v817 = vunpack.c.l.b16 %v713
          %v818 = vunpack.c.l.b16 %v714
          %v819 = vunpack.c.l.b16 %v715
          %v820 = vunpack.c.l.b16 %v716
          %v821 = vpack.c.b16 %v806, %v805
          %v822 = vpack.c.b16 %v808, %v807
          %v823 = vpack.c.b16 %v810, %v809
          %v824 = vpack.c.b16 %v812, %v811
          %v825 = vpack.c.b16 %v814, %v813
          %v826 = vpack.c.b16 %v816, %v815
          %v827 = vpack.c.b16 %v818, %v817
          %v828 = vpack.c.b16 %v820, %v819
          %vm829 = vcmask 523264
          %v831 = vsel %vm829, %v781, 0
          %v834 = vsel %vm829, %v782, 0
          %v837 = vsel %vm829, %v783, 0
          %v840 = vsel %vm829, %v784, 0
          %v843 = vsel %vm829, %v785, 0
          %v846 = vsel %vm829, %v786, 0
          %v849 = vsel %vm829, %v787, 0
          %v852 = vsel %vm829, %v788, 0
          %v855 = vsel %vm829, %v821, 0
          %v858 = vsel %vm829, %v822, 0
          %v861 = vsel %vm829, %v823, 0
          %v864 = vsel %vm829, %v824, 0
          %v867 = vsel %vm829, %v825, 0
          %v870 = vsel %vm829, %v826, 0
          %v873 = vsel %vm829, %v827, 0
          %v876 = vsel %vm829, %v828, 0
          %878 = vmatprep.subr.bf16.mxu0 0
          %879 = vmatpush1.bf16.xpose.msra.mxu0 %v855
          %880 = vmatprep.subr.bf16.mxu0 0
          %881 = vmatpush1.bf16.xpose.msra.mxu0 %v858
          %882 = vmatprep.subr.bf16.mxu0 0
          %883 = vmatpush1.bf16.xpose.msra.mxu0 %v861
          %884 = vmatprep.subr.bf16.mxu0 0
          %885 = vmatpush1.bf16.xpose.msra.mxu0 %v864
          %886 = vmatprep.subr.bf16.mxu0 0
          %887 = vmatpush1.bf16.xpose.msra.mxu0 %v867
          %888 = vmatprep.subr.bf16.mxu0 0
          %889 = vmatpush1.bf16.xpose.msra.mxu0 %v870
          %890 = vmatprep.subr.bf16.mxu0 0
          %891 = vmatpush1.bf16.xpose.msra.mxu0 %v873
          %892 = vmatprep.subr.bf16.mxu0 0
          %893 = vmatpush1.bf16.xpose.msra.mxu0 %v876
          %894 = vmatprep.subr.bf16.mxu0 0
          %895 = vmatpush1.bf16.xpose.msra.mxu0 0
          %896 = vmatprep.subr.bf16.mxu0 0
          %897 = vmatpush1.bf16.xpose.msra.mxu0 0
          %898 = vmatprep.subr.bf16.mxu0 0
          %899 = vmatpush1.bf16.xpose.msra.mxu0 0
          %900 = vmatprep.subr.bf16.mxu0 0
          %901 = vmatpush1.bf16.xpose.msra.mxu0 0
          %902 = vmatprep.subr.bf16.mxu0 0
          %903 = vmatpush1.bf16.xpose.msra.mxu0 0
          %904 = vmatprep.subr.bf16.mxu0 0
          %905 = vmatpush1.bf16.xpose.msra.mxu0 0
          %906 = vmatprep.subr.bf16.mxu0 0
          %907 = vmatpush1.bf16.xpose.msra.mxu0 0
          %908 = vmatprep.subr.bf16.mxu0 0
          %909 = vmatpush1.bf16.xpose.msra.mxu0 0
          %910 = vmatprep.mubr.bf16.mxu0 0
          %911 = vmatmul.mubr.bf16.gmra.mrb[0].mxu0 %v831
          %v912 = vpop.f32.mrb[0].mxu0
          %v913 = vadd.f32 0.0, %v912
          %v914 = vpop.f32.mrb[0].mxu0
          %v915 = vpop.f32.mrb[0].mxu0
          %v916 = vadd.f32 0.0, %v915
          %v917 = vpop.f32.mrb[0].mxu0
          %918 = vmatprep.mubr.bf16.mxu0 0
          %919 = vmatmul.mubr.bf16.gmra.mrb[0].mxu0 %v834
          %v920 = vpop.f32.mrb[0].mxu0
          %v921 = vadd.f32 0.0, %v920
          %v922 = vpop.f32.mrb[0].mxu0
          %v923 = vpop.f32.mrb[0].mxu0
          %v924 = vadd.f32 0.0, %v923
          %v925 = vpop.f32.mrb[0].mxu0
          %926 = vmatprep.mubr.bf16.mxu0 0
          %927 = vmatmul.mubr.bf16.gmra.mrb[0].mxu0 %v837
          %v928 = vpop.f32.mrb[0].mxu0
          %v929 = vadd.f32 0.0, %v928
          %v930 = vpop.f32.mrb[0].mxu0
          %v931 = vpop.f32.mrb[0].mxu0
          %v932 = vadd.f32 0.0, %v931
          %v933 = vpop.f32.mrb[0].mxu0
          %934 = vmatprep.mubr.bf16.mxu0 0
          %935 = vmatmul.mubr.bf16.gmra.mrb[0].mxu0 %v840
          %v936 = vpop.f32.mrb[0].mxu0
          %v937 = vadd.f32 0.0, %v936
          %v938 = vpop.f32.mrb[0].mxu0
          %v939 = vpop.f32.mrb[0].mxu0
          %v940 = vadd.f32 0.0, %v939
          %v941 = vpop.f32.mrb[0].mxu0
          %942 = vmatprep.mubr.bf16.mxu0 0
          %943 = vmatmul.mubr.bf16.gmra.mrb[0].mxu0 %v843
          %v944 = vpop.f32.mrb[0].mxu0
          %v945 = vadd.f32 0.0, %v944
          %v946 = vpop.f32.mrb[0].mxu0
          %v947 = vpop.f32.mrb[0].mxu0
          %v948 = vadd.f32 0.0, %v947
          %v949 = vpop.f32.mrb[0].mxu0
          %950 = vmatprep.mubr.bf16.mxu0 0
          %951 = vmatmul.mubr.bf16.gmra.mrb[0].mxu0 %v846
          %v952 = vpop.f32.mrb[0].mxu0
          %v953 = vadd.f32 0.0, %v952
          %v954 = vpop.f32.mrb[0].mxu0
          %v955 = vpop.f32.mrb[0].mxu0
          %v956 = vadd.f32 0.0, %v955
          %v957 = vpop.f32.mrb[0].mxu0
          %958 = vmatprep.mubr.bf16.mxu0 0
          %959 = vmatmul.mubr.bf16.gmra.mrb[0].mxu0 %v849
          %v960 = vpop.f32.mrb[0].mxu0
          %v961 = vadd.f32 0.0, %v960
          %v962 = vpop.f32.mrb[0].mxu0
          %v963 = vpop.f32.mrb[0].mxu0
          %v964 = vadd.f32 0.0, %v963
          %v965 = vpop.f32.mrb[0].mxu0
          %966 = vmatprep.mubr.bf16.mxu0 0
          %967 = vmatmul.mubr.bf16.gmra.mrb[0].mxu0 %v852
          %v968 = vpop.f32.mrb[0].mxu0
          %v969 = vadd.f32 0.0, %v968
          %v970 = vpop.f32.mrb[0].mxu0
          %v971 = vpop.f32.mrb[0].mxu0
          %v972 = vadd.f32 0.0, %v971
          %v973 = vpop.f32.mrb[0].mxu0
          %974 = vdwg.mxu0
          %v975 = vld [vmem:[#allocation2] sm:$0xff]
          %v976 = vld [vmem:[#allocation2 + $0x8] sm:$0xff]
          %v977 = vld [vmem:[#allocation2 + $0x10] sm:$0xff]
          %v978 = vld [vmem:[#allocation2 + $0x18] sm:$0xff]
          %v979 = vld [vmem:[#allocation2 + $0x20] sm:$0xff]
          %v980 = vld [vmem:[#allocation2 + $0x28] sm:$0xff]
          %v981 = vld [vmem:[#allocation2 + $0x30] sm:$0xff]
          %v982 = vld [vmem:[#allocation2 + $0x38] sm:$0xff]
          %v983 = vld [vmem:[#allocation2 + $0x40] sm:$0xff]
          %v984 = vld [vmem:[#allocation2 + $0x48] sm:$0xff]
          %v985 = vld [vmem:[#allocation2 + $0x50] sm:$0xff]
          %v986 = vld [vmem:[#allocation2 + $0x58] sm:$0xff]
          %v987 = vld [vmem:[#allocation2 + $0x60] sm:$0xff]
          %v988 = vld [vmem:[#allocation2 + $0x68] sm:$0xff]
          %v989 = vld [vmem:[#allocation2 + $0x70] sm:$0xff]
          %v990 = vld [vmem:[#allocation2 + $0x78] sm:$0xff]
          %991 = vmax.xlane.f32.xlu0 %v913
          %v992 = vpop.xlane.xlu0 %991
          %993 = vmax.xlane.f32.xlu0 %v916
          %v994 = vpop.xlane.xlu0 %993
          %995 = vmax.xlane.f32.xlu0 %v921
          %v996 = vpop.xlane.xlu0 %995
          %997 = vmax.xlane.f32.xlu0 %v924
          %v998 = vpop.xlane.xlu0 %997
          %999 = vmax.xlane.f32.xlu0 %v929
          %v1000 = vpop.xlane.xlu0 %999
          %1001 = vmax.xlane.f32.xlu0 %v932
          %v1002 = vpop.xlane.xlu0 %1001
          %1003 = vmax.xlane.f32.xlu0 %v937
          %v1004 = vpop.xlane.xlu0 %1003
          %1005 = vmax.xlane.f32.xlu0 %v940
          %v1006 = vpop.xlane.xlu0 %1005
          %1007 = vmax.xlane.f32.xlu0 %v945
          %v1008 = vpop.xlane.xlu0 %1007
          %1009 = vmax.xlane.f32.xlu0 %v948
          %v1010 = vpop.xlane.xlu0 %1009
          %1011 = vmax.xlane.f32.xlu0 %v953
          %v1012 = vpop.xlane.xlu0 %1011
          %1013 = vmax.xlane.f32.xlu0 %v956
          %v1014 = vpop.xlane.xlu0 %1013
          %1015 = vmax.xlane.f32.xlu0 %v961
          %v1016 = vpop.xlane.xlu0 %1015
          %1017 = vmax.xlane.f32.xlu0 %v964
          %v1018 = vpop.xlane.xlu0 %1017
          %1019 = vmax.xlane.f32.xlu0 %v969
          %v1020 = vpop.xlane.xlu0 %1019
          %1021 = vmax.xlane.f32.xlu0 %v972
          %v1022 = vpop.xlane.xlu0 %1021
          %v1023 = vmax.f32 %v975, %v992
          %v1024 = vmax.f32 %v976, %v994
          %v1025 = vmax.f32 %v977, %v996
          %v1026 = vmax.f32 %v978, %v998
          %v1027 = vmax.f32 %v979, %v1000
          %v1028 = vmax.f32 %v980, %v1002
          %v1029 = vmax.f32 %v981, %v1004
          %v1030 = vmax.f32 %v982, %v1006
          %v1031 = vmax.f32 %v983, %v1008
          %v1032 = vmax.f32 %v984, %v1010
          %v1033 = vmax.f32 %v985, %v1012
          %v1034 = vmax.f32 %v986, %v1014
          %v1035 = vmax.f32 %v987, %v1016
          %v1036 = vmax.f32 %v988, %v1018
          %v1037 = vmax.f32 %v989, %v1020
          %v1038 = vmax.f32 %v990, %v1022
          %v1039 = vsub.f32 %v975, %v1023
          %v1040 = vsub.f32 %v976, %v1024
          %v1041 = vsub.f32 %v977, %v1025
          %v1042 = vsub.f32 %v978, %v1026
          %v1043 = vsub.f32 %v979, %v1027
          %v1044 = vsub.f32 %v980, %v1028
          %v1045 = vsub.f32 %v981, %v1029
          %v1046 = vsub.f32 %v982, %v1030
          %v1047 = vsub.f32 %v983, %v1031
          %v1048 = vsub.f32 %v984, %v1032
          %v1049 = vsub.f32 %v985, %v1033
          %v1050 = vsub.f32 %v986, %v1034
          %v1051 = vsub.f32 %v987, %v1035
          %v1052 = vsub.f32 %v988, %v1036
          %v1053 = vsub.f32 %v989, %v1037
          %v1054 = vsub.f32 %v990, %v1038
          %v1055 = vmul.f32 %v1039, 1.442695
          %v1056 = vpow.pop %v1055
          %v1057 = vmul.f32 %v1040, 1.442695
          %v1058 = vpow.pop %v1057
          %v1059 = vmul.f32 %v1041, 1.442695
          %v1060 = vpow.pop %v1059
          %v1061 = vmul.f32 %v1042, 1.442695
          %v1062 = vpow.pop %v1061
          %v1063 = vmul.f32 %v1043, 1.442695
          %v1064 = vpow.pop %v1063
          %v1065 = vmul.f32 %v1044, 1.442695
          %v1066 = vpow.pop %v1065
          %v1067 = vmul.f32 %v1045, 1.442695
          %v1068 = vpow.pop %v1067
          %v1069 = vmul.f32 %v1046, 1.442695
          %v1070 = vpow.pop %v1069
          %v1071 = vmul.f32 %v1047, 1.442695
          %v1072 = vpow.pop %v1071
          %v1073 = vmul.f32 %v1048, 1.442695
          %v1074 = vpow.pop %v1073
          %v1075 = vmul.f32 %v1049, 1.442695
          %v1076 = vpow.pop %v1075
          %v1077 = vmul.f32 %v1050, 1.442695
          %v1078 = vpow.pop %v1077
          %v1079 = vmul.f32 %v1051, 1.442695
          %v1080 = vpow.pop %v1079
          %v1081 = vmul.f32 %v1052, 1.442695
          %v1082 = vpow.pop %v1081
          %v1083 = vmul.f32 %v1053, 1.442695
          %v1084 = vpow.pop %v1083
          %v1085 = vmul.f32 %v1054, 1.442695
          %v1086 = vpow.pop %v1085
          %1088 = vset.pattern.permute.xlu0 0
          %1089 = vperm.xlu0 %1088, %v1023
          %v1090 = vpop.permute.xlu0 %1089
          %1093 = vset.pattern.permute.xlu0 0
          %1094 = vperm.xlu0 %1093, %v1024
          %v1095 = vpop.permute.xlu0 %1094
          %1098 = vset.pattern.permute.xlu0 0
          %1099 = vperm.xlu0 %1098, %v1025
          %v1100 = vpop.permute.xlu0 %1099
          %1103 = vset.pattern.permute.xlu0 0
          %1104 = vperm.xlu0 %1103, %v1026
          %v1105 = vpop.permute.xlu0 %1104
          %1108 = vset.pattern.permute.xlu0 0
          %1109 = vperm.xlu0 %1108, %v1027
          %v1110 = vpop.permute.xlu0 %1109
          %1113 = vset.pattern.permute.xlu0 0
          %1114 = vperm.xlu0 %1113, %v1028
          %v1115 = vpop.permute.xlu0 %1114
          %1118 = vset.pattern.permute.xlu0 0
          %1119 = vperm.xlu0 %1118, %v1029
          %v1120 = vpop.permute.xlu0 %1119
          %1123 = vset.pattern.permute.xlu0 0
          %1124 = vperm.xlu0 %1123, %v1030
          %v1125 = vpop.permute.xlu0 %1124
          %1128 = vset.pattern.permute.xlu0 0
          %1129 = vperm.xlu0 %1128, %v1031
          %v1130 = vpop.permute.xlu0 %1129
          %1133 = vset.pattern.permute.xlu0 0
          %1134 = vperm.xlu0 %1133, %v1032
          %v1135 = vpop.permute.xlu0 %1134
          %1138 = vset.pattern.permute.xlu0 0
          %1139 = vperm.xlu0 %1138, %v1033
          %v1140 = vpop.permute.xlu0 %1139
          %1143 = vset.pattern.permute.xlu0 0
          %1144 = vperm.xlu0 %1143, %v1034
          %v1145 = vpop.permute.xlu0 %1144
          %1148 = vset.pattern.permute.xlu0 0
          %1149 = vperm.xlu0 %1148, %v1035
          %v1150 = vpop.permute.xlu0 %1149
          %1153 = vset.pattern.permute.xlu0 0
          %1154 = vperm.xlu0 %1153, %v1036
          %v1155 = vpop.permute.xlu0 %1154
          %1158 = vset.pattern.permute.xlu0 0
          %1159 = vperm.xlu0 %1158, %v1037
          %v1160 = vpop.permute.xlu0 %1159
          %1163 = vset.pattern.permute.xlu0 0
          %1164 = vperm.xlu0 %1163, %v1038
          %v1165 = vpop.permute.xlu0 %1164
          %v1167 = vsub.f32 %v913, %v1090
          %v1168 = vsub.f32 %v916, %v1095
          %v1169 = vsub.f32 %v921, %v1100
          %v1170 = vsub.f32 %v924, %v1105
          %v1171 = vsub.f32 %v929, %v1110
          %v1172 = vsub.f32 %v932, %v1115
          %v1173 = vsub.f32 %v937, %v1120
          %v1174 = vsub.f32 %v940, %v1125
          %v1175 = vsub.f32 %v945, %v1130
          %v1176 = vsub.f32 %v948, %v1135
          %v1177 = vsub.f32 %v953, %v1140
          %v1178 = vsub.f32 %v956, %v1145
          %v1179 = vsub.f32 %v961, %v1150
          %v1180 = vsub.f32 %v964, %v1155
          %v1181 = vsub.f32 %v969, %v1160
          %v1182 = vsub.f32 %v972, %v1165
          %v1183 = vmul.f32 %v1167, 1.442695
          %v1184 = vpow.pop %v1183
          %v1185 = vmul.f32 %v1168, 1.442695
          %v1186 = vpow.pop %v1185
          %v1187 = vmul.f32 %v1169, 1.442695
          %v1188 = vpow.pop %v1187
          %v1189 = vmul.f32 %v1170, 1.442695
          %v1190 = vpow.pop %v1189
          %v1191 = vmul.f32 %v1171, 1.442695
          %v1192 = vpow.pop %v1191
          %v1193 = vmul.f32 %v1172, 1.442695
          %v1194 = vpow.pop %v1193
          %v1195 = vmul.f32 %v1173, 1.442695
          %v1196 = vpow.pop %v1195
          %v1197 = vmul.f32 %v1174, 1.442695
          %v1198 = vpow.pop %v1197
          %v1199 = vmul.f32 %v1175, 1.442695
          %v1200 = vpow.pop %v1199
          %v1201 = vmul.f32 %v1176, 1.442695
          %v1202 = vpow.pop %v1201
          %v1203 = vmul.f32 %v1177, 1.442695
          %v1204 = vpow.pop %v1203
          %v1205 = vmul.f32 %v1178, 1.442695
          %v1206 = vpow.pop %v1205
          %v1207 = vmul.f32 %v1179, 1.442695
          %v1208 = vpow.pop %v1207
          %v1209 = vmul.f32 %v1180, 1.442695
          %v1210 = vpow.pop %v1209
          %v1211 = vmul.f32 %v1181, 1.442695
          %v1212 = vpow.pop %v1211
          %v1213 = vmul.f32 %v1182, 1.442695
          %v1214 = vpow.pop %v1213
          %v1215 = vld [vmem:[#allocation3] sm:$0xff]
          %v1216 = vld [vmem:[#allocation3 + $0x8] sm:$0xff]
          %v1217 = vld [vmem:[#allocation3 + $0x10] sm:$0xff]
          %v1218 = vld [vmem:[#allocation3 + $0x18] sm:$0xff]
          %v1219 = vld [vmem:[#allocation3 + $0x20] sm:$0xff]
          %v1220 = vld [vmem:[#allocation3 + $0x28] sm:$0xff]
          %v1221 = vld [vmem:[#allocation3 + $0x30] sm:$0xff]
          %v1222 = vld [vmem:[#allocation3 + $0x38] sm:$0xff]
          %v1223 = vld [vmem:[#allocation3 + $0x40] sm:$0xff]
          %v1224 = vld [vmem:[#allocation3 + $0x48] sm:$0xff]
          %v1225 = vld [vmem:[#allocation3 + $0x50] sm:$0xff]
          %v1226 = vld [vmem:[#allocation3 + $0x58] sm:$0xff]
          %v1227 = vld [vmem:[#allocation3 + $0x60] sm:$0xff]
          %v1228 = vld [vmem:[#allocation3 + $0x68] sm:$0xff]
          %v1229 = vld [vmem:[#allocation3 + $0x70] sm:$0xff]
          %v1230 = vld [vmem:[#allocation3 + $0x78] sm:$0xff]
          %v1231 = vmul.f32 %v1056, %v1215
          %v1232 = vmul.f32 %v1058, %v1216
          %v1233 = vmul.f32 %v1060, %v1217
          %v1234 = vmul.f32 %v1062, %v1218
          %v1235 = vmul.f32 %v1064, %v1219
          %v1236 = vmul.f32 %v1066, %v1220
          %v1237 = vmul.f32 %v1068, %v1221
          %v1238 = vmul.f32 %v1070, %v1222
          %v1239 = vmul.f32 %v1072, %v1223
          %v1240 = vmul.f32 %v1074, %v1224
          %v1241 = vmul.f32 %v1076, %v1225
          %v1242 = vmul.f32 %v1078, %v1226
          %v1243 = vmul.f32 %v1080, %v1227
          %v1244 = vmul.f32 %v1082, %v1228
          %v1245 = vmul.f32 %v1084, %v1229
          %v1246 = vmul.f32 %v1086, %v1230
          %1247 = vadd.xlane.f32.xlu0 %v1184
          %v1248 = vpop.xlane.xlu0 %1247
          %1249 = vadd.xlane.f32.xlu0 %v1186
          %v1250 = vpop.xlane.xlu0 %1249
          %1251 = vadd.xlane.f32.xlu0 %v1188
          %v1252 = vpop.xlane.xlu0 %1251
          %1253 = vadd.xlane.f32.xlu0 %v1190
          %v1254 = vpop.xlane.xlu0 %1253
          %1255 = vadd.xlane.f32.xlu0 %v1192
          %v1256 = vpop.xlane.xlu0 %1255
          %1257 = vadd.xlane.f32.xlu0 %v1194
          %v1258 = vpop.xlane.xlu0 %1257
          %1259 = vadd.xlane.f32.xlu0 %v1196
          %v1260 = vpop.xlane.xlu0 %1259
          %1261 = vadd.xlane.f32.xlu0 %v1198
          %v1262 = vpop.xlane.xlu0 %1261
          %1263 = vadd.xlane.f32.xlu0 %v1200
          %v1264 = vpop.xlane.xlu0 %1263
          %1265 = vadd.xlane.f32.xlu0 %v1202
          %v1266 = vpop.xlane.xlu0 %1265
          %1267 = vadd.xlane.f32.xlu0 %v1204
          %v1268 = vpop.xlane.xlu0 %1267
          %1269 = vadd.xlane.f32.xlu0 %v1206
          %v1270 = vpop.xlane.xlu0 %1269
          %1271 = vadd.xlane.f32.xlu0 %v1208
          %v1272 = vpop.xlane.xlu0 %1271
          %1273 = vadd.xlane.f32.xlu0 %v1210
          %v1274 = vpop.xlane.xlu0 %1273
          %1275 = vadd.xlane.f32.xlu0 %v1212
          %v1276 = vpop.xlane.xlu0 %1275
          %1277 = vadd.xlane.f32.xlu0 %v1214
          %v1278 = vpop.xlane.xlu0 %1277
          %v1279 = vadd.f32 %v1231, %v1248
          %v1280 = vadd.f32 %v1232, %v1250
          %v1281 = vadd.f32 %v1233, %v1252
          %v1282 = vadd.f32 %v1234, %v1254
          %v1283 = vadd.f32 %v1235, %v1256
          %v1284 = vadd.f32 %v1236, %v1258
          %v1285 = vadd.f32 %v1237, %v1260
          %v1286 = vadd.f32 %v1238, %v1262
          %v1287 = vadd.f32 %v1239, %v1264
          %v1288 = vadd.f32 %v1240, %v1266
          %v1289 = vadd.f32 %v1241, %v1268
          %v1290 = vadd.f32 %v1242, %v1270
          %v1291 = vadd.f32 %v1243, %v1272
          %v1292 = vadd.f32 %v1244, %v1274
          %v1293 = vadd.f32 %v1245, %v1276
          %v1294 = vadd.f32 %v1246, %v1278
          %vm1295 = vcmask 7168
          %1296 = vst.msk [vmem:[#allocation3] sm:$0xff] %vm1295, %v1279
          %1297 = vst.msk [vmem:[#allocation3 + $0x8] sm:$0xff] %vm1295, %v1280
          %1298 = vst.msk [vmem:[#allocation3 + $0x10] sm:$0xff] %vm1295, %v1281
          %1299 = vst.msk [vmem:[#allocation3 + $0x18] sm:$0xff] %vm1295, %v1282
          %1300 = vst.msk [vmem:[#allocation3 + $0x20] sm:$0xff] %vm1295, %v1283
          %1301 = vst.msk [vmem:[#allocation3 + $0x28] sm:$0xff] %vm1295, %v1284
          %1302 = vst.msk [vmem:[#allocation3 + $0x30] sm:$0xff] %vm1295, %v1285
          %1303 = vst.msk [vmem:[#allocation3 + $0x38] sm:$0xff] %vm1295, %v1286
          %1304 = vst.msk [vmem:[#allocation3 + $0x40] sm:$0xff] %vm1295, %v1287
          %1305 = vst.msk [vmem:[#allocation3 + $0x48] sm:$0xff] %vm1295, %v1288
          %1306 = vst.msk [vmem:[#allocation3 + $0x50] sm:$0xff] %vm1295, %v1289
          %1307 = vst.msk [vmem:[#allocation3 + $0x58] sm:$0xff] %vm1295, %v1290
          %1308 = vst.msk [vmem:[#allocation3 + $0x60] sm:$0xff] %vm1295, %v1291
          %1309 = vst.msk [vmem:[#allocation3 + $0x68] sm:$0xff] %vm1295, %v1292
          %1310 = vst.msk [vmem:[#allocation3 + $0x70] sm:$0xff] %vm1295, %v1293
          %1311 = vst.msk [vmem:[#allocation3 + $0x78] sm:$0xff] %vm1295, %v1294
          %v1312 = vld [vmem:[#allocation4] sm:$0xff]
          %v1313 = vld [vmem:[#allocation4 + $0x8] sm:$0xff]
          %v1314 = vld [vmem:[#allocation4 + $0x10] sm:$0xff]
          %v1315 = vld [vmem:[#allocation4 + $0x18] sm:$0xff]
          %v1316 = vld [vmem:[#allocation4 + $0x20] sm:$0xff]
          %v1317 = vld [vmem:[#allocation4 + $0x28] sm:$0xff]
          %v1318 = vld [vmem:[#allocation4 + $0x30] sm:$0xff]
          %v1319 = vld [vmem:[#allocation4 + $0x38] sm:$0xff]
          %v1320 = vld [vmem:[#allocation4 + $0x40] sm:$0xff]
          %v1321 = vld [vmem:[#allocation4 + $0x48] sm:$0xff]
          %v1322 = vld [vmem:[#allocation4 + $0x50] sm:$0xff]
          %v1323 = vld [vmem:[#allocation4 + $0x58] sm:$0xff]
          %v1324 = vld [vmem:[#allocation4 + $0x60] sm:$0xff]
          %v1325 = vld [vmem:[#allocation4 + $0x68] sm:$0xff]
          %v1326 = vld [vmem:[#allocation4 + $0x70] sm:$0xff]
          %v1327 = vld [vmem:[#allocation4 + $0x78] sm:$0xff]
          %1329 = vset.pattern.permute.xlu0 0
          %1330 = vperm.xlu0 %1329, %v1056
          %v1331 = vpop.permute.xlu0 %1330
          %1334 = vset.pattern.permute.xlu0 0
          %1335 = vperm.xlu0 %1334, %v1058
          %v1336 = vpop.permute.xlu0 %1335
          %1339 = vset.pattern.permute.xlu0 0
          %1340 = vperm.xlu0 %1339, %v1060
          %v1341 = vpop.permute.xlu0 %1340
          %1344 = vset.pattern.permute.xlu0 0
          %1345 = vperm.xlu0 %1344, %v1062
          %v1346 = vpop.permute.xlu0 %1345
          %1349 = vset.pattern.permute.xlu0 0
          %1350 = vperm.xlu0 %1349, %v1064
          %v1351 = vpop.permute.xlu0 %1350
          %1354 = vset.pattern.permute.xlu0 0
          %1355 = vperm.xlu0 %1354, %v1066
          %v1356 = vpop.permute.xlu0 %1355
          %1359 = vset.pattern.permute.xlu0 0
          %1360 = vperm.xlu0 %1359, %v1068
          %v1361 = vpop.permute.xlu0 %1360
          %1364 = vset.pattern.permute.xlu0 0
          %1365 = vperm.xlu0 %1364, %v1070
          %v1366 = vpop.permute.xlu0 %1365
          %1369 = vset.pattern.permute.xlu0 0
          %1370 = vperm.xlu0 %1369, %v1072
          %v1371 = vpop.permute.xlu0 %1370
          %1374 = vset.pattern.permute.xlu0 0
          %1375 = vperm.xlu0 %1374, %v1074
          %v1376 = vpop.permute.xlu0 %1375
          %1379 = vset.pattern.permute.xlu0 0
          %1380 = vperm.xlu0 %1379, %v1076
          %v1381 = vpop.permute.xlu0 %1380
          %1384 = vset.pattern.permute.xlu0 0
          %1385 = vperm.xlu0 %1384, %v1078
          %v1386 = vpop.permute.xlu0 %1385
          %1389 = vset.pattern.permute.xlu0 0
          %1390 = vperm.xlu0 %1389, %v1080
          %v1391 = vpop.permute.xlu0 %1390
          %1394 = vset.pattern.permute.xlu0 0
          %1395 = vperm.xlu0 %1394, %v1082
          %v1396 = vpop.permute.xlu0 %1395
          %1399 = vset.pattern.permute.xlu0 0
          %1400 = vperm.xlu0 %1399, %v1084
          %v1401 = vpop.permute.xlu0 %1400
          %1404 = vset.pattern.permute.xlu0 0
          %1405 = vperm.xlu0 %1404, %v1086
          %v1406 = vpop.permute.xlu0 %1405
          %v1408 = vmul.f32 %v1331, %v1312
          %v1409 = vmul.f32 %v1336, %v1313
          %v1410 = vmul.f32 %v1341, %v1314
          %v1411 = vmul.f32 %v1346, %v1315
          %v1412 = vmul.f32 %v1351, %v1316
          %v1413 = vmul.f32 %v1356, %v1317
          %v1414 = vmul.f32 %v1361, %v1318
          %v1415 = vmul.f32 %v1366, %v1319
          %v1416 = vmul.f32 %v1371, %v1320
          %v1417 = vmul.f32 %v1376, %v1321
          %v1418 = vmul.f32 %v1381, %v1322
          %v1419 = vmul.f32 %v1386, %v1323
          %v1420 = vmul.f32 %v1391, %v1324
          %v1421 = vmul.f32 %v1396, %v1325
          %v1422 = vmul.f32 %v1401, %v1326
          %v1423 = vmul.f32 %v1406, %v1327
          %v1424 = vpack.c.bf16 %v1186, %v1184
          %v1425 = vpack.c.bf16 %v1190, %v1188
          %v1426 = vpack.c.bf16 %v1194, %v1192
          %v1427 = vpack.c.bf16 %v1198, %v1196
          %v1428 = vpack.c.bf16 %v1202, %v1200
          %v1429 = vpack.c.bf16 %v1206, %v1204
          %v1430 = vpack.c.bf16 %v1210, %v1208
          %v1431 = vpack.c.bf16 %v1214, %v1212
          %v1448 = vunpack.c.l.b16 %v717
          %v1449 = vunpack.c.l.b16 %v718
          %v1450 = vunpack.c.l.b16 %v719
          %v1451 = vunpack.c.l.b16 %v720
          %v1452 = vunpack.c.l.b16 %v721
          %v1453 = vunpack.c.l.b16 %v722
          %v1454 = vunpack.c.l.b16 %v723
          %v1455 = vunpack.c.l.b16 %v724
          %v1456 = vunpack.c.l.b16 %v725
          %v1457 = vunpack.c.l.b16 %v726
          %v1458 = vunpack.c.l.b16 %v727
          %v1459 = vunpack.c.l.b16 %v728
          %v1460 = vunpack.c.l.b16 %v729
          %v1461 = vunpack.c.l.b16 %v730
          %v1462 = vunpack.c.l.b16 %v731
          %v1463 = vunpack.c.l.b16 %v732
          %v1464 = vpack.c.b16 %v1449, %v1448
          %v1465 = vpack.c.b16 %v1451, %v1450
          %v1466 = vpack.c.b16 %v1453, %v1452
          %v1467 = vpack.c.b16 %v1455, %v1454
          %v1468 = vpack.c.b16 %v1457, %v1456
          %v1469 = vpack.c.b16 %v1459, %v1458
          %v1470 = vpack.c.b16 %v1461, %v1460
          %v1471 = vpack.c.b16 %v1463, %v1462
          %1480 = vmatprep.subr.bf16.mxu0 0
          %1481 = vmatpush1.bf16.msra.mxu0 %v1464
          %1482 = vmatprep.subr.bf16.mxu0 0
          %1483 = vmatpush1.bf16.msra.mxu0 %v1465
          %1484 = vmatprep.subr.bf16.mxu0 0
          %1485 = vmatpush1.bf16.msra.mxu0 %v1466
          %1486 = vmatprep.subr.bf16.mxu0 0
          %1487 = vmatpush1.bf16.msra.mxu0 %v1467
          %1488 = vmatprep.subr.bf16.mxu0 0
          %1489 = vmatpush1.bf16.msra.mxu0 %v1468
          %1490 = vmatprep.subr.bf16.mxu0 0
          %1491 = vmatpush1.bf16.msra.mxu0 %v1469
          %1492 = vmatprep.subr.bf16.mxu0 0
          %1493 = vmatpush1.bf16.msra.mxu0 %v1470
          %1494 = vmatprep.subr.bf16.mxu0 0
          %1495 = vmatpush1.bf16.msra.mxu0 %v1471
          %1496 = vmatprep.subr.bf16.mxu0 0
          %1497 = vmatpush1.bf16.msra.mxu0 0
          %1498 = vmatprep.subr.bf16.mxu0 0
          %1499 = vmatpush1.bf16.msra.mxu0 0
          %1500 = vmatprep.subr.bf16.mxu0 0
          %1501 = vmatpush1.bf16.msra.mxu0 0
          %1502 = vmatprep.subr.bf16.mxu0 0
          %1503 = vmatpush1.bf16.msra.mxu0 0
          %1504 = vmatprep.subr.bf16.mxu0 0
          %1505 = vmatpush1.bf16.msra.mxu0 0
          %1506 = vmatprep.subr.bf16.mxu0 0
          %1507 = vmatpush1.bf16.msra.mxu0 0
          %1508 = vmatprep.subr.bf16.mxu0 0
          %1509 = vmatpush1.bf16.msra.mxu0 0
          %1510 = vmatprep.subr.bf16.mxu0 0
          %1511 = vmatpush1.bf16.msra.mxu0 0
          %1512 = vmatprep.mubr.bf16.mxu0 0
          %1513 = vmatmul.mubr.bf16.gmra.mrb[0].mxu0 %v1424
          %v1514 = vpop.f32.mrb[0].mxu0
          %v1515 = vadd.f32 0.0, %v1514
          %v1516 = vpop.f32.mrb[0].mxu0
          %v1517 = vpop.f32.mrb[0].mxu0
          %v1518 = vadd.f32 0.0, %v1517
          %v1519 = vpop.f32.mrb[0].mxu0
          %1520 = vmatprep.mubr.bf16.mxu0 0
          %1521 = vmatmul.mubr.bf16.gmra.mrb[0].mxu0 %v1425
          %v1522 = vpop.f32.mrb[0].mxu0
          %v1523 = vadd.f32 0.0, %v1522
          %v1524 = vpop.f32.mrb[0].mxu0
          %v1525 = vpop.f32.mrb[0].mxu0
          %v1526 = vadd.f32 0.0, %v1525
          %v1527 = vpop.f32.mrb[0].mxu0
          %1528 = vmatprep.mubr.bf16.mxu0 0
          %1529 = vmatmul.mubr.bf16.gmra.mrb[0].mxu0 %v1426
          %v1530 = vpop.f32.mrb[0].mxu0
          %v1531 = vadd.f32 0.0, %v1530
          %v1532 = vpop.f32.mrb[0].mxu0
          %v1533 = vpop.f32.mrb[0].mxu0
          %v1534 = vadd.f32 0.0, %v1533
          %v1535 = vpop.f32.mrb[0].mxu0
          %1536 = vmatprep.mubr.bf16.mxu0 0
          %1537 = vmatmul.mubr.bf16.gmra.mrb[0].mxu0 %v1427
          %v1538 = vpop.f32.mrb[0].mxu0
          %v1539 = vadd.f32 0.0, %v1538
          %v1540 = vpop.f32.mrb[0].mxu0
          %v1541 = vpop.f32.mrb[0].mxu0
          %v1542 = vadd.f32 0.0, %v1541
          %v1543 = vpop.f32.mrb[0].mxu0
          %1544 = vmatprep.mubr.bf16.mxu0 0
          %1545 = vmatmul.mubr.bf16.gmra.mrb[0].mxu0 %v1428
          %v1546 = vpop.f32.mrb[0].mxu0
          %v1547 = vadd.f32 0.0, %v1546
          %v1548 = vpop.f32.mrb[0].mxu0
          %v1549 = vpop.f32.mrb[0].mxu0
          %v1550 = vadd.f32 0.0, %v1549
          %v1551 = vpop.f32.mrb[0].mxu0
          %1552 = vmatprep.mubr.bf16.mxu0 0
          %1553 = vmatmul.mubr.bf16.gmra.mrb[0].mxu0 %v1429
          %v1554 = vpop.f32.mrb[0].mxu0
          %v1555 = vadd.f32 0.0, %v1554
          %v1556 = vpop.f32.mrb[0].mxu0
          %v1557 = vpop.f32.mrb[0].mxu0
          %v1558 = vadd.f32 0.0, %v1557
          %v1559 = vpop.f32.mrb[0].mxu0
          %1560 = vmatprep.mubr.bf16.mxu0 0
          %1561 = vmatmul.mubr.bf16.gmra.mrb[0].mxu0 %v1430
          %v1562 = vpop.f32.mrb[0].mxu0
          %v1563 = vadd.f32 0.0, %v1562
          %v1564 = vpop.f32.mrb[0].mxu0
          %v1565 = vpop.f32.mrb[0].mxu0
          %v1566 = vadd.f32 0.0, %v1565
          %v1567 = vpop.f32.mrb[0].mxu0
          %1568 = vmatprep.mubr.bf16.mxu0 0
          %1569 = vmatmul.mubr.bf16.gmra.mrb[0].mxu0 %v1431
          %v1570 = vpop.f32.mrb[0].mxu0
          %v1571 = vadd.f32 0.0, %v1570
          %v1572 = vpop.f32.mrb[0].mxu0
          %v1573 = vpop.f32.mrb[0].mxu0
          %v1574 = vadd.f32 0.0, %v1573
          %v1575 = vpop.f32.mrb[0].mxu0
          %1576 = vdwg.mxu0
          %v1577 = vadd.f32 %v1408, %v1515
          %v1578 = vadd.f32 %v1409, %v1518
          %v1579 = vadd.f32 %v1410, %v1523
          %v1580 = vadd.f32 %v1411, %v1526
          %v1581 = vadd.f32 %v1412, %v1531
          %v1582 = vadd.f32 %v1413, %v1534
          %v1583 = vadd.f32 %v1414, %v1539
          %v1584 = vadd.f32 %v1415, %v1542
          %v1585 = vadd.f32 %v1416, %v1547
          %v1586 = vadd.f32 %v1417, %v1550
          %v1587 = vadd.f32 %v1418, %v1555
          %v1588 = vadd.f32 %v1419, %v1558
          %v1589 = vadd.f32 %v1420, %v1563
          %v1590 = vadd.f32 %v1421, %v1566
          %v1591 = vadd.f32 %v1422, %v1571
          %v1592 = vadd.f32 %v1423, %v1574
          %1593 = vst.msk [vmem:[#allocation4] sm:$0xff] %vm829, %v1577
          %1594 = vst.msk [vmem:[#allocation4 + $0x8] sm:$0xff] %vm829, %v1578
          %1595 = vst.msk [vmem:[#allocation4 + $0x10] sm:$0xff] %vm829, %v1579
          %1596 = vst.msk [vmem:[#allocation4 + $0x18] sm:$0xff] %vm829, %v1580
          %1597 = vst.msk [vmem:[#allocation4 + $0x20] sm:$0xff] %vm829, %v1581
          %1598 = vst.msk [vmem:[#allocation4 + $0x28] sm:$0xff] %vm829, %v1582
          %1599 = vst.msk [vmem:[#allocation4 + $0x30] sm:$0xff] %vm829, %v1583
          %1600 = vst.msk [vmem:[#allocation4 + $0x38] sm:$0xff] %vm829, %v1584
          %1601 = vst.msk [vmem:[#allocation4 + $0x40] sm:$0xff] %vm829, %v1585
          %1602 = vst.msk [vmem:[#allocation4 + $0x48] sm:$0xff] %vm829, %v1586
          %1603 = vst.msk [vmem:[#allocation4 + $0x50] sm:$0xff] %vm829, %v1587
          %1604 = vst.msk [vmem:[#allocation4 + $0x58] sm:$0xff] %vm829, %v1588
          %1605 = vst.msk [vmem:[#allocation4 + $0x60] sm:$0xff] %vm829, %v1589
          %1606 = vst.msk [vmem:[#allocation4 + $0x68] sm:$0xff] %vm829, %v1590
          %1607 = vst.msk [vmem:[#allocation4 + $0x70] sm:$0xff] %vm829, %v1591
          %1608 = vst.msk [vmem:[#allocation4 + $0x78] sm:$0xff] %vm829, %v1592
          %1609 = vst.msk [vmem:[#allocation2] sm:$0xff] %vm1295, %v1023
          %1610 = vst.msk [vmem:[#allocation2 + $0x8] sm:$0xff] %vm1295, %v1024
          %1611 = vst.msk [vmem:[#allocation2 + $0x10] sm:$0xff] %vm1295, %v1025
          %1612 = vst.msk [vmem:[#allocation2 + $0x18] sm:$0xff] %vm1295, %v1026
          %1613 = vst.msk [vmem:[#allocation2 + $0x20] sm:$0xff] %vm1295, %v1027
          %1614 = vst.msk [vmem:[#allocation2 + $0x28] sm:$0xff] %vm1295, %v1028
          %1615 = vst.msk [vmem:[#allocation2 + $0x30] sm:$0xff] %vm1295, %v1029
          %1616 = vst.msk [vmem:[#allocation2 + $0x38] sm:$0xff] %vm1295, %v1030
          %1617 = vst.msk [vmem:[#allocation2 + $0x40] sm:$0xff] %vm1295, %v1031
          %1618 = vst.msk [vmem:[#allocation2 + $0x48] sm:$0xff] %vm1295, %v1032
          %1619 = vst.msk [vmem:[#allocation2 + $0x50] sm:$0xff] %vm1295, %v1033
          %1620 = vst.msk [vmem:[#allocation2 + $0x58] sm:$0xff] %vm1295, %v1034
          %1621 = vst.msk [vmem:[#allocation2 + $0x60] sm:$0xff] %vm1295, %v1035
          %1622 = vst.msk [vmem:[#allocation2 + $0x68] sm:$0xff] %vm1295, %v1036
          %1623 = vst.msk [vmem:[#allocation2 + $0x70] sm:$0xff] %vm1295, %v1037
          %1624 = vst.msk [vmem:[#allocation2 + $0x78] sm:$0xff] %vm1295, %v1038
          %1625 = vrot.lane.b32.xlu0 %v781, 64
          %v1626 = vpop.permute.xlu0 %1625
          %1627 = vrot.lane.b32.xlu0 %v782, 64
          %v1628 = vpop.permute.xlu0 %1627
          %1629 = vrot.lane.b32.xlu0 %v783, 64
          %v1630 = vpop.permute.xlu0 %1629
          %1631 = vrot.lane.b32.xlu0 %v784, 64
          %v1632 = vpop.permute.xlu0 %1631
          %1633 = vrot.lane.b32.xlu0 %v785, 64
          %v1634 = vpop.permute.xlu0 %1633
          %1635 = vrot.lane.b32.xlu0 %v786, 64
          %v1636 = vpop.permute.xlu0 %1635
          %1637 = vrot.lane.b32.xlu0 %v787, 64
          %v1638 = vpop.permute.xlu0 %1637
          %1639 = vrot.lane.b32.xlu0 %v788, 64
          %v1640 = vpop.permute.xlu0 %1639
          %1641 = vrot.lane.b32.xlu0 %v821, 64
          %v1642 = vpop.permute.xlu0 %1641
          %1643 = vrot.lane.b32.xlu0 %v822, 64
          %v1644 = vpop.permute.xlu0 %1643
          %1645 = vrot.lane.b32.xlu0 %v823, 64
          %v1646 = vpop.permute.xlu0 %1645
          %1647 = vrot.lane.b32.xlu0 %v824, 64
          %v1648 = vpop.permute.xlu0 %1647
          %1649 = vrot.lane.b32.xlu0 %v825, 64
          %v1650 = vpop.permute.xlu0 %1649
          %1651 = vrot.lane.b32.xlu0 %v826, 64
          %v1652 = vpop.permute.xlu0 %1651
          %1653 = vrot.lane.b32.xlu0 %v827, 64
          %v1654 = vpop.permute.xlu0 %1653
          %1655 = vrot.lane.b32.xlu0 %v828, 64
          %v1656 = vpop.permute.xlu0 %1655
          %v1658 = vsel %vm829, %v1626, 0
          %v1661 = vsel %vm829, %v1628, 0
          %v1664 = vsel %vm829, %v1630, 0
          %v1667 = vsel %vm829, %v1632, 0
          %v1670 = vsel %vm829, %v1634, 0
          %v1673 = vsel %vm829, %v1636, 0
          %v1676 = vsel %vm829, %v1638, 0
          %v1679 = vsel %vm829, %v1640, 0
          %v1682 = vsel %vm829, %v1642, 0
          %v1685 = vsel %vm829, %v1644, 0
          %v1688 = vsel %vm829, %v1646, 0
          %v1691 = vsel %vm829, %v1648, 0
          %v1694 = vsel %vm829, %v1650, 0
          %v1697 = vsel %vm829, %v1652, 0
          %v1700 = vsel %vm829, %v1654, 0
          %v1703 = vsel %vm829, %v1656, 0
          %1705 = vmatprep.subr.bf16.mxu0 0
          %1706 = vmatpush1.bf16.xpose.msra.mxu0 %v1682
          %1707 = vmatprep.subr.bf16.mxu0 0
          %1708 = vmatpush1.bf16.xpose.msra.mxu0 %v1685
          %1709 = vmatprep.subr.bf16.mxu0 0
          %1710 = vmatpush1.bf16.xpose.msra.mxu0 %v1688
          %1711 = vmatprep.subr.bf16.mxu0 0
          %1712 = vmatpush1.bf16.xpose.msra.mxu0 %v1691
          %1713 = vmatprep.subr.bf16.mxu0 0
          %1714 = vmatpush1.bf16.xpose.msra.mxu0 %v1694
          %1715 = vmatprep.subr.bf16.mxu0 0
          %1716 = vmatpush1.bf16.xpose.msra.mxu0 %v1697
          %1717 = vmatprep.subr.bf16.mxu0 0
          %1718 = vmatpush1.bf16.xpose.msra.mxu0 %v1700
          %1719 = vmatprep.subr.bf16.mxu0 0
          %1720 = vmatpush1.bf16.xpose.msra.mxu0 %v1703
          %1721 = vmatprep.subr.bf16.mxu0 0
          %1722 = vmatpush1.bf16.xpose.msra.mxu0 0
          %1723 = vmatprep.subr.bf16.mxu0 0
          %1724 = vmatpush1.bf16.xpose.msra.mxu0 0
          %1725 = vmatprep.subr.bf16.mxu0 0
          %1726 = vmatpush1.bf16.xpose.msra.mxu0 0
          %1727 = vmatprep.subr.bf16.mxu0 0
          %1728 = vmatpush1.bf16.xpose.msra.mxu0 0
          %1729 = vmatprep.subr.bf16.mxu0 0
          %1730 = vmatpush1.bf16.xpose.msra.mxu0 0
          %1731 = vmatprep.subr.bf16.mxu0 0
          %1732 = vmatpush1.bf16.xpose.msra.mxu0 0
          %1733 = vmatprep.subr.bf16.mxu0 0
          %1734 = vmatpush1.bf16.xpose.msra.mxu0 0
          %1735 = vmatprep.subr.bf16.mxu0 0
          %1736 = vmatpush1.bf16.xpose.msra.mxu0 0
          %1737 = vmatprep.mubr.bf16.mxu0 0
          %1738 = vmatmul.mubr.bf16.gmra.mrb[0].mxu0 %v1658
          %v1739 = vpop.f32.mrb[0].mxu0
          %v1740 = vadd.f32 0.0, %v1739
          %v1741 = vpop.f32.mrb[0].mxu0
          %v1742 = vpop.f32.mrb[0].mxu0
          %v1743 = vadd.f32 0.0, %v1742
          %v1744 = vpop.f32.mrb[0].mxu0
          %1745 = vmatprep.mubr.bf16.mxu0 0
          %1746 = vmatmul.mubr.bf16.gmra.mrb[0].mxu0 %v1661
          %v1747 = vpop.f32.mrb[0].mxu0
          %v1748 = vadd.f32 0.0, %v1747
          %v1749 = vpop.f32.mrb[0].mxu0
          %v1750 = vpop.f32.mrb[0].mxu0
          %v1751 = vadd.f32 0.0, %v1750
          %v1752 = vpop.f32.mrb[0].mxu0
          %1753 = vmatprep.mubr.bf16.mxu0 0
          %1754 = vmatmul.mubr.bf16.gmra.mrb[0].mxu0 %v1664
          %v1755 = vpop.f32.mrb[0].mxu0
          %v1756 = vadd.f32 0.0, %v1755
          %v1757 = vpop.f32.mrb[0].mxu0
          %v1758 = vpop.f32.mrb[0].mxu0
          %v1759 = vadd.f32 0.0, %v1758
          %v1760 = vpop.f32.mrb[0].mxu0
          %1761 = vmatprep.mubr.bf16.mxu0 0
          %1762 = vmatmul.mubr.bf16.gmra.mrb[0].mxu0 %v1667
          %v1763 = vpop.f32.mrb[0].mxu0
          %v1764 = vadd.f32 0.0, %v1763
          %v1765 = vpop.f32.mrb[0].mxu0
          %v1766 = vpop.f32.mrb[0].mxu0
          %v1767 = vadd.f32 0.0, %v1766
          %v1768 = vpop.f32.mrb[0].mxu0
          %1769 = vmatprep.mubr.bf16.mxu0 0
          %1770 = vmatmul.mubr.bf16.gmra.mrb[0].mxu0 %v1670
          %v1771 = vpop.f32.mrb[0].mxu0
          %v1772 = vadd.f32 0.0, %v1771
          %v1773 = vpop.f32.mrb[0].mxu0
          %v1774 = vpop.f32.mrb[0].mxu0
          %v1775 = vadd.f32 0.0, %v1774
          %v1776 = vpop.f32.mrb[0].mxu0
          %1777 = vmatprep.mubr.bf16.mxu0 0
          %1778 = vmatmul.mubr.bf16.gmra.mrb[0].mxu0 %v1673
          %v1779 = vpop.f32.mrb[0].mxu0
          %v1780 = vadd.f32 0.0, %v1779
          %v1781 = vpop.f32.mrb[0].mxu0
          %v1782 = vpop.f32.mrb[0].mxu0
          %v1783 = vadd.f32 0.0, %v1782
          %v1784 = vpop.f32.mrb[0].mxu0
          %1785 = vmatprep.mubr.bf16.mxu0 0
          %1786 = vmatmul.mubr.bf16.gmra.mrb[0].mxu0 %v1676
          %v1787 = vpop.f32.mrb[0].mxu0
          %v1788 = vadd.f32 0.0, %v1787
          %v1789 = vpop.f32.mrb[0].mxu0
          %v1790 = vpop.f32.mrb[0].mxu0
          %v1791 = vadd.f32 0.0, %v1790
          %v1792 = vpop.f32.mrb[0].mxu0
          %1793 = vmatprep.mubr.bf16.mxu0 0
          %1794 = vmatmul.mubr.bf16.gmra.mrb[0].mxu0 %v1679
          %v1795 = vpop.f32.mrb[0].mxu0
          %v1796 = vadd.f32 0.0, %v1795
          %v1797 = vpop.f32.mrb[0].mxu0
          %v1798 = vpop.f32.mrb[0].mxu0
          %v1799 = vadd.f32 0.0, %v1798
          %v1800 = vpop.f32.mrb[0].mxu0
          %1801 = vdwg.mxu0
          %s1802 = scalar_lea.vmem [#allocation2], 128
          %v1803 = vld [vmem:[%s1802] sm:$0xff]
          %v1804 = vld [vmem:[%s1802 + $0x8] sm:$0xff]
          %v1805 = vld [vmem:[%s1802 + $0x10] sm:$0xff]
          %v1806 = vld [vmem:[%s1802 + $0x18] sm:$0xff]
          %v1807 = vld [vmem:[%s1802 + $0x20] sm:$0xff]
          %v1808 = vld [vmem:[%s1802 + $0x28] sm:$0xff]
          %v1809 = vld [vmem:[%s1802 + $0x30] sm:$0xff]
          %v1810 = vld [vmem:[%s1802 + $0x38] sm:$0xff]
          %v1811 = vld [vmem:[%s1802 + $0x40] sm:$0xff]
          %v1812 = vld [vmem:[%s1802 + $0x48] sm:$0xff]
          %v1813 = vld [vmem:[%s1802 + $0x50] sm:$0xff]
          %v1814 = vld [vmem:[%s1802 + $0x58] sm:$0xff]
          %v1815 = vld [vmem:[%s1802 + $0x60] sm:$0xff]
          %v1816 = vld [vmem:[%s1802 + $0x68] sm:$0xff]
          %v1817 = vld [vmem:[%s1802 + $0x70] sm:$0xff]
          %v1818 = vld [vmem:[%s1802 + $0x78] sm:$0xff]
          %1819 = vmax.xlane.f32.xlu0 %v1740
          %v1820 = vpop.xlane.xlu0 %1819
          %1821 = vmax.xlane.f32.xlu0 %v1743
          %v1822 = vpop.xlane.xlu0 %1821
          %1823 = vmax.xlane.f32.xlu0 %v1748
          %v1824 = vpop.xlane.xlu0 %1823
          %1825 = vmax.xlane.f32.xlu0 %v1751
          %v1826 = vpop.xlane.xlu0 %1825
          %1827 = vmax.xlane.f32.xlu0 %v1756
          %v1828 = vpop.xlane.xlu0 %1827
          %1829 = vmax.xlane.f32.xlu0 %v1759
          %v1830 = vpop.xlane.xlu0 %1829
          %1831 = vmax.xlane.f32.xlu0 %v1764
          %v1832 = vpop.xlane.xlu0 %1831
          %1833 = vmax.xlane.f32.xlu0 %v1767
          %v1834 = vpop.xlane.xlu0 %1833
          %1835 = vmax.xlane.f32.xlu0 %v1772
          %v1836 = vpop.xlane.xlu0 %1835
          %1837 = vmax.xlane.f32.xlu0 %v1775
          %v1838 = vpop.xlane.xlu0 %1837
          %1839 = vmax.xlane.f32.xlu0 %v1780
          %v1840 = vpop.xlane.xlu0 %1839
          %1841 = vmax.xlane.f32.xlu0 %v1783
          %v1842 = vpop.xlane.xlu0 %1841
          %1843 = vmax.xlane.f32.xlu0 %v1788
          %v1844 = vpop.xlane.xlu0 %1843
          %1845 = vmax.xlane.f32.xlu0 %v1791
          %v1846 = vpop.xlane.xlu0 %1845
          %1847 = vmax.xlane.f32.xlu0 %v1796
          %v1848 = vpop.xlane.xlu0 %1847
          %1849 = vmax.xlane.f32.xlu0 %v1799
          %v1850 = vpop.xlane.xlu0 %1849
          %v1851 = vmax.f32 %v1803, %v1820
          %v1852 = vmax.f32 %v1804, %v1822
          %v1853 = vmax.f32 %v1805, %v1824
          %v1854 = vmax.f32 %v1806, %v1826
          %v1855 = vmax.f32 %v1807, %v1828
          %v1856 = vmax.f32 %v1808, %v1830
          %v1857 = vmax.f32 %v1809, %v1832
          %v1858 = vmax.f32 %v1810, %v1834
          %v1859 = vmax.f32 %v1811, %v1836
          %v1860 = vmax.f32 %v1812, %v1838
          %v1861 = vmax.f32 %v1813, %v1840
          %v1862 = vmax.f32 %v1814, %v1842
          %v1863 = vmax.f32 %v1815, %v1844
          %v1864 = vmax.f32 %v1816, %v1846
          %v1865 = vmax.f32 %v1817, %v1848
          %v1866 = vmax.f32 %v1818, %v1850
          %v1867 = vsub.f32 %v1803, %v1851
          %v1868 = vsub.f32 %v1804, %v1852
          %v1869 = vsub.f32 %v1805, %v1853
          %v1870 = vsub.f32 %v1806, %v1854
          %v1871 = vsub.f32 %v1807, %v1855
          %v1872 = vsub.f32 %v1808, %v1856
          %v1873 = vsub.f32 %v1809, %v1857
          %v1874 = vsub.f32 %v1810, %v1858
          %v1875 = vsub.f32 %v1811, %v1859
          %v1876 = vsub.f32 %v1812, %v1860
          %v1877 = vsub.f32 %v1813, %v1861
          %v1878 = vsub.f32 %v1814, %v1862
          %v1879 = vsub.f32 %v1815, %v1863
          %v1880 = vsub.f32 %v1816, %v1864
          %v1881 = vsub.f32 %v1817, %v1865
          %v1882 = vsub.f32 %v1818, %v1866
          %v1883 = vmul.f32 %v1867, 1.442695
          %v1884 = vpow.pop %v1883
          %v1885 = vmul.f32 %v1868, 1.442695
          %v1886 = vpow.pop %v1885
          %v1887 = vmul.f32 %v1869, 1.442695
          %v1888 = vpow.pop %v1887
          %v1889 = vmul.f32 %v1870, 1.442695
          %v1890 = vpow.pop %v1889
          %v1891 = vmul.f32 %v1871, 1.442695
          %v1892 = vpow.pop %v1891
          %v1893 = vmul.f32 %v1872, 1.442695
          %v1894 = vpow.pop %v1893
          %v1895 = vmul.f32 %v1873, 1.442695
          %v1896 = vpow.pop %v1895
          %v1897 = vmul.f32 %v1874, 1.442695
          %v1898 = vpow.pop %v1897
          %v1899 = vmul.f32 %v1875, 1.442695
          %v1900 = vpow.pop %v1899
          %v1901 = vmul.f32 %v1876, 1.442695
          %v1902 = vpow.pop %v1901
          %v1903 = vmul.f32 %v1877, 1.442695
          %v1904 = vpow.pop %v1903
          %v1905 = vmul.f32 %v1878, 1.442695
          %v1906 = vpow.pop %v1905
          %v1907 = vmul.f32 %v1879, 1.442695
          %v1908 = vpow.pop %v1907
          %v1909 = vmul.f32 %v1880, 1.442695
          %v1910 = vpow.pop %v1909
          %v1911 = vmul.f32 %v1881, 1.442695
          %v1912 = vpow.pop %v1911
          %v1913 = vmul.f32 %v1882, 1.442695
          %v1914 = vpow.pop %v1913
          %1916 = vset.pattern.permute.xlu0 0
          %1917 = vperm.xlu0 %1916, %v1851
          %v1918 = vpop.permute.xlu0 %1917
          %1921 = vset.pattern.permute.xlu0 0
          %1922 = vperm.xlu0 %1921, %v1852
          %v1923 = vpop.permute.xlu0 %1922
          %1926 = vset.pattern.permute.xlu0 0
          %1927 = vperm.xlu0 %1926, %v1853
          %v1928 = vpop.permute.xlu0 %1927
          %1931 = vset.pattern.permute.xlu0 0
          %1932 = vperm.xlu0 %1931, %v1854
          %v1933 = vpop.permute.xlu0 %1932
          %1936 = vset.pattern.permute.xlu0 0
          %1937 = vperm.xlu0 %1936, %v1855
          %v1938 = vpop.permute.xlu0 %1937
          %1941 = vset.pattern.permute.xlu0 0
          %1942 = vperm.xlu0 %1941, %v1856
          %v1943 = vpop.permute.xlu0 %1942
          %1946 = vset.pattern.permute.xlu0 0
          %1947 = vperm.xlu0 %1946, %v1857
          %v1948 = vpop.permute.xlu0 %1947
          %1951 = vset.pattern.permute.xlu0 0
          %1952 = vperm.xlu0 %1951, %v1858
          %v1953 = vpop.permute.xlu0 %1952
          %1956 = vset.pattern.permute.xlu0 0
          %1957 = vperm.xlu0 %1956, %v1859
          %v1958 = vpop.permute.xlu0 %1957
          %1961 = vset.pattern.permute.xlu0 0
          %1962 = vperm.xlu0 %1961, %v1860
          %v1963 = vpop.permute.xlu0 %1962
          %1966 = vset.pattern.permute.xlu0 0
          %1967 = vperm.xlu0 %1966, %v1861
          %v1968 = vpop.permute.xlu0 %1967
          %1971 = vset.pattern.permute.xlu0 0
          %1972 = vperm.xlu0 %1971, %v1862
          %v1973 = vpop.permute.xlu0 %1972
          %1976 = vset.pattern.permute.xlu0 0
          %1977 = vperm.xlu0 %1976, %v1863
          %v1978 = vpop.permute.xlu0 %1977
          %1981 = vset.pattern.permute.xlu0 0
          %1982 = vperm.xlu0 %1981, %v1864
          %v1983 = vpop.permute.xlu0 %1982
          %1986 = vset.pattern.permute.xlu0 0
          %1987 = vperm.xlu0 %1986, %v1865
          %v1988 = vpop.permute.xlu0 %1987
          %1991 = vset.pattern.permute.xlu0 0
          %1992 = vperm.xlu0 %1991, %v1866
          %v1993 = vpop.permute.xlu0 %1992
          %v1995 = vsub.f32 %v1740, %v1918
          %v1996 = vsub.f32 %v1743, %v1923
          %v1997 = vsub.f32 %v1748, %v1928
          %v1998 = vsub.f32 %v1751, %v1933
          %v1999 = vsub.f32 %v1756, %v1938
          %v2000 = vsub.f32 %v1759, %v1943
          %v2001 = vsub.f32 %v1764, %v1948
          %v2002 = vsub.f32 %v1767, %v1953
          %v2003 = vsub.f32 %v1772, %v1958
          %v2004 = vsub.f32 %v1775, %v1963
          %v2005 = vsub.f32 %v1780, %v1968
          %v2006 = vsub.f32 %v1783, %v1973
          %v2007 = vsub.f32 %v1788, %v1978
          %v2008 = vsub.f32 %v1791, %v1983
          %v2009 = vsub.f32 %v1796, %v1988
          %v2010 = vsub.f32 %v1799, %v1993
          %v2011 = vmul.f32 %v1995, 1.442695
          %v2012 = vpow.pop %v2011
          %v2013 = vmul.f32 %v1996, 1.442695
          %v2014 = vpow.pop %v2013
          %v2015 = vmul.f32 %v1997, 1.442695
          %v2016 = vpow.pop %v2015
          %v2017 = vmul.f32 %v1998, 1.442695
          %v2018 = vpow.pop %v2017
          %v2019 = vmul.f32 %v1999, 1.442695
          %v2020 = vpow.pop %v2019
          %v2021 = vmul.f32 %v2000, 1.442695
          %v2022 = vpow.pop %v2021
          %v2023 = vmul.f32 %v2001, 1.442695
          %v2024 = vpow.pop %v2023
          %v2025 = vmul.f32 %v2002, 1.442695
          %v2026 = vpow.pop %v2025
          %v2027 = vmul.f32 %v2003, 1.442695
          %v2028 = vpow.pop %v2027
          %v2029 = vmul.f32 %v2004, 1.442695
          %v2030 = vpow.pop %v2029
          %v2031 = vmul.f32 %v2005, 1.442695
          %v2032 = vpow.pop %v2031
          %v2033 = vmul.f32 %v2006, 1.442695
          %v2034 = vpow.pop %v2033
          %v2035 = vmul.f32 %v2007, 1.442695
          %v2036 = vpow.pop %v2035
          %v2037 = vmul.f32 %v2008, 1.442695
          %v2038 = vpow.pop %v2037
          %v2039 = vmul.f32 %v2009, 1.442695
          %v2040 = vpow.pop %v2039
          %v2041 = vmul.f32 %v2010, 1.442695
          %v2042 = vpow.pop %v2041
          %s2043 = scalar_lea.vmem [#allocation3], 128
          %v2044 = vld [vmem:[%s2043] sm:$0xff]
          %v2045 = vld [vmem:[%s2043 + $0x8] sm:$0xff]
          %v2046 = vld [vmem:[%s2043 + $0x10] sm:$0xff]
          %v2047 = vld [vmem:[%s2043 + $0x18] sm:$0xff]
          %v2048 = vld [vmem:[%s2043 + $0x20] sm:$0xff]
          %v2049 = vld [vmem:[%s2043 + $0x28] sm:$0xff]
          %v2050 = vld [vmem:[%s2043 + $0x30] sm:$0xff]
          %v2051 = vld [vmem:[%s2043 + $0x38] sm:$0xff]
          %v2052 = vld [vmem:[%s2043 + $0x40] sm:$0xff]
          %v2053 = vld [vmem:[%s2043 + $0x48] sm:$0xff]
          %v2054 = vld [vmem:[%s2043 + $0x50] sm:$0xff]
          %v2055 = vld [vmem:[%s2043 + $0x58] sm:$0xff]
          %v2056 = vld [vmem:[%s2043 + $0x60] sm:$0xff]
          %v2057 = vld [vmem:[%s2043 + $0x68] sm:$0xff]
          %v2058 = vld [vmem:[%s2043 + $0x70] sm:$0xff]
          %v2059 = vld [vmem:[%s2043 + $0x78] sm:$0xff]
          %v2060 = vmul.f32 %v1884, %v2044
          %v2061 = vmul.f32 %v1886, %v2045
          %v2062 = vmul.f32 %v1888, %v2046
          %v2063 = vmul.f32 %v1890, %v2047
          %v2064 = vmul.f32 %v1892, %v2048
          %v2065 = vmul.f32 %v1894, %v2049
          %v2066 = vmul.f32 %v1896, %v2050
          %v2067 = vmul.f32 %v1898, %v2051
          %v2068 = vmul.f32 %v1900, %v2052
          %v2069 = vmul.f32 %v1902, %v2053
          %v2070 = vmul.f32 %v1904, %v2054
          %v2071 = vmul.f32 %v1906, %v2055
          %v2072 = vmul.f32 %v1908, %v2056
          %v2073 = vmul.f32 %v1910, %v2057
          %v2074 = vmul.f32 %v1912, %v2058
          %v2075 = vmul.f32 %v1914, %v2059
          %2076 = vadd.xlane.f32.xlu0 %v2012
          %v2077 = vpop.xlane.xlu0 %2076
          %2078 = vadd.xlane.f32.xlu0 %v2014
          %v2079 = vpop.xlane.xlu0 %2078
          %2080 = vadd.xlane.f32.xlu0 %v2016
          %v2081 = vpop.xlane.xlu0 %2080
          %2082 = vadd.xlane.f32.xlu0 %v2018
          %v2083 = vpop.xlane.xlu0 %2082
          %2084 = vadd.xlane.f32.xlu0 %v2020
          %v2085 = vpop.xlane.xlu0 %2084
          %2086 = vadd.xlane.f32.xlu0 %v2022
          %v2087 = vpop.xlane.xlu0 %2086
          %2088 = vadd.xlane.f32.xlu0 %v2024
          %v2089 = vpop.xlane.xlu0 %2088
          %2090 = vadd.xlane.f32.xlu0 %v2026
          %v2091 = vpop.xlane.xlu0 %2090
          %2092 = vadd.xlane.f32.xlu0 %v2028
          %v2093 = vpop.xlane.xlu0 %2092
          %2094 = vadd.xlane.f32.xlu0 %v2030
          %v2095 = vpop.xlane.xlu0 %2094
          %2096 = vadd.xlane.f32.xlu0 %v2032
          %v2097 = vpop.xlane.xlu0 %2096
          %2098 = vadd.xlane.f32.xlu0 %v2034
          %v2099 = vpop.xlane.xlu0 %2098
          %2100 = vadd.xlane.f32.xlu0 %v2036
          %v2101 = vpop.xlane.xlu0 %2100
          %2102 = vadd.xlane.f32.xlu0 %v2038
          %v2103 = vpop.xlane.xlu0 %2102
          %2104 = vadd.xlane.f32.xlu0 %v2040
          %v2105 = vpop.xlane.xlu0 %2104
          %2106 = vadd.xlane.f32.xlu0 %v2042
          %v2107 = vpop.xlane.xlu0 %2106
          %v2108 = vadd.f32 %v2060, %v2077
          %v2109 = vadd.f32 %v2061, %v2079
          %v2110 = vadd.f32 %v2062, %v2081
          %v2111 = vadd.f32 %v2063, %v2083
          %v2112 = vadd.f32 %v2064, %v2085
          %v2113 = vadd.f32 %v2065, %v2087
          %v2114 = vadd.f32 %v2066, %v2089
          %v2115 = vadd.f32 %v2067, %v2091
          %v2116 = vadd.f32 %v2068, %v2093
          %v2117 = vadd.f32 %v2069, %v2095
          %v2118 = vadd.f32 %v2070, %v2097
          %v2119 = vadd.f32 %v2071, %v2099
          %v2120 = vadd.f32 %v2072, %v2101
          %v2121 = vadd.f32 %v2073, %v2103
          %v2122 = vadd.f32 %v2074, %v2105
          %v2123 = vadd.f32 %v2075, %v2107
          %2124 = vst.msk [vmem:[%s2043] sm:$0xff] %vm1295, %v2108
          %2125 = vst.msk [vmem:[%s2043 + $0x8] sm:$0xff] %vm1295, %v2109
          %2126 = vst.msk [vmem:[%s2043 + $0x10] sm:$0xff] %vm1295, %v2110
          %2127 = vst.msk [vmem:[%s2043 + $0x18] sm:$0xff] %vm1295, %v2111
          %2128 = vst.msk [vmem:[%s2043 + $0x20] sm:$0xff] %vm1295, %v2112
          %2129 = vst.msk [vmem:[%s2043 + $0x28] sm:$0xff] %vm1295, %v2113
          %2130 = vst.msk [vmem:[%s2043 + $0x30] sm:$0xff] %vm1295, %v2114
          %2131 = vst.msk [vmem:[%s2043 + $0x38] sm:$0xff] %vm1295, %v2115
          %2132 = vst.msk [vmem:[%s2043 + $0x40] sm:$0xff] %vm1295, %v2116
          %2133 = vst.msk [vmem:[%s2043 + $0x48] sm:$0xff] %vm1295, %v2117
          %2134 = vst.msk [vmem:[%s2043 + $0x50] sm:$0xff] %vm1295, %v2118
          %2135 = vst.msk [vmem:[%s2043 + $0x58] sm:$0xff] %vm1295, %v2119
          %2136 = vst.msk [vmem:[%s2043 + $0x60] sm:$0xff] %vm1295, %v2120
          %2137 = vst.msk [vmem:[%s2043 + $0x68] sm:$0xff] %vm1295, %v2121
          %2138 = vst.msk [vmem:[%s2043 + $0x70] sm:$0xff] %vm1295, %v2122
          %2139 = vst.msk [vmem:[%s2043 + $0x78] sm:$0xff] %vm1295, %v2123
          %s2140 = scalar_lea.vmem [#allocation4], 128
          %v2141 = vld [vmem:[%s2140] sm:$0xff]
          %v2142 = vld [vmem:[%s2140 + $0x8] sm:$0xff]
          %v2143 = vld [vmem:[%s2140 + $0x10] sm:$0xff]
          %v2144 = vld [vmem:[%s2140 + $0x18] sm:$0xff]
          %v2145 = vld [vmem:[%s2140 + $0x20] sm:$0xff]
          %v2146 = vld [vmem:[%s2140 + $0x28] sm:$0xff]
          %v2147 = vld [vmem:[%s2140 + $0x30] sm:$0xff]
          %v2148 = vld [vmem:[%s2140 + $0x38] sm:$0xff]
          %v2149 = vld [vmem:[%s2140 + $0x40] sm:$0xff]
          %v2150 = vld [vmem:[%s2140 + $0x48] sm:$0xff]
          %v2151 = vld [vmem:[%s2140 + $0x50] sm:$0xff]
          %v2152 = vld [vmem:[%s2140 + $0x58] sm:$0xff]
          %v2153 = vld [vmem:[%s2140 + $0x60] sm:$0xff]
          %v2154 = vld [vmem:[%s2140 + $0x68] sm:$0xff]
          %v2155 = vld [vmem:[%s2140 + $0x70] sm:$0xff]
          %v2156 = vld [vmem:[%s2140 + $0x78] sm:$0xff]
          %2158 = vset.pattern.permute.xlu0 0
          %2159 = vperm.xlu0 %2158, %v1884
          %v2160 = vpop.permute.xlu0 %2159
          %2163 = vset.pattern.permute.xlu0 0
          %2164 = vperm.xlu0 %2163, %v1886
          %v2165 = vpop.permute.xlu0 %2164
          %2168 = vset.pattern.permute.xlu0 0
          %2169 = vperm.xlu0 %2168, %v1888
          %v2170 = vpop.permute.xlu0 %2169
          %2173 = vset.pattern.permute.xlu0 0
          %2174 = vperm.xlu0 %2173, %v1890
          %v2175 = vpop.permute.xlu0 %2174
          %2178 = vset.pattern.permute.xlu0 0
          %2179 = vperm.xlu0 %2178, %v1892
          %v2180 = vpop.permute.xlu0 %2179
          %2183 = vset.pattern.permute.xlu0 0
          %2184 = vperm.xlu0 %2183, %v1894
          %v2185 = vpop.permute.xlu0 %2184
          %2188 = vset.pattern.permute.xlu0 0
          %2189 = vperm.xlu0 %2188, %v1896
          %v2190 = vpop.permute.xlu0 %2189
          %2193 = vset.pattern.permute.xlu0 0
          %2194 = vperm.xlu0 %2193, %v1898
          %v2195 = vpop.permute.xlu0 %2194
          %2198 = vset.pattern.permute.xlu0 0
          %2199 = vperm.xlu0 %2198, %v1900
          %v2200 = vpop.permute.xlu0 %2199
          %2203 = vset.pattern.permute.xlu0 0
          %2204 = vperm.xlu0 %2203, %v1902
          %v2205 = vpop.permute.xlu0 %2204
          %2208 = vset.pattern.permute.xlu0 0
          %2209 = vperm.xlu0 %2208, %v1904
          %v2210 = vpop.permute.xlu0 %2209
          %2213 = vset.pattern.permute.xlu0 0
          %2214 = vperm.xlu0 %2213, %v1906
          %v2215 = vpop.permute.xlu0 %2214
          %2218 = vset.pattern.permute.xlu0 0
          %2219 = vperm.xlu0 %2218, %v1908
          %v2220 = vpop.permute.xlu0 %2219
          %2223 = vset.pattern.permute.xlu0 0
          %2224 = vperm.xlu0 %2223, %v1910
          %v2225 = vpop.permute.xlu0 %2224
          %2228 = vset.pattern.permute.xlu0 0
          %2229 = vperm.xlu0 %2228, %v1912
          %v2230 = vpop.permute.xlu0 %2229
          %2233 = vset.pattern.permute.xlu0 0
          %2234 = vperm.xlu0 %2233, %v1914
          %v2235 = vpop.permute.xlu0 %2234
          %v2237 = vmul.f32 %v2160, %v2141
          %v2238 = vmul.f32 %v2165, %v2142
          %v2239 = vmul.f32 %v2170, %v2143
          %v2240 = vmul.f32 %v2175, %v2144
          %v2241 = vmul.f32 %v2180, %v2145
          %v2242 = vmul.f32 %v2185, %v2146
          %v2243 = vmul.f32 %v2190, %v2147
          %v2244 = vmul.f32 %v2195, %v2148
          %v2245 = vmul.f32 %v2200, %v2149
          %v2246 = vmul.f32 %v2205, %v2150
          %v2247 = vmul.f32 %v2210, %v2151
          %v2248 = vmul.f32 %v2215, %v2152
          %v2249 = vmul.f32 %v2220, %v2153
          %v2250 = vmul.f32 %v2225, %v2154
          %v2251 = vmul.f32 %v2230, %v2155
          %v2252 = vmul.f32 %v2235, %v2156
          %v2253 = vpack.c.bf16 %v2014, %v2012
          %v2254 = vpack.c.bf16 %v2018, %v2016
          %v2255 = vpack.c.bf16 %v2022, %v2020
          %v2256 = vpack.c.bf16 %v2026, %v2024
          %v2257 = vpack.c.bf16 %v2030, %v2028
          %v2258 = vpack.c.bf16 %v2034, %v2032
          %v2259 = vpack.c.bf16 %v2038, %v2036
          %v2260 = vpack.c.bf16 %v2042, %v2040
          %2261 = vrot.lane.b32.xlu0 %v1464, 64
          %v2262 = vpop.permute.xlu0 %2261
          %2263 = vrot.lane.b32.xlu0 %v1465, 64
          %v2264 = vpop.permute.xlu0 %2263
          %2265 = vrot.lane.b32.xlu0 %v1466, 64
          %v2266 = vpop.permute.xlu0 %2265
          %2267 = vrot.lane.b32.xlu0 %v1467, 64
          %v2268 = vpop.permute.xlu0 %2267
          %2269 = vrot.lane.b32.xlu0 %v1468, 64
          %v2270 = vpop.permute.xlu0 %2269
          %2271 = vrot.lane.b32.xlu0 %v1469, 64
          %v2272 = vpop.permute.xlu0 %2271
          %2273 = vrot.lane.b32.xlu0 %v1470, 64
          %v2274 = vpop.permute.xlu0 %2273
          %2275 = vrot.lane.b32.xlu0 %v1471, 64
          %v2276 = vpop.permute.xlu0 %2275
          %2285 = vmatprep.subr.bf16.mxu0 0
          %2286 = vmatpush1.bf16.msra.mxu0 %v2262
          %2287 = vmatprep.subr.bf16.mxu0 0
          %2288 = vmatpush1.bf16.msra.mxu0 %v2264
          %2289 = vmatprep.subr.bf16.mxu0 0
          %2290 = vmatpush1.bf16.msra.mxu0 %v2266
          %2291 = vmatprep.subr.bf16.mxu0 0
          %2292 = vmatpush1.bf16.msra.mxu0 %v2268
          %2293 = vmatprep.subr.bf16.mxu0 0
          %2294 = vmatpush1.bf16.msra.mxu0 %v2270
          %2295 = vmatprep.subr.bf16.mxu0 0
          %2296 = vmatpush1.bf16.msra.mxu0 %v2272
          %2297 = vmatprep.subr.bf16.mxu0 0
          %2298 = vmatpush1.bf16.msra.mxu0 %v2274
          %2299 = vmatprep.subr.bf16.mxu0 0
          %2300 = vmatpush1.bf16.msra.mxu0 %v2276
          %2301 = vmatprep.subr.bf16.mxu0 0
          %2302 = vmatpush1.bf16.msra.mxu0 0
          %2303 = vmatprep.subr.bf16.mxu0 0
          %2304 = vmatpush1.bf16.msra.mxu0 0
          %2305 = vmatprep.subr.bf16.mxu0 0
          %2306 = vmatpush1.bf16.msra.mxu0 0
          %2307 = vmatprep.subr.bf16.mxu0 0
          %2308 = vmatpush1.bf16.msra.mxu0 0
          %2309 = vmatprep.subr.bf16.mxu0 0
          %2310 = vmatpush1.bf16.msra.mxu0 0
          %2311 = vmatprep.subr.bf16.mxu0 0
          %2312 = vmatpush1.bf16.msra.mxu0 0
          %2313 = vmatprep.subr.bf16.mxu0 0
          %2314 = vmatpush1.bf16.msra.mxu0 0
          %2315 = vmatprep.subr.bf16.mxu0 0
          %2316 = vmatpush1.bf16.msra.mxu0 0
          %2317 = vmatprep.mubr.bf16.mxu0 0
          %2318 = vmatmul.mubr.bf16.gmra.mrb[0].mxu0 %v2253
          %v2319 = vpop.f32.mrb[0].mxu0
          %v2320 = vadd.f32 0.0, %v2319
          %v2321 = vpop.f32.mrb[0].mxu0
          %v2322 = vpop.f32.mrb[0].mxu0
          %v2323 = vadd.f32 0.0, %v2322
          %v2324 = vpop.f32.mrb[0].mxu0
          %2325 = vmatprep.mubr.bf16.mxu0 0
          %2326 = vmatmul.mubr.bf16.gmra.mrb[0].mxu0 %v2254
          %v2327 = vpop.f32.mrb[0].mxu0
          %v2328 = vadd.f32 0.0, %v2327
          %v2329 = vpop.f32.mrb[0].mxu0
          %v2330 = vpop.f32.mrb[0].mxu0
          %v2331 = vadd.f32 0.0, %v2330
          %v2332 = vpop.f32.mrb[0].mxu0
          %2333 = vmatprep.mubr.bf16.mxu0 0
          %2334 = vmatmul.mubr.bf16.gmra.mrb[0].mxu0 %v2255
          %v2335 = vpop.f32.mrb[0].mxu0
          %v2336 = vadd.f32 0.0, %v2335
          %v2337 = vpop.f32.mrb[0].mxu0
          %v2338 = vpop.f32.mrb[0].mxu0
          %v2339 = vadd.f32 0.0, %v2338
          %v2340 = vpop.f32.mrb[0].mxu0
          %2341 = vmatprep.mubr.bf16.mxu0 0
          %2342 = vmatmul.mubr.bf16.gmra.mrb[0].mxu0 %v2256
          %v2343 = vpop.f32.mrb[0].mxu0
          %v2344 = vadd.f32 0.0, %v2343
          %v2345 = vpop.f32.mrb[0].mxu0
          %v2346 = vpop.f32.mrb[0].mxu0
          %v2347 = vadd.f32 0.0, %v2346
          %v2348 = vpop.f32.mrb[0].mxu0
          %2349 = vmatprep.mubr.bf16.mxu0 0
          %2350 = vmatmul.mubr.bf16.gmra.mrb[0].mxu0 %v2257
          %v2351 = vpop.f32.mrb[0].mxu0
          %v2352 = vadd.f32 0.0, %v2351
          %v2353 = vpop.f32.mrb[0].mxu0
          %v2354 = vpop.f32.mrb[0].mxu0
          %v2355 = vadd.f32 0.0, %v2354
          %v2356 = vpop.f32.mrb[0].mxu0
          %2357 = vmatprep.mubr.bf16.mxu0 0
          %2358 = vmatmul.mubr.bf16.gmra.mrb[0].mxu0 %v2258
          %v2359 = vpop.f32.mrb[0].mxu0
          %v2360 = vadd.f32 0.0, %v2359
          %v2361 = vpop.f32.mrb[0].mxu0
          %v2362 = vpop.f32.mrb[0].mxu0
          %v2363 = vadd.f32 0.0, %v2362
          %v2364 = vpop.f32.mrb[0].mxu0
          %2365 = vmatprep.mubr.bf16.mxu0 0
          %2366 = vmatmul.mubr.bf16.gmra.mrb[0].mxu0 %v2259
          %v2367 = vpop.f32.mrb[0].mxu0
          %v2368 = vadd.f32 0.0, %v2367
          %v2369 = vpop.f32.mrb[0].mxu0
          %v2370 = vpop.f32.mrb[0].mxu0
          %v2371 = vadd.f32 0.0, %v2370
          %v2372 = vpop.f32.mrb[0].mxu0
          %2373 = vmatprep.mubr.bf16.mxu0 0
          %2374 = vmatmul.mubr.bf16.gmra.mrb[0].mxu0 %v2260
          %v2375 = vpop.f32.mrb[0].mxu0
          %v2376 = vadd.f32 0.0, %v2375
          %v2377 = vpop.f32.mrb[0].mxu0
          %v2378 = vpop.f32.mrb[0].mxu0
          %v2379 = vadd.f32 0.0, %v2378
          %v2380 = vpop.f32.mrb[0].mxu0
          %2381 = vdwg.mxu0
          %v2382 = vadd.f32 %v2237, %v2320
          %v2383 = vadd.f32 %v2238, %v2323
          %v2384 = vadd.f32 %v2239, %v2328
          %v2385 = vadd.f32 %v2240, %v2331
          %v2386 = vadd.f32 %v2241, %v2336
          %v2387 = vadd.f32 %v2242, %v2339
          %v2388 = vadd.f32 %v2243, %v2344
          %v2389 = vadd.f32 %v2244, %v2347
          %v2390 = vadd.f32 %v2245, %v2352
          %v2391 = vadd.f32 %v2246, %v2355
          %v2392 = vadd.f32 %v2247, %v2360
          %v2393 = vadd.f32 %v2248, %v2363
          %v2394 = vadd.f32 %v2249, %v2368
          %v2395 = vadd.f32 %v2250, %v2371
          %v2396 = vadd.f32 %v2251, %v2376
          %v2397 = vadd.f32 %v2252, %v2379
          %2398 = vst.msk [vmem:[%s2140] sm:$0xff] %vm829, %v2382
          %2399 = vst.msk [vmem:[%s2140 + $0x8] sm:$0xff] %vm829, %v2383
          %2400 = vst.msk [vmem:[%s2140 + $0x10] sm:$0xff] %vm829, %v2384
          %2401 = vst.msk [vmem:[%s2140 + $0x18] sm:$0xff] %vm829, %v2385
          %2402 = vst.msk [vmem:[%s2140 + $0x20] sm:$0xff] %vm829, %v2386
          %2403 = vst.msk [vmem:[%s2140 + $0x28] sm:$0xff] %vm829, %v2387
          %2404 = vst.msk [vmem:[%s2140 + $0x30] sm:$0xff] %vm829, %v2388
          %2405 = vst.msk [vmem:[%s2140 + $0x38] sm:$0xff] %vm829, %v2389
          %2406 = vst.msk [vmem:[%s2140 + $0x40] sm:$0xff] %vm829, %v2390
          %2407 = vst.msk [vmem:[%s2140 + $0x48] sm:$0xff] %vm829, %v2391
          %2408 = vst.msk [vmem:[%s2140 + $0x50] sm:$0xff] %vm829, %v2392
          %2409 = vst.msk [vmem:[%s2140 + $0x58] sm:$0xff] %vm829, %v2393
          %2410 = vst.msk [vmem:[%s2140 + $0x60] sm:$0xff] %vm829, %v2394
          %2411 = vst.msk [vmem:[%s2140 + $0x68] sm:$0xff] %vm829, %v2395
          %2412 = vst.msk [vmem:[%s2140 + $0x70] sm:$0xff] %vm829, %v2396
          %2413 = vst.msk [vmem:[%s2140 + $0x78] sm:$0xff] %vm829, %v2397
          %2414 = vst.msk [vmem:[%s1802] sm:$0xff] %vm1295, %v1851
          %2415 = vst.msk [vmem:[%s1802 + $0x8] sm:$0xff] %vm1295, %v1852
          %2416 = vst.msk [vmem:[%s1802 + $0x10] sm:$0xff] %vm1295, %v1853
          %2417 = vst.msk [vmem:[%s1802 + $0x18] sm:$0xff] %vm1295, %v1854
          %2418 = vst.msk [vmem:[%s1802 + $0x20] sm:$0xff] %vm1295, %v1855
          %2419 = vst.msk [vmem:[%s1802 + $0x28] sm:$0xff] %vm1295, %v1856
          %2420 = vst.msk [vmem:[%s1802 + $0x30] sm:$0xff] %vm1295, %v1857
          %2421 = vst.msk [vmem:[%s1802 + $0x38] sm:$0xff] %vm1295, %v1858
          %2422 = vst.msk [vmem:[%s1802 + $0x40] sm:$0xff] %vm1295, %v1859
          %2423 = vst.msk [vmem:[%s1802 + $0x48] sm:$0xff] %vm1295, %v1860
          %2424 = vst.msk [vmem:[%s1802 + $0x50] sm:$0xff] %vm1295, %v1861
          %2425 = vst.msk [vmem:[%s1802 + $0x58] sm:$0xff] %vm1295, %v1862
          %2426 = vst.msk [vmem:[%s1802 + $0x60] sm:$0xff] %vm1295, %v1863
          %2427 = vst.msk [vmem:[%s1802 + $0x68] sm:$0xff] %vm1295, %v1864
          %2428 = vst.msk [vmem:[%s1802 + $0x70] sm:$0xff] %vm1295, %v1865
          %2429 = vst.msk [vmem:[%s1802 + $0x78] sm:$0xff] %vm1295, %v1866
        $region163: #{multi_head_attention.4} parent=142 // pred_fallthru
          _
        %p2430 = scmp.eq.s32.totalorder %s23, %s22
        // Predicated region
        $region164: #{multi_head_attention.4} parent=142 // pred_check
          %p2431 = pneg %p2430
        $region165: #{multi_head_attention.4} parent=142 // pred_check_branch
          %2433 = sbr.rel (%p2431) target = $region167
        $region166: #{multi_head_attention.4} parent=142 // pred_region
          %v2434 = vld [vmem:[%s529] sm:$0xf]
          %v2435 = vld [vmem:[%s529 + $0x4] sm:$0xf]
          %v2436 = vld [vmem:[%s529 + $0x8] sm:$0xf]
          %v2437 = vld [vmem:[%s529 + $0xc] sm:$0xf]
          %v2438 = vld [vmem:[%s529 + $0x10] sm:$0xf]
          %v2439 = vld [vmem:[%s529 + $0x14] sm:$0xf]
          %v2440 = vld [vmem:[%s529 + $0x18] sm:$0xf]
          %v2441 = vld [vmem:[%s529 + $0x1c] sm:$0xf]
          %v2442 = vld [vmem:[%s529 + $0x20] sm:$0xf]
          %v2443 = vld [vmem:[%s529 + $0x24] sm:$0xf]
          %v2444 = vld [vmem:[%s529 + $0x28] sm:$0xf]
          %v2445 = vld [vmem:[%s529 + $0x2c] sm:$0xf]
          %v2446 = vld [vmem:[%s529 + $0x30] sm:$0xf]
          %v2447 = vld [vmem:[%s529 + $0x34] sm:$0xf]
          %v2448 = vld [vmem:[%s529 + $0x38] sm:$0xf]
          %v2449 = vld [vmem:[%s529 + $0x3c] sm:$0xf]
          %v2450 = vld [vmem:[%s536] sm:$0xf]
          %v2451 = vld [vmem:[%s536 + $0x4] sm:$0xf]
          %v2452 = vld [vmem:[%s536 + $0x8] sm:$0xf]
          %v2453 = vld [vmem:[%s536 + $0xc] sm:$0xf]
          %v2454 = vld [vmem:[%s536 + $0x10] sm:$0xf]
          %v2455 = vld [vmem:[%s536 + $0x14] sm:$0xf]
          %v2456 = vld [vmem:[%s536 + $0x18] sm:$0xf]
          %v2457 = vld [vmem:[%s536 + $0x1c] sm:$0xf]
          %v2458 = vld [vmem:[%s536 + $0x20] sm:$0xf]
          %v2459 = vld [vmem:[%s536 + $0x24] sm:$0xf]
          %v2460 = vld [vmem:[%s536 + $0x28] sm:$0xf]
          %v2461 = vld [vmem:[%s536 + $0x2c] sm:$0xf]
          %v2462 = vld [vmem:[%s536 + $0x30] sm:$0xf]
          %v2463 = vld [vmem:[%s536 + $0x34] sm:$0xf]
          %v2464 = vld [vmem:[%s536 + $0x38] sm:$0xf]
          %v2465 = vld [vmem:[%s536 + $0x3c] sm:$0xf]
          %v2466 = vld [vmem:[%s543] sm:$0xf]
          %v2467 = vld [vmem:[%s543 + $0x4] sm:$0xf]
          %v2468 = vld [vmem:[%s543 + $0x8] sm:$0xf]
          %v2469 = vld [vmem:[%s543 + $0xc] sm:$0xf]
          %v2470 = vld [vmem:[%s543 + $0x10] sm:$0xf]
          %v2471 = vld [vmem:[%s543 + $0x14] sm:$0xf]
          %v2472 = vld [vmem:[%s543 + $0x18] sm:$0xf]
          %v2473 = vld [vmem:[%s543 + $0x1c] sm:$0xf]
          %v2474 = vld [vmem:[%s543 + $0x20] sm:$0xf]
          %v2475 = vld [vmem:[%s543 + $0x24] sm:$0xf]
          %v2476 = vld [vmem:[%s543 + $0x28] sm:$0xf]
          %v2477 = vld [vmem:[%s543 + $0x2c] sm:$0xf]
          %v2478 = vld [vmem:[%s543 + $0x30] sm:$0xf]
          %v2479 = vld [vmem:[%s543 + $0x34] sm:$0xf]
          %v2480 = vld [vmem:[%s543 + $0x38] sm:$0xf]
          %v2481 = vld [vmem:[%s543 + $0x3c] sm:$0xf]
          %v2482 = vlaneseq
          %v2483 = vshrl.u32 %v2482, 7
          %v2484 = vadd.s32 %v2483, 8
          %v2485 = vadd.s32 %v2483, 16
          %v2486 = vadd.s32 %v2483, 24
          %v2487 = vadd.s32 %v2483, 32
          %v2488 = vadd.s32 %v2483, 40
          %v2489 = vadd.s32 %v2483, 48
          %v2490 = vadd.s32 %v2483, 56
          %v2491 = vadd.s32 %v2483, 64
          %v2492 = vadd.s32 %v2483, 72
          %v2493 = vadd.s32 %v2483, 80
          %v2494 = vadd.s32 %v2483, 88
          %v2495 = vadd.s32 %v2483, 96
          %v2496 = vadd.s32 %v2483, 104
          %v2497 = vadd.s32 %v2483, 112
          %v2498 = vadd.s32 %v2483, 120
          %v2499 = vlaneseq
          %v2500 = vand.u32 %v2499, 127
          %vm2501 = vcmp.le.s32.totalorder %v2500, %v2483
          %vm2502 = vcmp.le.s32.totalorder %v2500, %v2484
          %vm2503 = vcmp.le.s32.totalorder %v2500, %v2485
          %vm2504 = vcmp.le.s32.totalorder %v2500, %v2486
          %vm2505 = vcmp.le.s32.totalorder %v2500, %v2487
          %vm2506 = vcmp.le.s32.totalorder %v2500, %v2488
          %vm2507 = vcmp.le.s32.totalorder %v2500, %v2489
          %vm2508 = vcmp.le.s32.totalorder %v2500, %v2490
          %vm2509 = vcmp.le.s32.totalorder %v2500, %v2491
          %vm2510 = vcmp.le.s32.totalorder %v2500, %v2492
          %vm2511 = vcmp.le.s32.totalorder %v2500, %v2493
          %vm2512 = vcmp.le.s32.totalorder %v2500, %v2494
          %vm2513 = vcmp.le.s32.totalorder %v2500, %v2495
          %vm2514 = vcmp.le.s32.totalorder %v2500, %v2496
          %vm2515 = vcmp.le.s32.totalorder %v2500, %v2497
          %vm2516 = vcmp.le.s32.totalorder %v2500, %v2498
          %v2517 = vmul.bf16 %v2434, 1040203264
          %v2518 = vmul.bf16 %v2435, 1040203264
          %v2519 = vmul.bf16 %v2436, 1040203264
          %v2520 = vmul.bf16 %v2437, 1040203264
          %v2521 = vmul.bf16 %v2438, 1040203264
          %v2522 = vmul.bf16 %v2439, 1040203264
          %v2523 = vmul.bf16 %v2440, 1040203264
          %v2524 = vmul.bf16 %v2441, 1040203264
          %v2525 = vmul.bf16 %v2442, 1040203264
          %v2526 = vmul.bf16 %v2443, 1040203264
          %v2527 = vmul.bf16 %v2444, 1040203264
          %v2528 = vmul.bf16 %v2445, 1040203264
          %v2529 = vmul.bf16 %v2446, 1040203264
          %v2530 = vmul.bf16 %v2447, 1040203264
          %v2531 = vmul.bf16 %v2448, 1040203264
          %v2532 = vmul.bf16 %v2449, 1040203264
          %v2549 = vunpack.c.l.b16 %v2517
          %v2550 = vunpack.c.l.b16 %v2518
          %v2551 = vunpack.c.l.b16 %v2519
          %v2552 = vunpack.c.l.b16 %v2520
          %v2553 = vunpack.c.l.b16 %v2521
          %v2554 = vunpack.c.l.b16 %v2522
          %v2555 = vunpack.c.l.b16 %v2523
          %v2556 = vunpack.c.l.b16 %v2524
          %v2557 = vunpack.c.l.b16 %v2525
          %v2558 = vunpack.c.l.b16 %v2526
          %v2559 = vunpack.c.l.b16 %v2527
          %v2560 = vunpack.c.l.b16 %v2528
          %v2561 = vunpack.c.l.b16 %v2529
          %v2562 = vunpack.c.l.b16 %v2530
          %v2563 = vunpack.c.l.b16 %v2531
          %v2564 = vunpack.c.l.b16 %v2532
          %v2565 = vpack.c.b16 %v2550, %v2549
          %v2566 = vpack.c.b16 %v2552, %v2551
          %v2567 = vpack.c.b16 %v2554, %v2553
          %v2568 = vpack.c.b16 %v2556, %v2555
          %v2569 = vpack.c.b16 %v2558, %v2557
          %v2570 = vpack.c.b16 %v2560, %v2559
          %v2571 = vpack.c.b16 %v2562, %v2561
          %v2572 = vpack.c.b16 %v2564, %v2563
          %v2589 = vunpack.c.l.b16 %v2450
          %v2590 = vunpack.c.l.b16 %v2451
          %v2591 = vunpack.c.l.b16 %v2452
          %v2592 = vunpack.c.l.b16 %v2453
          %v2593 = vunpack.c.l.b16 %v2454
          %v2594 = vunpack.c.l.b16 %v2455
          %v2595 = vunpack.c.l.b16 %v2456
          %v2596 = vunpack.c.l.b16 %v2457
          %v2597 = vunpack.c.l.b16 %v2458
          %v2598 = vunpack.c.l.b16 %v2459
          %v2599 = vunpack.c.l.b16 %v2460
          %v2600 = vunpack.c.l.b16 %v2461
          %v2601 = vunpack.c.l.b16 %v2462
          %v2602 = vunpack.c.l.b16 %v2463
          %v2603 = vunpack.c.l.b16 %v2464
          %v2604 = vunpack.c.l.b16 %v2465
          %v2605 = vpack.c.b16 %v2590, %v2589
          %v2606 = vpack.c.b16 %v2592, %v2591
          %v2607 = vpack.c.b16 %v2594, %v2593
          %v2608 = vpack.c.b16 %v2596, %v2595
          %v2609 = vpack.c.b16 %v2598, %v2597
          %v2610 = vpack.c.b16 %v2600, %v2599
          %v2611 = vpack.c.b16 %v2602, %v2601
          %v2612 = vpack.c.b16 %v2604, %v2603
          %vm2613 = vcmask 523264
          %v2615 = vsel %vm2613, %v2565, 0
          %v2618 = vsel %vm2613, %v2566, 0
          %v2621 = vsel %vm2613, %v2567, 0
          %v2624 = vsel %vm2613, %v2568, 0
          %v2627 = vsel %vm2613, %v2569, 0
          %v2630 = vsel %vm2613, %v2570, 0
          %v2633 = vsel %vm2613, %v2571, 0
          %v2636 = vsel %vm2613, %v2572, 0
          %v2639 = vsel %vm2613, %v2605, 0
          %v2642 = vsel %vm2613, %v2606, 0
          %v2645 = vsel %vm2613, %v2607, 0
          %v2648 = vsel %vm2613, %v2608, 0
          %v2651 = vsel %vm2613, %v2609, 0
          %v2654 = vsel %vm2613, %v2610, 0
          %v2657 = vsel %vm2613, %v2611, 0
          %v2660 = vsel %vm2613, %v2612, 0
          %2662 = vmatprep.subr.bf16.mxu0 0
          %2663 = vmatpush1.bf16.xpose.msra.mxu0 %v2639
          %2664 = vmatprep.subr.bf16.mxu0 0
          %2665 = vmatpush1.bf16.xpose.msra.mxu0 %v2642
          %2666 = vmatprep.subr.bf16.mxu0 0
          %2667 = vmatpush1.bf16.xpose.msra.mxu0 %v2645
          %2668 = vmatprep.subr.bf16.mxu0 0
          %2669 = vmatpush1.bf16.xpose.msra.mxu0 %v2648
          %2670 = vmatprep.subr.bf16.mxu0 0
          %2671 = vmatpush1.bf16.xpose.msra.mxu0 %v2651
          %2672 = vmatprep.subr.bf16.mxu0 0
          %2673 = vmatpush1.bf16.xpose.msra.mxu0 %v2654
          %2674 = vmatprep.subr.bf16.mxu0 0
          %2675 = vmatpush1.bf16.xpose.msra.mxu0 %v2657
          %2676 = vmatprep.subr.bf16.mxu0 0
          %2677 = vmatpush1.bf16.xpose.msra.mxu0 %v2660
          %2678 = vmatprep.subr.bf16.mxu0 0
          %2679 = vmatpush1.bf16.xpose.msra.mxu0 0
          %2680 = vmatprep.subr.bf16.mxu0 0
          %2681 = vmatpush1.bf16.xpose.msra.mxu0 0
          %2682 = vmatprep.subr.bf16.mxu0 0
          %2683 = vmatpush1.bf16.xpose.msra.mxu0 0
          %2684 = vmatprep.subr.bf16.mxu0 0
          %2685 = vmatpush1.bf16.xpose.msra.mxu0 0
          %2686 = vmatprep.subr.bf16.mxu0 0
          %2687 = vmatpush1.bf16.xpose.msra.mxu0 0
          %2688 = vmatprep.subr.bf16.mxu0 0
          %2689 = vmatpush1.bf16.xpose.msra.mxu0 0
          %2690 = vmatprep.subr.bf16.mxu0 0
          %2691 = vmatpush1.bf16.xpose.msra.mxu0 0
          %2692 = vmatprep.subr.bf16.mxu0 0
          %2693 = vmatpush1.bf16.xpose.msra.mxu0 0
          %2694 = vmatprep.mubr.bf16.mxu0 0
          %2695 = vmatmul.mubr.bf16.gmra.mrb[0].mxu0 %v2615
          %v2696 = vpop.f32.mrb[0].mxu0
          %v2697 = vadd.f32 0.0, %v2696
          %v2698 = vpop.f32.mrb[0].mxu0
          %v2699 = vpop.f32.mrb[0].mxu0
          %v2700 = vadd.f32 0.0, %v2699
          %v2701 = vpop.f32.mrb[0].mxu0
          %2702 = vmatprep.mubr.bf16.mxu0 0
          %2703 = vmatmul.mubr.bf16.gmra.mrb[0].mxu0 %v2618
          %v2704 = vpop.f32.mrb[0].mxu0
          %v2705 = vadd.f32 0.0, %v2704
          %v2706 = vpop.f32.mrb[0].mxu0
          %v2707 = vpop.f32.mrb[0].mxu0
          %v2708 = vadd.f32 0.0, %v2707
          %v2709 = vpop.f32.mrb[0].mxu0
          %2710 = vmatprep.mubr.bf16.mxu0 0
          %2711 = vmatmul.mubr.bf16.gmra.mrb[0].mxu0 %v2621
          %v2712 = vpop.f32.mrb[0].mxu0
          %v2713 = vadd.f32 0.0, %v2712
          %v2714 = vpop.f32.mrb[0].mxu0
          %v2715 = vpop.f32.mrb[0].mxu0
          %v2716 = vadd.f32 0.0, %v2715
          %v2717 = vpop.f32.mrb[0].mxu0
          %2718 = vmatprep.mubr.bf16.mxu0 0
          %2719 = vmatmul.mubr.bf16.gmra.mrb[0].mxu0 %v2624
          %v2720 = vpop.f32.mrb[0].mxu0
          %v2721 = vadd.f32 0.0, %v2720
          %v2722 = vpop.f32.mrb[0].mxu0
          %v2723 = vpop.f32.mrb[0].mxu0
          %v2724 = vadd.f32 0.0, %v2723
          %v2725 = vpop.f32.mrb[0].mxu0
          %2726 = vmatprep.mubr.bf16.mxu0 0
          %2727 = vmatmul.mubr.bf16.gmra.mrb[0].mxu0 %v2627
          %v2728 = vpop.f32.mrb[0].mxu0
          %v2729 = vadd.f32 0.0, %v2728
          %v2730 = vpop.f32.mrb[0].mxu0
          %v2731 = vpop.f32.mrb[0].mxu0
          %v2732 = vadd.f32 0.0, %v2731
          %v2733 = vpop.f32.mrb[0].mxu0
          %2734 = vmatprep.mubr.bf16.mxu0 0
          %2735 = vmatmul.mubr.bf16.gmra.mrb[0].mxu0 %v2630
          %v2736 = vpop.f32.mrb[0].mxu0
          %v2737 = vadd.f32 0.0, %v2736
          %v2738 = vpop.f32.mrb[0].mxu0
          %v2739 = vpop.f32.mrb[0].mxu0
          %v2740 = vadd.f32 0.0, %v2739
          %v2741 = vpop.f32.mrb[0].mxu0
          %2742 = vmatprep.mubr.bf16.mxu0 0
          %2743 = vmatmul.mubr.bf16.gmra.mrb[0].mxu0 %v2633
          %v2744 = vpop.f32.mrb[0].mxu0
          %v2745 = vadd.f32 0.0, %v2744
          %v2746 = vpop.f32.mrb[0].mxu0
          %v2747 = vpop.f32.mrb[0].mxu0
          %v2748 = vadd.f32 0.0, %v2747
          %v2749 = vpop.f32.mrb[0].mxu0
          %2750 = vmatprep.mubr.bf16.mxu0 0
          %2751 = vmatmul.mubr.bf16.gmra.mrb[0].mxu0 %v2636
          %v2752 = vpop.f32.mrb[0].mxu0
          %v2753 = vadd.f32 0.0, %v2752
          %v2754 = vpop.f32.mrb[0].mxu0
          %v2755 = vpop.f32.mrb[0].mxu0
          %v2756 = vadd.f32 0.0, %v2755
          %v2757 = vpop.f32.mrb[0].mxu0
          %2758 = vdwg.mxu0
          %v2759 = vsel %vm2501, %v2697, -1e+30
          %v2760 = vsel %vm2502, %v2700, -1e+30
          %v2761 = vsel %vm2503, %v2705, -1e+30
          %v2762 = vsel %vm2504, %v2708, -1e+30
          %v2763 = vsel %vm2505, %v2713, -1e+30
          %v2764 = vsel %vm2506, %v2716, -1e+30
          %v2765 = vsel %vm2507, %v2721, -1e+30
          %v2766 = vsel %vm2508, %v2724, -1e+30
          %v2767 = vsel %vm2509, %v2729, -1e+30
          %v2768 = vsel %vm2510, %v2732, -1e+30
          %v2769 = vsel %vm2511, %v2737, -1e+30
          %v2770 = vsel %vm2512, %v2740, -1e+30
          %v2771 = vsel %vm2513, %v2745, -1e+30
          %v2772 = vsel %vm2514, %v2748, -1e+30
          %v2773 = vsel %vm2515, %v2753, -1e+30
          %v2774 = vsel %vm2516, %v2756, -1e+30
          %v2775 = vld [vmem:[#allocation2] sm:$0xff]
          %v2776 = vld [vmem:[#allocation2 + $0x8] sm:$0xff]
          %v2777 = vld [vmem:[#allocation2 + $0x10] sm:$0xff]
          %v2778 = vld [vmem:[#allocation2 + $0x18] sm:$0xff]
          %v2779 = vld [vmem:[#allocation2 + $0x20] sm:$0xff]
          %v2780 = vld [vmem:[#allocation2 + $0x28] sm:$0xff]
          %v2781 = vld [vmem:[#allocation2 + $0x30] sm:$0xff]
          %v2782 = vld [vmem:[#allocation2 + $0x38] sm:$0xff]
          %v2783 = vld [vmem:[#allocation2 + $0x40] sm:$0xff]
          %v2784 = vld [vmem:[#allocation2 + $0x48] sm:$0xff]
          %v2785 = vld [vmem:[#allocation2 + $0x50] sm:$0xff]
          %v2786 = vld [vmem:[#allocation2 + $0x58] sm:$0xff]
          %v2787 = vld [vmem:[#allocation2 + $0x60] sm:$0xff]
          %v2788 = vld [vmem:[#allocation2 + $0x68] sm:$0xff]
          %v2789 = vld [vmem:[#allocation2 + $0x70] sm:$0xff]
          %v2790 = vld [vmem:[#allocation2 + $0x78] sm:$0xff]
          %2791 = vmax.xlane.f32.xlu0 %v2759
          %v2792 = vpop.xlane.xlu0 %2791
          %2793 = vmax.xlane.f32.xlu0 %v2760
          %v2794 = vpop.xlane.xlu0 %2793
          %2795 = vmax.xlane.f32.xlu0 %v2761
          %v2796 = vpop.xlane.xlu0 %2795
          %2797 = vmax.xlane.f32.xlu0 %v2762
          %v2798 = vpop.xlane.xlu0 %2797
          %2799 = vmax.xlane.f32.xlu0 %v2763
          %v2800 = vpop.xlane.xlu0 %2799
          %2801 = vmax.xlane.f32.xlu0 %v2764
          %v2802 = vpop.xlane.xlu0 %2801
          %2803 = vmax.xlane.f32.xlu0 %v2765
          %v2804 = vpop.xlane.xlu0 %2803
          %2805 = vmax.xlane.f32.xlu0 %v2766
          %v2806 = vpop.xlane.xlu0 %2805
          %2807 = vmax.xlane.f32.xlu0 %v2767
          %v2808 = vpop.xlane.xlu0 %2807
          %2809 = vmax.xlane.f32.xlu0 %v2768
          %v2810 = vpop.xlane.xlu0 %2809
          %2811 = vmax.xlane.f32.xlu0 %v2769
          %v2812 = vpop.xlane.xlu0 %2811
          %2813 = vmax.xlane.f32.xlu0 %v2770
          %v2814 = vpop.xlane.xlu0 %2813
          %2815 = vmax.xlane.f32.xlu0 %v2771
          %v2816 = vpop.xlane.xlu0 %2815
          %2817 = vmax.xlane.f32.xlu0 %v2772
          %v2818 = vpop.xlane.xlu0 %2817
          %2819 = vmax.xlane.f32.xlu0 %v2773
          %v2820 = vpop.xlane.xlu0 %2819
          %2821 = vmax.xlane.f32.xlu0 %v2774
          %v2822 = vpop.xlane.xlu0 %2821
          %v2823 = vmax.f32 %v2775, %v2792
          %v2824 = vmax.f32 %v2776, %v2794
          %v2825 = vmax.f32 %v2777, %v2796
          %v2826 = vmax.f32 %v2778, %v2798
          %v2827 = vmax.f32 %v2779, %v2800
          %v2828 = vmax.f32 %v2780, %v2802
          %v2829 = vmax.f32 %v2781, %v2804
          %v2830 = vmax.f32 %v2782, %v2806
          %v2831 = vmax.f32 %v2783, %v2808
          %v2832 = vmax.f32 %v2784, %v2810
          %v2833 = vmax.f32 %v2785, %v2812
          %v2834 = vmax.f32 %v2786, %v2814
          %v2835 = vmax.f32 %v2787, %v2816
          %v2836 = vmax.f32 %v2788, %v2818
          %v2837 = vmax.f32 %v2789, %v2820
          %v2838 = vmax.f32 %v2790, %v2822
          %v2839 = vsub.f32 %v2775, %v2823
          %v2840 = vsub.f32 %v2776, %v2824
          %v2841 = vsub.f32 %v2777, %v2825
          %v2842 = vsub.f32 %v2778, %v2826
          %v2843 = vsub.f32 %v2779, %v2827
          %v2844 = vsub.f32 %v2780, %v2828
          %v2845 = vsub.f32 %v2781, %v2829
          %v2846 = vsub.f32 %v2782, %v2830
          %v2847 = vsub.f32 %v2783, %v2831
          %v2848 = vsub.f32 %v2784, %v2832
          %v2849 = vsub.f32 %v2785, %v2833
          %v2850 = vsub.f32 %v2786, %v2834
          %v2851 = vsub.f32 %v2787, %v2835
          %v2852 = vsub.f32 %v2788, %v2836
          %v2853 = vsub.f32 %v2789, %v2837
          %v2854 = vsub.f32 %v2790, %v2838
          %v2855 = vmul.f32 %v2839, 1.442695
          %v2856 = vpow.pop %v2855
          %v2857 = vmul.f32 %v2840, 1.442695
          %v2858 = vpow.pop %v2857
          %v2859 = vmul.f32 %v2841, 1.442695
          %v2860 = vpow.pop %v2859
          %v2861 = vmul.f32 %v2842, 1.442695
          %v2862 = vpow.pop %v2861
          %v2863 = vmul.f32 %v2843, 1.442695
          %v2864 = vpow.pop %v2863
          %v2865 = vmul.f32 %v2844, 1.442695
          %v2866 = vpow.pop %v2865
          %v2867 = vmul.f32 %v2845, 1.442695
          %v2868 = vpow.pop %v2867
          %v2869 = vmul.f32 %v2846, 1.442695
          %v2870 = vpow.pop %v2869
          %v2871 = vmul.f32 %v2847, 1.442695
          %v2872 = vpow.pop %v2871
          %v2873 = vmul.f32 %v2848, 1.442695
          %v2874 = vpow.pop %v2873
          %v2875 = vmul.f32 %v2849, 1.442695
          %v2876 = vpow.pop %v2875
          %v2877 = vmul.f32 %v2850, 1.442695
          %v2878 = vpow.pop %v2877
          %v2879 = vmul.f32 %v2851, 1.442695
          %v2880 = vpow.pop %v2879
          %v2881 = vmul.f32 %v2852, 1.442695
          %v2882 = vpow.pop %v2881
          %v2883 = vmul.f32 %v2853, 1.442695
          %v2884 = vpow.pop %v2883
          %v2885 = vmul.f32 %v2854, 1.442695
          %v2886 = vpow.pop %v2885
          %2888 = vset.pattern.permute.xlu0 0
          %2889 = vperm.xlu0 %2888, %v2823
          %v2890 = vpop.permute.xlu0 %2889
          %2893 = vset.pattern.permute.xlu0 0
          %2894 = vperm.xlu0 %2893, %v2824
          %v2895 = vpop.permute.xlu0 %2894
          %2898 = vset.pattern.permute.xlu0 0
          %2899 = vperm.xlu0 %2898, %v2825
          %v2900 = vpop.permute.xlu0 %2899
          %2903 = vset.pattern.permute.xlu0 0
          %2904 = vperm.xlu0 %2903, %v2826
          %v2905 = vpop.permute.xlu0 %2904
          %2908 = vset.pattern.permute.xlu0 0
          %2909 = vperm.xlu0 %2908, %v2827
          %v2910 = vpop.permute.xlu0 %2909
          %2913 = vset.pattern.permute.xlu0 0
          %2914 = vperm.xlu0 %2913, %v2828
          %v2915 = vpop.permute.xlu0 %2914
          %2918 = vset.pattern.permute.xlu0 0
          %2919 = vperm.xlu0 %2918, %v2829
          %v2920 = vpop.permute.xlu0 %2919
          %2923 = vset.pattern.permute.xlu0 0
          %2924 = vperm.xlu0 %2923, %v2830
          %v2925 = vpop.permute.xlu0 %2924
          %2928 = vset.pattern.permute.xlu0 0
          %2929 = vperm.xlu0 %2928, %v2831
          %v2930 = vpop.permute.xlu0 %2929
          %2933 = vset.pattern.permute.xlu0 0
          %2934 = vperm.xlu0 %2933, %v2832
          %v2935 = vpop.permute.xlu0 %2934
          %2938 = vset.pattern.permute.xlu0 0
          %2939 = vperm.xlu0 %2938, %v2833
          %v2940 = vpop.permute.xlu0 %2939
          %2943 = vset.pattern.permute.xlu0 0
          %2944 = vperm.xlu0 %2943, %v2834
          %v2945 = vpop.permute.xlu0 %2944
          %2948 = vset.pattern.permute.xlu0 0
          %2949 = vperm.xlu0 %2948, %v2835
          %v2950 = vpop.permute.xlu0 %2949
          %2953 = vset.pattern.permute.xlu0 0
          %2954 = vperm.xlu0 %2953, %v2836
          %v2955 = vpop.permute.xlu0 %2954
          %2958 = vset.pattern.permute.xlu0 0
          %2959 = vperm.xlu0 %2958, %v2837
          %v2960 = vpop.permute.xlu0 %2959
          %2963 = vset.pattern.permute.xlu0 0
          %2964 = vperm.xlu0 %2963, %v2838
          %v2965 = vpop.permute.xlu0 %2964
          %v2967 = vsub.f32 %v2759, %v2890
          %v2968 = vsub.f32 %v2760, %v2895
          %v2969 = vsub.f32 %v2761, %v2900
          %v2970 = vsub.f32 %v2762, %v2905
          %v2971 = vsub.f32 %v2763, %v2910
          %v2972 = vsub.f32 %v2764, %v2915
          %v2973 = vsub.f32 %v2765, %v2920
          %v2974 = vsub.f32 %v2766, %v2925
          %v2975 = vsub.f32 %v2767, %v2930
          %v2976 = vsub.f32 %v2768, %v2935
          %v2977 = vsub.f32 %v2769, %v2940
          %v2978 = vsub.f32 %v2770, %v2945
          %v2979 = vsub.f32 %v2771, %v2950
          %v2980 = vsub.f32 %v2772, %v2955
          %v2981 = vsub.f32 %v2773, %v2960
          %v2982 = vsub.f32 %v2774, %v2965
          %v2983 = vmul.f32 %v2967, 1.442695
          %v2984 = vpow.pop %v2983
          %v2985 = vmul.f32 %v2968, 1.442695
          %v2986 = vpow.pop %v2985
          %v2987 = vmul.f32 %v2969, 1.442695
          %v2988 = vpow.pop %v2987
          %v2989 = vmul.f32 %v2970, 1.442695
          %v2990 = vpow.pop %v2989
          %v2991 = vmul.f32 %v2971, 1.442695
          %v2992 = vpow.pop %v2991
          %v2993 = vmul.f32 %v2972, 1.442695
          %v2994 = vpow.pop %v2993
          %v2995 = vmul.f32 %v2973, 1.442695
          %v2996 = vpow.pop %v2995
          %v2997 = vmul.f32 %v2974, 1.442695
          %v2998 = vpow.pop %v2997
          %v2999 = vmul.f32 %v2975, 1.442695
          %v3000 = vpow.pop %v2999
          %v3001 = vmul.f32 %v2976, 1.442695
          %v3002 = vpow.pop %v3001
          %v3003 = vmul.f32 %v2977, 1.442695
          %v3004 = vpow.pop %v3003
          %v3005 = vmul.f32 %v2978, 1.442695
          %v3006 = vpow.pop %v3005
          %v3007 = vmul.f32 %v2979, 1.442695
          %v3008 = vpow.pop %v3007
          %v3009 = vmul.f32 %v2980, 1.442695
          %v3010 = vpow.pop %v3009
          %v3011 = vmul.f32 %v2981, 1.442695
          %v3012 = vpow.pop %v3011
          %v3013 = vmul.f32 %v2982, 1.442695
          %v3014 = vpow.pop %v3013
          %v3015 = vld [vmem:[#allocation3] sm:$0xff]
          %v3016 = vld [vmem:[#allocation3 + $0x8] sm:$0xff]
          %v3017 = vld [vmem:[#allocation3 + $0x10] sm:$0xff]
          %v3018 = vld [vmem:[#allocation3 + $0x18] sm:$0xff]
          %v3019 = vld [vmem:[#allocation3 + $0x20] sm:$0xff]
          %v3020 = vld [vmem:[#allocation3 + $0x28] sm:$0xff]
          %v3021 = vld [vmem:[#allocation3 + $0x30] sm:$0xff]
          %v3022 = vld [vmem:[#allocation3 + $0x38] sm:$0xff]
          %v3023 = vld [vmem:[#allocation3 + $0x40] sm:$0xff]
          %v3024 = vld [vmem:[#allocation3 + $0x48] sm:$0xff]
          %v3025 = vld [vmem:[#allocation3 + $0x50] sm:$0xff]
          %v3026 = vld [vmem:[#allocation3 + $0x58] sm:$0xff]
          %v3027 = vld [vmem:[#allocation3 + $0x60] sm:$0xff]
          %v3028 = vld [vmem:[#allocation3 + $0x68] sm:$0xff]
          %v3029 = vld [vmem:[#allocation3 + $0x70] sm:$0xff]
          %v3030 = vld [vmem:[#allocation3 + $0x78] sm:$0xff]
          %v3031 = vmul.f32 %v2856, %v3015
          %v3032 = vmul.f32 %v2858, %v3016
          %v3033 = vmul.f32 %v2860, %v3017
          %v3034 = vmul.f32 %v2862, %v3018
          %v3035 = vmul.f32 %v2864, %v3019
          %v3036 = vmul.f32 %v2866, %v3020
          %v3037 = vmul.f32 %v2868, %v3021
          %v3038 = vmul.f32 %v2870, %v3022
          %v3039 = vmul.f32 %v2872, %v3023
          %v3040 = vmul.f32 %v2874, %v3024
          %v3041 = vmul.f32 %v2876, %v3025
          %v3042 = vmul.f32 %v2878, %v3026
          %v3043 = vmul.f32 %v2880, %v3027
          %v3044 = vmul.f32 %v2882, %v3028
          %v3045 = vmul.f32 %v2884, %v3029
          %v3046 = vmul.f32 %v2886, %v3030
          %3047 = vadd.xlane.f32.xlu0 %v2984
          %v3048 = vpop.xlane.xlu0 %3047
          %3049 = vadd.xlane.f32.xlu0 %v2986
          %v3050 = vpop.xlane.xlu0 %3049
          %3051 = vadd.xlane.f32.xlu0 %v2988
          %v3052 = vpop.xlane.xlu0 %3051
          %3053 = vadd.xlane.f32.xlu0 %v2990
          %v3054 = vpop.xlane.xlu0 %3053
          %3055 = vadd.xlane.f32.xlu0 %v2992
          %v3056 = vpop.xlane.xlu0 %3055
          %3057 = vadd.xlane.f32.xlu0 %v2994
          %v3058 = vpop.xlane.xlu0 %3057
          %3059 = vadd.xlane.f32.xlu0 %v2996
          %v3060 = vpop.xlane.xlu0 %3059
          %3061 = vadd.xlane.f32.xlu0 %v2998
          %v3062 = vpop.xlane.xlu0 %3061
          %3063 = vadd.xlane.f32.xlu0 %v3000
          %v3064 = vpop.xlane.xlu0 %3063
          %3065 = vadd.xlane.f32.xlu0 %v3002
          %v3066 = vpop.xlane.xlu0 %3065
          %3067 = vadd.xlane.f32.xlu0 %v3004
          %v3068 = vpop.xlane.xlu0 %3067
          %3069 = vadd.xlane.f32.xlu0 %v3006
          %v3070 = vpop.xlane.xlu0 %3069
          %3071 = vadd.xlane.f32.xlu0 %v3008
          %v3072 = vpop.xlane.xlu0 %3071
          %3073 = vadd.xlane.f32.xlu0 %v3010
          %v3074 = vpop.xlane.xlu0 %3073
          %3075 = vadd.xlane.f32.xlu0 %v3012
          %v3076 = vpop.xlane.xlu0 %3075
          %3077 = vadd.xlane.f32.xlu0 %v3014
          %v3078 = vpop.xlane.xlu0 %3077
          %v3079 = vadd.f32 %v3031, %v3048
          %v3080 = vadd.f32 %v3032, %v3050
          %v3081 = vadd.f32 %v3033, %v3052
          %v3082 = vadd.f32 %v3034, %v3054
          %v3083 = vadd.f32 %v3035, %v3056
          %v3084 = vadd.f32 %v3036, %v3058
          %v3085 = vadd.f32 %v3037, %v3060
          %v3086 = vadd.f32 %v3038, %v3062
          %v3087 = vadd.f32 %v3039, %v3064
          %v3088 = vadd.f32 %v3040, %v3066
          %v3089 = vadd.f32 %v3041, %v3068
          %v3090 = vadd.f32 %v3042, %v3070
          %v3091 = vadd.f32 %v3043, %v3072
          %v3092 = vadd.f32 %v3044, %v3074
          %v3093 = vadd.f32 %v3045, %v3076
          %v3094 = vadd.f32 %v3046, %v3078
          %vm3095 = vcmask 7168
          %3096 = vst.msk [vmem:[#allocation3] sm:$0xff] %vm3095, %v3079
          %3097 = vst.msk [vmem:[#allocation3 + $0x8] sm:$0xff] %vm3095, %v3080
          %3098 = vst.msk [vmem:[#allocation3 + $0x10] sm:$0xff] %vm3095, %v3081
          %3099 = vst.msk [vmem:[#allocation3 + $0x18] sm:$0xff] %vm3095, %v3082
          %3100 = vst.msk [vmem:[#allocation3 + $0x20] sm:$0xff] %vm3095, %v3083
          %3101 = vst.msk [vmem:[#allocation3 + $0x28] sm:$0xff] %vm3095, %v3084
          %3102 = vst.msk [vmem:[#allocation3 + $0x30] sm:$0xff] %vm3095, %v3085
          %3103 = vst.msk [vmem:[#allocation3 + $0x38] sm:$0xff] %vm3095, %v3086
          %3104 = vst.msk [vmem:[#allocation3 + $0x40] sm:$0xff] %vm3095, %v3087
          %3105 = vst.msk [vmem:[#allocation3 + $0x48] sm:$0xff] %vm3095, %v3088
          %3106 = vst.msk [vmem:[#allocation3 + $0x50] sm:$0xff] %vm3095, %v3089
          %3107 = vst.msk [vmem:[#allocation3 + $0x58] sm:$0xff] %vm3095, %v3090
          %3108 = vst.msk [vmem:[#allocation3 + $0x60] sm:$0xff] %vm3095, %v3091
          %3109 = vst.msk [vmem:[#allocation3 + $0x68] sm:$0xff] %vm3095, %v3092
          %3110 = vst.msk [vmem:[#allocation3 + $0x70] sm:$0xff] %vm3095, %v3093
          %3111 = vst.msk [vmem:[#allocation3 + $0x78] sm:$0xff] %vm3095, %v3094
          %v3112 = vld [vmem:[#allocation4] sm:$0xff]
          %v3113 = vld [vmem:[#allocation4 + $0x8] sm:$0xff]
          %v3114 = vld [vmem:[#allocation4 + $0x10] sm:$0xff]
          %v3115 = vld [vmem:[#allocation4 + $0x18] sm:$0xff]
          %v3116 = vld [vmem:[#allocation4 + $0x20] sm:$0xff]
          %v3117 = vld [vmem:[#allocation4 + $0x28] sm:$0xff]
          %v3118 = vld [vmem:[#allocation4 + $0x30] sm:$0xff]
          %v3119 = vld [vmem:[#allocation4 + $0x38] sm:$0xff]
          %v3120 = vld [vmem:[#allocation4 + $0x40] sm:$0xff]
          %v3121 = vld [vmem:[#allocation4 + $0x48] sm:$0xff]
          %v3122 = vld [vmem:[#allocation4 + $0x50] sm:$0xff]
          %v3123 = vld [vmem:[#allocation4 + $0x58] sm:$0xff]
          %v3124 = vld [vmem:[#allocation4 + $0x60] sm:$0xff]
          %v3125 = vld [vmem:[#allocation4 + $0x68] sm:$0xff]
          %v3126 = vld [vmem:[#allocation4 + $0x70] sm:$0xff]
          %v3127 = vld [vmem:[#allocation4 + $0x78] sm:$0xff]
          %3129 = vset.pattern.permute.xlu0 0
          %3130 = vperm.xlu0 %3129, %v2856
          %v3131 = vpop.permute.xlu0 %3130
          %3134 = vset.pattern.permute.xlu0 0
          %3135 = vperm.xlu0 %3134, %v2858
          %v3136 = vpop.permute.xlu0 %3135
          %3139 = vset.pattern.permute.xlu0 0
          %3140 = vperm.xlu0 %3139, %v2860
          %v3141 = vpop.permute.xlu0 %3140
          %3144 = vset.pattern.permute.xlu0 0
          %3145 = vperm.xlu0 %3144, %v2862
          %v3146 = vpop.permute.xlu0 %3145
          %3149 = vset.pattern.permute.xlu0 0
          %3150 = vperm.xlu0 %3149, %v2864
          %v3151 = vpop.permute.xlu0 %3150
          %3154 = vset.pattern.permute.xlu0 0
          %3155 = vperm.xlu0 %3154, %v2866
          %v3156 = vpop.permute.xlu0 %3155
          %3159 = vset.pattern.permute.xlu0 0
          %3160 = vperm.xlu0 %3159, %v2868
          %v3161 = vpop.permute.xlu0 %3160
          %3164 = vset.pattern.permute.xlu0 0
          %3165 = vperm.xlu0 %3164, %v2870
          %v3166 = vpop.permute.xlu0 %3165
          %3169 = vset.pattern.permute.xlu0 0
          %3170 = vperm.xlu0 %3169, %v2872
          %v3171 = vpop.permute.xlu0 %3170
          %3174 = vset.pattern.permute.xlu0 0
          %3175 = vperm.xlu0 %3174, %v2874
          %v3176 = vpop.permute.xlu0 %3175
          %3179 = vset.pattern.permute.xlu0 0
          %3180 = vperm.xlu0 %3179, %v2876
          %v3181 = vpop.permute.xlu0 %3180
          %3184 = vset.pattern.permute.xlu0 0
          %3185 = vperm.xlu0 %3184, %v2878
          %v3186 = vpop.permute.xlu0 %3185
          %3189 = vset.pattern.permute.xlu0 0
          %3190 = vperm.xlu0 %3189, %v2880
          %v3191 = vpop.permute.xlu0 %3190
          %3194 = vset.pattern.permute.xlu0 0
          %3195 = vperm.xlu0 %3194, %v2882
          %v3196 = vpop.permute.xlu0 %3195
          %3199 = vset.pattern.permute.xlu0 0
          %3200 = vperm.xlu0 %3199, %v2884
          %v3201 = vpop.permute.xlu0 %3200
          %3204 = vset.pattern.permute.xlu0 0
          %3205 = vperm.xlu0 %3204, %v2886
          %v3206 = vpop.permute.xlu0 %3205
          %v3208 = vmul.f32 %v3131, %v3112
          %v3209 = vmul.f32 %v3136, %v3113
          %v3210 = vmul.f32 %v3141, %v3114
          %v3211 = vmul.f32 %v3146, %v3115
          %v3212 = vmul.f32 %v3151, %v3116
          %v3213 = vmul.f32 %v3156, %v3117
          %v3214 = vmul.f32 %v3161, %v3118
          %v3215 = vmul.f32 %v3166, %v3119
          %v3216 = vmul.f32 %v3171, %v3120
          %v3217 = vmul.f32 %v3176, %v3121
          %v3218 = vmul.f32 %v3181, %v3122
          %v3219 = vmul.f32 %v3186, %v3123
          %v3220 = vmul.f32 %v3191, %v3124
          %v3221 = vmul.f32 %v3196, %v3125
          %v3222 = vmul.f32 %v3201, %v3126
          %v3223 = vmul.f32 %v3206, %v3127
          %v3224 = vpack.c.bf16 %v2986, %v2984
          %v3225 = vpack.c.bf16 %v2990, %v2988
          %v3226 = vpack.c.bf16 %v2994, %v2992
          %v3227 = vpack.c.bf16 %v2998, %v2996
          %v3228 = vpack.c.bf16 %v3002, %v3000
          %v3229 = vpack.c.bf16 %v3006, %v3004
          %v3230 = vpack.c.bf16 %v3010, %v3008
          %v3231 = vpack.c.bf16 %v3014, %v3012
          %v3248 = vunpack.c.l.b16 %v2466
          %v3249 = vunpack.c.l.b16 %v2467
          %v3250 = vunpack.c.l.b16 %v2468
          %v3251 = vunpack.c.l.b16 %v2469
          %v3252 = vunpack.c.l.b16 %v2470
          %v3253 = vunpack.c.l.b16 %v2471
          %v3254 = vunpack.c.l.b16 %v2472
          %v3255 = vunpack.c.l.b16 %v2473
          %v3256 = vunpack.c.l.b16 %v2474
          %v3257 = vunpack.c.l.b16 %v2475
          %v3258 = vunpack.c.l.b16 %v2476
          %v3259 = vunpack.c.l.b16 %v2477
          %v3260 = vunpack.c.l.b16 %v2478
          %v3261 = vunpack.c.l.b16 %v2479
          %v3262 = vunpack.c.l.b16 %v2480
          %v3263 = vunpack.c.l.b16 %v2481
          %v3264 = vpack.c.b16 %v3249, %v3248
          %v3265 = vpack.c.b16 %v3251, %v3250
          %v3266 = vpack.c.b16 %v3253, %v3252
          %v3267 = vpack.c.b16 %v3255, %v3254
          %v3268 = vpack.c.b16 %v3257, %v3256
          %v3269 = vpack.c.b16 %v3259, %v3258
          %v3270 = vpack.c.b16 %v3261, %v3260
          %v3271 = vpack.c.b16 %v3263, %v3262
          %3280 = vmatprep.subr.bf16.mxu0 0
          %3281 = vmatpush1.bf16.msra.mxu0 %v3264
          %3282 = vmatprep.subr.bf16.mxu0 0
          %3283 = vmatpush1.bf16.msra.mxu0 %v3265
          %3284 = vmatprep.subr.bf16.mxu0 0
          %3285 = vmatpush1.bf16.msra.mxu0 %v3266
          %3286 = vmatprep.subr.bf16.mxu0 0
          %3287 = vmatpush1.bf16.msra.mxu0 %v3267
          %3288 = vmatprep.subr.bf16.mxu0 0
          %3289 = vmatpush1.bf16.msra.mxu0 %v3268
          %3290 = vmatprep.subr.bf16.mxu0 0
          %3291 = vmatpush1.bf16.msra.mxu0 %v3269
          %3292 = vmatprep.subr.bf16.mxu0 0
          %3293 = vmatpush1.bf16.msra.mxu0 %v3270
          %3294 = vmatprep.subr.bf16.mxu0 0
          %3295 = vmatpush1.bf16.msra.mxu0 %v3271
          %3296 = vmatprep.subr.bf16.mxu0 0
          %3297 = vmatpush1.bf16.msra.mxu0 0
          %3298 = vmatprep.subr.bf16.mxu0 0
          %3299 = vmatpush1.bf16.msra.mxu0 0
          %3300 = vmatprep.subr.bf16.mxu0 0
          %3301 = vmatpush1.bf16.msra.mxu0 0
          %3302 = vmatprep.subr.bf16.mxu0 0
          %3303 = vmatpush1.bf16.msra.mxu0 0
          %3304 = vmatprep.subr.bf16.mxu0 0
          %3305 = vmatpush1.bf16.msra.mxu0 0
          %3306 = vmatprep.subr.bf16.mxu0 0
          %3307 = vmatpush1.bf16.msra.mxu0 0
          %3308 = vmatprep.subr.bf16.mxu0 0
          %3309 = vmatpush1.bf16.msra.mxu0 0
          %3310 = vmatprep.subr.bf16.mxu0 0
          %3311 = vmatpush1.bf16.msra.mxu0 0
          %3312 = vmatprep.mubr.bf16.mxu0 0
          %3313 = vmatmul.mubr.bf16.gmra.mrb[0].mxu0 %v3224
          %v3314 = vpop.f32.mrb[0].mxu0
          %v3315 = vadd.f32 0.0, %v3314
          %v3316 = vpop.f32.mrb[0].mxu0
          %v3317 = vpop.f32.mrb[0].mxu0
          %v3318 = vadd.f32 0.0, %v3317
          %v3319 = vpop.f32.mrb[0].mxu0
          %3320 = vmatprep.mubr.bf16.mxu0 0
          %3321 = vmatmul.mubr.bf16.gmra.mrb[0].mxu0 %v3225
          %v3322 = vpop.f32.mrb[0].mxu0
          %v3323 = vadd.f32 0.0, %v3322
          %v3324 = vpop.f32.mrb[0].mxu0
          %v3325 = vpop.f32.mrb[0].mxu0
          %v3326 = vadd.f32 0.0, %v3325
          %v3327 = vpop.f32.mrb[0].mxu0
          %3328 = vmatprep.mubr.bf16.mxu0 0
          %3329 = vmatmul.mubr.bf16.gmra.mrb[0].mxu0 %v3226
          %v3330 = vpop.f32.mrb[0].mxu0
          %v3331 = vadd.f32 0.0, %v3330
          %v3332 = vpop.f32.mrb[0].mxu0
          %v3333 = vpop.f32.mrb[0].mxu0
          %v3334 = vadd.f32 0.0, %v3333
          %v3335 = vpop.f32.mrb[0].mxu0
          %3336 = vmatprep.mubr.bf16.mxu0 0
          %3337 = vmatmul.mubr.bf16.gmra.mrb[0].mxu0 %v3227
          %v3338 = vpop.f32.mrb[0].mxu0
          %v3339 = vadd.f32 0.0, %v3338
          %v3340 = vpop.f32.mrb[0].mxu0
          %v3341 = vpop.f32.mrb[0].mxu0
          %v3342 = vadd.f32 0.0, %v3341
          %v3343 = vpop.f32.mrb[0].mxu0
          %3344 = vmatprep.mubr.bf16.mxu0 0
          %3345 = vmatmul.mubr.bf16.gmra.mrb[0].mxu0 %v3228
          %v3346 = vpop.f32.mrb[0].mxu0
          %v3347 = vadd.f32 0.0, %v3346
          %v3348 = vpop.f32.mrb[0].mxu0
          %v3349 = vpop.f32.mrb[0].mxu0
          %v3350 = vadd.f32 0.0, %v3349
          %v3351 = vpop.f32.mrb[0].mxu0
          %3352 = vmatprep.mubr.bf16.mxu0 0
          %3353 = vmatmul.mubr.bf16.gmra.mrb[0].mxu0 %v3229
          %v3354 = vpop.f32.mrb[0].mxu0
          %v3355 = vadd.f32 0.0, %v3354
          %v3356 = vpop.f32.mrb[0].mxu0
          %v3357 = vpop.f32.mrb[0].mxu0
          %v3358 = vadd.f32 0.0, %v3357
          %v3359 = vpop.f32.mrb[0].mxu0
          %3360 = vmatprep.mubr.bf16.mxu0 0
          %3361 = vmatmul.mubr.bf16.gmra.mrb[0].mxu0 %v3230
          %v3362 = vpop.f32.mrb[0].mxu0
          %v3363 = vadd.f32 0.0, %v3362
          %v3364 = vpop.f32.mrb[0].mxu0
          %v3365 = vpop.f32.mrb[0].mxu0
          %v3366 = vadd.f32 0.0, %v3365
          %v3367 = vpop.f32.mrb[0].mxu0
          %3368 = vmatprep.mubr.bf16.mxu0 0
          %3369 = vmatmul.mubr.bf16.gmra.mrb[0].mxu0 %v3231
          %v3370 = vpop.f32.mrb[0].mxu0
          %v3371 = vadd.f32 0.0, %v3370
          %v3372 = vpop.f32.mrb[0].mxu0
          %v3373 = vpop.f32.mrb[0].mxu0
          %v3374 = vadd.f32 0.0, %v3373
          %v3375 = vpop.f32.mrb[0].mxu0
          %3376 = vdwg.mxu0
          %v3377 = vadd.f32 %v3208, %v3315
          %v3378 = vadd.f32 %v3209, %v3318
          %v3379 = vadd.f32 %v3210, %v3323
          %v3380 = vadd.f32 %v3211, %v3326
          %v3381 = vadd.f32 %v3212, %v3331
          %v3382 = vadd.f32 %v3213, %v3334
          %v3383 = vadd.f32 %v3214, %v3339
          %v3384 = vadd.f32 %v3215, %v3342
          %v3385 = vadd.f32 %v3216, %v3347
          %v3386 = vadd.f32 %v3217, %v3350
          %v3387 = vadd.f32 %v3218, %v3355
          %v3388 = vadd.f32 %v3219, %v3358
          %v3389 = vadd.f32 %v3220, %v3363
          %v3390 = vadd.f32 %v3221, %v3366
          %v3391 = vadd.f32 %v3222, %v3371
          %v3392 = vadd.f32 %v3223, %v3374
          %3393 = vst.msk [vmem:[#allocation4] sm:$0xff] %vm2613, %v3377
          %3394 = vst.msk [vmem:[#allocation4 + $0x8] sm:$0xff] %vm2613, %v3378
          %3395 = vst.msk [vmem:[#allocation4 + $0x10] sm:$0xff] %vm2613, %v3379
          %3396 = vst.msk [vmem:[#allocation4 + $0x18] sm:$0xff] %vm2613, %v3380
          %3397 = vst.msk [vmem:[#allocation4 + $0x20] sm:$0xff] %vm2613, %v3381
          %3398 = vst.msk [vmem:[#allocation4 + $0x28] sm:$0xff] %vm2613, %v3382
          %3399 = vst.msk [vmem:[#allocation4 + $0x30] sm:$0xff] %vm2613, %v3383
          %3400 = vst.msk [vmem:[#allocation4 + $0x38] sm:$0xff] %vm2613, %v3384
          %3401 = vst.msk [vmem:[#allocation4 + $0x40] sm:$0xff] %vm2613, %v3385
          %3402 = vst.msk [vmem:[#allocation4 + $0x48] sm:$0xff] %vm2613, %v3386
          %3403 = vst.msk [vmem:[#allocation4 + $0x50] sm:$0xff] %vm2613, %v3387
          %3404 = vst.msk [vmem:[#allocation4 + $0x58] sm:$0xff] %vm2613, %v3388
          %3405 = vst.msk [vmem:[#allocation4 + $0x60] sm:$0xff] %vm2613, %v3389
          %3406 = vst.msk [vmem:[#allocation4 + $0x68] sm:$0xff] %vm2613, %v3390
          %3407 = vst.msk [vmem:[#allocation4 + $0x70] sm:$0xff] %vm2613, %v3391
          %3408 = vst.msk [vmem:[#allocation4 + $0x78] sm:$0xff] %vm2613, %v3392
          %3409 = vst.msk [vmem:[#allocation2] sm:$0xff] %vm3095, %v2823
          %3410 = vst.msk [vmem:[#allocation2 + $0x8] sm:$0xff] %vm3095, %v2824
          %3411 = vst.msk [vmem:[#allocation2 + $0x10] sm:$0xff] %vm3095, %v2825
          %3412 = vst.msk [vmem:[#allocation2 + $0x18] sm:$0xff] %vm3095, %v2826
          %3413 = vst.msk [vmem:[#allocation2 + $0x20] sm:$0xff] %vm3095, %v2827
          %3414 = vst.msk [vmem:[#allocation2 + $0x28] sm:$0xff] %vm3095, %v2828
          %3415 = vst.msk [vmem:[#allocation2 + $0x30] sm:$0xff] %vm3095, %v2829
          %3416 = vst.msk [vmem:[#allocation2 + $0x38] sm:$0xff] %vm3095, %v2830
          %3417 = vst.msk [vmem:[#allocation2 + $0x40] sm:$0xff] %vm3095, %v2831
          %3418 = vst.msk [vmem:[#allocation2 + $0x48] sm:$0xff] %vm3095, %v2832
          %3419 = vst.msk [vmem:[#allocation2 + $0x50] sm:$0xff] %vm3095, %v2833
          %3420 = vst.msk [vmem:[#allocation2 + $0x58] sm:$0xff] %vm3095, %v2834
          %3421 = vst.msk [vmem:[#allocation2 + $0x60] sm:$0xff] %vm3095, %v2835
          %3422 = vst.msk [vmem:[#allocation2 + $0x68] sm:$0xff] %vm3095, %v2836
          %3423 = vst.msk [vmem:[#allocation2 + $0x70] sm:$0xff] %vm3095, %v2837
          %3424 = vst.msk [vmem:[#allocation2 + $0x78] sm:$0xff] %vm3095, %v2838
          %3425 = vrot.lane.b32.xlu0 %v2565, 64
          %v3426 = vpop.permute.xlu0 %3425
          %3427 = vrot.lane.b32.xlu0 %v2566, 64
          %v3428 = vpop.permute.xlu0 %3427
          %3429 = vrot.lane.b32.xlu0 %v2567, 64
          %v3430 = vpop.permute.xlu0 %3429
          %3431 = vrot.lane.b32.xlu0 %v2568, 64
          %v3432 = vpop.permute.xlu0 %3431
          %3433 = vrot.lane.b32.xlu0 %v2569, 64
          %v3434 = vpop.permute.xlu0 %3433
          %3435 = vrot.lane.b32.xlu0 %v2570, 64
          %v3436 = vpop.permute.xlu0 %3435
          %3437 = vrot.lane.b32.xlu0 %v2571, 64
          %v3438 = vpop.permute.xlu0 %3437
          %3439 = vrot.lane.b32.xlu0 %v2572, 64
          %v3440 = vpop.permute.xlu0 %3439
          %3441 = vrot.lane.b32.xlu0 %v2605, 64
          %v3442 = vpop.permute.xlu0 %3441
          %3443 = vrot.lane.b32.xlu0 %v2606, 64
          %v3444 = vpop.permute.xlu0 %3443
          %3445 = vrot.lane.b32.xlu0 %v2607, 64
          %v3446 = vpop.permute.xlu0 %3445
          %3447 = vrot.lane.b32.xlu0 %v2608, 64
          %v3448 = vpop.permute.xlu0 %3447
          %3449 = vrot.lane.b32.xlu0 %v2609, 64
          %v3450 = vpop.permute.xlu0 %3449
          %3451 = vrot.lane.b32.xlu0 %v2610, 64
          %v3452 = vpop.permute.xlu0 %3451
          %3453 = vrot.lane.b32.xlu0 %v2611, 64
          %v3454 = vpop.permute.xlu0 %3453
          %3455 = vrot.lane.b32.xlu0 %v2612, 64
          %v3456 = vpop.permute.xlu0 %3455
          %v3458 = vsel %vm2613, %v3426, 0
          %v3461 = vsel %vm2613, %v3428, 0
          %v3464 = vsel %vm2613, %v3430, 0
          %v3467 = vsel %vm2613, %v3432, 0
          %v3470 = vsel %vm2613, %v3434, 0
          %v3473 = vsel %vm2613, %v3436, 0
          %v3476 = vsel %vm2613, %v3438, 0
          %v3479 = vsel %vm2613, %v3440, 0
          %v3482 = vsel %vm2613, %v3442, 0
          %v3485 = vsel %vm2613, %v3444, 0
          %v3488 = vsel %vm2613, %v3446, 0
          %v3491 = vsel %vm2613, %v3448, 0
          %v3494 = vsel %vm2613, %v3450, 0
          %v3497 = vsel %vm2613, %v3452, 0
          %v3500 = vsel %vm2613, %v3454, 0
          %v3503 = vsel %vm2613, %v3456, 0
          %3505 = vmatprep.subr.bf16.mxu0 0
          %3506 = vmatpush1.bf16.xpose.msra.mxu0 %v3482
          %3507 = vmatprep.subr.bf16.mxu0 0
          %3508 = vmatpush1.bf16.xpose.msra.mxu0 %v3485
          %3509 = vmatprep.subr.bf16.mxu0 0
          %3510 = vmatpush1.bf16.xpose.msra.mxu0 %v3488
          %3511 = vmatprep.subr.bf16.mxu0 0
          %3512 = vmatpush1.bf16.xpose.msra.mxu0 %v3491
          %3513 = vmatprep.subr.bf16.mxu0 0
          %3514 = vmatpush1.bf16.xpose.msra.mxu0 %v3494
          %3515 = vmatprep.subr.bf16.mxu0 0
          %3516 = vmatpush1.bf16.xpose.msra.mxu0 %v3497
          %3517 = vmatprep.subr.bf16.mxu0 0
          %3518 = vmatpush1.bf16.xpose.msra.mxu0 %v3500
          %3519 = vmatprep.subr.bf16.mxu0 0
          %3520 = vmatpush1.bf16.xpose.msra.mxu0 %v3503
          %3521 = vmatprep.subr.bf16.mxu0 0
          %3522 = vmatpush1.bf16.xpose.msra.mxu0 0
          %3523 = vmatprep.subr.bf16.mxu0 0
          %3524 = vmatpush1.bf16.xpose.msra.mxu0 0
          %3525 = vmatprep.subr.bf16.mxu0 0
          %3526 = vmatpush1.bf16.xpose.msra.mxu0 0
          %3527 = vmatprep.subr.bf16.mxu0 0
          %3528 = vmatpush1.bf16.xpose.msra.mxu0 0
          %3529 = vmatprep.subr.bf16.mxu0 0
          %3530 = vmatpush1.bf16.xpose.msra.mxu0 0
          %3531 = vmatprep.subr.bf16.mxu0 0
          %3532 = vmatpush1.bf16.xpose.msra.mxu0 0
          %3533 = vmatprep.subr.bf16.mxu0 0
          %3534 = vmatpush1.bf16.xpose.msra.mxu0 0
          %3535 = vmatprep.subr.bf16.mxu0 0
          %3536 = vmatpush1.bf16.xpose.msra.mxu0 0
          %3537 = vmatprep.mubr.bf16.mxu0 0
          %3538 = vmatmul.mubr.bf16.gmra.mrb[0].mxu0 %v3458
          %v3539 = vpop.f32.mrb[0].mxu0
          %v3540 = vadd.f32 0.0, %v3539
          %v3541 = vpop.f32.mrb[0].mxu0
          %v3542 = vpop.f32.mrb[0].mxu0
          %v3543 = vadd.f32 0.0, %v3542
          %v3544 = vpop.f32.mrb[0].mxu0
          %3545 = vmatprep.mubr.bf16.mxu0 0
          %3546 = vmatmul.mubr.bf16.gmra.mrb[0].mxu0 %v3461
          %v3547 = vpop.f32.mrb[0].mxu0
          %v3548 = vadd.f32 0.0, %v3547
          %v3549 = vpop.f32.mrb[0].mxu0
          %v3550 = vpop.f32.mrb[0].mxu0
          %v3551 = vadd.f32 0.0, %v3550
          %v3552 = vpop.f32.mrb[0].mxu0
          %3553 = vmatprep.mubr.bf16.mxu0 0
          %3554 = vmatmul.mubr.bf16.gmra.mrb[0].mxu0 %v3464
          %v3555 = vpop.f32.mrb[0].mxu0
          %v3556 = vadd.f32 0.0, %v3555
          %v3557 = vpop.f32.mrb[0].mxu0
          %v3558 = vpop.f32.mrb[0].mxu0
          %v3559 = vadd.f32 0.0, %v3558
          %v3560 = vpop.f32.mrb[0].mxu0
          %3561 = vmatprep.mubr.bf16.mxu0 0
          %3562 = vmatmul.mubr.bf16.gmra.mrb[0].mxu0 %v3467
          %v3563 = vpop.f32.mrb[0].mxu0
          %v3564 = vadd.f32 0.0, %v3563
          %v3565 = vpop.f32.mrb[0].mxu0
          %v3566 = vpop.f32.mrb[0].mxu0
          %v3567 = vadd.f32 0.0, %v3566
          %v3568 = vpop.f32.mrb[0].mxu0
          %3569 = vmatprep.mubr.bf16.mxu0 0
          %3570 = vmatmul.mubr.bf16.gmra.mrb[0].mxu0 %v3470
          %v3571 = vpop.f32.mrb[0].mxu0
          %v3572 = vadd.f32 0.0, %v3571
          %v3573 = vpop.f32.mrb[0].mxu0
          %v3574 = vpop.f32.mrb[0].mxu0
          %v3575 = vadd.f32 0.0, %v3574
          %v3576 = vpop.f32.mrb[0].mxu0
          %3577 = vmatprep.mubr.bf16.mxu0 0
          %3578 = vmatmul.mubr.bf16.gmra.mrb[0].mxu0 %v3473
          %v3579 = vpop.f32.mrb[0].mxu0
          %v3580 = vadd.f32 0.0, %v3579
          %v3581 = vpop.f32.mrb[0].mxu0
          %v3582 = vpop.f32.mrb[0].mxu0
          %v3583 = vadd.f32 0.0, %v3582
          %v3584 = vpop.f32.mrb[0].mxu0
          %3585 = vmatprep.mubr.bf16.mxu0 0
          %3586 = vmatmul.mubr.bf16.gmra.mrb[0].mxu0 %v3476
          %v3587 = vpop.f32.mrb[0].mxu0
          %v3588 = vadd.f32 0.0, %v3587
          %v3589 = vpop.f32.mrb[0].mxu0
          %v3590 = vpop.f32.mrb[0].mxu0
          %v3591 = vadd.f32 0.0, %v3590
          %v3592 = vpop.f32.mrb[0].mxu0
          %3593 = vmatprep.mubr.bf16.mxu0 0
          %3594 = vmatmul.mubr.bf16.gmra.mrb[0].mxu0 %v3479
          %v3595 = vpop.f32.mrb[0].mxu0
          %v3596 = vadd.f32 0.0, %v3595
          %v3597 = vpop.f32.mrb[0].mxu0
          %v3598 = vpop.f32.mrb[0].mxu0
          %v3599 = vadd.f32 0.0, %v3598
          %v3600 = vpop.f32.mrb[0].mxu0
          %3601 = vdwg.mxu0
          %v3602 = vsel %vm2501, %v3540, -1e+30
          %v3603 = vsel %vm2502, %v3543, -1e+30
          %v3604 = vsel %vm2503, %v3548, -1e+30
          %v3605 = vsel %vm2504, %v3551, -1e+30
          %v3606 = vsel %vm2505, %v3556, -1e+30
          %v3607 = vsel %vm2506, %v3559, -1e+30
          %v3608 = vsel %vm2507, %v3564, -1e+30
          %v3609 = vsel %vm2508, %v3567, -1e+30
          %v3610 = vsel %vm2509, %v3572, -1e+30
          %v3611 = vsel %vm2510, %v3575, -1e+30
          %v3612 = vsel %vm2511, %v3580, -1e+30
          %v3613 = vsel %vm2512, %v3583, -1e+30
          %v3614 = vsel %vm2513, %v3588, -1e+30
          %v3615 = vsel %vm2514, %v3591, -1e+30
          %v3616 = vsel %vm2515, %v3596, -1e+30
          %v3617 = vsel %vm2516, %v3599, -1e+30
          %s3618 = scalar_lea.vmem [#allocation2], 128
          %v3619 = vld [vmem:[%s3618] sm:$0xff]
          %v3620 = vld [vmem:[%s3618 + $0x8] sm:$0xff]
          %v3621 = vld [vmem:[%s3618 + $0x10] sm:$0xff]
          %v3622 = vld [vmem:[%s3618 + $0x18] sm:$0xff]
          %v3623 = vld [vmem:[%s3618 + $0x20] sm:$0xff]
          %v3624 = vld [vmem:[%s3618 + $0x28] sm:$0xff]
          %v3625 = vld [vmem:[%s3618 + $0x30] sm:$0xff]
          %v3626 = vld [vmem:[%s3618 + $0x38] sm:$0xff]
          %v3627 = vld [vmem:[%s3618 + $0x40] sm:$0xff]
          %v3628 = vld [vmem:[%s3618 + $0x48] sm:$0xff]
          %v3629 = vld [vmem:[%s3618 + $0x50] sm:$0xff]
          %v3630 = vld [vmem:[%s3618 + $0x58] sm:$0xff]
          %v3631 = vld [vmem:[%s3618 + $0x60] sm:$0xff]
          %v3632 = vld [vmem:[%s3618 + $0x68] sm:$0xff]
          %v3633 = vld [vmem:[%s3618 + $0x70] sm:$0xff]
          %v3634 = vld [vmem:[%s3618 + $0x78] sm:$0xff]
          %3635 = vmax.xlane.f32.xlu0 %v3602
          %v3636 = vpop.xlane.xlu0 %3635
          %3637 = vmax.xlane.f32.xlu0 %v3603
          %v3638 = vpop.xlane.xlu0 %3637
          %3639 = vmax.xlane.f32.xlu0 %v3604
          %v3640 = vpop.xlane.xlu0 %3639
          %3641 = vmax.xlane.f32.xlu0 %v3605
          %v3642 = vpop.xlane.xlu0 %3641
          %3643 = vmax.xlane.f32.xlu0 %v3606
          %v3644 = vpop.xlane.xlu0 %3643
          %3645 = vmax.xlane.f32.xlu0 %v3607
          %v3646 = vpop.xlane.xlu0 %3645
          %3647 = vmax.xlane.f32.xlu0 %v3608
          %v3648 = vpop.xlane.xlu0 %3647
          %3649 = vmax.xlane.f32.xlu0 %v3609
          %v3650 = vpop.xlane.xlu0 %3649
          %3651 = vmax.xlane.f32.xlu0 %v3610
          %v3652 = vpop.xlane.xlu0 %3651
          %3653 = vmax.xlane.f32.xlu0 %v3611
          %v3654 = vpop.xlane.xlu0 %3653
          %3655 = vmax.xlane.f32.xlu0 %v3612
          %v3656 = vpop.xlane.xlu0 %3655
          %3657 = vmax.xlane.f32.xlu0 %v3613
          %v3658 = vpop.xlane.xlu0 %3657
          %3659 = vmax.xlane.f32.xlu0 %v3614
          %v3660 = vpop.xlane.xlu0 %3659
          %3661 = vmax.xlane.f32.xlu0 %v3615
          %v3662 = vpop.xlane.xlu0 %3661
          %3663 = vmax.xlane.f32.xlu0 %v3616
          %v3664 = vpop.xlane.xlu0 %3663
          %3665 = vmax.xlane.f32.xlu0 %v3617
          %v3666 = vpop.xlane.xlu0 %3665
          %v3667 = vmax.f32 %v3619, %v3636
          %v3668 = vmax.f32 %v3620, %v3638
          %v3669 = vmax.f32 %v3621, %v3640
          %v3670 = vmax.f32 %v3622, %v3642
          %v3671 = vmax.f32 %v3623, %v3644
          %v3672 = vmax.f32 %v3624, %v3646
          %v3673 = vmax.f32 %v3625, %v3648
          %v3674 = vmax.f32 %v3626, %v3650
          %v3675 = vmax.f32 %v3627, %v3652
          %v3676 = vmax.f32 %v3628, %v3654
          %v3677 = vmax.f32 %v3629, %v3656
          %v3678 = vmax.f32 %v3630, %v3658
          %v3679 = vmax.f32 %v3631, %v3660
          %v3680 = vmax.f32 %v3632, %v3662
          %v3681 = vmax.f32 %v3633, %v3664
          %v3682 = vmax.f32 %v3634, %v3666
          %v3683 = vsub.f32 %v3619, %v3667
          %v3684 = vsub.f32 %v3620, %v3668
          %v3685 = vsub.f32 %v3621, %v3669
          %v3686 = vsub.f32 %v3622, %v3670
          %v3687 = vsub.f32 %v3623, %v3671
          %v3688 = vsub.f32 %v3624, %v3672
          %v3689 = vsub.f32 %v3625, %v3673
          %v3690 = vsub.f32 %v3626, %v3674
          %v3691 = vsub.f32 %v3627, %v3675
          %v3692 = vsub.f32 %v3628, %v3676
          %v3693 = vsub.f32 %v3629, %v3677
          %v3694 = vsub.f32 %v3630, %v3678
          %v3695 = vsub.f32 %v3631, %v3679
          %v3696 = vsub.f32 %v3632, %v3680
          %v3697 = vsub.f32 %v3633, %v3681
          %v3698 = vsub.f32 %v3634, %v3682
          %v3699 = vmul.f32 %v3683, 1.442695
          %v3700 = vpow.pop %v3699
          %v3701 = vmul.f32 %v3684, 1.442695
          %v3702 = vpow.pop %v3701
          %v3703 = vmul.f32 %v3685, 1.442695
          %v3704 = vpow.pop %v3703
          %v3705 = vmul.f32 %v3686, 1.442695
          %v3706 = vpow.pop %v3705
          %v3707 = vmul.f32 %v3687, 1.442695
          %v3708 = vpow.pop %v3707
          %v3709 = vmul.f32 %v3688, 1.442695
          %v3710 = vpow.pop %v3709
          %v3711 = vmul.f32 %v3689, 1.442695
          %v3712 = vpow.pop %v3711
          %v3713 = vmul.f32 %v3690, 1.442695
          %v3714 = vpow.pop %v3713
          %v3715 = vmul.f32 %v3691, 1.442695
          %v3716 = vpow.pop %v3715
          %v3717 = vmul.f32 %v3692, 1.442695
          %v3718 = vpow.pop %v3717
          %v3719 = vmul.f32 %v3693, 1.442695
          %v3720 = vpow.pop %v3719
          %v3721 = vmul.f32 %v3694, 1.442695
          %v3722 = vpow.pop %v3721
          %v3723 = vmul.f32 %v3695, 1.442695
          %v3724 = vpow.pop %v3723
          %v3725 = vmul.f32 %v3696, 1.442695
          %v3726 = vpow.pop %v3725
          %v3727 = vmul.f32 %v3697, 1.442695
          %v3728 = vpow.pop %v3727
          %v3729 = vmul.f32 %v3698, 1.442695
          %v3730 = vpow.pop %v3729
          %3732 = vset.pattern.permute.xlu0 0
          %3733 = vperm.xlu0 %3732, %v3667
          %v3734 = vpop.permute.xlu0 %3733
          %3737 = vset.pattern.permute.xlu0 0
          %3738 = vperm.xlu0 %3737, %v3668
          %v3739 = vpop.permute.xlu0 %3738
          %3742 = vset.pattern.permute.xlu0 0
          %3743 = vperm.xlu0 %3742, %v3669
          %v3744 = vpop.permute.xlu0 %3743
          %3747 = vset.pattern.permute.xlu0 0
          %3748 = vperm.xlu0 %3747, %v3670
          %v3749 = vpop.permute.xlu0 %3748
          %3752 = vset.pattern.permute.xlu0 0
          %3753 = vperm.xlu0 %3752, %v3671
          %v3754 = vpop.permute.xlu0 %3753
          %3757 = vset.pattern.permute.xlu0 0
          %3758 = vperm.xlu0 %3757, %v3672
          %v3759 = vpop.permute.xlu0 %3758
          %3762 = vset.pattern.permute.xlu0 0
          %3763 = vperm.xlu0 %3762, %v3673
          %v3764 = vpop.permute.xlu0 %3763
          %3767 = vset.pattern.permute.xlu0 0
          %3768 = vperm.xlu0 %3767, %v3674
          %v3769 = vpop.permute.xlu0 %3768
          %3772 = vset.pattern.permute.xlu0 0
          %3773 = vperm.xlu0 %3772, %v3675
          %v3774 = vpop.permute.xlu0 %3773
          %3777 = vset.pattern.permute.xlu0 0
          %3778 = vperm.xlu0 %3777, %v3676
          %v3779 = vpop.permute.xlu0 %3778
          %3782 = vset.pattern.permute.xlu0 0
          %3783 = vperm.xlu0 %3782, %v3677
          %v3784 = vpop.permute.xlu0 %3783
          %3787 = vset.pattern.permute.xlu0 0
          %3788 = vperm.xlu0 %3787, %v3678
          %v3789 = vpop.permute.xlu0 %3788
          %3792 = vset.pattern.permute.xlu0 0
          %3793 = vperm.xlu0 %3792, %v3679
          %v3794 = vpop.permute.xlu0 %3793
          %3797 = vset.pattern.permute.xlu0 0
          %3798 = vperm.xlu0 %3797, %v3680
          %v3799 = vpop.permute.xlu0 %3798
          %3802 = vset.pattern.permute.xlu0 0
          %3803 = vperm.xlu0 %3802, %v3681
          %v3804 = vpop.permute.xlu0 %3803
          %3807 = vset.pattern.permute.xlu0 0
          %3808 = vperm.xlu0 %3807, %v3682
          %v3809 = vpop.permute.xlu0 %3808
          %v3811 = vsub.f32 %v3602, %v3734
          %v3812 = vsub.f32 %v3603, %v3739
          %v3813 = vsub.f32 %v3604, %v3744
          %v3814 = vsub.f32 %v3605, %v3749
          %v3815 = vsub.f32 %v3606, %v3754
          %v3816 = vsub.f32 %v3607, %v3759
          %v3817 = vsub.f32 %v3608, %v3764
          %v3818 = vsub.f32 %v3609, %v3769
          %v3819 = vsub.f32 %v3610, %v3774
          %v3820 = vsub.f32 %v3611, %v3779
          %v3821 = vsub.f32 %v3612, %v3784
          %v3822 = vsub.f32 %v3613, %v3789
          %v3823 = vsub.f32 %v3614, %v3794
          %v3824 = vsub.f32 %v3615, %v3799
          %v3825 = vsub.f32 %v3616, %v3804
          %v3826 = vsub.f32 %v3617, %v3809
          %v3827 = vmul.f32 %v3811, 1.442695
          %v3828 = vpow.pop %v3827
          %v3829 = vmul.f32 %v3812, 1.442695
          %v3830 = vpow.pop %v3829
          %v3831 = vmul.f32 %v3813, 1.442695
          %v3832 = vpow.pop %v3831
          %v3833 = vmul.f32 %v3814, 1.442695
          %v3834 = vpow.pop %v3833
          %v3835 = vmul.f32 %v3815, 1.442695
          %v3836 = vpow.pop %v3835
          %v3837 = vmul.f32 %v3816, 1.442695
          %v3838 = vpow.pop %v3837
          %v3839 = vmul.f32 %v3817, 1.442695
          %v3840 = vpow.pop %v3839
          %v3841 = vmul.f32 %v3818, 1.442695
          %v3842 = vpow.pop %v3841
          %v3843 = vmul.f32 %v3819, 1.442695
          %v3844 = vpow.pop %v3843
          %v3845 = vmul.f32 %v3820, 1.442695
          %v3846 = vpow.pop %v3845
          %v3847 = vmul.f32 %v3821, 1.442695
          %v3848 = vpow.pop %v3847
          %v3849 = vmul.f32 %v3822, 1.442695
          %v3850 = vpow.pop %v3849
          %v3851 = vmul.f32 %v3823, 1.442695
          %v3852 = vpow.pop %v3851
          %v3853 = vmul.f32 %v3824, 1.442695
          %v3854 = vpow.pop %v3853
          %v3855 = vmul.f32 %v3825, 1.442695
          %v3856 = vpow.pop %v3855
          %v3857 = vmul.f32 %v3826, 1.442695
          %v3858 = vpow.pop %v3857
          %s3859 = scalar_lea.vmem [#allocation3], 128
          %v3860 = vld [vmem:[%s3859] sm:$0xff]
          %v3861 = vld [vmem:[%s3859 + $0x8] sm:$0xff]
          %v3862 = vld [vmem:[%s3859 + $0x10] sm:$0xff]
          %v3863 = vld [vmem:[%s3859 + $0x18] sm:$0xff]
          %v3864 = vld [vmem:[%s3859 + $0x20] sm:$0xff]
          %v3865 = vld [vmem:[%s3859 + $0x28] sm:$0xff]
          %v3866 = vld [vmem:[%s3859 + $0x30] sm:$0xff]
          %v3867 = vld [vmem:[%s3859 + $0x38] sm:$0xff]
          %v3868 = vld [vmem:[%s3859 + $0x40] sm:$0xff]
          %v3869 = vld [vmem:[%s3859 + $0x48] sm:$0xff]
          %v3870 = vld [vmem:[%s3859 + $0x50] sm:$0xff]
          %v3871 = vld [vmem:[%s3859 + $0x58] sm:$0xff]
          %v3872 = vld [vmem:[%s3859 + $0x60] sm:$0xff]
          %v3873 = vld [vmem:[%s3859 + $0x68] sm:$0xff]
          %v3874 = vld [vmem:[%s3859 + $0x70] sm:$0xff]
          %v3875 = vld [vmem:[%s3859 + $0x78] sm:$0xff]
          %v3876 = vmul.f32 %v3700, %v3860
          %v3877 = vmul.f32 %v3702, %v3861
          %v3878 = vmul.f32 %v3704, %v3862
          %v3879 = vmul.f32 %v3706, %v3863
          %v3880 = vmul.f32 %v3708, %v3864
          %v3881 = vmul.f32 %v3710, %v3865
          %v3882 = vmul.f32 %v3712, %v3866
          %v3883 = vmul.f32 %v3714, %v3867
          %v3884 = vmul.f32 %v3716, %v3868
          %v3885 = vmul.f32 %v3718, %v3869
          %v3886 = vmul.f32 %v3720, %v3870
          %v3887 = vmul.f32 %v3722, %v3871
          %v3888 = vmul.f32 %v3724, %v3872
          %v3889 = vmul.f32 %v3726, %v3873
          %v3890 = vmul.f32 %v3728, %v3874
          %v3891 = vmul.f32 %v3730, %v3875
          %3892 = vadd.xlane.f32.xlu0 %v3828
          %v3893 = vpop.xlane.xlu0 %3892
          %3894 = vadd.xlane.f32.xlu0 %v3830
          %v3895 = vpop.xlane.xlu0 %3894
          %3896 = vadd.xlane.f32.xlu0 %v3832
          %v3897 = vpop.xlane.xlu0 %3896
          %3898 = vadd.xlane.f32.xlu0 %v3834
          %v3899 = vpop.xlane.xlu0 %3898
          %3900 = vadd.xlane.f32.xlu0 %v3836
          %v3901 = vpop.xlane.xlu0 %3900
          %3902 = vadd.xlane.f32.xlu0 %v3838
          %v3903 = vpop.xlane.xlu0 %3902
          %3904 = vadd.xlane.f32.xlu0 %v3840
          %v3905 = vpop.xlane.xlu0 %3904
          %3906 = vadd.xlane.f32.xlu0 %v3842
          %v3907 = vpop.xlane.xlu0 %3906
          %3908 = vadd.xlane.f32.xlu0 %v3844
          %v3909 = vpop.xlane.xlu0 %3908
          %3910 = vadd.xlane.f32.xlu0 %v3846
          %v3911 = vpop.xlane.xlu0 %3910
          %3912 = vadd.xlane.f32.xlu0 %v3848
          %v3913 = vpop.xlane.xlu0 %3912
          %3914 = vadd.xlane.f32.xlu0 %v3850
          %v3915 = vpop.xlane.xlu0 %3914
          %3916 = vadd.xlane.f32.xlu0 %v3852
          %v3917 = vpop.xlane.xlu0 %3916
          %3918 = vadd.xlane.f32.xlu0 %v3854
          %v3919 = vpop.xlane.xlu0 %3918
          %3920 = vadd.xlane.f32.xlu0 %v3856
          %v3921 = vpop.xlane.xlu0 %3920
          %3922 = vadd.xlane.f32.xlu0 %v3858
          %v3923 = vpop.xlane.xlu0 %3922
          %v3924 = vadd.f32 %v3876, %v3893
          %v3925 = vadd.f32 %v3877, %v3895
          %v3926 = vadd.f32 %v3878, %v3897
          %v3927 = vadd.f32 %v3879, %v3899
          %v3928 = vadd.f32 %v3880, %v3901
          %v3929 = vadd.f32 %v3881, %v3903
          %v3930 = vadd.f32 %v3882, %v3905
          %v3931 = vadd.f32 %v3883, %v3907
          %v3932 = vadd.f32 %v3884, %v3909
          %v3933 = vadd.f32 %v3885, %v3911
          %v3934 = vadd.f32 %v3886, %v3913
          %v3935 = vadd.f32 %v3887, %v3915
          %v3936 = vadd.f32 %v3888, %v3917
          %v3937 = vadd.f32 %v3889, %v3919
          %v3938 = vadd.f32 %v3890, %v3921
          %v3939 = vadd.f32 %v3891, %v3923
          %3940 = vst.msk [vmem:[%s3859] sm:$0xff] %vm3095, %v3924
          %3941 = vst.msk [vmem:[%s3859 + $0x8] sm:$0xff] %vm3095, %v3925
          %3942 = vst.msk [vmem:[%s3859 + $0x10] sm:$0xff] %vm3095, %v3926
          %3943 = vst.msk [vmem:[%s3859 + $0x18] sm:$0xff] %vm3095, %v3927
          %3944 = vst.msk [vmem:[%s3859 + $0x20] sm:$0xff] %vm3095, %v3928
          %3945 = vst.msk [vmem:[%s3859 + $0x28] sm:$0xff] %vm3095, %v3929
          %3946 = vst.msk [vmem:[%s3859 + $0x30] sm:$0xff] %vm3095, %v3930
          %3947 = vst.msk [vmem:[%s3859 + $0x38] sm:$0xff] %vm3095, %v3931
          %3948 = vst.msk [vmem:[%s3859 + $0x40] sm:$0xff] %vm3095, %v3932
          %3949 = vst.msk [vmem:[%s3859 + $0x48] sm:$0xff] %vm3095, %v3933
          %3950 = vst.msk [vmem:[%s3859 + $0x50] sm:$0xff] %vm3095, %v3934
          %3951 = vst.msk [vmem:[%s3859 + $0x58] sm:$0xff] %vm3095, %v3935
          %3952 = vst.msk [vmem:[%s3859 + $0x60] sm:$0xff] %vm3095, %v3936
          %3953 = vst.msk [vmem:[%s3859 + $0x68] sm:$0xff] %vm3095, %v3937
          %3954 = vst.msk [vmem:[%s3859 + $0x70] sm:$0xff] %vm3095, %v3938
          %3955 = vst.msk [vmem:[%s3859 + $0x78] sm:$0xff] %vm3095, %v3939
          %s3956 = scalar_lea.vmem [#allocation4], 128
          %v3957 = vld [vmem:[%s3956] sm:$0xff]
          %v3958 = vld [vmem:[%s3956 + $0x8] sm:$0xff]
          %v3959 = vld [vmem:[%s3956 + $0x10] sm:$0xff]
          %v3960 = vld [vmem:[%s3956 + $0x18] sm:$0xff]
          %v3961 = vld [vmem:[%s3956 + $0x20] sm:$0xff]
          %v3962 = vld [vmem:[%s3956 + $0x28] sm:$0xff]
          %v3963 = vld [vmem:[%s3956 + $0x30] sm:$0xff]
          %v3964 = vld [vmem:[%s3956 + $0x38] sm:$0xff]
          %v3965 = vld [vmem:[%s3956 + $0x40] sm:$0xff]
          %v3966 = vld [vmem:[%s3956 + $0x48] sm:$0xff]
          %v3967 = vld [vmem:[%s3956 + $0x50] sm:$0xff]
          %v3968 = vld [vmem:[%s3956 + $0x58] sm:$0xff]
          %v3969 = vld [vmem:[%s3956 + $0x60] sm:$0xff]
          %v3970 = vld [vmem:[%s3956 + $0x68] sm:$0xff]
          %v3971 = vld [vmem:[%s3956 + $0x70] sm:$0xff]
          %v3972 = vld [vmem:[%s3956 + $0x78] sm:$0xff]
          %3974 = vset.pattern.permute.xlu0 0
          %3975 = vperm.xlu0 %3974, %v3700
          %v3976 = vpop.permute.xlu0 %3975
          %3979 = vset.pattern.permute.xlu0 0
          %3980 = vperm.xlu0 %3979, %v3702
          %v3981 = vpop.permute.xlu0 %3980
          %3984 = vset.pattern.permute.xlu0 0
          %3985 = vperm.xlu0 %3984, %v3704
          %v3986 = vpop.permute.xlu0 %3985
          %3989 = vset.pattern.permute.xlu0 0
          %3990 = vperm.xlu0 %3989, %v3706
          %v3991 = vpop.permute.xlu0 %3990
          %3994 = vset.pattern.permute.xlu0 0
          %3995 = vperm.xlu0 %3994, %v3708
          %v3996 = vpop.permute.xlu0 %3995
          %3999 = vset.pattern.permute.xlu0 0
          %4000 = vperm.xlu0 %3999, %v3710
          %v4001 = vpop.permute.xlu0 %4000
          %4004 = vset.pattern.permute.xlu0 0
          %4005 = vperm.xlu0 %4004, %v3712
          %v4006 = vpop.permute.xlu0 %4005
          %4009 = vset.pattern.permute.xlu0 0
          %4010 = vperm.xlu0 %4009, %v3714
          %v4011 = vpop.permute.xlu0 %4010
          %4014 = vset.pattern.permute.xlu0 0
          %4015 = vperm.xlu0 %4014, %v3716
          %v4016 = vpop.permute.xlu0 %4015
          %4019 = vset.pattern.permute.xlu0 0
          %4020 = vperm.xlu0 %4019, %v3718
          %v4021 = vpop.permute.xlu0 %4020
          %4024 = vset.pattern.permute.xlu0 0
          %4025 = vperm.xlu0 %4024, %v3720
          %v4026 = vpop.permute.xlu0 %4025
          %4029 = vset.pattern.permute.xlu0 0
          %4030 = vperm.xlu0 %4029, %v3722
          %v4031 = vpop.permute.xlu0 %4030
          %4034 = vset.pattern.permute.xlu0 0
          %4035 = vperm.xlu0 %4034, %v3724
          %v4036 = vpop.permute.xlu0 %4035
          %4039 = vset.pattern.permute.xlu0 0
          %4040 = vperm.xlu0 %4039, %v3726
          %v4041 = vpop.permute.xlu0 %4040
          %4044 = vset.pattern.permute.xlu0 0
          %4045 = vperm.xlu0 %4044, %v3728
          %v4046 = vpop.permute.xlu0 %4045
          %4049 = vset.pattern.permute.xlu0 0
          %4050 = vperm.xlu0 %4049, %v3730
          %v4051 = vpop.permute.xlu0 %4050
          %v4053 = vmul.f32 %v3976, %v3957
          %v4054 = vmul.f32 %v3981, %v3958
          %v4055 = vmul.f32 %v3986, %v3959
          %v4056 = vmul.f32 %v3991, %v3960
          %v4057 = vmul.f32 %v3996, %v3961
          %v4058 = vmul.f32 %v4001, %v3962
          %v4059 = vmul.f32 %v4006, %v3963
          %v4060 = vmul.f32 %v4011, %v3964
          %v4061 = vmul.f32 %v4016, %v3965
          %v4062 = vmul.f32 %v4021, %v3966
          %v4063 = vmul.f32 %v4026, %v3967
          %v4064 = vmul.f32 %v4031, %v3968
          %v4065 = vmul.f32 %v4036, %v3969
          %v4066 = vmul.f32 %v4041, %v3970
          %v4067 = vmul.f32 %v4046, %v3971
          %v4068 = vmul.f32 %v4051, %v3972
          %v4069 = vpack.c.bf16 %v3830, %v3828
          %v4070 = vpack.c.bf16 %v3834, %v3832
          %v4071 = vpack.c.bf16 %v3838, %v3836
          %v4072 = vpack.c.bf16 %v3842, %v3840
          %v4073 = vpack.c.bf16 %v3846, %v3844
          %v4074 = vpack.c.bf16 %v3850, %v3848
          %v4075 = vpack.c.bf16 %v3854, %v3852
          %v4076 = vpack.c.bf16 %v3858, %v3856
          %4077 = vrot.lane.b32.xlu0 %v3264, 64
          %v4078 = vpop.permute.xlu0 %4077
          %4079 = vrot.lane.b32.xlu0 %v3265, 64
          %v4080 = vpop.permute.xlu0 %4079
          %4081 = vrot.lane.b32.xlu0 %v3266, 64
          %v4082 = vpop.permute.xlu0 %4081
          %4083 = vrot.lane.b32.xlu0 %v3267, 64
          %v4084 = vpop.permute.xlu0 %4083
          %4085 = vrot.lane.b32.xlu0 %v3268, 64
          %v4086 = vpop.permute.xlu0 %4085
          %4087 = vrot.lane.b32.xlu0 %v3269, 64
          %v4088 = vpop.permute.xlu0 %4087
          %4089 = vrot.lane.b32.xlu0 %v3270, 64
          %v4090 = vpop.permute.xlu0 %4089
          %4091 = vrot.lane.b32.xlu0 %v3271, 64
          %v4092 = vpop.permute.xlu0 %4091
          %4101 = vmatprep.subr.bf16.mxu0 0
          %4102 = vmatpush1.bf16.msra.mxu0 %v4078
          %4103 = vmatprep.subr.bf16.mxu0 0
          %4104 = vmatpush1.bf16.msra.mxu0 %v4080
          %4105 = vmatprep.subr.bf16.mxu0 0
          %4106 = vmatpush1.bf16.msra.mxu0 %v4082
          %4107 = vmatprep.subr.bf16.mxu0 0
          %4108 = vmatpush1.bf16.msra.mxu0 %v4084
          %4109 = vmatprep.subr.bf16.mxu0 0
          %4110 = vmatpush1.bf16.msra.mxu0 %v4086
          %4111 = vmatprep.subr.bf16.mxu0 0
          %4112 = vmatpush1.bf16.msra.mxu0 %v4088
          %4113 = vmatprep.subr.bf16.mxu0 0
          %4114 = vmatpush1.bf16.msra.mxu0 %v4090
          %4115 = vmatprep.subr.bf16.mxu0 0
          %4116 = vmatpush1.bf16.msra.mxu0 %v4092
          %4117 = vmatprep.subr.bf16.mxu0 0
          %4118 = vmatpush1.bf16.msra.mxu0 0
          %4119 = vmatprep.subr.bf16.mxu0 0
          %4120 = vmatpush1.bf16.msra.mxu0 0
          %4121 = vmatprep.subr.bf16.mxu0 0
          %4122 = vmatpush1.bf16.msra.mxu0 0
          %4123 = vmatprep.subr.bf16.mxu0 0
          %4124 = vmatpush1.bf16.msra.mxu0 0
          %4125 = vmatprep.subr.bf16.mxu0 0
          %4126 = vmatpush1.bf16.msra.mxu0 0
          %4127 = vmatprep.subr.bf16.mxu0 0
          %4128 = vmatpush1.bf16.msra.mxu0 0
          %4129 = vmatprep.subr.bf16.mxu0 0
          %4130 = vmatpush1.bf16.msra.mxu0 0
          %4131 = vmatprep.subr.bf16.mxu0 0
          %4132 = vmatpush1.bf16.msra.mxu0 0
          %4133 = vmatprep.mubr.bf16.mxu0 0
          %4134 = vmatmul.mubr.bf16.gmra.mrb[0].mxu0 %v4069
          %v4135 = vpop.f32.mrb[0].mxu0
          %v4136 = vadd.f32 0.0, %v4135
          %v4137 = vpop.f32.mrb[0].mxu0
          %v4138 = vpop.f32.mrb[0].mxu0
          %v4139 = vadd.f32 0.0, %v4138
          %v4140 = vpop.f32.mrb[0].mxu0
          %4141 = vmatprep.mubr.bf16.mxu0 0
          %4142 = vmatmul.mubr.bf16.gmra.mrb[0].mxu0 %v4070
          %v4143 = vpop.f32.mrb[0].mxu0
          %v4144 = vadd.f32 0.0, %v4143
          %v4145 = vpop.f32.mrb[0].mxu0
          %v4146 = vpop.f32.mrb[0].mxu0
          %v4147 = vadd.f32 0.0, %v4146
          %v4148 = vpop.f32.mrb[0].mxu0
          %4149 = vmatprep.mubr.bf16.mxu0 0
          %4150 = vmatmul.mubr.bf16.gmra.mrb[0].mxu0 %v4071
          %v4151 = vpop.f32.mrb[0].mxu0
          %v4152 = vadd.f32 0.0, %v4151
          %v4153 = vpop.f32.mrb[0].mxu0
          %v4154 = vpop.f32.mrb[0].mxu0
          %v4155 = vadd.f32 0.0, %v4154
          %v4156 = vpop.f32.mrb[0].mxu0
          %4157 = vmatprep.mubr.bf16.mxu0 0
          %4158 = vmatmul.mubr.bf16.gmra.mrb[0].mxu0 %v4072
          %v4159 = vpop.f32.mrb[0].mxu0
          %v4160 = vadd.f32 0.0, %v4159
          %v4161 = vpop.f32.mrb[0].mxu0
          %v4162 = vpop.f32.mrb[0].mxu0
          %v4163 = vadd.f32 0.0, %v4162
          %v4164 = vpop.f32.mrb[0].mxu0
          %4165 = vmatprep.mubr.bf16.mxu0 0
          %4166 = vmatmul.mubr.bf16.gmra.mrb[0].mxu0 %v4073
          %v4167 = vpop.f32.mrb[0].mxu0
          %v4168 = vadd.f32 0.0, %v4167
          %v4169 = vpop.f32.mrb[0].mxu0
          %v4170 = vpop.f32.mrb[0].mxu0
          %v4171 = vadd.f32 0.0, %v4170
          %v4172 = vpop.f32.mrb[0].mxu0
          %4173 = vmatprep.mubr.bf16.mxu0 0
          %4174 = vmatmul.mubr.bf16.gmra.mrb[0].mxu0 %v4074
          %v4175 = vpop.f32.mrb[0].mxu0
          %v4176 = vadd.f32 0.0, %v4175
          %v4177 = vpop.f32.mrb[0].mxu0
          %v4178 = vpop.f32.mrb[0].mxu0
          %v4179 = vadd.f32 0.0, %v4178
          %v4180 = vpop.f32.mrb[0].mxu0
          %4181 = vmatprep.mubr.bf16.mxu0 0
          %4182 = vmatmul.mubr.bf16.gmra.mrb[0].mxu0 %v4075
          %v4183 = vpop.f32.mrb[0].mxu0
          %v4184 = vadd.f32 0.0, %v4183
          %v4185 = vpop.f32.mrb[0].mxu0
          %v4186 = vpop.f32.mrb[0].mxu0
          %v4187 = vadd.f32 0.0, %v4186
          %v4188 = vpop.f32.mrb[0].mxu0
          %4189 = vmatprep.mubr.bf16.mxu0 0
          %4190 = vmatmul.mubr.bf16.gmra.mrb[0].mxu0 %v4076
          %v4191 = vpop.f32.mrb[0].mxu0
          %v4192 = vadd.f32 0.0, %v4191
          %v4193 = vpop.f32.mrb[0].mxu0
          %v4194 = vpop.f32.mrb[0].mxu0
          %v4195 = vadd.f32 0.0, %v4194
          %v4196 = vpop.f32.mrb[0].mxu0
          %4197 = vdwg.mxu0
          %v4198 = vadd.f32 %v4053, %v4136
          %v4199 = vadd.f32 %v4054, %v4139
          %v4200 = vadd.f32 %v4055, %v4144
          %v4201 = vadd.f32 %v4056, %v4147
          %v4202 = vadd.f32 %v4057, %v4152
          %v4203 = vadd.f32 %v4058, %v4155
          %v4204 = vadd.f32 %v4059, %v4160
          %v4205 = vadd.f32 %v4060, %v4163
          %v4206 = vadd.f32 %v4061, %v4168
          %v4207 = vadd.f32 %v4062, %v4171
          %v4208 = vadd.f32 %v4063, %v4176
          %v4209 = vadd.f32 %v4064, %v4179
          %v4210 = vadd.f32 %v4065, %v4184
          %v4211 = vadd.f32 %v4066, %v4187
          %v4212 = vadd.f32 %v4067, %v4192
          %v4213 = vadd.f32 %v4068, %v4195
          %4214 = vst.msk [vmem:[%s3956] sm:$0xff] %vm2613, %v4198
          %4215 = vst.msk [vmem:[%s3956 + $0x8] sm:$0xff] %vm2613, %v4199
          %4216 = vst.msk [vmem:[%s3956 + $0x10] sm:$0xff] %vm2613, %v4200
          %4217 = vst.msk [vmem:[%s3956 + $0x18] sm:$0xff] %vm2613, %v4201
          %4218 = vst.msk [vmem:[%s3956 + $0x20] sm:$0xff] %vm2613, %v4202
          %4219 = vst.msk [vmem:[%s3956 + $0x28] sm:$0xff] %vm2613, %v4203
          %4220 = vst.msk [vmem:[%s3956 + $0x30] sm:$0xff] %vm2613, %v4204
          %4221 = vst.msk [vmem:[%s3956 + $0x38] sm:$0xff] %vm2613, %v4205
          %4222 = vst.msk [vmem:[%s3956 + $0x40] sm:$0xff] %vm2613, %v4206
          %4223 = vst.msk [vmem:[%s3956 + $0x48] sm:$0xff] %vm2613, %v4207
          %4224 = vst.msk [vmem:[%s3956 + $0x50] sm:$0xff] %vm2613, %v4208
          %4225 = vst.msk [vmem:[%s3956 + $0x58] sm:$0xff] %vm2613, %v4209
          %4226 = vst.msk [vmem:[%s3956 + $0x60] sm:$0xff] %vm2613, %v4210
          %4227 = vst.msk [vmem:[%s3956 + $0x68] sm:$0xff] %vm2613, %v4211
          %4228 = vst.msk [vmem:[%s3956 + $0x70] sm:$0xff] %vm2613, %v4212
          %4229 = vst.msk [vmem:[%s3956 + $0x78] sm:$0xff] %vm2613, %v4213
          %4230 = vst.msk [vmem:[%s3618] sm:$0xff] %vm3095, %v3667
          %4231 = vst.msk [vmem:[%s3618 + $0x8] sm:$0xff] %vm3095, %v3668
          %4232 = vst.msk [vmem:[%s3618 + $0x10] sm:$0xff] %vm3095, %v3669
          %4233 = vst.msk [vmem:[%s3618 + $0x18] sm:$0xff] %vm3095, %v3670
          %4234 = vst.msk [vmem:[%s3618 + $0x20] sm:$0xff] %vm3095, %v3671
          %4235 = vst.msk [vmem:[%s3618 + $0x28] sm:$0xff] %vm3095, %v3672
          %4236 = vst.msk [vmem:[%s3618 + $0x30] sm:$0xff] %vm3095, %v3673
          %4237 = vst.msk [vmem:[%s3618 + $0x38] sm:$0xff] %vm3095, %v3674
          %4238 = vst.msk [vmem:[%s3618 + $0x40] sm:$0xff] %vm3095, %v3675
          %4239 = vst.msk [vmem:[%s3618 + $0x48] sm:$0xff] %vm3095, %v3676
          %4240 = vst.msk [vmem:[%s3618 + $0x50] sm:$0xff] %vm3095, %v3677
          %4241 = vst.msk [vmem:[%s3618 + $0x58] sm:$0xff] %vm3095, %v3678
          %4242 = vst.msk [vmem:[%s3618 + $0x60] sm:$0xff] %vm3095, %v3679
          %4243 = vst.msk [vmem:[%s3618 + $0x68] sm:$0xff] %vm3095, %v3680
          %4244 = vst.msk [vmem:[%s3618 + $0x70] sm:$0xff] %vm3095, %v3681
          %4245 = vst.msk [vmem:[%s3618 + $0x78] sm:$0xff] %vm3095, %v3682
        $region167: #{multi_head_attention.4} parent=142 // pred_fallthru
          _
        %p4246 = scmp.eq.s32.totalorder %s23, 1
        // Predicated region
        $region168: #{multi_head_attention.4} parent=142 // pred_check
          %p4247 = pneg %p4246
        $region169: #{multi_head_attention.4} parent=142 // pred_check_branch
          %4249 = sbr.rel (%p4247) target = $region171
        $region170: #{multi_head_attention.4} parent=142 // pred_region
          %v4250 = vld [vmem:[#allocation4] sm:$0xff]
          %v4251 = vld [vmem:[#allocation4 + $0x8] sm:$0xff]
          %v4252 = vld [vmem:[#allocation4 + $0x10] sm:$0xff]
          %v4253 = vld [vmem:[#allocation4 + $0x18] sm:$0xff]
          %v4254 = vld [vmem:[#allocation4 + $0x20] sm:$0xff]
          %v4255 = vld [vmem:[#allocation4 + $0x28] sm:$0xff]
          %v4256 = vld [vmem:[#allocation4 + $0x30] sm:$0xff]
          %v4257 = vld [vmem:[#allocation4 + $0x38] sm:$0xff]
          %v4258 = vld [vmem:[#allocation4 + $0x40] sm:$0xff]
          %v4259 = vld [vmem:[#allocation4 + $0x48] sm:$0xff]
          %v4260 = vld [vmem:[#allocation4 + $0x50] sm:$0xff]
          %v4261 = vld [vmem:[#allocation4 + $0x58] sm:$0xff]
          %v4262 = vld [vmem:[#allocation4 + $0x60] sm:$0xff]
          %v4263 = vld [vmem:[#allocation4 + $0x68] sm:$0xff]
          %v4264 = vld [vmem:[#allocation4 + $0x70] sm:$0xff]
          %v4265 = vld [vmem:[#allocation4 + $0x78] sm:$0xff]
          %v4266 = vld [vmem:[#allocation3] sm:$0xff]
          %v4267 = vld [vmem:[#allocation3 + $0x8] sm:$0xff]
          %v4268 = vld [vmem:[#allocation3 + $0x10] sm:$0xff]
          %v4269 = vld [vmem:[#allocation3 + $0x18] sm:$0xff]
          %v4270 = vld [vmem:[#allocation3 + $0x20] sm:$0xff]
          %v4271 = vld [vmem:[#allocation3 + $0x28] sm:$0xff]
          %v4272 = vld [vmem:[#allocation3 + $0x30] sm:$0xff]
          %v4273 = vld [vmem:[#allocation3 + $0x38] sm:$0xff]
          %v4274 = vld [vmem:[#allocation3 + $0x40] sm:$0xff]
          %v4275 = vld [vmem:[#allocation3 + $0x48] sm:$0xff]
          %v4276 = vld [vmem:[#allocation3 + $0x50] sm:$0xff]
          %v4277 = vld [vmem:[#allocation3 + $0x58] sm:$0xff]
          %v4278 = vld [vmem:[#allocation3 + $0x60] sm:$0xff]
          %v4279 = vld [vmem:[#allocation3 + $0x68] sm:$0xff]
          %v4280 = vld [vmem:[#allocation3 + $0x70] sm:$0xff]
          %v4281 = vld [vmem:[#allocation3 + $0x78] sm:$0xff]
          %v4282 = vrcp.pop %v4266
          %v4283 = vrcp.pop %v4267
          %v4284 = vrcp.pop %v4268
          %v4285 = vrcp.pop %v4269
          %v4286 = vrcp.pop %v4270
          %v4287 = vrcp.pop %v4271
          %v4288 = vrcp.pop %v4272
          %v4289 = vrcp.pop %v4273
          %v4290 = vrcp.pop %v4274
          %v4291 = vrcp.pop %v4275
          %v4292 = vrcp.pop %v4276
          %v4293 = vrcp.pop %v4277
          %v4294 = vrcp.pop %v4278
          %v4295 = vrcp.pop %v4279
          %v4296 = vrcp.pop %v4280
          %v4297 = vrcp.pop %v4281
          %4299 = vset.pattern.permute.xlu0 0
          %4300 = vperm.xlu0 %4299, %v4282
          %v4301 = vpop.permute.xlu0 %4300
          %4304 = vset.pattern.permute.xlu0 0
          %4305 = vperm.xlu0 %4304, %v4283
          %v4306 = vpop.permute.xlu0 %4305
          %4309 = vset.pattern.permute.xlu0 0
          %4310 = vperm.xlu0 %4309, %v4284
          %v4311 = vpop.permute.xlu0 %4310
          %4314 = vset.pattern.permute.xlu0 0
          %4315 = vperm.xlu0 %4314, %v4285
          %v4316 = vpop.permute.xlu0 %4315
          %4319 = vset.pattern.permute.xlu0 0
          %4320 = vperm.xlu0 %4319, %v4286
          %v4321 = vpop.permute.xlu0 %4320
          %4324 = vset.pattern.permute.xlu0 0
          %4325 = vperm.xlu0 %4324, %v4287
          %v4326 = vpop.permute.xlu0 %4325
          %4329 = vset.pattern.permute.xlu0 0
          %4330 = vperm.xlu0 %4329, %v4288
          %v4331 = vpop.permute.xlu0 %4330
          %4334 = vset.pattern.permute.xlu0 0
          %4335 = vperm.xlu0 %4334, %v4289
          %v4336 = vpop.permute.xlu0 %4335
          %4339 = vset.pattern.permute.xlu0 0
          %4340 = vperm.xlu0 %4339, %v4290
          %v4341 = vpop.permute.xlu0 %4340
          %4344 = vset.pattern.permute.xlu0 0
          %4345 = vperm.xlu0 %4344, %v4291
          %v4346 = vpop.permute.xlu0 %4345
          %4349 = vset.pattern.permute.xlu0 0
          %4350 = vperm.xlu0 %4349, %v4292
          %v4351 = vpop.permute.xlu0 %4350
          %4354 = vset.pattern.permute.xlu0 0
          %4355 = vperm.xlu0 %4354, %v4293
          %v4356 = vpop.permute.xlu0 %4355
          %4359 = vset.pattern.permute.xlu0 0
          %4360 = vperm.xlu0 %4359, %v4294
          %v4361 = vpop.permute.xlu0 %4360
          %4364 = vset.pattern.permute.xlu0 0
          %4365 = vperm.xlu0 %4364, %v4295
          %v4366 = vpop.permute.xlu0 %4365
          %4369 = vset.pattern.permute.xlu0 0
          %4370 = vperm.xlu0 %4369, %v4296
          %v4371 = vpop.permute.xlu0 %4370
          %4374 = vset.pattern.permute.xlu0 0
          %4375 = vperm.xlu0 %4374, %v4297
          %v4376 = vpop.permute.xlu0 %4375
          %v4378 = vmul.f32 %v4250, %v4301
          %v4379 = vmul.f32 %v4251, %v4306
          %v4380 = vmul.f32 %v4252, %v4311
          %v4381 = vmul.f32 %v4253, %v4316
          %v4382 = vmul.f32 %v4254, %v4321
          %v4383 = vmul.f32 %v4255, %v4326
          %v4384 = vmul.f32 %v4256, %v4331
          %v4385 = vmul.f32 %v4257, %v4336
          %v4386 = vmul.f32 %v4258, %v4341
          %v4387 = vmul.f32 %v4259, %v4346
          %v4388 = vmul.f32 %v4260, %v4351
          %v4389 = vmul.f32 %v4261, %v4356
          %v4390 = vmul.f32 %v4262, %v4361
          %v4391 = vmul.f32 %v4263, %v4366
          %v4392 = vmul.f32 %v4264, %v4371
          %v4393 = vmul.f32 %v4265, %v4376
          %s4394 = scalar_lea.vmem [#allocation4], 128
          %v4395 = vld [vmem:[%s4394] sm:$0xff]
          %v4396 = vld [vmem:[%s4394 + $0x8] sm:$0xff]
          %v4397 = vld [vmem:[%s4394 + $0x10] sm:$0xff]
          %v4398 = vld [vmem:[%s4394 + $0x18] sm:$0xff]
          %v4399 = vld [vmem:[%s4394 + $0x20] sm:$0xff]
          %v4400 = vld [vmem:[%s4394 + $0x28] sm:$0xff]
          %v4401 = vld [vmem:[%s4394 + $0x30] sm:$0xff]
          %v4402 = vld [vmem:[%s4394 + $0x38] sm:$0xff]
          %v4403 = vld [vmem:[%s4394 + $0x40] sm:$0xff]
          %v4404 = vld [vmem:[%s4394 + $0x48] sm:$0xff]
          %v4405 = vld [vmem:[%s4394 + $0x50] sm:$0xff]
          %v4406 = vld [vmem:[%s4394 + $0x58] sm:$0xff]
          %v4407 = vld [vmem:[%s4394 + $0x60] sm:$0xff]
          %v4408 = vld [vmem:[%s4394 + $0x68] sm:$0xff]
          %v4409 = vld [vmem:[%s4394 + $0x70] sm:$0xff]
          %v4410 = vld [vmem:[%s4394 + $0x78] sm:$0xff]
          %s4411 = scalar_lea.vmem [#allocation3], 128
          %v4412 = vld [vmem:[%s4411] sm:$0xff]
          %v4413 = vld [vmem:[%s4411 + $0x8] sm:$0xff]
          %v4414 = vld [vmem:[%s4411 + $0x10] sm:$0xff]
          %v4415 = vld [vmem:[%s4411 + $0x18] sm:$0xff]
          %v4416 = vld [vmem:[%s4411 + $0x20] sm:$0xff]
          %v4417 = vld [vmem:[%s4411 + $0x28] sm:$0xff]
          %v4418 = vld [vmem:[%s4411 + $0x30] sm:$0xff]
          %v4419 = vld [vmem:[%s4411 + $0x38] sm:$0xff]
          %v4420 = vld [vmem:[%s4411 + $0x40] sm:$0xff]
          %v4421 = vld [vmem:[%s4411 + $0x48] sm:$0xff]
          %v4422 = vld [vmem:[%s4411 + $0x50] sm:$0xff]
          %v4423 = vld [vmem:[%s4411 + $0x58] sm:$0xff]
          %v4424 = vld [vmem:[%s4411 + $0x60] sm:$0xff]
          %v4425 = vld [vmem:[%s4411 + $0x68] sm:$0xff]
          %v4426 = vld [vmem:[%s4411 + $0x70] sm:$0xff]
          %v4427 = vld [vmem:[%s4411 + $0x78] sm:$0xff]
          %v4428 = vrcp.pop %v4412
          %v4429 = vrcp.pop %v4413
          %v4430 = vrcp.pop %v4414
          %v4431 = vrcp.pop %v4415
          %v4432 = vrcp.pop %v4416
          %v4433 = vrcp.pop %v4417
          %v4434 = vrcp.pop %v4418
          %v4435 = vrcp.pop %v4419
          %v4436 = vrcp.pop %v4420
          %v4437 = vrcp.pop %v4421
          %v4438 = vrcp.pop %v4422
          %v4439 = vrcp.pop %v4423
          %v4440 = vrcp.pop %v4424
          %v4441 = vrcp.pop %v4425
          %v4442 = vrcp.pop %v4426
          %v4443 = vrcp.pop %v4427
          %4445 = vset.pattern.permute.xlu0 0
          %4446 = vperm.xlu0 %4445, %v4428
          %v4447 = vpop.permute.xlu0 %4446
          %4450 = vset.pattern.permute.xlu0 0
          %4451 = vperm.xlu0 %4450, %v4429
          %v4452 = vpop.permute.xlu0 %4451
          %4455 = vset.pattern.permute.xlu0 0
          %4456 = vperm.xlu0 %4455, %v4430
          %v4457 = vpop.permute.xlu0 %4456
          %4460 = vset.pattern.permute.xlu0 0
          %4461 = vperm.xlu0 %4460, %v4431
          %v4462 = vpop.permute.xlu0 %4461
          %4465 = vset.pattern.permute.xlu0 0
          %4466 = vperm.xlu0 %4465, %v4432
          %v4467 = vpop.permute.xlu0 %4466
          %4470 = vset.pattern.permute.xlu0 0
          %4471 = vperm.xlu0 %4470, %v4433
          %v4472 = vpop.permute.xlu0 %4471
          %4475 = vset.pattern.permute.xlu0 0
          %4476 = vperm.xlu0 %4475, %v4434
          %v4477 = vpop.permute.xlu0 %4476
          %4480 = vset.pattern.permute.xlu0 0
          %4481 = vperm.xlu0 %4480, %v4435
          %v4482 = vpop.permute.xlu0 %4481
          %4485 = vset.pattern.permute.xlu0 0
          %4486 = vperm.xlu0 %4485, %v4436
          %v4487 = vpop.permute.xlu0 %4486
          %4490 = vset.pattern.permute.xlu0 0
          %4491 = vperm.xlu0 %4490, %v4437
          %v4492 = vpop.permute.xlu0 %4491
          %4495 = vset.pattern.permute.xlu0 0
          %4496 = vperm.xlu0 %4495, %v4438
          %v4497 = vpop.permute.xlu0 %4496
          %4500 = vset.pattern.permute.xlu0 0
          %4501 = vperm.xlu0 %4500, %v4439
          %v4502 = vpop.permute.xlu0 %4501
          %4505 = vset.pattern.permute.xlu0 0
          %4506 = vperm.xlu0 %4505, %v4440
          %v4507 = vpop.permute.xlu0 %4506
          %4510 = vset.pattern.permute.xlu0 0
          %4511 = vperm.xlu0 %4510, %v4441
          %v4512 = vpop.permute.xlu0 %4511
          %4515 = vset.pattern.permute.xlu0 0
          %4516 = vperm.xlu0 %4515, %v4442
          %v4517 = vpop.permute.xlu0 %4516
          %4520 = vset.pattern.permute.xlu0 0
          %4521 = vperm.xlu0 %4520, %v4443
          %v4522 = vpop.permute.xlu0 %4521
          %v4524 = vmul.f32 %v4395, %v4447
          %v4525 = vmul.f32 %v4396, %v4452
          %v4526 = vmul.f32 %v4397, %v4457
          %v4527 = vmul.f32 %v4398, %v4462
          %v4528 = vmul.f32 %v4399, %v4467
          %v4529 = vmul.f32 %v4400, %v4472
          %v4530 = vmul.f32 %v4401, %v4477
          %v4531 = vmul.f32 %v4402, %v4482
          %v4532 = vmul.f32 %v4403, %v4487
          %v4533 = vmul.f32 %v4404, %v4492
          %v4534 = vmul.f32 %v4405, %v4497
          %v4535 = vmul.f32 %v4406, %v4502
          %v4536 = vmul.f32 %v4407, %v4507
          %v4537 = vmul.f32 %v4408, %v4512
          %v4538 = vmul.f32 %v4409, %v4517
          %v4539 = vmul.f32 %v4410, %v4522
          %4556 = vrot.lane.b32.xlu0 %v4524, 64
          %v4557 = vpop.permute.xlu0 %4556
          %4558 = vrot.lane.b32.xlu0 %v4525, 64
          %v4559 = vpop.permute.xlu0 %4558
          %4560 = vrot.lane.b32.xlu0 %v4526, 64
          %v4561 = vpop.permute.xlu0 %4560
          %4562 = vrot.lane.b32.xlu0 %v4527, 64
          %v4563 = vpop.permute.xlu0 %4562
          %4564 = vrot.lane.b32.xlu0 %v4528, 64
          %v4565 = vpop.permute.xlu0 %4564
          %4566 = vrot.lane.b32.xlu0 %v4529, 64
          %v4567 = vpop.permute.xlu0 %4566
          %4568 = vrot.lane.b32.xlu0 %v4530, 64
          %v4569 = vpop.permute.xlu0 %4568
          %4570 = vrot.lane.b32.xlu0 %v4531, 64
          %v4571 = vpop.permute.xlu0 %4570
          %4572 = vrot.lane.b32.xlu0 %v4532, 64
          %v4573 = vpop.permute.xlu0 %4572
          %4574 = vrot.lane.b32.xlu0 %v4533, 64
          %v4575 = vpop.permute.xlu0 %4574
          %4576 = vrot.lane.b32.xlu0 %v4534, 64
          %v4577 = vpop.permute.xlu0 %4576
          %4578 = vrot.lane.b32.xlu0 %v4535, 64
          %v4579 = vpop.permute.xlu0 %4578
          %4580 = vrot.lane.b32.xlu0 %v4536, 64
          %v4581 = vpop.permute.xlu0 %4580
          %4582 = vrot.lane.b32.xlu0 %v4537, 64
          %v4583 = vpop.permute.xlu0 %4582
          %4584 = vrot.lane.b32.xlu0 %v4538, 64
          %v4585 = vpop.permute.xlu0 %4584
          %4586 = vrot.lane.b32.xlu0 %v4539, 64
          %v4587 = vpop.permute.xlu0 %4586
          %vm4604 = vcmask 523264
          %v4605 = vsel %vm4604, %v4378, %v4557
          %v4606 = vsel %vm4604, %v4379, %v4559
          %v4607 = vsel %vm4604, %v4380, %v4561
          %v4608 = vsel %vm4604, %v4381, %v4563
          %v4609 = vsel %vm4604, %v4382, %v4565
          %v4610 = vsel %vm4604, %v4383, %v4567
          %v4611 = vsel %vm4604, %v4384, %v4569
          %v4612 = vsel %vm4604, %v4385, %v4571
          %v4613 = vsel %vm4604, %v4386, %v4573
          %v4614 = vsel %vm4604, %v4387, %v4575
          %v4615 = vsel %vm4604, %v4388, %v4577
          %v4616 = vsel %vm4604, %v4389, %v4579
          %v4617 = vsel %vm4604, %v4390, %v4581
          %v4618 = vsel %vm4604, %v4391, %v4583
          %v4619 = vsel %vm4604, %v4392, %v4585
          %v4620 = vsel %vm4604, %v4393, %v4587
          %v4621 = vpack.c.bf16 %v4606, %v4605
          %v4622 = vpack.c.bf16 %v4608, %v4607
          %v4623 = vpack.c.bf16 %v4610, %v4609
          %v4624 = vpack.c.bf16 %v4612, %v4611
          %v4625 = vpack.c.bf16 %v4614, %v4613
          %v4626 = vpack.c.bf16 %v4616, %v4615
          %v4627 = vpack.c.bf16 %v4618, %v4617
          %v4628 = vpack.c.bf16 %v4620, %v4619
          %v4637 = vunpack.c.l.b16 %v4621
          %v4638 = vunpack.c.h.b16 %v4621
          %v4639 = vunpack.c.l.b16 %v4622
          %v4640 = vunpack.c.h.b16 %v4622
          %v4641 = vunpack.c.l.b16 %v4623
          %v4642 = vunpack.c.h.b16 %v4623
          %v4643 = vunpack.c.l.b16 %v4624
          %v4644 = vunpack.c.h.b16 %v4624
          %v4645 = vunpack.c.l.b16 %v4625
          %v4646 = vunpack.c.h.b16 %v4625
          %v4647 = vunpack.c.l.b16 %v4626
          %v4648 = vunpack.c.h.b16 %v4626
          %v4649 = vunpack.c.l.b16 %v4627
          %v4650 = vunpack.c.h.b16 %v4627
          %v4651 = vunpack.c.l.b16 %v4628
          %v4652 = vunpack.c.h.b16 %v4628
          %v4653 = vpack.c.b16 %v4637, %v4637
          %v4654 = vpack.c.b16 %v4638, %v4638
          %v4655 = vpack.c.b16 %v4639, %v4639
          %v4656 = vpack.c.b16 %v4640, %v4640
          %v4657 = vpack.c.b16 %v4641, %v4641
          %v4658 = vpack.c.b16 %v4642, %v4642
          %v4659 = vpack.c.b16 %v4643, %v4643
          %v4660 = vpack.c.b16 %v4644, %v4644
          %v4661 = vpack.c.b16 %v4645, %v4645
          %v4662 = vpack.c.b16 %v4646, %v4646
          %v4663 = vpack.c.b16 %v4647, %v4647
          %v4664 = vpack.c.b16 %v4648, %v4648
          %v4665 = vpack.c.b16 %v4649, %v4649
          %v4666 = vpack.c.b16 %v4650, %v4650
          %v4667 = vpack.c.b16 %v4651, %v4651
          %v4668 = vpack.c.b16 %v4652, %v4652
          %4685 = vst [vmem:[%s570] sm:$0xf] %v4653
          %4686 = vst [vmem:[%s570 + $0x4] sm:$0xf] %v4654
          %4687 = vst [vmem:[%s570 + $0x8] sm:$0xf] %v4655
          %4688 = vst [vmem:[%s570 + $0xc] sm:$0xf] %v4656
          %4689 = vst [vmem:[%s570 + $0x10] sm:$0xf] %v4657
          %4690 = vst [vmem:[%s570 + $0x14] sm:$0xf] %v4658
          %4691 = vst [vmem:[%s570 + $0x18] sm:$0xf] %v4659
          %4692 = vst [vmem:[%s570 + $0x1c] sm:$0xf] %v4660
          %4693 = vst [vmem:[%s570 + $0x20] sm:$0xf] %v4661
          %4694 = vst [vmem:[%s570 + $0x24] sm:$0xf] %v4662
          %4695 = vst [vmem:[%s570 + $0x28] sm:$0xf] %v4663
          %4696 = vst [vmem:[%s570 + $0x2c] sm:$0xf] %v4664
          %4697 = vst [vmem:[%s570 + $0x30] sm:$0xf] %v4665
          %4698 = vst [vmem:[%s570 + $0x34] sm:$0xf] %v4666
          %4699 = vst [vmem:[%s570 + $0x38] sm:$0xf] %v4667
          %4700 = vst [vmem:[%s570 + $0x3c] sm:$0xf] %v4668
        $region171: #{multi_head_attention.4} parent=142 // pred_fallthru
          _
        %s4701 = sand.u32 %s146, 1
        %s4702 = sand.u32 %s146, 1
        %s4703 = smul.addr %s4702, 64
        %s4704 = scalar_lea.vmem [#allocation8], %s4703
        // Predicated region
        $region172: #{multi_head_attention.4} parent=142 // pred_check
          %p4705 = pneg %p156
        $region173: #{multi_head_attention.4} parent=142 // pred_check_branch
          %4707 = sbr.rel (%p4705) target = $region175
        $region174: #{multi_head_attention.4} parent=142 // pred_region
          %s4708 = smul.u32 16, %s22
          %s4709 = smul.addr %s4708, 3
          %s4710 = sadd.s32 %s21, %s4709
          %s4711 = smul.addr %s20, 96
          %s4712 = sadd.s32 %s4710, %s4711
          %s4713 = smul.addr %s4712, 4
          %s4714 = scalar_lea.vmem %s3, %s4713
          // Predicated region
          $region176: #{multi_head_attention.4} parent=174 // pred_check
            _
          $region177: #{multi_head_attention.4} parent=174 // pred_check_branch
            %4716 = sbr.rel (0) target = $region179
          $region178: #{multi_head_attention.4} parent=174 // pred_region
            // Predicated region
            $region180: #{multi_head_attention.4} parent=178 // pred_check
              _
            $region181: #{multi_head_attention.4} parent=178 // pred_check_branch
              %4718 = sbr.rel target = $region183
            $region182: #{multi_head_attention.4} parent=178 // pred_region
              // Predicated region
              $region195: #{multi_head_attention.4} parent=182 // pred_check
                _
              $region196: #{multi_head_attention.4} parent=182 // pred_check_branch
                %4763 = sbr.rel (0) target = $region198
              $region197: #{multi_head_attention.4} parent=182 // pred_region
                loop: start=0, step=1, limit=1
                $region199: #{multi_head_attention.4} parent=197 // loop_pre_header
                  _
                $region200: #{multi_head_attention.4} parent=197 // loop_header
                  %s4765 = sphi 0, %s4769
                  %p4766 = scmp.ge.s32.totalorder %s4765, 1
                  %s4770 = sphi %s4704, %s4704
                  %s4771 = sphi %s4714, %s4714
                $region201: #{multi_head_attention.4} parent=197 // loop_header_branch
                  %4768 = sbr.rel (%p4766) target = $region205
                $region202: #{multi_head_attention.4} parent=197 // loop_body
                  _
                $region203: #{multi_head_attention.4} parent=197 // loop_footer
                  %s4769 = sadd.s32 1, %s4765
                $region204: #{multi_head_attention.4} parent=197 // loop_footer_branch
                  %4764 = sbr.rel target = $region200
                $region205: #{multi_head_attention.4} parent=197 // loop_exit
                  _
                loop: start=0, step=1, limit=1
                $region206: #{multi_head_attention.4} parent=197 // loop_pre_header
                  _
                $region207: #{multi_head_attention.4} parent=197 // loop_header
                  %s4774 = sphi 0, %s4778
                  %p4775 = scmp.ge.s32.totalorder %s4774, 1
                  %s4779 = sphi %s4704, %s4704
                  %s4780 = sphi %s4714, %s4714
                $region208: #{multi_head_attention.4} parent=197 // loop_header_branch
                  %4777 = sbr.rel (%p4775) target = $region212
                $region209: #{multi_head_attention.4} parent=197 // loop_body
                  %v4781 = vld [vmem:[%s4779] sm:$0xf]
                  %4782 = vst [vmem:[%s4780] sm:$0xf] %v4781
                  %v4783 = vld [vmem:[%s4779 + $0x4] sm:$0xf]
                  %4784 = vst [vmem:[%s4780 + $0xc] sm:$0xf] %v4783
                  %v4785 = vld [vmem:[%s4779 + $0x8] sm:$0xf]
                  %4786 = vst [vmem:[%s4780 + $0x18] sm:$0xf] %v4785
                  %v4787 = vld [vmem:[%s4779 + $0xc] sm:$0xf]
                  %4788 = vst [vmem:[%s4780 + $0x24] sm:$0xf] %v4787
                  %v4789 = vld [vmem:[%s4779 + $0x10] sm:$0xf]
                  %4790 = vst [vmem:[%s4780 + $0x30] sm:$0xf] %v4789
                  %v4791 = vld [vmem:[%s4779 + $0x14] sm:$0xf]
                  %4792 = vst [vmem:[%s4780 + $0x3c] sm:$0xf] %v4791
                  %v4793 = vld [vmem:[%s4779 + $0x18] sm:$0xf]
                  %4794 = vst [vmem:[%s4780 + $0x48] sm:$0xf] %v4793
                  %v4795 = vld [vmem:[%s4779 + $0x1c] sm:$0xf]
                  %4796 = vst [vmem:[%s4780 + $0x54] sm:$0xf] %v4795
                  %v4797 = vld [vmem:[%s4779 + $0x20] sm:$0xf]
                  %4798 = vst [vmem:[%s4780 + $0x60] sm:$0xf] %v4797
                  %v4799 = vld [vmem:[%s4779 + $0x24] sm:$0xf]
                  %4800 = vst [vmem:[%s4780 + $0x6c] sm:$0xf] %v4799
                  %v4801 = vld [vmem:[%s4779 + $0x28] sm:$0xf]
                  %4802 = vst [vmem:[%s4780 + $0x78] sm:$0xf] %v4801
                  %v4803 = vld [vmem:[%s4779 + $0x2c] sm:$0xf]
                  %4804 = vst [vmem:[%s4780 + $0x84] sm:$0xf] %v4803
                  %v4805 = vld [vmem:[%s4779 + $0x30] sm:$0xf]
                  %4806 = vst [vmem:[%s4780 + $0x90] sm:$0xf] %v4805
                  %v4807 = vld [vmem:[%s4779 + $0x34] sm:$0xf]
                  %4808 = vst [vmem:[%s4780 + $0x9c] sm:$0xf] %v4807
                  %v4809 = vld [vmem:[%s4779 + $0x38] sm:$0xf]
                  %4810 = vst [vmem:[%s4780 + $0xa8] sm:$0xf] %v4809
                  %v4811 = vld [vmem:[%s4779 + $0x3c] sm:$0xf]
                  %4812 = vst [vmem:[%s4780 + $0xb4] sm:$0xf] %v4811
                $region210: #{multi_head_attention.4} parent=197 // loop_footer
                  %s4778 = sadd.s32 1, %s4774
                $region211: #{multi_head_attention.4} parent=197 // loop_footer_branch
                  %4773 = sbr.rel target = $region207
                $region212: #{multi_head_attention.4} parent=197 // loop_exit
                  _
              $region198: #{multi_head_attention.4} parent=182 // pred_fallthru
                _
            $region183: #{multi_head_attention.4} parent=178 // pred_fallthru
              _
            // Predicated region
            $region184: #{multi_head_attention.4} parent=178 // pred_check
              _
            $region185: #{multi_head_attention.4} parent=178 // pred_check_branch
              %4720 = sbr.rel (0) target = $region187
            $region186: #{multi_head_attention.4} parent=178 // pred_region
              loop: start=0, step=1, limit=1
              $region188: #{multi_head_attention.4} parent=186 // loop_pre_header
                _
              $region189: #{multi_head_attention.4} parent=186 // loop_header
                %s4723 = sphi 0, %s4727
                %p4724 = scmp.ge.s32.totalorder %s4723, 1
                %s4728 = sphi %s4704, %s4704
                %s4729 = sphi %s4714, %s4714
              $region190: #{multi_head_attention.4} parent=186 // loop_header_branch
                %4726 = sbr.rel (%p4724) target = $region194
              $region191: #{multi_head_attention.4} parent=186 // loop_body
                %v4730 = vld [vmem:[%s4728] sm:$0xf]
                %4731 = vst [vmem:[%s4729] sm:$0xf] %v4730
                %v4732 = vld [vmem:[%s4728 + $0x4] sm:$0xf]
                %4733 = vst [vmem:[%s4729 + $0xc] sm:$0xf] %v4732
                %v4734 = vld [vmem:[%s4728 + $0x8] sm:$0xf]
                %4735 = vst [vmem:[%s4729 + $0x18] sm:$0xf] %v4734
                %v4736 = vld [vmem:[%s4728 + $0xc] sm:$0xf]
                %4737 = vst [vmem:[%s4729 + $0x24] sm:$0xf] %v4736
                %v4738 = vld [vmem:[%s4728 + $0x10] sm:$0xf]
                %4739 = vst [vmem:[%s4729 + $0x30] sm:$0xf] %v4738
                %v4740 = vld [vmem:[%s4728 + $0x14] sm:$0xf]
                %4741 = vst [vmem:[%s4729 + $0x3c] sm:$0xf] %v4740
                %v4742 = vld [vmem:[%s4728 + $0x18] sm:$0xf]
                %4743 = vst [vmem:[%s4729 + $0x48] sm:$0xf] %v4742
                %v4744 = vld [vmem:[%s4728 + $0x1c] sm:$0xf]
                %4745 = vst [vmem:[%s4729 + $0x54] sm:$0xf] %v4744
                %v4746 = vld [vmem:[%s4728 + $0x20] sm:$0xf]
                %4747 = vst [vmem:[%s4729 + $0x60] sm:$0xf] %v4746
                %v4748 = vld [vmem:[%s4728 + $0x24] sm:$0xf]
                %4749 = vst [vmem:[%s4729 + $0x6c] sm:$0xf] %v4748
                %v4750 = vld [vmem:[%s4728 + $0x28] sm:$0xf]
                %4751 = vst [vmem:[%s4729 + $0x78] sm:$0xf] %v4750
                %v4752 = vld [vmem:[%s4728 + $0x2c] sm:$0xf]
                %4753 = vst [vmem:[%s4729 + $0x84] sm:$0xf] %v4752
                %v4754 = vld [vmem:[%s4728 + $0x30] sm:$0xf]
                %4755 = vst [vmem:[%s4729 + $0x90] sm:$0xf] %v4754
                %v4756 = vld [vmem:[%s4728 + $0x34] sm:$0xf]
                %4757 = vst [vmem:[%s4729 + $0x9c] sm:$0xf] %v4756
                %v4758 = vld [vmem:[%s4728 + $0x38] sm:$0xf]
                %4759 = vst [vmem:[%s4729 + $0xa8] sm:$0xf] %v4758
                %v4760 = vld [vmem:[%s4728 + $0x3c] sm:$0xf]
                %4761 = vst [vmem:[%s4729 + $0xb4] sm:$0xf] %v4760
              $region192: #{multi_head_attention.4} parent=186 // loop_footer
                %s4727 = sadd.s32 1, %s4723
              $region193: #{multi_head_attention.4} parent=186 // loop_footer_branch
                %4722 = sbr.rel target = $region189
              $region194: #{multi_head_attention.4} parent=186 // loop_exit
                _
            $region187: #{multi_head_attention.4} parent=178 // pred_fallthru
              _
          $region179: #{multi_head_attention.4} parent=174 // pred_fallthru
            _
          %4813 = vnop
        $region175: #{multi_head_attention.4} parent=142 // pred_fallthru
          _
      $region143: #{multi_head_attention.4} parent=5 // pred_fallthru
        _
      %p4814 = scmp.le.s32.totalorder 2, %s9
      // Predicated region
      $region213: #{multi_head_attention.4} parent=5 // pred_check
        %p4815 = pneg %p4814
      $region214: #{multi_head_attention.4} parent=5 // pred_check_branch
        %4817 = sbr.rel (%p4815) target = $region216
      $region215: #{multi_head_attention.4} parent=5 // pred_region
        %s4818 = ssub.s32 %s9, 2
        // Predicated region
        $region217: #{multi_head_attention.4} parent=215 // pred_check
          %p4819 = pneg %p162
        $region218: #{multi_head_attention.4} parent=215 // pred_check_branch
          %4821 = sbr.rel (%p4819) target = $region220
        $region219: #{multi_head_attention.4} parent=215 // pred_region
          %s4822 = sand.u32 %s147, 1
          %s4823 = sand.u32 %s147, 1
          %s4824 = smul.addr %s4823, 64
          %s4825 = scalar_lea.vmem [#allocation8], %s4824
        $region220: #{multi_head_attention.4} parent=215 // pred_fallthru
          _
      $region216: #{multi_head_attention.4} parent=5 // pred_fallthru
        _
    $region6: #{multi_head_attention.4} parent=1 // loop_footer
      %s13 = sadd.s32 1, %s9
    $region7: #{multi_head_attention.4} parent=1 // loop_footer_branch
      %8 = sbr.rel target = $region3
    $region8: #{multi_head_attention.4} parent=1 // loop_exit
      _

</llo_original>
